<compile_context>
chip_gen: v7x
topology: tpu7x:2x2x1
jax: 0.10.0
libtpu: 0.0.40
codegen_flags: <defaults>
</compile_context>

<pallas_src>
import jax
import jax.numpy as jnp
from jax.experimental import pallas as pl
from jax.experimental.pallas import tpu as pltpu


def _silu(x):
    return x * jax.nn.sigmoid(x)


def _group_norm(x, gamma, beta, agg, scat, inv_n, eps=1e-5):
    """GroupNorm over an (HW, C) tile of one batch element (f32 statistics).

    agg:  (C, G) one-hot channel->group matrix (gathers per-group sums).
    scat: (G, C) one-hot group->channel matrix (broadcasts stats back).
    """
    hi = jax.lax.Precision.HIGHEST
    s1 = jnp.sum(x, axis=0, keepdims=True)                       # (1, C)
    s2 = jnp.sum(x * x, axis=0, keepdims=True)                   # (1, C)
    g1 = jnp.dot(s1, agg, precision=hi, preferred_element_type=jnp.float32)
    g2 = jnp.dot(s2, agg, precision=hi, preferred_element_type=jnp.float32)
    mean_g = g1 * inv_n                                          # (1, G)
    var_g = g2 * inv_n - mean_g * mean_g
    inv_g = jax.lax.rsqrt(var_g + eps)
    mean_c = jnp.dot(mean_g, scat, precision=hi, preferred_element_type=jnp.float32)
    inv_c = jnp.dot(inv_g, scat, precision=hi, preferred_element_type=jnp.float32)
    return (x - mean_c) * inv_c * gamma + beta


def _conv3x3(a, w_ref, bias, not_first, not_last, pad_ref, W, HW):
    """3x3 SAME conv on an (HW, Cin) f32 tile as 3 K-stacked bf16 MXU matmuls.

    w_ref:   (3, 3*Cin, Cout) bf16 weights, K laid out as (kx, Cin) per ky.
    pad_ref: (HW + 2*W, 3*Cin) bf16 scratch with W halo rows on each side.
    """
    C = a.shape[1]
    Cout = w_ref.shape[2]
    dt = pad_ref.dtype

    # Zero only the halo rows (the rows never overwritten with data below).
    halo = jnp.zeros((W + 1, 3 * C), dt)
    pad_ref[pl.ds(0, W + 1), :] = halo
    pad_ref[pl.ds(HW + W - 1, W + 1), :] = halo

    # Three column-shifted copies of the activation stacked along channels:
    #   block [0 , C )  pairs with kx=0 (neighbour w-1): stored one row later,
    #                    source column W-1 masked to kill the row wrap-around.
    #   block [C , 2C)  pairs with kx=1 (neighbour w):   unshifted.
    #   block [2C, 3C)  pairs with kx=2 (neighbour w+1): stored one row earlier,
    #                    source column 0 masked to kill the row wrap-around.
    pad_ref[pl.ds(W + 1, HW), pl.ds(0, C)] = (a * not_last).astype(dt)
    pad_ref[pl.ds(W, HW), pl.ds(C, C)] = a.astype(dt)
    pad_ref[pl.ds(W - 1, HW), pl.ds(2 * C, C)] = (a * not_first).astype(dt)

    # One MXU matmul per ky row offset (dy = ky - 1), each contracting K = 3*Cin.
    acc = jnp.zeros((HW, Cout), jnp.float32)
    for ky in range(3):
        win = pad_ref[pl.ds(ky * W, HW), :]                      # (HW, 3*Cin) bf16
        acc = acc + jnp.dot(win, w_ref[ky], preferred_element_type=jnp.float32)
    return acc + bias


def _make_resnet_block_kernel(W, HW, inv_n1, inv_n2):
    def kernel(x_ref, t_ref,
               agg1_ref, scat1_ref, g1_ref, be1_ref, w1_ref, b1_ref,
               tw_ref, tb_ref,
               agg2_ref, scat2_ref, g2_ref, be2_ref, w2_ref, b2_ref,
               wres_ref, bres_ref,
               out_ref, pad1_ref, pad2_ref):
        x = x_ref[...].astype(jnp.float32)                       # (HW, Cin)

        # Column-validity masks for the dx = +-1 taps, generated in-kernel.
        pix = jax.lax.broadcasted_iota(jnp.int32, (HW, 1), 0)
        if (W & (W - 1)) == 0:                                   # power-of-two W
            col = jnp.bitwise_and(pix, W - 1)
        else:
            pf = pix.astype(jnp.float32)                         # exact for H <= ~4k
            col = (pf - jnp.floor(pf / float(W)) * float(W)).astype(jnp.int32)
        not_first = (col > 0).astype(jnp.float32)                # column != 0
        not_last = (col < W - 1).astype(jnp.float32)             # column != W-1

        # Residual path: 1x1 conv (identity weights when Cin == Cout).
        residual = jnp.dot(x.astype(jnp.bfloat16), wres_ref[...],
                           preferred_element_type=jnp.float32) + bres_ref[...]

        # gn1: GroupNorm -> SiLU -> Conv3x3
        h = _group_norm(x, g1_ref[...], be1_ref[...],
                        agg1_ref[...], scat1_ref[...], inv_n1)
        h = _silu(h)
        h = _conv3x3(h, w1_ref, b1_ref[...], not_first, not_last, pad1_ref, W, HW)

        # Time-embedding FFN: SiLU -> Linear, broadcast over all pixels.
        te = _silu(t_ref[...].astype(jnp.float32))               # (1, Temb)
        te = jnp.dot(te.astype(jnp.bfloat16), tw_ref[...],
                     preferred_element_type=jnp.float32) + tb_ref[...]
        h = h + te

        # gn2: GroupNorm -> SiLU -> Dropout -> Conv3x3
        # TODO(synk): training-mode dropout (pltpu.prng_*) not implemented; eval identity.
        h = _group_norm(h, g2_ref[...], be2_ref[...],
                        agg2_ref[...], scat2_ref[...], inv_n2)
        h = _silu(h)
        h = _conv3x3(h, w2_ref, b2_ref[...], not_first, not_last, pad2_ref, W, HW)

        out_ref[...] = (h + residual).astype(out_ref.dtype)

    return kernel


def _group_onehot(C, G):
    grp = jnp.arange(C, dtype=jnp.int32) // (C // G)
    agg = (grp[:, None] == jnp.arange(G, dtype=jnp.int32)[None, :]).astype(jnp.float32)
    return agg, agg.T                                            # (C, G), (G, C)


def resnet_block_forward(x_nchw, temb, params, num_groups):
    """Fused ResNetBlock forward. x_nchw: (B, Cin, H, W); temb: (B, 4*ch)."""
    B, Cin, H, W = x_nchw.shape
    HW = H * W
    Cout = params["b1"].shape[0]
    Temb = temb.shape[1]
    G = num_groups

    # Layout plumbing (plain JAX glue): NCHW -> (B, HW, C) pixels x channels.
    x2d = jnp.transpose(x_nchw, (0, 2, 3, 1)).reshape(B, HW, Cin).astype(jnp.float32)
    t3d = temb.reshape(B, 1, Temb).astype(jnp.float32)

    # MXU operands in bf16 (accumulation stays f32 in-kernel).
    w1 = params["w1_hwio"].reshape(3, 3 * Cin, Cout).astype(jnp.bfloat16)
    w2 = params["w2_hwio"].reshape(3, 3 * Cout, Cout).astype(jnp.bfloat16)
    tw = params["tw"].astype(jnp.bfloat16)
    if params.get("wres") is None:                               # nn.Identity() branch
        assert Cin == Cout, "identity residual requires Cin == Cout"
        wres = jnp.eye(Cin, dtype=jnp.bfloat16)
        bres = jnp.zeros((Cout,), jnp.float32)
    else:
        wres = params["wres"].astype(jnp.bfloat16)
        bres = params["bres"].astype(jnp.float32)

    agg1, scat1 = _group_onehot(Cin, G)
    agg2, scat2 = _group_onehot(Cout, G)

    row = lambda v: v.reshape(1, -1).astype(jnp.float32)
    c2 = lambda b: (0, 0)
    c3 = lambda b: (0, 0, 0)

    PR = HW + 2 * W                                              # padded scratch rows

    # Explicit VMEM budget: streamed x/out (double-buffered), bf16 conv scratches,
    # resident bf16 weights (x2 for the pipeline's buffering) + headroom.
    est = (2 * HW * (Cin + Cout) * 4
           + PR * 3 * (Cin + Cout) * 2
           + 2 * (9 * Cin * Cout + 9 * Cout * Cout + Temb * Cout + Cin * Cout) * 2
           + 64 * 1024)
    vmem_limit = int(min(100 * 1024 * 1024, max(32 * 1024 * 1024, 2 * est)))

    kernel = _make_resnet_block_kernel(
        W, HW, 1.0 / (HW * (Cin // G)), 1.0 / (HW * (Cout // G)))

    out2d = pl.pallas_call(
        kernel,
        out_shape=jax.ShapeDtypeStruct((B, HW, Cout), jnp.float32),
        grid=(B,),
        in_specs=[
            pl.BlockSpec((None, HW, Cin), lambda b: (b, 0, 0)),   # x (per batch elem)
            pl.BlockSpec((None, 1, Temb), lambda b: (b, 0, 0)),   # time embedding row
            pl.BlockSpec((Cin, G), c2),                           # gn1 gather one-hot
            pl.BlockSpec((G, Cin), c2),                           # gn1 scatter one-hot
            pl.BlockSpec((1, Cin), c2),                           # gn1 gamma
            pl.BlockSpec((1, Cin), c2),                           # gn1 beta
            pl.BlockSpec((3, 3 * Cin, Cout), c3),                 # conv1 weight (bf16)
            pl.BlockSpec((1, Cout), c2),                          # conv1 bias
            pl.BlockSpec((Temb, Cout), c2),                       # t_ffn weight (bf16)
            pl.BlockSpec((1, Cout), c2),                          # t_ffn bias
            pl.BlockSpec((Cout, G), c2),                          # gn2 gather one-hot
            pl.BlockSpec((G, Cout), c2),                          # gn2 scatter one-hot
            pl.BlockSpec((1, Cout), c2),                          # gn2 gamma
            pl.BlockSpec((1, Cout), c2),                          # gn2 beta
            pl.BlockSpec((3, 3 * Cout, Cout), c3),                # conv2 weight (bf16)
            pl.BlockSpec((1, Cout), c2),                          # conv2 bias
            pl.BlockSpec((Cin, Cout), c2),                        # conv1x1 weight (bf16)
            pl.BlockSpec((1, Cout), c2),                          # conv1x1 bias
        ],
        out_specs=pl.BlockSpec((None, HW, Cout), lambda b: (b, 0, 0)),
        scratch_shapes=[
            pltpu.VMEM((PR, 3 * Cin), jnp.bfloat16),              # conv1 padded taps
            pltpu.VMEM((PR, 3 * Cout), jnp.bfloat16),             # conv2 padded taps
        ],
        compiler_params=pltpu.CompilerParams(
            dimension_semantics=("parallel",),
            vmem_limit_bytes=vmem_limit),
    )(x2d, t3d,
      agg1, scat1, row(params["g1"]), row(params["be1"]), w1, row(params["b1"]),
      tw, row(params["tb"]),
      agg2, scat2, row(params["g2"]), row(params["be2"]), w2, row(params["b2"]),
      wres, row(bres))

    return jnp.transpose(out2d.reshape(B, H, W, Cout), (0, 3, 1, 2))


# ----------------------------- pure-JAX reference -----------------------------
def resnet_block_reference(x_nchw, temb, params, num_groups, eps=1e-5):
    x = jnp.transpose(x_nchw, (0, 2, 3, 1))                      # NHWC
    hi = jax.lax.Precision.HIGHEST

    def gn(v, gamma, beta):
        b, h, w, c = v.shape
        g = num_groups
        vg = v.reshape(b, h, w, g, c // g)
        mean = vg.mean(axis=(1, 2, 4), keepdims=True)
        var = vg.var(axis=(1, 2, 4), keepdims=True)
        vn = ((vg - mean) * jax.lax.rsqrt(var + eps)).reshape(b, h, w, c)
        return vn * gamma.reshape(1, 1, 1, c) + beta.reshape(1, 1, 1, c)

    def conv3(v, w_hwio, bias):
        y = jax.lax.conv_general_dilated(
            v, w_hwio, window_strides=(1, 1), padding="SAME",
            dimension_numbers=("NHWC", "HWIO", "NHWC"), precision=hi)
        return y + bias.reshape(1, 1, 1, -1)

    silu = lambda v: v * jax.nn.sigmoid(v)

    if params.get("wres") is None:
        residual = x
    else:
        residual = jnp.einsum("bhwc,co->bhwo", x, params["wres"], precision=hi)
        residual = residual + params["bres"].reshape(1, 1, 1, -1)

    h = conv3(silu(gn(x, params["g1"], params["be1"])), params["w1_hwio"], params["b1"])
    te = jnp.dot(silu(temb), params["tw"], precision=hi) + params["tb"]
    h = h + te[:, None, None, :]
    h = conv3(silu(gn(h, params["g2"], params["be2"])), params["w2_hwio"], params["b2"])
    out = h + residual
    return jnp.transpose(out, (0, 3, 1, 2))


if __name__ == "__main__":
    # Small shapes consistent with the module.
    B, H, W = 2, 16, 16
    ch = 4                        # base channels -> time-embedding dim = 4*ch
    num_groups = 2
    in_channels = 4
    out_channels = 8
    t_dim = 4 * ch

    key = jax.random.PRNGKey(0)
    ks = jax.random.split(key, 16)

    params = {
        "g1": 1.0 + 0.1 * jax.random.normal(ks[0], (in_channels,), jnp.float32),
        "be1": 0.1 * jax.random.normal(ks[1], (in_channels,), jnp.float32),
        "w1_hwio": 0.1 * jax.random.normal(ks[2], (3, 3, in_channels, out_channels), jnp.float32),
        "b1": 0.1 * jax.random.normal(ks[3], (out_channels,), jnp.float32),
        "tw": 0.1 * jax.random.normal(ks[4], (t_dim, out_channels), jnp.float32),
        "tb": 0.1 * jax.random.normal(ks[5], (out_channels,), jnp.float32),
        "g2": 1.0 + 0.1 * jax.random.normal(ks[6], (out_channels,), jnp.float32),
        "be2": 0.1 * jax.random.normal(ks[7], (out_channels,), jnp.float32),
        "w2_hwio": 0.1 * jax.random.normal(ks[8], (3, 3, out_channels, out_channels), jnp.float32),
        "b2": 0.1 * jax.random.normal(ks[9], (out_channels,), jnp.float32),
        "wres": 0.1 * jax.random.normal(ks[10], (in_channels, out_channels), jnp.float32),
        "bres": 0.1 * jax.random.normal(ks[11], (out_channels,), jnp.float32),
    }

    x = jax.random.normal(ks[12], (B, in_channels, H, W), jnp.float32)
    temb = jax.random.normal(ks[13], (B, t_dim), jnp.float32)

    run = jax.jit(lambda xx, tt: resnet_block_forward(xx, tt, params, num_groups))
    out = jax.block_until_ready(run(x, temb))

    ref = resnet_block_reference(x, temb, params, num_groups)
    assert out.shape == (B, out_channels, H, W)
    # bf16 MXU matmuls (f32 accumulation) vs. f32 HIGHEST reference.
    max_err = float(jnp.max(jnp.abs(out - ref)))
    assert max_err < 5e-2, f"max abs error {max_err}"

    print("KERNEL_OK")
</pallas_src>

<mosaic_0001>
module attributes {stable_mosaic.version = 11 : i64} {
  func.func @kernel(%arg0: i32, %arg1: memref<1x256x4xf32, #tpu.memory_space<vmem>>, %arg2: memref<1x1x16xf32, #tpu.memory_space<vmem>>, %arg3: memref<4x2xf32, #tpu.memory_space<vmem>>, %arg4: memref<2x4xf32, #tpu.memory_space<vmem>>, %arg5: memref<1x4xf32, #tpu.memory_space<vmem>>, %arg6: memref<1x4xf32, #tpu.memory_space<vmem>>, %arg7: memref<3x12x8xbf16, #tpu.memory_space<vmem>>, %arg8: memref<1x8xf32, #tpu.memory_space<vmem>>, %arg9: memref<16x8xbf16, #tpu.memory_space<vmem>>, %arg10: memref<1x8xf32, #tpu.memory_space<vmem>>, %arg11: memref<8x2xf32, #tpu.memory_space<vmem>>, %arg12: memref<2x8xf32, #tpu.memory_space<vmem>>, %arg13: memref<1x8xf32, #tpu.memory_space<vmem>>, %arg14: memref<1x8xf32, #tpu.memory_space<vmem>>, %arg15: memref<3x24x8xbf16, #tpu.memory_space<vmem>>, %arg16: memref<1x8xf32, #tpu.memory_space<vmem>>, %arg17: memref<4x8xbf16, #tpu.memory_space<vmem>>, %arg18: memref<1x8xf32, #tpu.memory_space<vmem>>, %arg19: memref<1x256x8xf32, #tpu.memory_space<vmem>>, %arg20: memref<288x12xbf16, #tpu.memory_space<vmem>>, %arg21: memref<288x24xbf16, #tpu.memory_space<vmem>>) attributes {dimension_semantics = [#tpu.dimension_semantics<parallel>], iteration_bounds = array<i64: 2>, scalar_prefetch = 0 : i64, scratch_operands = 2 : i64, tpu.core_type = #tpu.core_type<tc>, window_params = [{transform_indices = @transform_0, window_bounds = array<i64: 1, 256, 4>}, {transform_indices = @transform_1, window_bounds = array<i64: 1, 1, 16>}, {pipeline_mode = #tpu.pipeline_mode<synchronous>, transform_indices = @transform_2, window_bounds = array<i64: 4, 2>}, {pipeline_mode = #tpu.pipeline_mode<synchronous>, transform_indices = @transform_3, window_bounds = array<i64: 2, 4>}, {pipeline_mode = #tpu.pipeline_mode<synchronous>, transform_indices = @transform_4, window_bounds = array<i64: 1, 4>}, {pipeline_mode = #tpu.pipeline_mode<synchronous>, transform_indices = @transform_5, window_bounds = array<i64: 1, 4>}, {pipeline_mode = #tpu.pipeline_mode<synchronous>, transform_indices = @transform_6, window_bounds = array<i64: 3, 12, 8>}, {pipeline_mode = #tpu.pipeline_mode<synchronous>, transform_indices = @transform_7, window_bounds = array<i64: 1, 8>}, {pipeline_mode = #tpu.pipeline_mode<synchronous>, transform_indices = @transform_8, window_bounds = array<i64: 16, 8>}, {pipeline_mode = #tpu.pipeline_mode<synchronous>, transform_indices = @transform_9, window_bounds = array<i64: 1, 8>}, {pipeline_mode = #tpu.pipeline_mode<synchronous>, transform_indices = @transform_10, window_bounds = array<i64: 8, 2>}, {pipeline_mode = #tpu.pipeline_mode<synchronous>, transform_indices = @transform_11, window_bounds = array<i64: 2, 8>}, {pipeline_mode = #tpu.pipeline_mode<synchronous>, transform_indices = @transform_12, window_bounds = array<i64: 1, 8>}, {pipeline_mode = #tpu.pipeline_mode<synchronous>, transform_indices = @transform_13, window_bounds = array<i64: 1, 8>}, {pipeline_mode = #tpu.pipeline_mode<synchronous>, transform_indices = @transform_14, window_bounds = array<i64: 3, 24, 8>}, {pipeline_mode = #tpu.pipeline_mode<synchronous>, transform_indices = @transform_15, window_bounds = array<i64: 1, 8>}, {pipeline_mode = #tpu.pipeline_mode<synchronous>, transform_indices = @transform_16, window_bounds = array<i64: 4, 8>}, {pipeline_mode = #tpu.pipeline_mode<synchronous>, transform_indices = @transform_17, window_bounds = array<i64: 1, 8>}, {transform_indices = @transform_18, window_bounds = array<i64: 1, 256, 8>}]} {
    %c0 = arith.constant 0 : index
    %c0_0 = arith.constant 0 : index
    %c0_1 = arith.constant 0 : index
    %0 = vector.load %arg1[%c0, %c0_0, %c0_1] : memref<1x256x4xf32, #tpu.memory_space<vmem>>, vector<1x256x4xf32>
    %1 = vector.shape_cast %0 : vector<1x256x4xf32> to vector<256x4xf32>
    %2 = tpu.iota {dimensions = array<i32: 0>} : vector<256x1xi32>
    %c15_i32 = arith.constant 15 : i32
    %3 = vector.broadcast %c15_i32 : i32 to vector<256x1xi32>
    %4 = arith.andi %2, %3 : vector<256x1xi32>
    %c0_i32 = arith.constant 0 : i32
    %5 = vector.broadcast %c0_i32 : i32 to vector<256x1xi32>
    %6 = arith.cmpi sgt, %4, %5 : vector<256x1xi32>
    %7 = arith.extui %6 : vector<256x1xi1> to vector<256x1xi32>
    %8 = arith.sitofp %7 : vector<256x1xi32> to vector<256x1xf32>
    %c15_i32_2 = arith.constant 15 : i32
    %9 = vector.broadcast %c15_i32_2 : i32 to vector<256x1xi32>
    %10 = arith.cmpi slt, %4, %9 : vector<256x1xi32>
    %11 = arith.extui %10 : vector<256x1xi1> to vector<256x1xi32>
    %12 = arith.sitofp %11 : vector<256x1xi32> to vector<256x1xf32>
    %13 = arith.truncf %1 : vector<256x4xf32> to vector<256x4xbf16>
    %c0_3 = arith.constant 0 : index
    %c0_4 = arith.constant 0 : index
    %14 = vector.load %arg17[%c0_3, %c0_4] : memref<4x8xbf16, #tpu.memory_space<vmem>>, vector<4x8xbf16>
    %cst = arith.constant dense<0.000000e+00> : vector<256x8xf32>
    %15 = tpu.matmul %13, %14, %cst {dimension_numbers = #tpu.dot_dimension_numbers<[1], [0], [0], [1], [0, 0, 1, 1], [], []>} : vector<256x4xbf16>, vector<4x8xbf16>, vector<256x8xf32> -> vector<256x8xf32>
    %c0_5 = arith.constant 0 : index
    %c0_6 = arith.constant 0 : index
    %16 = vector.load %arg18[%c0_5, %c0_6] : memref<1x8xf32, #tpu.memory_space<vmem>>, vector<1x8xf32>
    %17 = vector.broadcast %16 : vector<1x8xf32> to vector<256x8xf32>
    %18 = arith.addf %15, %17 : vector<256x8xf32>
    %c0_7 = arith.constant 0 : index
    %c0_8 = arith.constant 0 : index
    %19 = vector.load %arg5[%c0_7, %c0_8] : memref<1x4xf32, #tpu.memory_space<vmem>>, vector<1x4xf32>
    %c0_9 = arith.constant 0 : index
    %c0_10 = arith.constant 0 : index
    %20 = vector.load %arg6[%c0_9, %c0_10] : memref<1x4xf32, #tpu.memory_space<vmem>>, vector<1x4xf32>
    %c0_11 = arith.constant 0 : index
    %c0_12 = arith.constant 0 : index
    %21 = vector.load %arg3[%c0_11, %c0_12] : memref<4x2xf32, #tpu.memory_space<vmem>>, vector<4x2xf32>
    %c0_13 = arith.constant 0 : index
    %c0_14 = arith.constant 0 : index
    %22 = vector.load %arg4[%c0_13, %c0_14] : memref<2x4xf32, #tpu.memory_space<vmem>>, vector<2x4xf32>
    %cst_15 = arith.constant dense<0.000000e+00> : vector<4xf32>
    %23 = vector.multi_reduction <add>, %1, %cst_15 [0] : vector<256x4xf32> to vector<4xf32>
    %24 = vector.shape_cast %23 : vector<4xf32> to vector<1x4xf32>
    %25 = arith.mulf %1, %1 : vector<256x4xf32>
    %cst_16 = arith.constant dense<0.000000e+00> : vector<4xf32>
    %26 = vector.multi_reduction <add>, %25, %cst_16 [0] : vector<256x4xf32> to vector<4xf32>
    %27 = vector.shape_cast %26 : vector<4xf32> to vector<1x4xf32>
    %cst_17 = arith.constant dense<0.000000e+00> : vector<1x2xf32>
    %28 = tpu.matmul %24, %21, %cst_17 {dimension_numbers = #tpu.dot_dimension_numbers<[1], [0], [0], [1], [0, 0, 1, 1], [], []>, precision = #tpu.contract_precision<fp32>} : vector<1x4xf32>, vector<4x2xf32>, vector<1x2xf32> -> vector<1x2xf32>
    %cst_18 = arith.constant dense<0.000000e+00> : vector<1x2xf32>
    %29 = tpu.matmul %27, %21, %cst_18 {dimension_numbers = #tpu.dot_dimension_numbers<[1], [0], [0], [1], [0, 0, 1, 1], [], []>, precision = #tpu.contract_precision<fp32>} : vector<1x4xf32>, vector<4x2xf32>, vector<1x2xf32> -> vector<1x2xf32>
    %cst_19 = arith.constant 0.001953125 : f32
    %30 = vector.broadcast %cst_19 : f32 to vector<1x2xf32>
    %31 = arith.mulf %28, %30 : vector<1x2xf32>
    %cst_20 = arith.constant 0.001953125 : f32
    %32 = vector.broadcast %cst_20 : f32 to vector<1x2xf32>
    %33 = arith.mulf %29, %32 : vector<1x2xf32>
    %34 = arith.mulf %31, %31 : vector<1x2xf32>
    %35 = arith.subf %33, %34 : vector<1x2xf32>
    %cst_21 = arith.constant 9.99999974E-6 : f32
    %36 = vector.broadcast %cst_21 : f32 to vector<1x2xf32>
    %37 = arith.addf %35, %36 : vector<1x2xf32>
    %38 = math.rsqrt %37 : vector<1x2xf32>
    %cst_22 = arith.constant dense<0.000000e+00> : vector<1x4xf32>
    %39 = tpu.matmul %31, %22, %cst_22 {dimension_numbers = #tpu.dot_dimension_numbers<[1], [0], [0], [1], [0, 0, 1, 1], [], []>, precision = #tpu.contract_precision<fp32>} : vector<1x2xf32>, vector<2x4xf32>, vector<1x4xf32> -> vector<1x4xf32>
    %cst_23 = arith.constant dense<0.000000e+00> : vector<1x4xf32>
    %40 = tpu.matmul %38, %22, %cst_23 {dimension_numbers = #tpu.dot_dimension_numbers<[1], [0], [0], [1], [0, 0, 1, 1], [], []>, precision = #tpu.contract_precision<fp32>} : vector<1x2xf32>, vector<2x4xf32>, vector<1x4xf32> -> vector<1x4xf32>
    %41 = vector.broadcast %39 : vector<1x4xf32> to vector<256x4xf32>
    %42 = arith.subf %1, %41 : vector<256x4xf32>
    %43 = vector.broadcast %40 : vector<1x4xf32> to vector<256x4xf32>
    %44 = arith.mulf %42, %43 : vector<256x4xf32>
    %45 = vector.broadcast %19 : vector<1x4xf32> to vector<256x4xf32>
    %46 = arith.mulf %44, %45 : vector<256x4xf32>
    %47 = vector.broadcast %20 : vector<1x4xf32> to vector<256x4xf32>
    %48 = arith.addf %46, %47 : vector<256x4xf32>
    %49 = arith.negf %48 : vector<256x4xf32>
    %50 = math.exp %49 : vector<256x4xf32>
    %cst_24 = arith.constant 1.000000e+00 : f32
    %51 = vector.broadcast %cst_24 : f32 to vector<256x4xf32>
    %52 = arith.addf %51, %50 : vector<256x4xf32>
    %53 = arith.divf %51, %52 : vector<256x4xf32>
    %54 = arith.mulf %48, %53 : vector<256x4xf32>
    %c0_25 = arith.constant 0 : index
    %c0_26 = arith.constant 0 : index
    %55 = vector.load %arg8[%c0_25, %c0_26] : memref<1x8xf32, #tpu.memory_space<vmem>>, vector<1x8xf32>
    %cst_27 = arith.constant 0.000000e+00 : bf16
    %56 = vector.broadcast %cst_27 : bf16 to vector<17x12xbf16>
    %c0_28 = arith.constant 0 : index
    %c0_29 = arith.constant 0 : index
    %57 = vector.load %arg20[%c0_28, %c0_29] : memref<288x12xbf16, #tpu.memory_space<vmem>>, vector<17x12xbf16>
    tpu.vector_store %arg20[%c0_28, %c0_29], %56 {strides = array<i32>} : memref<288x12xbf16, #tpu.memory_space<vmem>>, vector<17x12xbf16>,
    %c271 = arith.constant 271 : index
    %c0_30 = arith.constant 0 : index
    %58 = vector.load %arg20[%c271, %c0_30] : memref<288x12xbf16, #tpu.memory_space<vmem>>, vector<17x12xbf16>
    tpu.vector_store %arg20[%c271, %c0_30], %56 {strides = array<i32>} : memref<288x12xbf16, #tpu.memory_space<vmem>>, vector<17x12xbf16>,
    %59 = vector.broadcast %12 : vector<256x1xf32> to vector<256x4xf32>
    %60 = arith.mulf %54, %59 : vector<256x4xf32>
    %61 = arith.truncf %60 : vector<256x4xf32> to vector<256x4xbf16>
    %c17 = arith.constant 17 : index
    %c0_31 = arith.constant 0 : index
    %62 = vector.load %arg20[%c17, %c0_31] : memref<288x12xbf16, #tpu.memory_space<vmem>>, vector<256x4xbf16>
    tpu.vector_store %arg20[%c17, %c0_31], %61 {strides = array<i32>} : memref<288x12xbf16, #tpu.memory_space<vmem>>, vector<256x4xbf16>,
    %63 = arith.truncf %54 : vector<256x4xf32> to vector<256x4xbf16>
    %c16 = arith.constant 16 : index
    %c4 = arith.constant 4 : index
    %64 = vector.load %arg20[%c16, %c4] : memref<288x12xbf16, #tpu.memory_space<vmem>>, vector<256x4xbf16>
    tpu.vector_store %arg20[%c16, %c4], %63 {strides = array<i32>} : memref<288x12xbf16, #tpu.memory_space<vmem>>, vector<256x4xbf16>,
    %65 = vector.broadcast %8 : vector<256x1xf32> to vector<256x4xf32>
    %66 = arith.mulf %54, %65 : vector<256x4xf32>
    %67 = arith.truncf %66 : vector<256x4xf32> to vector<256x4xbf16>
    %c15 = arith.constant 15 : index
    %c8 = arith.constant 8 : index
    %68 = vector.load %arg20[%c15, %c8] : memref<288x12xbf16, #tpu.memory_space<vmem>>, vector<256x4xbf16>
    tpu.vector_store %arg20[%c15, %c8], %67 {strides = array<i32>} : memref<288x12xbf16, #tpu.memory_space<vmem>>, vector<256x4xbf16>,
    %cst_32 = arith.constant 0.000000e+00 : f32
    %69 = vector.broadcast %cst_32 : f32 to vector<256x8xf32>
    %c0_33 = arith.constant 0 : index
    %c0_34 = arith.constant 0 : index
    %70 = vector.load %arg20[%c0_33, %c0_34] : memref<288x12xbf16, #tpu.memory_space<vmem>>, vector<256x12xbf16>
    %c0_35 = arith.constant 0 : index
    %c0_36 = arith.constant 0 : index
    %c0_37 = arith.constant 0 : index
    %71 = vector.load %arg7[%c0_35, %c0_36, %c0_37] : memref<3x12x8xbf16, #tpu.memory_space<vmem>>, vector<1x12x8xbf16>
    %72 = vector.shape_cast %71 : vector<1x12x8xbf16> to vector<12x8xbf16>
    %cst_38 = arith.constant dense<0.000000e+00> : vector<256x8xf32>
    %73 = tpu.matmul %70, %72, %cst_38 {dimension_numbers = #tpu.dot_dimension_numbers<[1], [0], [0], [1], [0, 0, 1, 1], [], []>} : vector<256x12xbf16>, vector<12x8xbf16>, vector<256x8xf32> -> vector<256x8xf32>
    %74 = arith.addf %69, %73 : vector<256x8xf32>
    %c16_39 = arith.constant 16 : index
    %c0_40 = arith.constant 0 : index
    %75 = vector.load %arg20[%c16_39, %c0_40] : memref<288x12xbf16, #tpu.memory_space<vmem>>, vector<256x12xbf16>
    %c1 = arith.constant 1 : index
    %c0_41 = arith.constant 0 : index
    %c0_42 = arith.constant 0 : index
    %76 = vector.load %arg7[%c1, %c0_41, %c0_42] : memref<3x12x8xbf16, #tpu.memory_space<vmem>>, vector<1x12x8xbf16>
    %77 = vector.shape_cast %76 : vector<1x12x8xbf16> to vector<12x8xbf16>
    %cst_43 = arith.constant dense<0.000000e+00> : vector<256x8xf32>
    %78 = tpu.matmul %75, %77, %cst_43 {dimension_numbers = #tpu.dot_dimension_numbers<[1], [0], [0], [1], [0, 0, 1, 1], [], []>} : vector<256x12xbf16>, vector<12x8xbf16>, vector<256x8xf32> -> vector<256x8xf32>
    %79 = arith.addf %74, %78 : vector<256x8xf32>
    %c32 = arith.constant 32 : index
    %c0_44 = arith.constant 0 : index
    %80 = vector.load %arg20[%c32, %c0_44] : memref<288x12xbf16, #tpu.memory_space<vmem>>, vector<256x12xbf16>
    %c2 = arith.constant 2 : index
    %c0_45 = arith.constant 0 : index
    %c0_46 = arith.constant 0 : index
    %81 = vector.load %arg7[%c2, %c0_45, %c0_46] : memref<3x12x8xbf16, #tpu.memory_space<vmem>>, vector<1x12x8xbf16>
    %82 = vector.shape_cast %81 : vector<1x12x8xbf16> to vector<12x8xbf16>
    %cst_47 = arith.constant dense<0.000000e+00> : vector<256x8xf32>
    %83 = tpu.matmul %80, %82, %cst_47 {dimension_numbers = #tpu.dot_dimension_numbers<[1], [0], [0], [1], [0, 0, 1, 1], [], []>} : vector<256x12xbf16>, vector<12x8xbf16>, vector<256x8xf32> -> vector<256x8xf32>
    %84 = arith.addf %79, %83 : vector<256x8xf32>
    %85 = vector.broadcast %55 : vector<1x8xf32> to vector<256x8xf32>
    %86 = arith.addf %84, %85 : vector<256x8xf32>
    %c0_48 = arith.constant 0 : index
    %c0_49 = arith.constant 0 : index
    %c0_50 = arith.constant 0 : index
    %87 = vector.load %arg2[%c0_48, %c0_49, %c0_50] : memref<1x1x16xf32, #tpu.memory_space<vmem>>, vector<1x1x16xf32>
    %88 = vector.shape_cast %87 : vector<1x1x16xf32> to vector<1x16xf32>
    %89 = arith.negf %88 : vector<1x16xf32>
    %90 = math.exp %89 : vector<1x16xf32>
    %cst_51 = arith.constant 1.000000e+00 : f32
    %91 = vector.broadcast %cst_51 : f32 to vector<1x16xf32>
    %92 = arith.addf %91, %90 : vector<1x16xf32>
    %93 = arith.divf %91, %92 : vector<1x16xf32>
    %94 = arith.mulf %88, %93 : vector<1x16xf32>
    %95 = arith.truncf %94 : vector<1x16xf32> to vector<1x16xbf16>
    %c0_52 = arith.constant 0 : index
    %c0_53 = arith.constant 0 : index
    %96 = vector.load %arg9[%c0_52, %c0_53] : memref<16x8xbf16, #tpu.memory_space<vmem>>, vector<16x8xbf16>
    %cst_54 = arith.constant dense<0.000000e+00> : vector<1x8xf32>
    %97 = tpu.matmul %95, %96, %cst_54 {dimension_numbers = #tpu.dot_dimension_numbers<[1], [0], [0], [1], [0, 0, 1, 1], [], []>} : vector<1x16xbf16>, vector<16x8xbf16>, vector<1x8xf32> -> vector<1x8xf32>
    %c0_55 = arith.constant 0 : index
    %c0_56 = arith.constant 0 : index
    %98 = vector.load %arg10[%c0_55, %c0_56] : memref<1x8xf32, #tpu.memory_space<vmem>>, vector<1x8xf32>
    %99 = arith.addf %97, %98 : vector<1x8xf32>
    %100 = vector.broadcast %99 : vector<1x8xf32> to vector<256x8xf32>
    %101 = arith.addf %86, %100 : vector<256x8xf32>
    %c0_57 = arith.constant 0 : index
    %c0_58 = arith.constant 0 : index
    %102 = vector.load %arg13[%c0_57, %c0_58] : memref<1x8xf32, #tpu.memory_space<vmem>>, vector<1x8xf32>
    %c0_59 = arith.constant 0 : index
    %c0_60 = arith.constant 0 : index
    %103 = vector.load %arg14[%c0_59, %c0_60] : memref<1x8xf32, #tpu.memory_space<vmem>>, vector<1x8xf32>
    %c0_61 = arith.constant 0 : index
    %c0_62 = arith.constant 0 : index
    %104 = vector.load %arg11[%c0_61, %c0_62] : memref<8x2xf32, #tpu.memory_space<vmem>>, vector<8x2xf32>
    %c0_63 = arith.constant 0 : index
    %c0_64 = arith.constant 0 : index
    %105 = vector.load %arg12[%c0_63, %c0_64] : memref<2x8xf32, #tpu.memory_space<vmem>>, vector<2x8xf32>
    %cst_65 = arith.constant dense<0.000000e+00> : vector<8xf32>
    %106 = vector.multi_reduction <add>, %101, %cst_65 [0] : vector<256x8xf32> to vector<8xf32>
    %107 = vector.shape_cast %106 : vector<8xf32> to vector<1x8xf32>
    %108 = arith.mulf %101, %101 : vector<256x8xf32>
    %cst_66 = arith.constant dense<0.000000e+00> : vector<8xf32>
    %109 = vector.multi_reduction <add>, %108, %cst_66 [0] : vector<256x8xf32> to vector<8xf32>
    %110 = vector.shape_cast %109 : vector<8xf32> to vector<1x8xf32>
    %cst_67 = arith.constant dense<0.000000e+00> : vector<1x2xf32>
    %111 = tpu.matmul %107, %104, %cst_67 {dimension_numbers = #tpu.dot_dimension_numbers<[1], [0], [0], [1], [0, 0, 1, 1], [], []>, precision = #tpu.contract_precision<fp32>} : vector<1x8xf32>, vector<8x2xf32>, vector<1x2xf32> -> vector<1x2xf32>
    %cst_68 = arith.constant dense<0.000000e+00> : vector<1x2xf32>
    %112 = tpu.matmul %110, %104, %cst_68 {dimension_numbers = #tpu.dot_dimension_numbers<[1], [0], [0], [1], [0, 0, 1, 1], [], []>, precision = #tpu.contract_precision<fp32>} : vector<1x8xf32>, vector<8x2xf32>, vector<1x2xf32> -> vector<1x2xf32>
    %cst_69 = arith.constant 9.765625E-4 : f32
    %113 = vector.broadcast %cst_69 : f32 to vector<1x2xf32>
    %114 = arith.mulf %111, %113 : vector<1x2xf32>
    %cst_70 = arith.constant 9.765625E-4 : f32
    %115 = vector.broadcast %cst_70 : f32 to vector<1x2xf32>
    %116 = arith.mulf %112, %115 : vector<1x2xf32>
    %117 = arith.mulf %114, %114 : vector<1x2xf32>
    %118 = arith.subf %116, %117 : vector<1x2xf32>
    %cst_71 = arith.constant 9.99999974E-6 : f32
    %119 = vector.broadcast %cst_71 : f32 to vector<1x2xf32>
    %120 = arith.addf %118, %119 : vector<1x2xf32>
    %121 = math.rsqrt %120 : vector<1x2xf32>
    %cst_72 = arith.constant dense<0.000000e+00> : vector<1x8xf32>
    %122 = tpu.matmul %114, %105, %cst_72 {dimension_numbers = #tpu.dot_dimension_numbers<[1], [0], [0], [1], [0, 0, 1, 1], [], []>, precision = #tpu.contract_precision<fp32>} : vector<1x2xf32>, vector<2x8xf32>, vector<1x8xf32> -> vector<1x8xf32>
    %cst_73 = arith.constant dense<0.000000e+00> : vector<1x8xf32>
    %123 = tpu.matmul %121, %105, %cst_73 {dimension_numbers = #tpu.dot_dimension_numbers<[1], [0], [0], [1], [0, 0, 1, 1], [], []>, precision = #tpu.contract_precision<fp32>} : vector<1x2xf32>, vector<2x8xf32>, vector<1x8xf32> -> vector<1x8xf32>
    %124 = vector.broadcast %122 : vector<1x8xf32> to vector<256x8xf32>
    %125 = arith.subf %101, %124 : vector<256x8xf32>
    %126 = vector.broadcast %123 : vector<1x8xf32> to vector<256x8xf32>
    %127 = arith.mulf %125, %126 : vector<256x8xf32>
    %128 = vector.broadcast %102 : vector<1x8xf32> to vector<256x8xf32>
    %129 = arith.mulf %127, %128 : vector<256x8xf32>
    %130 = vector.broadcast %103 : vector<1x8xf32> to vector<256x8xf32>
    %131 = arith.addf %129, %130 : vector<256x8xf32>
    %132 = arith.negf %131 : vector<256x8xf32>
    %133 = math.exp %132 : vector<256x8xf32>
    %cst_74 = arith.constant 1.000000e+00 : f32
    %134 = vector.broadcast %cst_74 : f32 to vector<256x8xf32>
    %135 = arith.addf %134, %133 : vector<256x8xf32>
    %136 = arith.divf %134, %135 : vector<256x8xf32>
    %137 = arith.mulf %131, %136 : vector<256x8xf32>
    %c0_75 = arith.constant 0 : index
    %c0_76 = arith.constant 0 : index
    %138 = vector.load %arg16[%c0_75, %c0_76] : memref<1x8xf32, #tpu.memory_space<vmem>>, vector<1x8xf32>
    %cst_77 = arith.constant 0.000000e+00 : bf16
    %139 = vector.broadcast %cst_77 : bf16 to vector<17x24xbf16>
    %c0_78 = arith.constant 0 : index
    %c0_79 = arith.constant 0 : index
    %140 = vector.load %arg21[%c0_78, %c0_79] : memref<288x24xbf16, #tpu.memory_space<vmem>>, vector<17x24xbf16>
    tpu.vector_store %arg21[%c0_78, %c0_79], %139 {strides = array<i32>} : memref<288x24xbf16, #tpu.memory_space<vmem>>, vector<17x24xbf16>,
    %c271_80 = arith.constant 271 : index
    %c0_81 = arith.constant 0 : index
    %141 = vector.load %arg21[%c271_80, %c0_81] : memref<288x24xbf16, #tpu.memory_space<vmem>>, vector<17x24xbf16>
    tpu.vector_store %arg21[%c271_80, %c0_81], %139 {strides = array<i32>} : memref<288x24xbf16, #tpu.memory_space<vmem>>, vector<17x24xbf16>,
    %142 = vector.broadcast %12 : vector<256x1xf32> to vector<256x8xf32>
    %143 = arith.mulf %137, %142 : vector<256x8xf32>
    %144 = arith.truncf %143 : vector<256x8xf32> to vector<256x8xbf16>
    %c17_82 = arith.constant 17 : index
    %c0_83 = arith.constant 0 : index
    %145 = vector.load %arg21[%c17_82, %c0_83] : memref<288x24xbf16, #tpu.memory_space<vmem>>, vector<256x8xbf16>
    tpu.vector_store %arg21[%c17_82, %c0_83], %144 {strides = array<i32>} : memref<288x24xbf16, #tpu.memory_space<vmem>>, vector<256x8xbf16>,
    %146 = arith.truncf %137 : vector<256x8xf32> to vector<256x8xbf16>
    %c16_84 = arith.constant 16 : index
    %c8_85 = arith.constant 8 : index
    %147 = vector.load %arg21[%c16_84, %c8_85] : memref<288x24xbf16, #tpu.memory_space<vmem>>, vector<256x8xbf16>
    tpu.vector_store %arg21[%c16_84, %c8_85], %146 {strides = array<i32>} : memref<288x24xbf16, #tpu.memory_space<vmem>>, vector<256x8xbf16>,
    %148 = vector.broadcast %8 : vector<256x1xf32> to vector<256x8xf32>
    %149 = arith.mulf %137, %148 : vector<256x8xf32>
    %150 = arith.truncf %149 : vector<256x8xf32> to vector<256x8xbf16>
    %c15_86 = arith.constant 15 : index
    %c16_87 = arith.constant 16 : index
    %151 = vector.load %arg21[%c15_86, %c16_87] : memref<288x24xbf16, #tpu.memory_space<vmem>>, vector<256x8xbf16>
    tpu.vector_store %arg21[%c15_86, %c16_87], %150 {strides = array<i32>} : memref<288x24xbf16, #tpu.memory_space<vmem>>, vector<256x8xbf16>,
    %cst_88 = arith.constant 0.000000e+00 : f32
    %152 = vector.broadcast %cst_88 : f32 to vector<256x8xf32>
    %c0_89 = arith.constant 0 : index
    %c0_90 = arith.constant 0 : index
    %153 = vector.load %arg21[%c0_89, %c0_90] : memref<288x24xbf16, #tpu.memory_space<vmem>>, vector<256x24xbf16>
    %c0_91 = arith.constant 0 : index
    %c0_92 = arith.constant 0 : index
    %c0_93 = arith.constant 0 : index
    %154 = vector.load %arg15[%c0_91, %c0_92, %c0_93] : memref<3x24x8xbf16, #tpu.memory_space<vmem>>, vector<1x24x8xbf16>
    %155 = vector.shape_cast %154 : vector<1x24x8xbf16> to vector<24x8xbf16>
    %cst_94 = arith.constant dense<0.000000e+00> : vector<256x8xf32>
    %156 = tpu.matmul %153, %155, %cst_94 {dimension_numbers = #tpu.dot_dimension_numbers<[1], [0], [0], [1], [0, 0, 1, 1], [], []>} : vector<256x24xbf16>, vector<24x8xbf16>, vector<256x8xf32> -> vector<256x8xf32>
    %157 = arith.addf %152, %156 : vector<256x8xf32>
    %c16_95 = arith.constant 16 : index
    %c0_96 = arith.constant 0 : index
    %158 = vector.load %arg21[%c16_95, %c0_96] : memref<288x24xbf16, #tpu.memory_space<vmem>>, vector<256x24xbf16>
    %c1_97 = arith.constant 1 : index
    %c0_98 = arith.constant 0 : index
    %c0_99 = arith.constant 0 : index
    %159 = vector.load %arg15[%c1_97, %c0_98, %c0_99] : memref<3x24x8xbf16, #tpu.memory_space<vmem>>, vector<1x24x8xbf16>
    %160 = vector.shape_cast %159 : vector<1x24x8xbf16> to vector<24x8xbf16>
    %cst_100 = arith.constant dense<0.000000e+00> : vector<256x8xf32>
    %161 = tpu.matmul %158, %160, %cst_100 {dimension_numbers = #tpu.dot_dimension_numbers<[1], [0], [0], [1], [0, 0, 1, 1], [], []>} : vector<256x24xbf16>, vector<24x8xbf16>, vector<256x8xf32> -> vector<256x8xf32>
    %162 = arith.addf %157, %161 : vector<256x8xf32>
    %c32_101 = arith.constant 32 : index
    %c0_102 = arith.constant 0 : index
    %163 = vector.load %arg21[%c32_101, %c0_102] : memref<288x24xbf16, #tpu.memory_space<vmem>>, vector<256x24xbf16>
    %c2_103 = arith.constant 2 : index
    %c0_104 = arith.constant 0 : index
    %c0_105 = arith.constant 0 : index
    %164 = vector.load %arg15[%c2_103, %c0_104, %c0_105] : memref<3x24x8xbf16, #tpu.memory_space<vmem>>, vector<1x24x8xbf16>
    %165 = vector.shape_cast %164 : vector<1x24x8xbf16> to vector<24x8xbf16>
    %cst_106 = arith.constant dense<0.000000e+00> : vector<256x8xf32>
    %166 = tpu.matmul %163, %165, %cst_106 {dimension_numbers = #tpu.dot_dimension_numbers<[1], [0], [0], [1], [0, 0, 1, 1], [], []>} : vector<256x24xbf16>, vector<24x8xbf16>, vector<256x8xf32> -> vector<256x8xf32>
    %167 = arith.addf %162, %166 : vector<256x8xf32>
    %168 = vector.broadcast %138 : vector<1x8xf32> to vector<256x8xf32>
    %169 = arith.addf %167, %168 : vector<256x8xf32>
    %170 = arith.addf %169, %18 : vector<256x8xf32>
    %c0_107 = arith.constant 0 : index
    %c0_108 = arith.constant 0 : index
    %c0_109 = arith.constant 0 : index
    %171 = vector.load %arg19[%c0_107, %c0_108, %c0_109] : memref<1x256x8xf32, #tpu.memory_space<vmem>>, vector<1x256x8xf32>
    %172 = vector.shape_cast %171 : vector<1x256x8xf32> to vector<256x8xf32>
    %173 = vector.shape_cast %170 : vector<256x8xf32> to vector<1x256x8xf32>
    tpu.vector_store %arg19[%c0_107, %c0_108, %c0_109], %173 {strides = array<i32>} : memref<1x256x8xf32, #tpu.memory_space<vmem>>, vector<1x256x8xf32>,
    return
  }
  func.func @transform_0(%arg0: i32) -> (i32, i32, i32) {
    %c0_i32 = arith.constant 0 : i32
    %c0_i32_0 = arith.constant 0 : i32
    %c0_i32_1 = arith.constant 0 : i32
    return %arg0, %c0_i32, %c0_i32_0 : i32, i32, i32
  }
  func.func @transform_1(%arg0: i32) -> (i32, i32, i32) {
    %c0_i32 = arith.constant 0 : i32
    %c0_i32_0 = arith.constant 0 : i32
    %c0_i32_1 = arith.constant 0 : i32
    return %arg0, %c0_i32, %c0_i32_0 : i32, i32, i32
  }
  func.func @transform_2(%arg0: i32) -> (i32, i32) {
    %c0_i32 = arith.constant 0 : i32
    %c0_i32_0 = arith.constant 0 : i32
    %c0_i32_1 = arith.constant 0 : i32
    return %c0_i32, %c0_i32_0 : i32, i32
  }
  func.func @transform_3(%arg0: i32) -> (i32, i32) {
    %c0_i32 = arith.constant 0 : i32
    %c0_i32_0 = arith.constant 0 : i32
    %c0_i32_1 = arith.constant 0 : i32
    return %c0_i32, %c0_i32_0 : i32, i32
  }
  func.func @transform_4(%arg0: i32) -> (i32, i32) {
    %c0_i32 = arith.constant 0 : i32
    %c0_i32_0 = arith.constant 0 : i32
    %c0_i32_1 = arith.constant 0 : i32
    return %c0_i32, %c0_i32_0 : i32, i32
  }
  func.func @transform_5(%arg0: i32) -> (i32, i32) {
    %c0_i32 = arith.constant 0 : i32
    %c0_i32_0 = arith.constant 0 : i32
    %c0_i32_1 = arith.constant 0 : i32
    return %c0_i32, %c0_i32_0 : i32, i32
  }
  func.func @transform_6(%arg0: i32) -> (i32, i32, i32) {
    %c0_i32 = arith.constant 0 : i32
    %c0_i32_0 = arith.constant 0 : i32
    %c0_i32_1 = arith.constant 0 : i32
    %c0_i32_2 = arith.constant 0 : i32
    return %c0_i32, %c0_i32_0, %c0_i32_1 : i32, i32, i32
  }
  func.func @transform_7(%arg0: i32) -> (i32, i32) {
    %c0_i32 = arith.constant 0 : i32
    %c0_i32_0 = arith.constant 0 : i32
    %c0_i32_1 = arith.constant 0 : i32
    return %c0_i32, %c0_i32_0 : i32, i32
  }
  func.func @transform_8(%arg0: i32) -> (i32, i32) {
    %c0_i32 = arith.constant 0 : i32
    %c0_i32_0 = arith.constant 0 : i32
    %c0_i32_1 = arith.constant 0 : i32
    return %c0_i32, %c0_i32_0 : i32, i32
  }
  func.func @transform_9(%arg0: i32) -> (i32, i32) {
    %c0_i32 = arith.constant 0 : i32
    %c0_i32_0 = arith.constant 0 : i32
    %c0_i32_1 = arith.constant 0 : i32
    return %c0_i32, %c0_i32_0 : i32, i32
  }
  func.func @transform_10(%arg0: i32) -> (i32, i32) {
    %c0_i32 = arith.constant 0 : i32
    %c0_i32_0 = arith.constant 0 : i32
    %c0_i32_1 = arith.constant 0 : i32
    return %c0_i32, %c0_i32_0 : i32, i32
  }
  func.func @transform_11(%arg0: i32) -> (i32, i32) {
    %c0_i32 = arith.constant 0 : i32
    %c0_i32_0 = arith.constant 0 : i32
    %c0_i32_1 = arith.constant 0 : i32
    return %c0_i32, %c0_i32_0 : i32, i32
  }
  func.func @transform_12(%arg0: i32) -> (i32, i32) {
    %c0_i32 = arith.constant 0 : i32
    %c0_i32_0 = arith.constant 0 : i32
    %c0_i32_1 = arith.constant 0 : i32
    return %c0_i32, %c0_i32_0 : i32, i32
  }
  func.func @transform_13(%arg0: i32) -> (i32, i32) {
    %c0_i32 = arith.constant 0 : i32
    %c0_i32_0 = arith.constant 0 : i32
    %c0_i32_1 = arith.constant 0 : i32
    return %c0_i32, %c0_i32_0 : i32, i32
  }
  func.func @transform_14(%arg0: i32) -> (i32, i32, i32) {
    %c0_i32 = arith.constant 0 : i32
    %c0_i32_0 = arith.constant 0 : i32
    %c0_i32_1 = arith.constant 0 : i32
    %c0_i32_2 = arith.constant 0 : i32
    return %c0_i32, %c0_i32_0, %c0_i32_1 : i32, i32, i32
  }
  func.func @transform_15(%arg0: i32) -> (i32, i32) {
    %c0_i32 = arith.constant 0 : i32
    %c0_i32_0 = arith.constant 0 : i32
    %c0_i32_1 = arith.constant 0 : i32
    return %c0_i32, %c0_i32_0 : i32, i32
  }
  func.func @transform_16(%arg0: i32) -> (i32, i32) {
    %c0_i32 = arith.constant 0 : i32
    %c0_i32_0 = arith.constant 0 : i32
    %c0_i32_1 = arith.constant 0 : i32
    return %c0_i32, %c0_i32_0 : i32, i32
  }
  func.func @transform_17(%arg0: i32) -> (i32, i32) {
    %c0_i32 = arith.constant 0 : i32
    %c0_i32_0 = arith.constant 0 : i32
    %c0_i32_1 = arith.constant 0 : i32
    return %c0_i32, %c0_i32_0 : i32, i32
  }
  func.func @transform_18(%arg0: i32) -> (i32, i32, i32) {
    %c0_i32 = arith.constant 0 : i32
    %c0_i32_0 = arith.constant 0 : i32
    %c0_i32_1 = arith.constant 0 : i32
    return %arg0, %c0_i32, %c0_i32_0 : i32, i32, i32
  }
}

</mosaic_0001>

<llo_original>
// kernel: _lambda_.1
$region0: #{_lambda_.1}
  #allocation0 [shape = 'u32[]', space=smem, size = 0x4, offset = 0x4, fixed_abs, tag = 'smem constant byte address 0x4 - core index']
  #allocation1 [shape = 'u32[144,128]{1,0:T(1,128)}', space=vmem, size = 0x12000, scoped, tag = 'internal scratch']
  #allocation2 [shape = 'bf16[288,12]{1,0:T(16,128)(2,1)}', space=vmem, size = 0x12000, scoped, tag = 'scratch operand']
  #allocation3 [shape = 'bf16[288,24]{1,0:T(16,128)(2,1)}', space=vmem, size = 0x12000, scoped, tag = 'scratch operand']
  %s0 = inlined_call_operand.vmem [shape: f32[2,256,4], index: 0, kind: input, shape index: {}]
  %s1 = inlined_call_operand.vmem [shape: f32[2,1,16], index: 1, kind: input, shape index: {}]
  %s2 = inlined_call_operand.vmem [shape: f32[4,2], index: 2, kind: input, shape index: {}]
  %s3 = inlined_call_operand.vmem [shape: f32[2,4], index: 3, kind: input, shape index: {}]
  %s4 = inlined_call_operand.vmem [shape: f32[1,4], index: 4, kind: input, shape index: {}]
  %s5 = inlined_call_operand.vmem [shape: f32[1,4], index: 5, kind: input, shape index: {}]
  %s6 = inlined_call_operand.vmem [shape: bf16[3,12,8], index: 6, kind: input, shape index: {}]
  %s7 = inlined_call_operand.vmem [shape: f32[1,8], index: 7, kind: input, shape index: {}]
  %s8 = inlined_call_operand.vmem [shape: bf16[16,8], index: 8, kind: input, shape index: {}]
  %s9 = inlined_call_operand.vmem [shape: f32[1,8], index: 9, kind: input, shape index: {}]
  %s10 = inlined_call_operand.vmem [shape: f32[8,2], index: 10, kind: input, shape index: {}]
  %s11 = inlined_call_operand.vmem [shape: f32[2,8], index: 11, kind: input, shape index: {}]
  %s12 = inlined_call_operand.vmem [shape: f32[1,8], index: 12, kind: input, shape index: {}]
  %s13 = inlined_call_operand.vmem [shape: f32[1,8], index: 13, kind: input, shape index: {}]
  %s14 = inlined_call_operand.vmem [shape: bf16[3,24,8], index: 14, kind: input, shape index: {}]
  %s15 = inlined_call_operand.vmem [shape: f32[1,8], index: 15, kind: input, shape index: {}]
  %s16 = inlined_call_operand.vmem [shape: bf16[4,8], index: 16, kind: input, shape index: {}]
  %s17 = inlined_call_operand.vmem [shape: f32[1,8], index: 17, kind: input, shape index: {}]
  %s18 = inlined_call_operand.vmem [shape: f32[2,256,8], index: 18, kind: output, shape index: {}]
  %s19 = sld [smem:[#allocation0]]
  $region105: #{_lambda_.1} parent=0
    _
  %s21 = ssub.s32 1, %s19
  %s22 = scalar_select 0, %s21, %s19
  loop: start=0, step=1, limit=4
  $region2: #{_lambda_.1} parent=0 // loop_pre_header
    _
  $region3: #{_lambda_.1} parent=0 // loop_header
    %s24 = sphi 0, %s28
    %p25 = scmp.ge.s32.totalorder %s24, 4
    %s34 = sphi 0, %s36
    %s37 = sphi 0, %s34
    %s38 = sphi 0, %s37
    %s54 = sphi 0, %s38
    %s60 = sphi 0, %s62
    %s63 = sphi 0, %s60
    %s64 = sphi 0, %s63
    %s80 = sphi 0, %s64
    %s84 = sphi 0, %s84
    %s86 = sphi 0, %s84
    %s87 = sphi 0, %s86
    %s101 = sphi 0, %s87
    %s105 = sphi 0, %s105
    %s107 = sphi 0, %s105
    %s108 = sphi 0, %s107
    %s122 = sphi 0, %s108
    %s126 = sphi 0, %s126
    %s128 = sphi 0, %s126
    %s129 = sphi 0, %s128
    %s143 = sphi 0, %s129
    %s147 = sphi 0, %s147
    %s149 = sphi 0, %s147
    %s150 = sphi 0, %s149
    %s164 = sphi 0, %s150
    %s168 = sphi 0, %s168
    %s170 = sphi 0, %s168
    %s171 = sphi 0, %s170
    %s185 = sphi 0, %s171
    %s189 = sphi 0, %s189
    %s191 = sphi 0, %s189
    %s192 = sphi 0, %s191
    %s206 = sphi 0, %s192
    %s210 = sphi 0, %s210
    %s212 = sphi 0, %s210
    %s213 = sphi 0, %s212
    %s227 = sphi 0, %s213
    %s231 = sphi 0, %s231
    %s233 = sphi 0, %s231
    %s234 = sphi 0, %s233
    %s248 = sphi 0, %s234
    %s252 = sphi 0, %s252
    %s254 = sphi 0, %s252
    %s255 = sphi 0, %s254
    %s269 = sphi 0, %s255
    %s273 = sphi 0, %s273
    %s275 = sphi 0, %s273
    %s276 = sphi 0, %s275
    %s290 = sphi 0, %s276
    %s294 = sphi 0, %s294
    %s296 = sphi 0, %s294
    %s297 = sphi 0, %s296
    %s311 = sphi 0, %s297
    %s315 = sphi 0, %s315
    %s317 = sphi 0, %s315
    %s318 = sphi 0, %s317
    %s332 = sphi 0, %s318
    %s336 = sphi 0, %s336
    %s338 = sphi 0, %s336
    %s339 = sphi 0, %s338
    %s353 = sphi 0, %s339
    %s357 = sphi 0, %s357
    %s359 = sphi 0, %s357
    %s360 = sphi 0, %s359
    %s374 = sphi 0, %s360
    %s378 = sphi 0, %s378
    %s380 = sphi 0, %s378
    %s381 = sphi 0, %s380
    %s395 = sphi 0, %s381
    %s399 = sphi 0, %s399
    %s401 = sphi 0, %s399
    %s402 = sphi 0, %s401
    %s416 = sphi 0, %s402
    %s422 = sphi 0, %s424
    %s425 = sphi 0, %s422
    %s426 = sphi 0, %s425
    %s442 = sphi 0, %s426
  $region4: #{_lambda_.1} parent=0 // loop_header_branch
    %27 = sbr.rel (%p25) target = $region8
  $region5: #{_lambda_.1} parent=0 // loop_body
    %s29 = ssub.s32 %s24, 1
    %s30 = ssub.s32 %s24, 2
    %s31 = sadd.s32 %s24, 1
    %s32 = ssub.s32 %s24, %s31
    %p33 = scmp.eq.s32.totalorder %s32, 0
    %s35 = sadd.s32 %s34, 1
    %s36 = scalar_select %p33, %s34, %s35
    %p39 = pneg %p33
    %p40 = scmp.eq.s32.totalorder %s24, 1
    %p41 = por %p39, %p40
    %p42 = scmp.ne.s32.totalorder %s34, %s37
    %p43 = scmp.eq.s32.totalorder %s24, 0
    %p44 = por %p42, %p43
    %p45 = scmp.ne.s32.totalorder %s34, %s37
    %p46 = scmp.eq.s32.totalorder %s29, 1
    %p47 = por %p45, %p46
    %p48 = scmp.ne.s32.totalorder %s37, %s38
    %p49 = scmp.eq.s32.totalorder %s29, 0
    %p50 = por %p48, %p49
    %p51 = scmp.ne.s32.totalorder %s37, %s38
    %p52 = scmp.eq.s32.totalorder %s30, 1
    %p53 = por %p51, %p52
    %p55 = scmp.ne.s32.totalorder %s38, %s54
    %p56 = scmp.eq.s32.totalorder %s30, 0
    %p57 = por %p55, %p56
    %s58 = ssub.s32 %s24, %s31
    %p59 = scmp.eq.s32.totalorder %s58, 0
    %s61 = sadd.s32 %s60, 1
    %s62 = scalar_select %p59, %s60, %s61
    %p65 = pneg %p59
    %p66 = scmp.eq.s32.totalorder %s24, 1
    %p67 = por %p65, %p66
    %p68 = scmp.ne.s32.totalorder %s60, %s63
    %p69 = scmp.eq.s32.totalorder %s24, 0
    %p70 = por %p68, %p69
    %p71 = scmp.ne.s32.totalorder %s60, %s63
    %p72 = scmp.eq.s32.totalorder %s29, 1
    %p73 = por %p71, %p72
    %p74 = scmp.ne.s32.totalorder %s63, %s64
    %p75 = scmp.eq.s32.totalorder %s29, 0
    %p76 = por %p74, %p75
    %p77 = scmp.ne.s32.totalorder %s63, %s64
    %p78 = scmp.eq.s32.totalorder %s30, 1
    %p79 = por %p77, %p78
    %p81 = scmp.ne.s32.totalorder %s64, %s80
    %p82 = scmp.eq.s32.totalorder %s30, 0
    %p83 = por %p81, %p82
    %s85 = sadd.s32 %s84, 1
    %p88 = scmp.eq.s32.totalorder %s24, 1
    %p89 = scmp.ne.s32.totalorder %s84, %s86
    %p90 = scmp.eq.s32.totalorder %s24, 0
    %p91 = por %p89, %p90
    %p92 = scmp.ne.s32.totalorder %s84, %s86
    %p93 = scmp.eq.s32.totalorder %s29, 1
    %p94 = por %p92, %p93
    %p95 = scmp.ne.s32.totalorder %s86, %s87
    %p96 = scmp.eq.s32.totalorder %s29, 0
    %p97 = por %p95, %p96
    %p98 = scmp.ne.s32.totalorder %s86, %s87
    %p99 = scmp.eq.s32.totalorder %s30, 1
    %p100 = por %p98, %p99
    %p102 = scmp.ne.s32.totalorder %s87, %s101
    %p103 = scmp.eq.s32.totalorder %s30, 0
    %p104 = por %p102, %p103
    %s106 = sadd.s32 %s105, 1
    %p109 = scmp.eq.s32.totalorder %s24, 1
    %p110 = scmp.ne.s32.totalorder %s105, %s107
    %p111 = scmp.eq.s32.totalorder %s24, 0
    %p112 = por %p110, %p111
    %p113 = scmp.ne.s32.totalorder %s105, %s107
    %p114 = scmp.eq.s32.totalorder %s29, 1
    %p115 = por %p113, %p114
    %p116 = scmp.ne.s32.totalorder %s107, %s108
    %p117 = scmp.eq.s32.totalorder %s29, 0
    %p118 = por %p116, %p117
    %p119 = scmp.ne.s32.totalorder %s107, %s108
    %p120 = scmp.eq.s32.totalorder %s30, 1
    %p121 = por %p119, %p120
    %p123 = scmp.ne.s32.totalorder %s108, %s122
    %p124 = scmp.eq.s32.totalorder %s30, 0
    %p125 = por %p123, %p124
    %s127 = sadd.s32 %s126, 1
    %p130 = scmp.eq.s32.totalorder %s24, 1
    %p131 = scmp.ne.s32.totalorder %s126, %s128
    %p132 = scmp.eq.s32.totalorder %s24, 0
    %p133 = por %p131, %p132
    %p134 = scmp.ne.s32.totalorder %s126, %s128
    %p135 = scmp.eq.s32.totalorder %s29, 1
    %p136 = por %p134, %p135
    %p137 = scmp.ne.s32.totalorder %s128, %s129
    %p138 = scmp.eq.s32.totalorder %s29, 0
    %p139 = por %p137, %p138
    %p140 = scmp.ne.s32.totalorder %s128, %s129
    %p141 = scmp.eq.s32.totalorder %s30, 1
    %p142 = por %p140, %p141
    %p144 = scmp.ne.s32.totalorder %s129, %s143
    %p145 = scmp.eq.s32.totalorder %s30, 0
    %p146 = por %p144, %p145
    %s148 = sadd.s32 %s147, 1
    %p151 = scmp.eq.s32.totalorder %s24, 1
    %p152 = scmp.ne.s32.totalorder %s147, %s149
    %p153 = scmp.eq.s32.totalorder %s24, 0
    %p154 = por %p152, %p153
    %p155 = scmp.ne.s32.totalorder %s147, %s149
    %p156 = scmp.eq.s32.totalorder %s29, 1
    %p157 = por %p155, %p156
    %p158 = scmp.ne.s32.totalorder %s149, %s150
    %p159 = scmp.eq.s32.totalorder %s29, 0
    %p160 = por %p158, %p159
    %p161 = scmp.ne.s32.totalorder %s149, %s150
    %p162 = scmp.eq.s32.totalorder %s30, 1
    %p163 = por %p161, %p162
    %p165 = scmp.ne.s32.totalorder %s150, %s164
    %p166 = scmp.eq.s32.totalorder %s30, 0
    %p167 = por %p165, %p166
    %s169 = sadd.s32 %s168, 1
    %p172 = scmp.eq.s32.totalorder %s24, 1
    %p173 = scmp.ne.s32.totalorder %s168, %s170
    %p174 = scmp.eq.s32.totalorder %s24, 0
    %p175 = por %p173, %p174
    %p176 = scmp.ne.s32.totalorder %s168, %s170
    %p177 = scmp.eq.s32.totalorder %s29, 1
    %p178 = por %p176, %p177
    %p179 = scmp.ne.s32.totalorder %s170, %s171
    %p180 = scmp.eq.s32.totalorder %s29, 0
    %p181 = por %p179, %p180
    %p182 = scmp.ne.s32.totalorder %s170, %s171
    %p183 = scmp.eq.s32.totalorder %s30, 1
    %p184 = por %p182, %p183
    %p186 = scmp.ne.s32.totalorder %s171, %s185
    %p187 = scmp.eq.s32.totalorder %s30, 0
    %p188 = por %p186, %p187
    %s190 = sadd.s32 %s189, 1
    %p193 = scmp.eq.s32.totalorder %s24, 1
    %p194 = scmp.ne.s32.totalorder %s189, %s191
    %p195 = scmp.eq.s32.totalorder %s24, 0
    %p196 = por %p194, %p195
    %p197 = scmp.ne.s32.totalorder %s189, %s191
    %p198 = scmp.eq.s32.totalorder %s29, 1
    %p199 = por %p197, %p198
    %p200 = scmp.ne.s32.totalorder %s191, %s192
    %p201 = scmp.eq.s32.totalorder %s29, 0
    %p202 = por %p200, %p201
    %p203 = scmp.ne.s32.totalorder %s191, %s192
    %p204 = scmp.eq.s32.totalorder %s30, 1
    %p205 = por %p203, %p204
    %p207 = scmp.ne.s32.totalorder %s192, %s206
    %p208 = scmp.eq.s32.totalorder %s30, 0
    %p209 = por %p207, %p208
    %s211 = sadd.s32 %s210, 1
    %p214 = scmp.eq.s32.totalorder %s24, 1
    %p215 = scmp.ne.s32.totalorder %s210, %s212
    %p216 = scmp.eq.s32.totalorder %s24, 0
    %p217 = por %p215, %p216
    %p218 = scmp.ne.s32.totalorder %s210, %s212
    %p219 = scmp.eq.s32.totalorder %s29, 1
    %p220 = por %p218, %p219
    %p221 = scmp.ne.s32.totalorder %s212, %s213
    %p222 = scmp.eq.s32.totalorder %s29, 0
    %p223 = por %p221, %p222
    %p224 = scmp.ne.s32.totalorder %s212, %s213
    %p225 = scmp.eq.s32.totalorder %s30, 1
    %p226 = por %p224, %p225
    %p228 = scmp.ne.s32.totalorder %s213, %s227
    %p229 = scmp.eq.s32.totalorder %s30, 0
    %p230 = por %p228, %p229
    %s232 = sadd.s32 %s231, 1
    %p235 = scmp.eq.s32.totalorder %s24, 1
    %p236 = scmp.ne.s32.totalorder %s231, %s233
    %p237 = scmp.eq.s32.totalorder %s24, 0
    %p238 = por %p236, %p237
    %p239 = scmp.ne.s32.totalorder %s231, %s233
    %p240 = scmp.eq.s32.totalorder %s29, 1
    %p241 = por %p239, %p240
    %p242 = scmp.ne.s32.totalorder %s233, %s234
    %p243 = scmp.eq.s32.totalorder %s29, 0
    %p244 = por %p242, %p243
    %p245 = scmp.ne.s32.totalorder %s233, %s234
    %p246 = scmp.eq.s32.totalorder %s30, 1
    %p247 = por %p245, %p246
    %p249 = scmp.ne.s32.totalorder %s234, %s248
    %p250 = scmp.eq.s32.totalorder %s30, 0
    %p251 = por %p249, %p250
    %s253 = sadd.s32 %s252, 1
    %p256 = scmp.eq.s32.totalorder %s24, 1
    %p257 = scmp.ne.s32.totalorder %s252, %s254
    %p258 = scmp.eq.s32.totalorder %s24, 0
    %p259 = por %p257, %p258
    %p260 = scmp.ne.s32.totalorder %s252, %s254
    %p261 = scmp.eq.s32.totalorder %s29, 1
    %p262 = por %p260, %p261
    %p263 = scmp.ne.s32.totalorder %s254, %s255
    %p264 = scmp.eq.s32.totalorder %s29, 0
    %p265 = por %p263, %p264
    %p266 = scmp.ne.s32.totalorder %s254, %s255
    %p267 = scmp.eq.s32.totalorder %s30, 1
    %p268 = por %p266, %p267
    %p270 = scmp.ne.s32.totalorder %s255, %s269
    %p271 = scmp.eq.s32.totalorder %s30, 0
    %p272 = por %p270, %p271
    %s274 = sadd.s32 %s273, 1
    %p277 = scmp.eq.s32.totalorder %s24, 1
    %p278 = scmp.ne.s32.totalorder %s273, %s275
    %p279 = scmp.eq.s32.totalorder %s24, 0
    %p280 = por %p278, %p279
    %p281 = scmp.ne.s32.totalorder %s273, %s275
    %p282 = scmp.eq.s32.totalorder %s29, 1
    %p283 = por %p281, %p282
    %p284 = scmp.ne.s32.totalorder %s275, %s276
    %p285 = scmp.eq.s32.totalorder %s29, 0
    %p286 = por %p284, %p285
    %p287 = scmp.ne.s32.totalorder %s275, %s276
    %p288 = scmp.eq.s32.totalorder %s30, 1
    %p289 = por %p287, %p288
    %p291 = scmp.ne.s32.totalorder %s276, %s290
    %p292 = scmp.eq.s32.totalorder %s30, 0
    %p293 = por %p291, %p292
    %s295 = sadd.s32 %s294, 1
    %p298 = scmp.eq.s32.totalorder %s24, 1
    %p299 = scmp.ne.s32.totalorder %s294, %s296
    %p300 = scmp.eq.s32.totalorder %s24, 0
    %p301 = por %p299, %p300
    %p302 = scmp.ne.s32.totalorder %s294, %s296
    %p303 = scmp.eq.s32.totalorder %s29, 1
    %p304 = por %p302, %p303
    %p305 = scmp.ne.s32.totalorder %s296, %s297
    %p306 = scmp.eq.s32.totalorder %s29, 0
    %p307 = por %p305, %p306
    %p308 = scmp.ne.s32.totalorder %s296, %s297
    %p309 = scmp.eq.s32.totalorder %s30, 1
    %p310 = por %p308, %p309
    %p312 = scmp.ne.s32.totalorder %s297, %s311
    %p313 = scmp.eq.s32.totalorder %s30, 0
    %p314 = por %p312, %p313
    %s316 = sadd.s32 %s315, 1
    %p319 = scmp.eq.s32.totalorder %s24, 1
    %p320 = scmp.ne.s32.totalorder %s315, %s317
    %p321 = scmp.eq.s32.totalorder %s24, 0
    %p322 = por %p320, %p321
    %p323 = scmp.ne.s32.totalorder %s315, %s317
    %p324 = scmp.eq.s32.totalorder %s29, 1
    %p325 = por %p323, %p324
    %p326 = scmp.ne.s32.totalorder %s317, %s318
    %p327 = scmp.eq.s32.totalorder %s29, 0
    %p328 = por %p326, %p327
    %p329 = scmp.ne.s32.totalorder %s317, %s318
    %p330 = scmp.eq.s32.totalorder %s30, 1
    %p331 = por %p329, %p330
    %p333 = scmp.ne.s32.totalorder %s318, %s332
    %p334 = scmp.eq.s32.totalorder %s30, 0
    %p335 = por %p333, %p334
    %s337 = sadd.s32 %s336, 1
    %p340 = scmp.eq.s32.totalorder %s24, 1
    %p341 = scmp.ne.s32.totalorder %s336, %s338
    %p342 = scmp.eq.s32.totalorder %s24, 0
    %p343 = por %p341, %p342
    %p344 = scmp.ne.s32.totalorder %s336, %s338
    %p345 = scmp.eq.s32.totalorder %s29, 1
    %p346 = por %p344, %p345
    %p347 = scmp.ne.s32.totalorder %s338, %s339
    %p348 = scmp.eq.s32.totalorder %s29, 0
    %p349 = por %p347, %p348
    %p350 = scmp.ne.s32.totalorder %s338, %s339
    %p351 = scmp.eq.s32.totalorder %s30, 1
    %p352 = por %p350, %p351
    %p354 = scmp.ne.s32.totalorder %s339, %s353
    %p355 = scmp.eq.s32.totalorder %s30, 0
    %p356 = por %p354, %p355
    %s358 = sadd.s32 %s357, 1
    %p361 = scmp.eq.s32.totalorder %s24, 1
    %p362 = scmp.ne.s32.totalorder %s357, %s359
    %p363 = scmp.eq.s32.totalorder %s24, 0
    %p364 = por %p362, %p363
    %p365 = scmp.ne.s32.totalorder %s357, %s359
    %p366 = scmp.eq.s32.totalorder %s29, 1
    %p367 = por %p365, %p366
    %p368 = scmp.ne.s32.totalorder %s359, %s360
    %p369 = scmp.eq.s32.totalorder %s29, 0
    %p370 = por %p368, %p369
    %p371 = scmp.ne.s32.totalorder %s359, %s360
    %p372 = scmp.eq.s32.totalorder %s30, 1
    %p373 = por %p371, %p372
    %p375 = scmp.ne.s32.totalorder %s360, %s374
    %p376 = scmp.eq.s32.totalorder %s30, 0
    %p377 = por %p375, %p376
    %s379 = sadd.s32 %s378, 1
    %p382 = scmp.eq.s32.totalorder %s24, 1
    %p383 = scmp.ne.s32.totalorder %s378, %s380
    %p384 = scmp.eq.s32.totalorder %s24, 0
    %p385 = por %p383, %p384
    %p386 = scmp.ne.s32.totalorder %s378, %s380
    %p387 = scmp.eq.s32.totalorder %s29, 1
    %p388 = por %p386, %p387
    %p389 = scmp.ne.s32.totalorder %s380, %s381
    %p390 = scmp.eq.s32.totalorder %s29, 0
    %p391 = por %p389, %p390
    %p392 = scmp.ne.s32.totalorder %s380, %s381
    %p393 = scmp.eq.s32.totalorder %s30, 1
    %p394 = por %p392, %p393
    %p396 = scmp.ne.s32.totalorder %s381, %s395
    %p397 = scmp.eq.s32.totalorder %s30, 0
    %p398 = por %p396, %p397
    %s400 = sadd.s32 %s399, 1
    %p403 = scmp.eq.s32.totalorder %s24, 1
    %p404 = scmp.ne.s32.totalorder %s399, %s401
    %p405 = scmp.eq.s32.totalorder %s24, 0
    %p406 = por %p404, %p405
    %p407 = scmp.ne.s32.totalorder %s399, %s401
    %p408 = scmp.eq.s32.totalorder %s29, 1
    %p409 = por %p407, %p408
    %p410 = scmp.ne.s32.totalorder %s401, %s402
    %p411 = scmp.eq.s32.totalorder %s29, 0
    %p412 = por %p410, %p411
    %p413 = scmp.ne.s32.totalorder %s401, %s402
    %p414 = scmp.eq.s32.totalorder %s30, 1
    %p415 = por %p413, %p414
    %p417 = scmp.ne.s32.totalorder %s402, %s416
    %p418 = scmp.eq.s32.totalorder %s30, 0
    %p419 = por %p417, %p418
    %s420 = ssub.s32 %s24, %s31
    %p421 = scmp.eq.s32.totalorder %s420, 0
    %s423 = sadd.s32 %s422, 1
    %s424 = scalar_select %p421, %s422, %s423
    %p427 = pneg %p421
    %p428 = scmp.eq.s32.totalorder %s24, 1
    %p429 = por %p427, %p428
    %p430 = scmp.ne.s32.totalorder %s422, %s425
    %p431 = scmp.eq.s32.totalorder %s24, 0
    %p432 = por %p430, %p431
    %p433 = scmp.ne.s32.totalorder %s422, %s425
    %p434 = scmp.eq.s32.totalorder %s29, 1
    %p435 = por %p433, %p434
    %p436 = scmp.ne.s32.totalorder %s425, %s426
    %p437 = scmp.eq.s32.totalorder %s29, 0
    %p438 = por %p436, %p437
    %p439 = scmp.ne.s32.totalorder %s425, %s426
    %p440 = scmp.eq.s32.totalorder %s30, 1
    %p441 = por %p439, %p440
    %p443 = scmp.ne.s32.totalorder %s426, %s442
    %p444 = scmp.eq.s32.totalorder %s30, 0
    %p445 = por %p443, %p444
    %p446 = scmp.le.s32.totalorder 1, %s24
    %p447 = scmp.lt.s32.totalorder %s24, 3
    %p448 = pnand %p446, %p447
    %p449 = pneg %p448
    // Predicated region
    $region9: #{_lambda_.1} parent=5 // pred_check
      _
    $region10: #{_lambda_.1} parent=5 // pred_check_branch
      %451 = sbr.rel (%p448) target = $region12
    $region11: #{_lambda_.1} parent=5 // pred_region
      %s452 = ssub.s32 %s24, 1
      // Predicated region
      $region13: #{_lambda_.1} parent=11 // pred_check
        %p453 = pneg %p97
      $region14: #{_lambda_.1} parent=11 // pred_check_branch
        %455 = sbr.rel (%p453) target = $region16
      $region15: #{_lambda_.1} parent=11 // pred_region
        _
      $region16: #{_lambda_.1} parent=11 // pred_fallthru
        _
      // Predicated region
      $region17: #{_lambda_.1} parent=11 // pred_check
        %p456 = pneg %p118
      $region18: #{_lambda_.1} parent=11 // pred_check_branch
        %458 = sbr.rel (%p456) target = $region20
      $region19: #{_lambda_.1} parent=11 // pred_region
        _
      $region20: #{_lambda_.1} parent=11 // pred_fallthru
        _
      // Predicated region
      $region21: #{_lambda_.1} parent=11 // pred_check
        %p459 = pneg %p139
      $region22: #{_lambda_.1} parent=11 // pred_check_branch
        %461 = sbr.rel (%p459) target = $region24
      $region23: #{_lambda_.1} parent=11 // pred_region
        _
      $region24: #{_lambda_.1} parent=11 // pred_fallthru
        _
      // Predicated region
      $region25: #{_lambda_.1} parent=11 // pred_check
        %p462 = pneg %p160
      $region26: #{_lambda_.1} parent=11 // pred_check_branch
        %464 = sbr.rel (%p462) target = $region28
      $region27: #{_lambda_.1} parent=11 // pred_region
        _
      $region28: #{_lambda_.1} parent=11 // pred_fallthru
        _
      // Predicated region
      $region29: #{_lambda_.1} parent=11 // pred_check
        %p465 = pneg %p181
      $region30: #{_lambda_.1} parent=11 // pred_check_branch
        %467 = sbr.rel (%p465) target = $region32
      $region31: #{_lambda_.1} parent=11 // pred_region
        _
      $region32: #{_lambda_.1} parent=11 // pred_fallthru
        _
      // Predicated region
      $region33: #{_lambda_.1} parent=11 // pred_check
        %p468 = pneg %p202
      $region34: #{_lambda_.1} parent=11 // pred_check_branch
        %470 = sbr.rel (%p468) target = $region36
      $region35: #{_lambda_.1} parent=11 // pred_region
        _
      $region36: #{_lambda_.1} parent=11 // pred_fallthru
        _
      // Predicated region
      $region37: #{_lambda_.1} parent=11 // pred_check
        %p471 = pneg %p223
      $region38: #{_lambda_.1} parent=11 // pred_check_branch
        %473 = sbr.rel (%p471) target = $region40
      $region39: #{_lambda_.1} parent=11 // pred_region
        _
      $region40: #{_lambda_.1} parent=11 // pred_fallthru
        _
      // Predicated region
      $region41: #{_lambda_.1} parent=11 // pred_check
        %p474 = pneg %p244
      $region42: #{_lambda_.1} parent=11 // pred_check_branch
        %476 = sbr.rel (%p474) target = $region44
      $region43: #{_lambda_.1} parent=11 // pred_region
        _
      $region44: #{_lambda_.1} parent=11 // pred_fallthru
        _
      // Predicated region
      $region45: #{_lambda_.1} parent=11 // pred_check
        %p477 = pneg %p265
      $region46: #{_lambda_.1} parent=11 // pred_check_branch
        %479 = sbr.rel (%p477) target = $region48
      $region47: #{_lambda_.1} parent=11 // pred_region
        _
      $region48: #{_lambda_.1} parent=11 // pred_fallthru
        _
      // Predicated region
      $region49: #{_lambda_.1} parent=11 // pred_check
        %p480 = pneg %p286
      $region50: #{_lambda_.1} parent=11 // pred_check_branch
        %482 = sbr.rel (%p480) target = $region52
      $region51: #{_lambda_.1} parent=11 // pred_region
        _
      $region52: #{_lambda_.1} parent=11 // pred_fallthru
        _
      // Predicated region
      $region53: #{_lambda_.1} parent=11 // pred_check
        %p483 = pneg %p307
      $region54: #{_lambda_.1} parent=11 // pred_check_branch
        %485 = sbr.rel (%p483) target = $region56
      $region55: #{_lambda_.1} parent=11 // pred_region
        _
      $region56: #{_lambda_.1} parent=11 // pred_fallthru
        _
      // Predicated region
      $region57: #{_lambda_.1} parent=11 // pred_check
        %p486 = pneg %p328
      $region58: #{_lambda_.1} parent=11 // pred_check_branch
        %488 = sbr.rel (%p486) target = $region60
      $region59: #{_lambda_.1} parent=11 // pred_region
        _
      $region60: #{_lambda_.1} parent=11 // pred_fallthru
        _
      // Predicated region
      $region61: #{_lambda_.1} parent=11 // pred_check
        %p489 = pneg %p349
      $region62: #{_lambda_.1} parent=11 // pred_check_branch
        %491 = sbr.rel (%p489) target = $region64
      $region63: #{_lambda_.1} parent=11 // pred_region
        _
      $region64: #{_lambda_.1} parent=11 // pred_fallthru
        _
      // Predicated region
      $region65: #{_lambda_.1} parent=11 // pred_check
        %p492 = pneg %p370
      $region66: #{_lambda_.1} parent=11 // pred_check_branch
        %494 = sbr.rel (%p492) target = $region68
      $region67: #{_lambda_.1} parent=11 // pred_region
        _
      $region68: #{_lambda_.1} parent=11 // pred_fallthru
        _
      // Predicated region
      $region69: #{_lambda_.1} parent=11 // pred_check
        %p495 = pneg %p391
      $region70: #{_lambda_.1} parent=11 // pred_check_branch
        %497 = sbr.rel (%p495) target = $region72
      $region71: #{_lambda_.1} parent=11 // pred_region
        _
      $region72: #{_lambda_.1} parent=11 // pred_fallthru
        _
      // Predicated region
      $region73: #{_lambda_.1} parent=11 // pred_check
        %p498 = pneg %p412
      $region74: #{_lambda_.1} parent=11 // pred_check_branch
        %500 = sbr.rel (%p498) target = $region76
      $region75: #{_lambda_.1} parent=11 // pred_region
        _
      $region76: #{_lambda_.1} parent=11 // pred_fallthru
        _
    $region12: #{_lambda_.1} parent=5 // pred_fallthru
      _
    %p501 = scmp.lt.s32.totalorder %s24, 2
    // Predicated region
    $region77: #{_lambda_.1} parent=5 // pred_check
      %p502 = pneg %p501
    $region78: #{_lambda_.1} parent=5 // pred_check_branch
      %504 = sbr.rel (%p502) target = $region80
    $region79: #{_lambda_.1} parent=5 // pred_region
      // Predicated region
      $region81: #{_lambda_.1} parent=79 // pred_check
        %p505 = pneg %p44
      $region82: #{_lambda_.1} parent=79 // pred_check_branch
        %507 = sbr.rel (%p505) target = $region84
      $region83: #{_lambda_.1} parent=79 // pred_region
        %p508 = scmp.lt.s32.totalorder %s24, 1
        %s509 = scalar_select %p508, %s24, 1
        %s510 = smul.addr %s509, 32
        %s511 = smul.addr %s510, 8
        %s512 = scalar_lea.vmem %s0, %s511
      $region84: #{_lambda_.1} parent=79 // pred_fallthru
        _
      // Predicated region
      $region85: #{_lambda_.1} parent=79 // pred_check
        %p513 = pneg %p70
      $region86: #{_lambda_.1} parent=79 // pred_check_branch
        %515 = sbr.rel (%p513) target = $region88
      $region87: #{_lambda_.1} parent=79 // pred_region
        %p516 = scmp.lt.s32.totalorder %s24, 1
        %s517 = scalar_select %p516, %s24, 1
        %s518 = scalar_lea.vmem %s1, %s517
      $region88: #{_lambda_.1} parent=79 // pred_fallthru
        _
    $region80: #{_lambda_.1} parent=5 // pred_fallthru
      _
    %p519 = scmp.le.s32.totalorder 1, %s24
    %p520 = scmp.lt.s32.totalorder %s24, 3
    %p521 = pnand %p519, %p520
    %p522 = pneg %p521
    // Predicated region
    $region89: #{_lambda_.1} parent=5 // pred_check
      _
    $region90: #{_lambda_.1} parent=5 // pred_check_branch
      %524 = sbr.rel (%p521) target = $region92
    $region91: #{_lambda_.1} parent=5 // pred_region
      %s525 = ssub.s32 %s24, 1
      %p526 = scmp.lt.s32.totalorder %s29, 1
      %s527 = scalar_select %p526, %s29, 1
      %s528 = smul.addr %s527, 32
      %s529 = smul.addr %s528, 8
      %s530 = scalar_lea.vmem %s0, %s529
      %p531 = pneg %p50
      %p532 = pneg %p47
      %p533 = scmp.lt.s32.totalorder %s29, 1
      %s534 = scalar_select %p533, %s29, 1
      %s535 = scalar_lea.vmem %s1, %s534
      %p536 = pneg %p76
      %p537 = pneg %p73
      %p538 = pneg %p97
      %p539 = pneg %p94
      %p540 = pneg %p118
      %p541 = pneg %p115
      %p542 = pneg %p139
      %p543 = pneg %p136
      %p544 = pneg %p160
      %p545 = pneg %p157
      %p546 = pneg %p181
      %p547 = pneg %p178
      %p548 = pneg %p202
      %p549 = pneg %p199
      %p550 = pneg %p223
      %p551 = pneg %p220
      %p552 = pneg %p244
      %p553 = pneg %p241
      %p554 = pneg %p265
      %p555 = pneg %p262
      %p556 = pneg %p286
      %p557 = pneg %p283
      %p558 = pneg %p307
      %p559 = pneg %p304
      %p560 = pneg %p328
      %p561 = pneg %p325
      %p562 = pneg %p349
      %p563 = pneg %p346
      %p564 = pneg %p370
      %p565 = pneg %p367
      %p566 = pneg %p391
      %p567 = pneg %p388
      %p568 = pneg %p412
      %p569 = pneg %p409
      %p570 = pneg %p438
      %p571 = pneg %p435
      %p572 = scmp.lt.s32.totalorder %s29, 1
      %s573 = scalar_select %p572, %s29, 1
      %s574 = smul.addr %s573, 32
      %s575 = smul.addr %s574, 8
      %s576 = scalar_lea.vmem %s18, %s575
      %p577 = scmp.lt.s32.totalorder %s29, 1
      %s578 = scalar_select %p577, %s29, 1
      %s579 = smul.addr %s578, 32
      %s580 = smul.addr %s579, 8
      %s581 = scalar_lea.vmem %s0, %s580
      %p582 = scmp.lt.s32.totalorder %s29, 1
      %s583 = scalar_select %p582, %s29, 1
      %s584 = scalar_lea.vmem %s1, %s583
      %p585 = scmp.lt.s32.totalorder %s29, 1
      %s586 = scalar_select %p585, %s29, 1
      %s587 = smul.addr %s586, 32
      %s588 = smul.addr %s587, 8
      %s589 = scalar_lea.vmem %s18, %s588
      %v591 = vld [vmem:[%s581] sm:$0xff]
      %v592 = vld [vmem:[%s581 + $0x8] sm:$0xff]
      %v593 = vld [vmem:[%s581 + $0x10] sm:$0xff]
      %v594 = vld [vmem:[%s581 + $0x18] sm:$0xff]
      %v595 = vld [vmem:[%s581 + $0x20] sm:$0xff]
      %v596 = vld [vmem:[%s581 + $0x28] sm:$0xff]
      %v597 = vld [vmem:[%s581 + $0x30] sm:$0xff]
      %v598 = vld [vmem:[%s581 + $0x38] sm:$0xff]
      %v599 = vld [vmem:[%s581 + $0x40] sm:$0xff]
      %v600 = vld [vmem:[%s581 + $0x48] sm:$0xff]
      %v601 = vld [vmem:[%s581 + $0x50] sm:$0xff]
      %v602 = vld [vmem:[%s581 + $0x58] sm:$0xff]
      %v603 = vld [vmem:[%s581 + $0x60] sm:$0xff]
      %v604 = vld [vmem:[%s581 + $0x68] sm:$0xff]
      %v605 = vld [vmem:[%s581 + $0x70] sm:$0xff]
      %v606 = vld [vmem:[%s581 + $0x78] sm:$0xff]
      %v607 = vld [vmem:[%s581 + $0x80] sm:$0xff]
      %v608 = vld [vmem:[%s581 + $0x88] sm:$0xff]
      %v609 = vld [vmem:[%s581 + $0x90] sm:$0xff]
      %v610 = vld [vmem:[%s581 + $0x98] sm:$0xff]
      %v611 = vld [vmem:[%s581 + $0xa0] sm:$0xff]
      %v612 = vld [vmem:[%s581 + $0xa8] sm:$0xff]
      %v613 = vld [vmem:[%s581 + $0xb0] sm:$0xff]
      %v614 = vld [vmem:[%s581 + $0xb8] sm:$0xff]
      %v615 = vld [vmem:[%s581 + $0xc0] sm:$0xff]
      %v616 = vld [vmem:[%s581 + $0xc8] sm:$0xff]
      %v617 = vld [vmem:[%s581 + $0xd0] sm:$0xff]
      %v618 = vld [vmem:[%s581 + $0xd8] sm:$0xff]
      %v619 = vld [vmem:[%s581 + $0xe0] sm:$0xff]
      %v620 = vld [vmem:[%s581 + $0xe8] sm:$0xff]
      %v621 = vld [vmem:[%s581 + $0xf0] sm:$0xff]
      %v622 = vld [vmem:[%s581 + $0xf8] sm:$0xff]
      %v623 = vlaneseq
      %v624 = vshrl.u32 %v623, 7
      %v625 = vadd.s32 %v624, 8
      %v626 = vadd.s32 %v624, 16
      %v627 = vadd.s32 %v624, 24
      %v628 = vadd.s32 %v624, 32
      %v629 = vadd.s32 %v624, 40
      %v630 = vadd.s32 %v624, 48
      %v631 = vadd.s32 %v624, 56
      %v632 = vadd.s32 %v624, 64
      %v633 = vadd.s32 %v624, 72
      %v634 = vadd.s32 %v624, 80
      %v635 = vadd.s32 %v624, 88
      %v636 = vadd.s32 %v624, 96
      %v637 = vadd.s32 %v624, 104
      %v638 = vadd.s32 %v624, 112
      %v639 = vadd.s32 %v624, 120
      %v640 = vadd.s32 %v624, 128
      %v641 = vadd.s32 %v624, 136
      %v642 = vadd.s32 %v624, 144
      %v643 = vadd.s32 %v624, 152
      %v644 = vadd.s32 %v624, 160
      %v645 = vadd.s32 %v624, 168
      %v646 = vadd.s32 %v624, 176
      %v647 = vadd.s32 %v624, 184
      %v648 = vadd.s32 %v624, 192
      %v649 = vadd.s32 %v624, 200
      %v650 = vadd.s32 %v624, 208
      %v651 = vadd.s32 %v624, 216
      %v652 = vadd.s32 %v624, 224
      %v653 = vadd.s32 %v624, 232
      %v654 = vadd.s32 %v624, 240
      %v655 = vadd.s32 %v624, 248
      %v656 = vand.u32 %v624, 15
      %v657 = vand.u32 %v625, 15
      %v658 = vand.u32 %v626, 15
      %v659 = vand.u32 %v627, 15
      %v660 = vand.u32 %v628, 15
      %v661 = vand.u32 %v629, 15
      %v662 = vand.u32 %v630, 15
      %v663 = vand.u32 %v631, 15
      %v664 = vand.u32 %v632, 15
      %v665 = vand.u32 %v633, 15
      %v666 = vand.u32 %v634, 15
      %v667 = vand.u32 %v635, 15
      %v668 = vand.u32 %v636, 15
      %v669 = vand.u32 %v637, 15
      %v670 = vand.u32 %v638, 15
      %v671 = vand.u32 %v639, 15
      %v672 = vand.u32 %v640, 15
      %v673 = vand.u32 %v641, 15
      %v674 = vand.u32 %v642, 15
      %v675 = vand.u32 %v643, 15
      %v676 = vand.u32 %v644, 15
      %v677 = vand.u32 %v645, 15
      %v678 = vand.u32 %v646, 15
      %v679 = vand.u32 %v647, 15
      %v680 = vand.u32 %v648, 15
      %v681 = vand.u32 %v649, 15
      %v682 = vand.u32 %v650, 15
      %v683 = vand.u32 %v651, 15
      %v684 = vand.u32 %v652, 15
      %v685 = vand.u32 %v653, 15
      %v686 = vand.u32 %v654, 15
      %v687 = vand.u32 %v655, 15
      %vm688 = vcmp.gt.s32.totalorder %v656, 0
      %vm689 = vcmp.gt.s32.totalorder %v657, 0
      %vm690 = vcmp.gt.s32.totalorder %v658, 0
      %vm691 = vcmp.gt.s32.totalorder %v659, 0
      %vm692 = vcmp.gt.s32.totalorder %v660, 0
      %vm693 = vcmp.gt.s32.totalorder %v661, 0
      %vm694 = vcmp.gt.s32.totalorder %v662, 0
      %vm695 = vcmp.gt.s32.totalorder %v663, 0
      %vm696 = vcmp.gt.s32.totalorder %v664, 0
      %vm697 = vcmp.gt.s32.totalorder %v665, 0
      %vm698 = vcmp.gt.s32.totalorder %v666, 0
      %vm699 = vcmp.gt.s32.totalorder %v667, 0
      %vm700 = vcmp.gt.s32.totalorder %v668, 0
      %vm701 = vcmp.gt.s32.totalorder %v669, 0
      %vm702 = vcmp.gt.s32.totalorder %v670, 0
      %vm703 = vcmp.gt.s32.totalorder %v671, 0
      %vm704 = vcmp.gt.s32.totalorder %v672, 0
      %vm705 = vcmp.gt.s32.totalorder %v673, 0
      %vm706 = vcmp.gt.s32.totalorder %v674, 0
      %vm707 = vcmp.gt.s32.totalorder %v675, 0
      %vm708 = vcmp.gt.s32.totalorder %v676, 0
      %vm709 = vcmp.gt.s32.totalorder %v677, 0
      %vm710 = vcmp.gt.s32.totalorder %v678, 0
      %vm711 = vcmp.gt.s32.totalorder %v679, 0
      %vm712 = vcmp.gt.s32.totalorder %v680, 0
      %vm713 = vcmp.gt.s32.totalorder %v681, 0
      %vm714 = vcmp.gt.s32.totalorder %v682, 0
      %vm715 = vcmp.gt.s32.totalorder %v683, 0
      %vm716 = vcmp.gt.s32.totalorder %v684, 0
      %vm717 = vcmp.gt.s32.totalorder %v685, 0
      %vm718 = vcmp.gt.s32.totalorder %v686, 0
      %vm719 = vcmp.gt.s32.totalorder %v687, 0
      %v720 = vsel %vm688, 1, 0
      %v721 = vsel %vm689, 1, 0
      %v722 = vsel %vm690, 1, 0
      %v723 = vsel %vm691, 1, 0
      %v724 = vsel %vm692, 1, 0
      %v725 = vsel %vm693, 1, 0
      %v726 = vsel %vm694, 1, 0
      %v727 = vsel %vm695, 1, 0
      %v728 = vsel %vm696, 1, 0
      %v729 = vsel %vm697, 1, 0
      %v730 = vsel %vm698, 1, 0
      %v731 = vsel %vm699, 1, 0
      %v732 = vsel %vm700, 1, 0
      %v733 = vsel %vm701, 1, 0
      %v734 = vsel %vm702, 1, 0
      %v735 = vsel %vm703, 1, 0
      %v736 = vsel %vm704, 1, 0
      %v737 = vsel %vm705, 1, 0
      %v738 = vsel %vm706, 1, 0
      %v739 = vsel %vm707, 1, 0
      %v740 = vsel %vm708, 1, 0
      %v741 = vsel %vm709, 1, 0
      %v742 = vsel %vm710, 1, 0
      %v743 = vsel %vm711, 1, 0
      %v744 = vsel %vm712, 1, 0
      %v745 = vsel %vm713, 1, 0
      %v746 = vsel %vm714, 1, 0
      %v747 = vsel %vm715, 1, 0
      %v748 = vsel %vm716, 1, 0
      %v749 = vsel %vm717, 1, 0
      %v750 = vsel %vm718, 1, 0
      %v751 = vsel %vm719, 1, 0
      %v752 = vcvt.s32.f32 %v720
      %v753 = vcvt.s32.f32 %v721
      %v754 = vcvt.s32.f32 %v722
      %v755 = vcvt.s32.f32 %v723
      %v756 = vcvt.s32.f32 %v724
      %v757 = vcvt.s32.f32 %v725
      %v758 = vcvt.s32.f32 %v726
      %v759 = vcvt.s32.f32 %v727
      %v760 = vcvt.s32.f32 %v728
      %v761 = vcvt.s32.f32 %v729
      %v762 = vcvt.s32.f32 %v730
      %v763 = vcvt.s32.f32 %v731
      %v764 = vcvt.s32.f32 %v732
      %v765 = vcvt.s32.f32 %v733
      %v766 = vcvt.s32.f32 %v734
      %v767 = vcvt.s32.f32 %v735
      %v768 = vcvt.s32.f32 %v736
      %v769 = vcvt.s32.f32 %v737
      %v770 = vcvt.s32.f32 %v738
      %v771 = vcvt.s32.f32 %v739
      %v772 = vcvt.s32.f32 %v740
      %v773 = vcvt.s32.f32 %v741
      %v774 = vcvt.s32.f32 %v742
      %v775 = vcvt.s32.f32 %v743
      %v776 = vcvt.s32.f32 %v744
      %v777 = vcvt.s32.f32 %v745
      %v778 = vcvt.s32.f32 %v746
      %v779 = vcvt.s32.f32 %v747
      %v780 = vcvt.s32.f32 %v748
      %v781 = vcvt.s32.f32 %v749
      %v782 = vcvt.s32.f32 %v750
      %v783 = vcvt.s32.f32 %v751
      %vm784 = vcmp.lt.s32.totalorder %v656, 15
      %vm785 = vcmp.lt.s32.totalorder %v657, 15
      %vm786 = vcmp.lt.s32.totalorder %v658, 15
      %vm787 = vcmp.lt.s32.totalorder %v659, 15
      %vm788 = vcmp.lt.s32.totalorder %v660, 15
      %vm789 = vcmp.lt.s32.totalorder %v661, 15
      %vm790 = vcmp.lt.s32.totalorder %v662, 15
      %vm791 = vcmp.lt.s32.totalorder %v663, 15
      %vm792 = vcmp.lt.s32.totalorder %v664, 15
      %vm793 = vcmp.lt.s32.totalorder %v665, 15
      %vm794 = vcmp.lt.s32.totalorder %v666, 15
      %vm795 = vcmp.lt.s32.totalorder %v667, 15
      %vm796 = vcmp.lt.s32.totalorder %v668, 15
      %vm797 = vcmp.lt.s32.totalorder %v669, 15
      %vm798 = vcmp.lt.s32.totalorder %v670, 15
      %vm799 = vcmp.lt.s32.totalorder %v671, 15
      %vm800 = vcmp.lt.s32.totalorder %v672, 15
      %vm801 = vcmp.lt.s32.totalorder %v673, 15
      %vm802 = vcmp.lt.s32.totalorder %v674, 15
      %vm803 = vcmp.lt.s32.totalorder %v675, 15
      %vm804 = vcmp.lt.s32.totalorder %v676, 15
      %vm805 = vcmp.lt.s32.totalorder %v677, 15
      %vm806 = vcmp.lt.s32.totalorder %v678, 15
      %vm807 = vcmp.lt.s32.totalorder %v679, 15
      %vm808 = vcmp.lt.s32.totalorder %v680, 15
      %vm809 = vcmp.lt.s32.totalorder %v681, 15
      %vm810 = vcmp.lt.s32.totalorder %v682, 15
      %vm811 = vcmp.lt.s32.totalorder %v683, 15
      %vm812 = vcmp.lt.s32.totalorder %v684, 15
      %vm813 = vcmp.lt.s32.totalorder %v685, 15
      %vm814 = vcmp.lt.s32.totalorder %v686, 15
      %vm815 = vcmp.lt.s32.totalorder %v687, 15
      %v816 = vsel %vm784, 1, 0
      %v817 = vsel %vm785, 1, 0
      %v818 = vsel %vm786, 1, 0
      %v819 = vsel %vm787, 1, 0
      %v820 = vsel %vm788, 1, 0
      %v821 = vsel %vm789, 1, 0
      %v822 = vsel %vm790, 1, 0
      %v823 = vsel %vm791, 1, 0
      %v824 = vsel %vm792, 1, 0
      %v825 = vsel %vm793, 1, 0
      %v826 = vsel %vm794, 1, 0
      %v827 = vsel %vm795, 1, 0
      %v828 = vsel %vm796, 1, 0
      %v829 = vsel %vm797, 1, 0
      %v830 = vsel %vm798, 1, 0
      %v831 = vsel %vm799, 1, 0
      %v832 = vsel %vm800, 1, 0
      %v833 = vsel %vm801, 1, 0
      %v834 = vsel %vm802, 1, 0
      %v835 = vsel %vm803, 1, 0
      %v836 = vsel %vm804, 1, 0
      %v837 = vsel %vm805, 1, 0
      %v838 = vsel %vm806, 1, 0
      %v839 = vsel %vm807, 1, 0
      %v840 = vsel %vm808, 1, 0
      %v841 = vsel %vm809, 1, 0
      %v842 = vsel %vm810, 1, 0
      %v843 = vsel %vm811, 1, 0
      %v844 = vsel %vm812, 1, 0
      %v845 = vsel %vm813, 1, 0
      %v846 = vsel %vm814, 1, 0
      %v847 = vsel %vm815, 1, 0
      %v848 = vcvt.s32.f32 %v816
      %v849 = vcvt.s32.f32 %v817
      %v850 = vcvt.s32.f32 %v818
      %v851 = vcvt.s32.f32 %v819
      %v852 = vcvt.s32.f32 %v820
      %v853 = vcvt.s32.f32 %v821
      %v854 = vcvt.s32.f32 %v822
      %v855 = vcvt.s32.f32 %v823
      %v856 = vcvt.s32.f32 %v824
      %v857 = vcvt.s32.f32 %v825
      %v858 = vcvt.s32.f32 %v826
      %v859 = vcvt.s32.f32 %v827
      %v860 = vcvt.s32.f32 %v828
      %v861 = vcvt.s32.f32 %v829
      %v862 = vcvt.s32.f32 %v830
      %v863 = vcvt.s32.f32 %v831
      %v864 = vcvt.s32.f32 %v832
      %v865 = vcvt.s32.f32 %v833
      %v866 = vcvt.s32.f32 %v834
      %v867 = vcvt.s32.f32 %v835
      %v868 = vcvt.s32.f32 %v836
      %v869 = vcvt.s32.f32 %v837
      %v870 = vcvt.s32.f32 %v838
      %v871 = vcvt.s32.f32 %v839
      %v872 = vcvt.s32.f32 %v840
      %v873 = vcvt.s32.f32 %v841
      %v874 = vcvt.s32.f32 %v842
      %v875 = vcvt.s32.f32 %v843
      %v876 = vcvt.s32.f32 %v844
      %v877 = vcvt.s32.f32 %v845
      %v878 = vcvt.s32.f32 %v846
      %v879 = vcvt.s32.f32 %v847
      %v880 = vpack.c.bf16 %v592, %v591
      %v881 = vpack.c.bf16 %v594, %v593
      %v882 = vpack.c.bf16 %v596, %v595
      %v883 = vpack.c.bf16 %v598, %v597
      %v884 = vpack.c.bf16 %v600, %v599
      %v885 = vpack.c.bf16 %v602, %v601
      %v886 = vpack.c.bf16 %v604, %v603
      %v887 = vpack.c.bf16 %v606, %v605
      %v888 = vpack.c.bf16 %v608, %v607
      %v889 = vpack.c.bf16 %v610, %v609
      %v890 = vpack.c.bf16 %v612, %v611
      %v891 = vpack.c.bf16 %v614, %v613
      %v892 = vpack.c.bf16 %v616, %v615
      %v893 = vpack.c.bf16 %v618, %v617
      %v894 = vpack.c.bf16 %v620, %v619
      %v895 = vpack.c.bf16 %v622, %v621
      %v896 = vld [vmem:[%s16] sm:$0x3]
      %v897 = vld [vmem:[%s17] sm:$0x1]
      %v899 = vlaneseq
      %v900 = vshrl.u32 %v899, 7
      %v901 = vsub.s32 0, %v900
      %v902 = vrot.slane %v897, %v901
      %vm904 = vcmask 31744
      %v906 = vsel %vm904, %v880, 0
      %v909 = vsel %vm904, %v881, 0
      %v912 = vsel %vm904, %v882, 0
      %v915 = vsel %vm904, %v883, 0
      %v918 = vsel %vm904, %v884, 0
      %v921 = vsel %vm904, %v885, 0
      %v924 = vsel %vm904, %v886, 0
      %v927 = vsel %vm904, %v887, 0
      %v930 = vsel %vm904, %v888, 0
      %v933 = vsel %vm904, %v889, 0
      %v936 = vsel %vm904, %v890, 0
      %v939 = vsel %vm904, %v891, 0
      %v942 = vsel %vm904, %v892, 0
      %v945 = vsel %vm904, %v893, 0
      %v948 = vsel %vm904, %v894, 0
      %v951 = vsel %vm904, %v895, 0
      %vm953 = vcmask 1041408
      %v955 = vsel %vm953, %v896, 0
      %957 = vmatprep.subr.bf16.mxu0 0
      %958 = vmatpush1.bf16.msra.mxu0 %v955
      %959 = vmatprep.subr.bf16.mxu0 0
      %960 = vmatpush1.bf16.msra.mxu0 0
      %961 = vmatprep.subr.bf16.mxu0 0
      %962 = vmatpush1.bf16.msra.mxu0 0
      %963 = vmatprep.subr.bf16.mxu0 0
      %964 = vmatpush1.bf16.msra.mxu0 0
      %965 = vmatprep.subr.bf16.mxu0 0
      %966 = vmatpush1.bf16.msra.mxu0 0
      %967 = vmatprep.subr.bf16.mxu0 0
      %968 = vmatpush1.bf16.msra.mxu0 0
      %969 = vmatprep.subr.bf16.mxu0 0
      %970 = vmatpush1.bf16.msra.mxu0 0
      %971 = vmatprep.subr.bf16.mxu0 0
      %972 = vmatpush1.bf16.msra.mxu0 0
      %973 = vmatprep.subr.bf16.mxu0 0
      %974 = vmatpush1.bf16.msra.mxu0 0
      %975 = vmatprep.subr.bf16.mxu0 0
      %976 = vmatpush1.bf16.msra.mxu0 0
      %977 = vmatprep.subr.bf16.mxu0 0
      %978 = vmatpush1.bf16.msra.mxu0 0
      %979 = vmatprep.subr.bf16.mxu0 0
      %980 = vmatpush1.bf16.msra.mxu0 0
      %981 = vmatprep.subr.bf16.mxu0 0
      %982 = vmatpush1.bf16.msra.mxu0 0
      %983 = vmatprep.subr.bf16.mxu0 0
      %984 = vmatpush1.bf16.msra.mxu0 0
      %985 = vmatprep.subr.bf16.mxu0 0
      %986 = vmatpush1.bf16.msra.mxu0 0
      %987 = vmatprep.subr.bf16.mxu0 0
      %988 = vmatpush1.bf16.msra.mxu0 0
      %989 = vmatprep.mubr.bf16.mxu0 0
      %990 = vmatmul.mubr.bf16.gmra.mrb[0].mxu0 %v906
      %v991 = vpop.f32.mrb[0].mxu0
      %v992 = vadd.f32 %v902, %v991
      %v993 = vpop.f32.mrb[0].mxu0
      %v994 = vpop.f32.mrb[0].mxu0
      %v995 = vadd.f32 %v902, %v994
      %v996 = vpop.f32.mrb[0].mxu0
      %997 = vmatprep.mubr.bf16.mxu0 0
      %998 = vmatmul.mubr.bf16.gmra.mrb[0].mxu0 %v909
      %v999 = vpop.f32.mrb[0].mxu0
      %v1000 = vadd.f32 %v902, %v999
      %v1001 = vpop.f32.mrb[0].mxu0
      %v1002 = vpop.f32.mrb[0].mxu0
      %v1003 = vadd.f32 %v902, %v1002
      %v1004 = vpop.f32.mrb[0].mxu0
      %1005 = vmatprep.mubr.bf16.mxu0 0
      %1006 = vmatmul.mubr.bf16.gmra.mrb[0].mxu0 %v912
      %v1007 = vpop.f32.mrb[0].mxu0
      %v1008 = vadd.f32 %v902, %v1007
      %v1009 = vpop.f32.mrb[0].mxu0
      %v1010 = vpop.f32.mrb[0].mxu0
      %v1011 = vadd.f32 %v902, %v1010
      %v1012 = vpop.f32.mrb[0].mxu0
      %1013 = vmatprep.mubr.bf16.mxu0 0
      %1014 = vmatmul.mubr.bf16.gmra.mrb[0].mxu0 %v915
      %v1015 = vpop.f32.mrb[0].mxu0
      %v1016 = vadd.f32 %v902, %v1015
      %v1017 = vpop.f32.mrb[0].mxu0
      %v1018 = vpop.f32.mrb[0].mxu0
      %v1019 = vadd.f32 %v902, %v1018
      %v1020 = vpop.f32.mrb[0].mxu0
      %1021 = vmatprep.mubr.bf16.mxu0 0
      %1022 = vmatmul.mubr.bf16.gmra.mrb[0].mxu0 %v918
      %v1023 = vpop.f32.mrb[0].mxu0
      %v1024 = vadd.f32 %v902, %v1023
      %v1025 = vpop.f32.mrb[0].mxu0
      %v1026 = vpop.f32.mrb[0].mxu0
      %v1027 = vadd.f32 %v902, %v1026
      %v1028 = vpop.f32.mrb[0].mxu0
      %1029 = vmatprep.mubr.bf16.mxu0 0
      %1030 = vmatmul.mubr.bf16.gmra.mrb[0].mxu0 %v921
      %v1031 = vpop.f32.mrb[0].mxu0
      %v1032 = vadd.f32 %v902, %v1031
      %v1033 = vpop.f32.mrb[0].mxu0
      %v1034 = vpop.f32.mrb[0].mxu0
      %v1035 = vadd.f32 %v902, %v1034
      %v1036 = vpop.f32.mrb[0].mxu0
      %1037 = vmatprep.mubr.bf16.mxu0 0
      %1038 = vmatmul.mubr.bf16.gmra.mrb[0].mxu0 %v924
      %v1039 = vpop.f32.mrb[0].mxu0
      %v1040 = vadd.f32 %v902, %v1039
      %v1041 = vpop.f32.mrb[0].mxu0
      %v1042 = vpop.f32.mrb[0].mxu0
      %v1043 = vadd.f32 %v902, %v1042
      %v1044 = vpop.f32.mrb[0].mxu0
      %1045 = vmatprep.mubr.bf16.mxu0 0
      %1046 = vmatmul.mubr.bf16.gmra.mrb[0].mxu0 %v927
      %v1047 = vpop.f32.mrb[0].mxu0
      %v1048 = vadd.f32 %v902, %v1047
      %v1049 = vpop.f32.mrb[0].mxu0
      %v1050 = vpop.f32.mrb[0].mxu0
      %v1051 = vadd.f32 %v902, %v1050
      %v1052 = vpop.f32.mrb[0].mxu0
      %1053 = vmatprep.mubr.bf16.mxu0 0
      %1054 = vmatmul.mubr.bf16.gmra.mrb[0].mxu0 %v930
      %v1055 = vpop.f32.mrb[0].mxu0
      %v1056 = vadd.f32 %v902, %v1055
      %v1057 = vpop.f32.mrb[0].mxu0
      %v1058 = vpop.f32.mrb[0].mxu0
      %v1059 = vadd.f32 %v902, %v1058
      %v1060 = vpop.f32.mrb[0].mxu0
      %1061 = vmatprep.mubr.bf16.mxu0 0
      %1062 = vmatmul.mubr.bf16.gmra.mrb[0].mxu0 %v933
      %v1063 = vpop.f32.mrb[0].mxu0
      %v1064 = vadd.f32 %v902, %v1063
      %v1065 = vpop.f32.mrb[0].mxu0
      %v1066 = vpop.f32.mrb[0].mxu0
      %v1067 = vadd.f32 %v902, %v1066
      %v1068 = vpop.f32.mrb[0].mxu0
      %1069 = vmatprep.mubr.bf16.mxu0 0
      %1070 = vmatmul.mubr.bf16.gmra.mrb[0].mxu0 %v936
      %v1071 = vpop.f32.mrb[0].mxu0
      %v1072 = vadd.f32 %v902, %v1071
      %v1073 = vpop.f32.mrb[0].mxu0
      %v1074 = vpop.f32.mrb[0].mxu0
      %v1075 = vadd.f32 %v902, %v1074
      %v1076 = vpop.f32.mrb[0].mxu0
      %1077 = vmatprep.mubr.bf16.mxu0 0
      %1078 = vmatmul.mubr.bf16.gmra.mrb[0].mxu0 %v939
      %v1079 = vpop.f32.mrb[0].mxu0
      %v1080 = vadd.f32 %v902, %v1079
      %v1081 = vpop.f32.mrb[0].mxu0
      %v1082 = vpop.f32.mrb[0].mxu0
      %v1083 = vadd.f32 %v902, %v1082
      %v1084 = vpop.f32.mrb[0].mxu0
      %1085 = vmatprep.mubr.bf16.mxu0 0
      %1086 = vmatmul.mubr.bf16.gmra.mrb[0].mxu0 %v942
      %v1087 = vpop.f32.mrb[0].mxu0
      %v1088 = vadd.f32 %v902, %v1087
      %v1089 = vpop.f32.mrb[0].mxu0
      %v1090 = vpop.f32.mrb[0].mxu0
      %v1091 = vadd.f32 %v902, %v1090
      %v1092 = vpop.f32.mrb[0].mxu0
      %1093 = vmatprep.mubr.bf16.mxu0 0
      %1094 = vmatmul.mubr.bf16.gmra.mrb[0].mxu0 %v945
      %v1095 = vpop.f32.mrb[0].mxu0
      %v1096 = vadd.f32 %v902, %v1095
      %v1097 = vpop.f32.mrb[0].mxu0
      %v1098 = vpop.f32.mrb[0].mxu0
      %v1099 = vadd.f32 %v902, %v1098
      %v1100 = vpop.f32.mrb[0].mxu0
      %1101 = vmatprep.mubr.bf16.mxu0 0
      %1102 = vmatmul.mubr.bf16.gmra.mrb[0].mxu0 %v948
      %v1103 = vpop.f32.mrb[0].mxu0
      %v1104 = vadd.f32 %v902, %v1103
      %v1105 = vpop.f32.mrb[0].mxu0
      %v1106 = vpop.f32.mrb[0].mxu0
      %v1107 = vadd.f32 %v902, %v1106
      %v1108 = vpop.f32.mrb[0].mxu0
      %1109 = vmatprep.mubr.bf16.mxu0 0
      %1110 = vmatmul.mubr.bf16.gmra.mrb[0].mxu0 %v951
      %v1111 = vpop.f32.mrb[0].mxu0
      %v1112 = vadd.f32 %v902, %v1111
      %v1113 = vpop.f32.mrb[0].mxu0
      %v1114 = vpop.f32.mrb[0].mxu0
      %v1115 = vadd.f32 %v902, %v1114
      %v1116 = vpop.f32.mrb[0].mxu0
      %1117 = vdwg.mxu0
      %v1118 = vld [vmem:[%s4] sm:$0x1]
      %v1119 = vld [vmem:[%s5] sm:$0x1]
      %v1120 = vld [vmem:[%s2] sm:$0xf]
      %v1121 = vld [vmem:[%s3] sm:$0x3]
      %v1122 = vsel %vm904, %v591, 0.0
      %v1123 = vsel %vm904, %v592, 0.0
      %v1124 = vadd.f32 %v1122, %v1123
      %v1125 = vsel %vm904, %v593, 0.0
      %v1126 = vadd.f32 %v1124, %v1125
      %v1127 = vsel %vm904, %v594, 0.0
      %v1128 = vadd.f32 %v1126, %v1127
      %v1129 = vsel %vm904, %v595, 0.0
      %v1130 = vadd.f32 %v1128, %v1129
      %v1131 = vsel %vm904, %v596, 0.0
      %v1132 = vadd.f32 %v1130, %v1131
      %v1133 = vsel %vm904, %v597, 0.0
      %v1134 = vadd.f32 %v1132, %v1133
      %v1135 = vsel %vm904, %v598, 0.0
      %v1136 = vadd.f32 %v1134, %v1135
      %v1137 = vsel %vm904, %v599, 0.0
      %v1138 = vadd.f32 %v1136, %v1137
      %v1139 = vsel %vm904, %v600, 0.0
      %v1140 = vadd.f32 %v1138, %v1139
      %v1141 = vsel %vm904, %v601, 0.0
      %v1142 = vadd.f32 %v1140, %v1141
      %v1143 = vsel %vm904, %v602, 0.0
      %v1144 = vadd.f32 %v1142, %v1143
      %v1145 = vsel %vm904, %v603, 0.0
      %v1146 = vadd.f32 %v1144, %v1145
      %v1147 = vsel %vm904, %v604, 0.0
      %v1148 = vadd.f32 %v1146, %v1147
      %v1149 = vsel %vm904, %v605, 0.0
      %v1150 = vadd.f32 %v1148, %v1149
      %v1151 = vsel %vm904, %v606, 0.0
      %v1152 = vadd.f32 %v1150, %v1151
      %v1153 = vsel %vm904, %v607, 0.0
      %v1154 = vadd.f32 %v1152, %v1153
      %v1155 = vsel %vm904, %v608, 0.0
      %v1156 = vadd.f32 %v1154, %v1155
      %v1157 = vsel %vm904, %v609, 0.0
      %v1158 = vadd.f32 %v1156, %v1157
      %v1159 = vsel %vm904, %v610, 0.0
      %v1160 = vadd.f32 %v1158, %v1159
      %v1161 = vsel %vm904, %v611, 0.0
      %v1162 = vadd.f32 %v1160, %v1161
      %v1163 = vsel %vm904, %v612, 0.0
      %v1164 = vadd.f32 %v1162, %v1163
      %v1165 = vsel %vm904, %v613, 0.0
      %v1166 = vadd.f32 %v1164, %v1165
      %v1167 = vsel %vm904, %v614, 0.0
      %v1168 = vadd.f32 %v1166, %v1167
      %v1169 = vsel %vm904, %v615, 0.0
      %v1170 = vadd.f32 %v1168, %v1169
      %v1171 = vsel %vm904, %v616, 0.0
      %v1172 = vadd.f32 %v1170, %v1171
      %v1173 = vsel %vm904, %v617, 0.0
      %v1174 = vadd.f32 %v1172, %v1173
      %v1175 = vsel %vm904, %v618, 0.0
      %v1176 = vadd.f32 %v1174, %v1175
      %v1177 = vsel %vm904, %v619, 0.0
      %v1178 = vadd.f32 %v1176, %v1177
      %v1179 = vsel %vm904, %v620, 0.0
      %v1180 = vadd.f32 %v1178, %v1179
      %v1181 = vsel %vm904, %v621, 0.0
      %v1182 = vadd.f32 %v1180, %v1181
      %v1183 = vsel %vm904, %v622, 0.0
      %v1184 = vadd.f32 %v1182, %v1183
      %v1185 = vrot.slane %v1184, 4
      %v1186 = vadd.f32 %v1184, %v1185
      %v1187 = vrot.slane %v1186, 2
      %v1188 = vadd.f32 %v1186, %v1187
      %v1189 = vrot.slane %v1188, 1
      %v1190 = vadd.f32 %v1188, %v1189
      %v1191 = vmul.f32 %v591, %v591
      %v1192 = vmul.f32 %v592, %v592
      %v1193 = vmul.f32 %v593, %v593
      %v1194 = vmul.f32 %v594, %v594
      %v1195 = vmul.f32 %v595, %v595
      %v1196 = vmul.f32 %v596, %v596
      %v1197 = vmul.f32 %v597, %v597
      %v1198 = vmul.f32 %v598, %v598
      %v1199 = vmul.f32 %v599, %v599
      %v1200 = vmul.f32 %v600, %v600
      %v1201 = vmul.f32 %v601, %v601
      %v1202 = vmul.f32 %v602, %v602
      %v1203 = vmul.f32 %v603, %v603
      %v1204 = vmul.f32 %v604, %v604
      %v1205 = vmul.f32 %v605, %v605
      %v1206 = vmul.f32 %v606, %v606
      %v1207 = vmul.f32 %v607, %v607
      %v1208 = vmul.f32 %v608, %v608
      %v1209 = vmul.f32 %v609, %v609
      %v1210 = vmul.f32 %v610, %v610
      %v1211 = vmul.f32 %v611, %v611
      %v1212 = vmul.f32 %v612, %v612
      %v1213 = vmul.f32 %v613, %v613
      %v1214 = vmul.f32 %v614, %v614
      %v1215 = vmul.f32 %v615, %v615
      %v1216 = vmul.f32 %v616, %v616
      %v1217 = vmul.f32 %v617, %v617
      %v1218 = vmul.f32 %v618, %v618
      %v1219 = vmul.f32 %v619, %v619
      %v1220 = vmul.f32 %v620, %v620
      %v1221 = vmul.f32 %v621, %v621
      %v1222 = vmul.f32 %v622, %v622
      %v1223 = vsel %vm904, %v1191, 0.0
      %v1224 = vsel %vm904, %v1192, 0.0
      %v1225 = vadd.f32 %v1223, %v1224
      %v1226 = vsel %vm904, %v1193, 0.0
      %v1227 = vadd.f32 %v1225, %v1226
      %v1228 = vsel %vm904, %v1194, 0.0
      %v1229 = vadd.f32 %v1227, %v1228
      %v1230 = vsel %vm904, %v1195, 0.0
      %v1231 = vadd.f32 %v1229, %v1230
      %v1232 = vsel %vm904, %v1196, 0.0
      %v1233 = vadd.f32 %v1231, %v1232
      %v1234 = vsel %vm904, %v1197, 0.0
      %v1235 = vadd.f32 %v1233, %v1234
      %v1236 = vsel %vm904, %v1198, 0.0
      %v1237 = vadd.f32 %v1235, %v1236
      %v1238 = vsel %vm904, %v1199, 0.0
      %v1239 = vadd.f32 %v1237, %v1238
      %v1240 = vsel %vm904, %v1200, 0.0
      %v1241 = vadd.f32 %v1239, %v1240
      %v1242 = vsel %vm904, %v1201, 0.0
      %v1243 = vadd.f32 %v1241, %v1242
      %v1244 = vsel %vm904, %v1202, 0.0
      %v1245 = vadd.f32 %v1243, %v1244
      %v1246 = vsel %vm904, %v1203, 0.0
      %v1247 = vadd.f32 %v1245, %v1246
      %v1248 = vsel %vm904, %v1204, 0.0
      %v1249 = vadd.f32 %v1247, %v1248
      %v1250 = vsel %vm904, %v1205, 0.0
      %v1251 = vadd.f32 %v1249, %v1250
      %v1252 = vsel %vm904, %v1206, 0.0
      %v1253 = vadd.f32 %v1251, %v1252
      %v1254 = vsel %vm904, %v1207, 0.0
      %v1255 = vadd.f32 %v1253, %v1254
      %v1256 = vsel %vm904, %v1208, 0.0
      %v1257 = vadd.f32 %v1255, %v1256
      %v1258 = vsel %vm904, %v1209, 0.0
      %v1259 = vadd.f32 %v1257, %v1258
      %v1260 = vsel %vm904, %v1210, 0.0
      %v1261 = vadd.f32 %v1259, %v1260
      %v1262 = vsel %vm904, %v1211, 0.0
      %v1263 = vadd.f32 %v1261, %v1262
      %v1264 = vsel %vm904, %v1212, 0.0
      %v1265 = vadd.f32 %v1263, %v1264
      %v1266 = vsel %vm904, %v1213, 0.0
      %v1267 = vadd.f32 %v1265, %v1266
      %v1268 = vsel %vm904, %v1214, 0.0
      %v1269 = vadd.f32 %v1267, %v1268
      %v1270 = vsel %vm904, %v1215, 0.0
      %v1271 = vadd.f32 %v1269, %v1270
      %v1272 = vsel %vm904, %v1216, 0.0
      %v1273 = vadd.f32 %v1271, %v1272
      %v1274 = vsel %vm904, %v1217, 0.0
      %v1275 = vadd.f32 %v1273, %v1274
      %v1276 = vsel %vm904, %v1218, 0.0
      %v1277 = vadd.f32 %v1275, %v1276
      %v1278 = vsel %vm904, %v1219, 0.0
      %v1279 = vadd.f32 %v1277, %v1278
      %v1280 = vsel %vm904, %v1220, 0.0
      %v1281 = vadd.f32 %v1279, %v1280
      %v1282 = vsel %vm904, %v1221, 0.0
      %v1283 = vadd.f32 %v1281, %v1282
      %v1284 = vsel %vm904, %v1222, 0.0
      %v1285 = vadd.f32 %v1283, %v1284
      %v1286 = vrot.slane %v1285, 4
      %v1287 = vadd.f32 %v1285, %v1286
      %v1288 = vrot.slane %v1287, 2
      %v1289 = vadd.f32 %v1287, %v1288
      %v1290 = vrot.slane %v1289, 1
      %v1291 = vadd.f32 %v1289, %v1290
      %v1293 = vsel %vm904, %v1190, 0
      %vm1295 = vcmask 1043456
      %v1297 = vsel %vm1295, %v1120, 0
      %1299 = vmatprep.subr.mxu0 0.0
      %v1300 = vand.u32 %v1297, 4294901760
      %1301 = vmatpush1.msra.mxu0 %v1300
      %1302 = vmatprep.subr.mxu0 0.0
      %1303 = vmatpush1.msra.mxu0 0.0
      %1304 = vmatprep.subr.mxu0 0.0
      %1305 = vmatpush1.msra.mxu0 0.0
      %1306 = vmatprep.subr.mxu0 0.0
      %1307 = vmatpush1.msra.mxu0 0.0
      %1308 = vmatprep.subr.mxu0 0.0
      %1309 = vmatpush1.msra.mxu0 0.0
      %1310 = vmatprep.subr.mxu0 0.0
      %1311 = vmatpush1.msra.mxu0 0.0
      %1312 = vmatprep.subr.mxu0 0.0
      %1313 = vmatpush1.msra.mxu0 0.0
      %1314 = vmatprep.subr.mxu0 0.0
      %1315 = vmatpush1.msra.mxu0 0.0
      %1316 = vmatprep.subr.mxu0 0.0
      %1317 = vmatpush1.msra.mxu0 0.0
      %1318 = vmatprep.subr.mxu0 0.0
      %1319 = vmatpush1.msra.mxu0 0.0
      %1320 = vmatprep.subr.mxu0 0.0
      %1321 = vmatpush1.msra.mxu0 0.0
      %1322 = vmatprep.subr.mxu0 0.0
      %1323 = vmatpush1.msra.mxu0 0.0
      %1324 = vmatprep.subr.mxu0 0.0
      %1325 = vmatpush1.msra.mxu0 0.0
      %1326 = vmatprep.subr.mxu0 0.0
      %1327 = vmatpush1.msra.mxu0 0.0
      %1328 = vmatprep.subr.mxu0 0.0
      %1329 = vmatpush1.msra.mxu0 0.0
      %1330 = vmatprep.subr.mxu0 0.0
      %1331 = vmatpush1.msra.mxu0 0.0
      %1332 = vmatprep.subr.mxu0 0.0
      %1333 = vmatpush1.msra.mxu0 0.0
      %1334 = vmatprep.subr.mxu0 0.0
      %1335 = vmatpush1.msra.mxu0 0.0
      %1336 = vmatprep.subr.mxu0 0.0
      %1337 = vmatpush1.msra.mxu0 0.0
      %1338 = vmatprep.subr.mxu0 0.0
      %1339 = vmatpush1.msra.mxu0 0.0
      %1340 = vmatprep.subr.mxu0 0.0
      %1341 = vmatpush1.msra.mxu0 0.0
      %1342 = vmatprep.subr.mxu0 0.0
      %1343 = vmatpush1.msra.mxu0 0.0
      %1344 = vmatprep.subr.mxu0 0.0
      %1345 = vmatpush1.msra.mxu0 0.0
      %1346 = vmatprep.subr.mxu0 0.0
      %1347 = vmatpush1.msra.mxu0 0.0
      %1348 = vmatprep.subr.mxu0 0.0
      %1349 = vmatpush1.msra.mxu0 0.0
      %1350 = vmatprep.subr.mxu0 0.0
      %1351 = vmatpush1.msra.mxu0 0.0
      %1352 = vmatprep.subr.mxu0 0.0
      %1353 = vmatpush1.msra.mxu0 0.0
      %1354 = vmatprep.subr.mxu0 0.0
      %1355 = vmatpush1.msra.mxu0 0.0
      %1356 = vmatprep.subr.mxu0 0.0
      %1357 = vmatpush1.msra.mxu0 0.0
      %1358 = vmatprep.subr.mxu0 0.0
      %1359 = vmatpush1.msra.mxu0 0.0
      %1360 = vmatprep.subr.mxu0 0.0
      %1361 = vmatpush1.msra.mxu0 0.0
      %1362 = vmatprep.subr.mxu0 0.0
      %1363 = vmatpush1.msra.mxu0 0.0
      %1364 = vmatprep.mubr.f32.mxu0 0.0
      %v1365 = vand.u32 %v1293, 4294901760
      %v1366 = vsub.f32 %v1293, %v1365
      %v1367 = vand.u32 %v1366, 4294901760
      %v1368 = vsub.f32 %v1366, %v1367
      %v1369 = vand.u32 %v1368, 4294901760
      %1370 = vmatmul.mubr.f32.gmra.mrb[0].mxu0 %v1369
      %v1371 = vpop.f32.mrb[0].mxu0
      %v1372 = vadd.f32 0.0, %v1371
      %v1373 = vpop.f32.mrb[0].mxu0
      %1374 = vdwg.mxu0
      %1375 = vmatprep.subr.mxu0 0.0
      %v1376 = vand.u32 %v1297, 4294901760
      %v1377 = vsub.f32 %v1297, %v1376
      %v1378 = vand.u32 %v1377, 4294901760
      %v1379 = vsub.f32 %v1377, %v1378
      %v1380 = vand.u32 %v1379, 4294901760
      %1381 = vmatpush1.msra.mxu0 %v1380
      %1382 = vmatprep.subr.mxu0 0.0
      %1383 = vmatpush1.msra.mxu0 0.0
      %1384 = vmatprep.subr.mxu0 0.0
      %1385 = vmatpush1.msra.mxu0 0.0
      %1386 = vmatprep.subr.mxu0 0.0
      %1387 = vmatpush1.msra.mxu0 0.0
      %1388 = vmatprep.subr.mxu0 0.0
      %1389 = vmatpush1.msra.mxu0 0.0
      %1390 = vmatprep.subr.mxu0 0.0
      %1391 = vmatpush1.msra.mxu0 0.0
      %1392 = vmatprep.subr.mxu0 0.0
      %1393 = vmatpush1.msra.mxu0 0.0
      %1394 = vmatprep.subr.mxu0 0.0
      %1395 = vmatpush1.msra.mxu0 0.0
      %1396 = vmatprep.subr.mxu0 0.0
      %1397 = vmatpush1.msra.mxu0 0.0
      %1398 = vmatprep.subr.mxu0 0.0
      %1399 = vmatpush1.msra.mxu0 0.0
      %1400 = vmatprep.subr.mxu0 0.0
      %1401 = vmatpush1.msra.mxu0 0.0
      %1402 = vmatprep.subr.mxu0 0.0
      %1403 = vmatpush1.msra.mxu0 0.0
      %1404 = vmatprep.subr.mxu0 0.0
      %1405 = vmatpush1.msra.mxu0 0.0
      %1406 = vmatprep.subr.mxu0 0.0
      %1407 = vmatpush1.msra.mxu0 0.0
      %1408 = vmatprep.subr.mxu0 0.0
      %1409 = vmatpush1.msra.mxu0 0.0
      %1410 = vmatprep.subr.mxu0 0.0
      %1411 = vmatpush1.msra.mxu0 0.0
      %1412 = vmatprep.subr.mxu0 0.0
      %1413 = vmatpush1.msra.mxu0 0.0
      %1414 = vmatprep.subr.mxu0 0.0
      %1415 = vmatpush1.msra.mxu0 0.0
      %1416 = vmatprep.subr.mxu0 0.0
      %1417 = vmatpush1.msra.mxu0 0.0
      %1418 = vmatprep.subr.mxu0 0.0
      %1419 = vmatpush1.msra.mxu0 0.0
      %1420 = vmatprep.subr.mxu0 0.0
      %1421 = vmatpush1.msra.mxu0 0.0
      %1422 = vmatprep.subr.mxu0 0.0
      %1423 = vmatpush1.msra.mxu0 0.0
      %1424 = vmatprep.subr.mxu0 0.0
      %1425 = vmatpush1.msra.mxu0 0.0
      %1426 = vmatprep.subr.mxu0 0.0
      %1427 = vmatpush1.msra.mxu0 0.0
      %1428 = vmatprep.subr.mxu0 0.0
      %1429 = vmatpush1.msra.mxu0 0.0
      %1430 = vmatprep.subr.mxu0 0.0
      %1431 = vmatpush1.msra.mxu0 0.0
      %1432 = vmatprep.subr.mxu0 0.0
      %1433 = vmatpush1.msra.mxu0 0.0
      %1434 = vmatprep.subr.mxu0 0.0
      %1435 = vmatpush1.msra.mxu0 0.0
      %1436 = vmatprep.subr.mxu0 0.0
      %1437 = vmatpush1.msra.mxu0 0.0
      %1438 = vmatprep.subr.mxu0 0.0
      %1439 = vmatpush1.msra.mxu0 0.0
      %1440 = vmatprep.subr.mxu0 0.0
      %1441 = vmatpush1.msra.mxu0 0.0
      %1442 = vmatprep.subr.mxu0 0.0
      %1443 = vmatpush1.msra.mxu0 0.0
      %1444 = vmatprep.mubr.f32.mxu0 0.0
      %v1445 = vand.u32 %v1293, 4294901760
      %1446 = vmatmul.mubr.f32.gmra.mrb[0].mxu0 %v1445
      %v1447 = vpop.f32.mrb[0].mxu0
      %v1448 = vadd.f32 %v1372, %v1447
      %v1449 = vpop.f32.mrb[0].mxu0
      %1450 = vdwg.mxu0
      %1451 = vmatprep.subr.mxu0 0.0
      %v1452 = vand.u32 %v1297, 4294901760
      %v1453 = vsub.f32 %v1297, %v1452
      %1454 = vmatpush1.msra.mxu0 %v1453
      %1455 = vmatprep.subr.mxu0 0.0
      %1456 = vmatpush1.msra.mxu0 0.0
      %1457 = vmatprep.subr.mxu0 0.0
      %1458 = vmatpush1.msra.mxu0 0.0
      %1459 = vmatprep.subr.mxu0 0.0
      %1460 = vmatpush1.msra.mxu0 0.0
      %1461 = vmatprep.subr.mxu0 0.0
      %1462 = vmatpush1.msra.mxu0 0.0
      %1463 = vmatprep.subr.mxu0 0.0
      %1464 = vmatpush1.msra.mxu0 0.0
      %1465 = vmatprep.subr.mxu0 0.0
      %1466 = vmatpush1.msra.mxu0 0.0
      %1467 = vmatprep.subr.mxu0 0.0
      %1468 = vmatpush1.msra.mxu0 0.0
      %1469 = vmatprep.subr.mxu0 0.0
      %1470 = vmatpush1.msra.mxu0 0.0
      %1471 = vmatprep.subr.mxu0 0.0
      %1472 = vmatpush1.msra.mxu0 0.0
      %1473 = vmatprep.subr.mxu0 0.0
      %1474 = vmatpush1.msra.mxu0 0.0
      %1475 = vmatprep.subr.mxu0 0.0
      %1476 = vmatpush1.msra.mxu0 0.0
      %1477 = vmatprep.subr.mxu0 0.0
      %1478 = vmatpush1.msra.mxu0 0.0
      %1479 = vmatprep.subr.mxu0 0.0
      %1480 = vmatpush1.msra.mxu0 0.0
      %1481 = vmatprep.subr.mxu0 0.0
      %1482 = vmatpush1.msra.mxu0 0.0
      %1483 = vmatprep.subr.mxu0 0.0
      %1484 = vmatpush1.msra.mxu0 0.0
      %1485 = vmatprep.subr.mxu0 0.0
      %1486 = vmatpush1.msra.mxu0 0.0
      %1487 = vmatprep.subr.mxu0 0.0
      %1488 = vmatpush1.msra.mxu0 0.0
      %1489 = vmatprep.subr.mxu0 0.0
      %1490 = vmatpush1.msra.mxu0 0.0
      %1491 = vmatprep.subr.mxu0 0.0
      %1492 = vmatpush1.msra.mxu0 0.0
      %1493 = vmatprep.subr.mxu0 0.0
      %1494 = vmatpush1.msra.mxu0 0.0
      %1495 = vmatprep.subr.mxu0 0.0
      %1496 = vmatpush1.msra.mxu0 0.0
      %1497 = vmatprep.subr.mxu0 0.0
      %1498 = vmatpush1.msra.mxu0 0.0
      %1499 = vmatprep.subr.mxu0 0.0
      %1500 = vmatpush1.msra.mxu0 0.0
      %1501 = vmatprep.subr.mxu0 0.0
      %1502 = vmatpush1.msra.mxu0 0.0
      %1503 = vmatprep.subr.mxu0 0.0
      %1504 = vmatpush1.msra.mxu0 0.0
      %1505 = vmatprep.subr.mxu0 0.0
      %1506 = vmatpush1.msra.mxu0 0.0
      %1507 = vmatprep.subr.mxu0 0.0
      %1508 = vmatpush1.msra.mxu0 0.0
      %1509 = vmatprep.subr.mxu0 0.0
      %1510 = vmatpush1.msra.mxu0 0.0
      %1511 = vmatprep.subr.mxu0 0.0
      %1512 = vmatpush1.msra.mxu0 0.0
      %1513 = vmatprep.subr.mxu0 0.0
      %1514 = vmatpush1.msra.mxu0 0.0
      %1515 = vmatprep.subr.mxu0 0.0
      %1516 = vmatpush1.msra.mxu0 0.0
      %1517 = vmatprep.mubr.f32.mxu0 0.0
      %v1518 = vand.u32 %v1293, 4294901760
      %v1519 = vsub.f32 %v1293, %v1518
      %1520 = vmatmul.mubr.f32.gmra.mrb[0].mxu0 %v1519
      %v1521 = vpop.f32.mrb[0].mxu0
      %v1522 = vadd.f32 %v1448, %v1521
      %v1523 = vpop.f32.mrb[0].mxu0
      %1524 = vdwg.mxu0
      %1525 = vmatprep.subr.mxu0 0.0
      %v1526 = vand.u32 %v1297, 4294901760
      %1527 = vmatpush1.msra.mxu0 %v1526
      %1528 = vmatprep.subr.mxu0 0.0
      %1529 = vmatpush1.msra.mxu0 0.0
      %1530 = vmatprep.subr.mxu0 0.0
      %1531 = vmatpush1.msra.mxu0 0.0
      %1532 = vmatprep.subr.mxu0 0.0
      %1533 = vmatpush1.msra.mxu0 0.0
      %1534 = vmatprep.subr.mxu0 0.0
      %1535 = vmatpush1.msra.mxu0 0.0
      %1536 = vmatprep.subr.mxu0 0.0
      %1537 = vmatpush1.msra.mxu0 0.0
      %1538 = vmatprep.subr.mxu0 0.0
      %1539 = vmatpush1.msra.mxu0 0.0
      %1540 = vmatprep.subr.mxu0 0.0
      %1541 = vmatpush1.msra.mxu0 0.0
      %1542 = vmatprep.subr.mxu0 0.0
      %1543 = vmatpush1.msra.mxu0 0.0
      %1544 = vmatprep.subr.mxu0 0.0
      %1545 = vmatpush1.msra.mxu0 0.0
      %1546 = vmatprep.subr.mxu0 0.0
      %1547 = vmatpush1.msra.mxu0 0.0
      %1548 = vmatprep.subr.mxu0 0.0
      %1549 = vmatpush1.msra.mxu0 0.0
      %1550 = vmatprep.subr.mxu0 0.0
      %1551 = vmatpush1.msra.mxu0 0.0
      %1552 = vmatprep.subr.mxu0 0.0
      %1553 = vmatpush1.msra.mxu0 0.0
      %1554 = vmatprep.subr.mxu0 0.0
      %1555 = vmatpush1.msra.mxu0 0.0
      %1556 = vmatprep.subr.mxu0 0.0
      %1557 = vmatpush1.msra.mxu0 0.0
      %1558 = vmatprep.subr.mxu0 0.0
      %1559 = vmatpush1.msra.mxu0 0.0
      %1560 = vmatprep.subr.mxu0 0.0
      %1561 = vmatpush1.msra.mxu0 0.0
      %1562 = vmatprep.subr.mxu0 0.0
      %1563 = vmatpush1.msra.mxu0 0.0
      %1564 = vmatprep.subr.mxu0 0.0
      %1565 = vmatpush1.msra.mxu0 0.0
      %1566 = vmatprep.subr.mxu0 0.0
      %1567 = vmatpush1.msra.mxu0 0.0
      %1568 = vmatprep.subr.mxu0 0.0
      %1569 = vmatpush1.msra.mxu0 0.0
      %1570 = vmatprep.subr.mxu0 0.0
      %1571 = vmatpush1.msra.mxu0 0.0
      %1572 = vmatprep.subr.mxu0 0.0
      %1573 = vmatpush1.msra.mxu0 0.0
      %1574 = vmatprep.subr.mxu0 0.0
      %1575 = vmatpush1.msra.mxu0 0.0
      %1576 = vmatprep.subr.mxu0 0.0
      %1577 = vmatpush1.msra.mxu0 0.0
      %1578 = vmatprep.subr.mxu0 0.0
      %1579 = vmatpush1.msra.mxu0 0.0
      %1580 = vmatprep.subr.mxu0 0.0
      %1581 = vmatpush1.msra.mxu0 0.0
      %1582 = vmatprep.subr.mxu0 0.0
      %1583 = vmatpush1.msra.mxu0 0.0
      %1584 = vmatprep.subr.mxu0 0.0
      %1585 = vmatpush1.msra.mxu0 0.0
      %1586 = vmatprep.subr.mxu0 0.0
      %1587 = vmatpush1.msra.mxu0 0.0
      %1588 = vmatprep.subr.mxu0 0.0
      %1589 = vmatpush1.msra.mxu0 0.0
      %1590 = vmatprep.mubr.f32.mxu0 0.0
      %v1591 = vand.u32 %v1293, 4294901760
      %v1592 = vsub.f32 %v1293, %v1591
      %v1593 = vand.u32 %v1592, 4294901760
      %1594 = vmatmul.mubr.f32.gmra.mrb[0].mxu0 %v1593
      %v1595 = vpop.f32.mrb[0].mxu0
      %v1596 = vadd.f32 %v1522, %v1595
      %v1597 = vpop.f32.mrb[0].mxu0
      %1598 = vdwg.mxu0
      %1599 = vmatprep.subr.mxu0 0.0
      %v1600 = vand.u32 %v1297, 4294901760
      %v1601 = vsub.f32 %v1297, %v1600
      %v1602 = vand.u32 %v1601, 4294901760
      %1603 = vmatpush1.msra.mxu0 %v1602
      %1604 = vmatprep.subr.mxu0 0.0
      %1605 = vmatpush1.msra.mxu0 0.0
      %1606 = vmatprep.subr.mxu0 0.0
      %1607 = vmatpush1.msra.mxu0 0.0
      %1608 = vmatprep.subr.mxu0 0.0
      %1609 = vmatpush1.msra.mxu0 0.0
      %1610 = vmatprep.subr.mxu0 0.0
      %1611 = vmatpush1.msra.mxu0 0.0
      %1612 = vmatprep.subr.mxu0 0.0
      %1613 = vmatpush1.msra.mxu0 0.0
      %1614 = vmatprep.subr.mxu0 0.0
      %1615 = vmatpush1.msra.mxu0 0.0
      %1616 = vmatprep.subr.mxu0 0.0
      %1617 = vmatpush1.msra.mxu0 0.0
      %1618 = vmatprep.subr.mxu0 0.0
      %1619 = vmatpush1.msra.mxu0 0.0
      %1620 = vmatprep.subr.mxu0 0.0
      %1621 = vmatpush1.msra.mxu0 0.0
      %1622 = vmatprep.subr.mxu0 0.0
      %1623 = vmatpush1.msra.mxu0 0.0
      %1624 = vmatprep.subr.mxu0 0.0
      %1625 = vmatpush1.msra.mxu0 0.0
      %1626 = vmatprep.subr.mxu0 0.0
      %1627 = vmatpush1.msra.mxu0 0.0
      %1628 = vmatprep.subr.mxu0 0.0
      %1629 = vmatpush1.msra.mxu0 0.0
      %1630 = vmatprep.subr.mxu0 0.0
      %1631 = vmatpush1.msra.mxu0 0.0
      %1632 = vmatprep.subr.mxu0 0.0
      %1633 = vmatpush1.msra.mxu0 0.0
      %1634 = vmatprep.subr.mxu0 0.0
      %1635 = vmatpush1.msra.mxu0 0.0
      %1636 = vmatprep.subr.mxu0 0.0
      %1637 = vmatpush1.msra.mxu0 0.0
      %1638 = vmatprep.subr.mxu0 0.0
      %1639 = vmatpush1.msra.mxu0 0.0
      %1640 = vmatprep.subr.mxu0 0.0
      %1641 = vmatpush1.msra.mxu0 0.0
      %1642 = vmatprep.subr.mxu0 0.0
      %1643 = vmatpush1.msra.mxu0 0.0
      %1644 = vmatprep.subr.mxu0 0.0
      %1645 = vmatpush1.msra.mxu0 0.0
      %1646 = vmatprep.subr.mxu0 0.0
      %1647 = vmatpush1.msra.mxu0 0.0
      %1648 = vmatprep.subr.mxu0 0.0
      %1649 = vmatpush1.msra.mxu0 0.0
      %1650 = vmatprep.subr.mxu0 0.0
      %1651 = vmatpush1.msra.mxu0 0.0
      %1652 = vmatprep.subr.mxu0 0.0
      %1653 = vmatpush1.msra.mxu0 0.0
      %1654 = vmatprep.subr.mxu0 0.0
      %1655 = vmatpush1.msra.mxu0 0.0
      %1656 = vmatprep.subr.mxu0 0.0
      %1657 = vmatpush1.msra.mxu0 0.0
      %1658 = vmatprep.subr.mxu0 0.0
      %1659 = vmatpush1.msra.mxu0 0.0
      %1660 = vmatprep.subr.mxu0 0.0
      %1661 = vmatpush1.msra.mxu0 0.0
      %1662 = vmatprep.subr.mxu0 0.0
      %1663 = vmatpush1.msra.mxu0 0.0
      %1664 = vmatprep.subr.mxu0 0.0
      %1665 = vmatpush1.msra.mxu0 0.0
      %1666 = vmatprep.mubr.f32.mxu0 0.0
      %v1667 = vand.u32 %v1293, 4294901760
      %1668 = vmatmul.mubr.f32.gmra.mrb[0].mxu0 %v1667
      %v1669 = vpop.f32.mrb[0].mxu0
      %v1670 = vadd.f32 %v1596, %v1669
      %v1671 = vpop.f32.mrb[0].mxu0
      %1672 = vdwg.mxu0
      %1673 = vmatprep.subr.mxu0 0.0
      %v1674 = vand.u32 %v1297, 4294901760
      %1675 = vmatpush1.msra.mxu0 %v1674
      %1676 = vmatprep.subr.mxu0 0.0
      %1677 = vmatpush1.msra.mxu0 0.0
      %1678 = vmatprep.subr.mxu0 0.0
      %1679 = vmatpush1.msra.mxu0 0.0
      %1680 = vmatprep.subr.mxu0 0.0
      %1681 = vmatpush1.msra.mxu0 0.0
      %1682 = vmatprep.subr.mxu0 0.0
      %1683 = vmatpush1.msra.mxu0 0.0
      %1684 = vmatprep.subr.mxu0 0.0
      %1685 = vmatpush1.msra.mxu0 0.0
      %1686 = vmatprep.subr.mxu0 0.0
      %1687 = vmatpush1.msra.mxu0 0.0
      %1688 = vmatprep.subr.mxu0 0.0
      %1689 = vmatpush1.msra.mxu0 0.0
      %1690 = vmatprep.subr.mxu0 0.0
      %1691 = vmatpush1.msra.mxu0 0.0
      %1692 = vmatprep.subr.mxu0 0.0
      %1693 = vmatpush1.msra.mxu0 0.0
      %1694 = vmatprep.subr.mxu0 0.0
      %1695 = vmatpush1.msra.mxu0 0.0
      %1696 = vmatprep.subr.mxu0 0.0
      %1697 = vmatpush1.msra.mxu0 0.0
      %1698 = vmatprep.subr.mxu0 0.0
      %1699 = vmatpush1.msra.mxu0 0.0
      %1700 = vmatprep.subr.mxu0 0.0
      %1701 = vmatpush1.msra.mxu0 0.0
      %1702 = vmatprep.subr.mxu0 0.0
      %1703 = vmatpush1.msra.mxu0 0.0
      %1704 = vmatprep.subr.mxu0 0.0
      %1705 = vmatpush1.msra.mxu0 0.0
      %1706 = vmatprep.subr.mxu0 0.0
      %1707 = vmatpush1.msra.mxu0 0.0
      %1708 = vmatprep.subr.mxu0 0.0
      %1709 = vmatpush1.msra.mxu0 0.0
      %1710 = vmatprep.subr.mxu0 0.0
      %1711 = vmatpush1.msra.mxu0 0.0
      %1712 = vmatprep.subr.mxu0 0.0
      %1713 = vmatpush1.msra.mxu0 0.0
      %1714 = vmatprep.subr.mxu0 0.0
      %1715 = vmatpush1.msra.mxu0 0.0
      %1716 = vmatprep.subr.mxu0 0.0
      %1717 = vmatpush1.msra.mxu0 0.0
      %1718 = vmatprep.subr.mxu0 0.0
      %1719 = vmatpush1.msra.mxu0 0.0
      %1720 = vmatprep.subr.mxu0 0.0
      %1721 = vmatpush1.msra.mxu0 0.0
      %1722 = vmatprep.subr.mxu0 0.0
      %1723 = vmatpush1.msra.mxu0 0.0
      %1724 = vmatprep.subr.mxu0 0.0
      %1725 = vmatpush1.msra.mxu0 0.0
      %1726 = vmatprep.subr.mxu0 0.0
      %1727 = vmatpush1.msra.mxu0 0.0
      %1728 = vmatprep.subr.mxu0 0.0
      %1729 = vmatpush1.msra.mxu0 0.0
      %1730 = vmatprep.subr.mxu0 0.0
      %1731 = vmatpush1.msra.mxu0 0.0
      %1732 = vmatprep.subr.mxu0 0.0
      %1733 = vmatpush1.msra.mxu0 0.0
      %1734 = vmatprep.subr.mxu0 0.0
      %1735 = vmatpush1.msra.mxu0 0.0
      %1736 = vmatprep.subr.mxu0 0.0
      %1737 = vmatpush1.msra.mxu0 0.0
      %1738 = vmatprep.mubr.f32.mxu0 0.0
      %v1739 = vand.u32 %v1293, 4294901760
      %1740 = vmatmul.mubr.f32.gmra.mrb[0].mxu0 %v1739
      %v1741 = vpop.f32.mrb[0].mxu0
      %v1742 = vadd.f32 %v1670, %v1741
      %v1743 = vpop.f32.mrb[0].mxu0
      %1744 = vdwg.mxu0
      %v1746 = vsel %vm904, %v1291, 0
      %1748 = vmatprep.subr.mxu0 0.0
      %v1749 = vand.u32 %v1297, 4294901760
      %1750 = vmatpush1.msra.mxu0 %v1749
      %1751 = vmatprep.subr.mxu0 0.0
      %1752 = vmatpush1.msra.mxu0 0.0
      %1753 = vmatprep.subr.mxu0 0.0
      %1754 = vmatpush1.msra.mxu0 0.0
      %1755 = vmatprep.subr.mxu0 0.0
      %1756 = vmatpush1.msra.mxu0 0.0
      %1757 = vmatprep.subr.mxu0 0.0
      %1758 = vmatpush1.msra.mxu0 0.0
      %1759 = vmatprep.subr.mxu0 0.0
      %1760 = vmatpush1.msra.mxu0 0.0
      %1761 = vmatprep.subr.mxu0 0.0
      %1762 = vmatpush1.msra.mxu0 0.0
      %1763 = vmatprep.subr.mxu0 0.0
      %1764 = vmatpush1.msra.mxu0 0.0
      %1765 = vmatprep.subr.mxu0 0.0
      %1766 = vmatpush1.msra.mxu0 0.0
      %1767 = vmatprep.subr.mxu0 0.0
      %1768 = vmatpush1.msra.mxu0 0.0
      %1769 = vmatprep.subr.mxu0 0.0
      %1770 = vmatpush1.msra.mxu0 0.0
      %1771 = vmatprep.subr.mxu0 0.0
      %1772 = vmatpush1.msra.mxu0 0.0
      %1773 = vmatprep.subr.mxu0 0.0
      %1774 = vmatpush1.msra.mxu0 0.0
      %1775 = vmatprep.subr.mxu0 0.0
      %1776 = vmatpush1.msra.mxu0 0.0
      %1777 = vmatprep.subr.mxu0 0.0
      %1778 = vmatpush1.msra.mxu0 0.0
      %1779 = vmatprep.subr.mxu0 0.0
      %1780 = vmatpush1.msra.mxu0 0.0
      %1781 = vmatprep.subr.mxu0 0.0
      %1782 = vmatpush1.msra.mxu0 0.0
      %1783 = vmatprep.subr.mxu0 0.0
      %1784 = vmatpush1.msra.mxu0 0.0
      %1785 = vmatprep.subr.mxu0 0.0
      %1786 = vmatpush1.msra.mxu0 0.0
      %1787 = vmatprep.subr.mxu0 0.0
      %1788 = vmatpush1.msra.mxu0 0.0
      %1789 = vmatprep.subr.mxu0 0.0
      %1790 = vmatpush1.msra.mxu0 0.0
      %1791 = vmatprep.subr.mxu0 0.0
      %1792 = vmatpush1.msra.mxu0 0.0
      %1793 = vmatprep.subr.mxu0 0.0
      %1794 = vmatpush1.msra.mxu0 0.0
      %1795 = vmatprep.subr.mxu0 0.0
      %1796 = vmatpush1.msra.mxu0 0.0
      %1797 = vmatprep.subr.mxu0 0.0
      %1798 = vmatpush1.msra.mxu0 0.0
      %1799 = vmatprep.subr.mxu0 0.0
      %1800 = vmatpush1.msra.mxu0 0.0
      %1801 = vmatprep.subr.mxu0 0.0
      %1802 = vmatpush1.msra.mxu0 0.0
      %1803 = vmatprep.subr.mxu0 0.0
      %1804 = vmatpush1.msra.mxu0 0.0
      %1805 = vmatprep.subr.mxu0 0.0
      %1806 = vmatpush1.msra.mxu0 0.0
      %1807 = vmatprep.subr.mxu0 0.0
      %1808 = vmatpush1.msra.mxu0 0.0
      %1809 = vmatprep.subr.mxu0 0.0
      %1810 = vmatpush1.msra.mxu0 0.0
      %1811 = vmatprep.subr.mxu0 0.0
      %1812 = vmatpush1.msra.mxu0 0.0
      %1813 = vmatprep.mubr.f32.mxu0 0.0
      %v1814 = vand.u32 %v1746, 4294901760
      %v1815 = vsub.f32 %v1746, %v1814
      %v1816 = vand.u32 %v1815, 4294901760
      %v1817 = vsub.f32 %v1815, %v1816
      %v1818 = vand.u32 %v1817, 4294901760
      %1819 = vmatmul.mubr.f32.gmra.mrb[0].mxu0 %v1818
      %v1820 = vpop.f32.mrb[0].mxu0
      %v1821 = vadd.f32 0.0, %v1820
      %v1822 = vpop.f32.mrb[0].mxu0
      %1823 = vdwg.mxu0
      %1824 = vmatprep.subr.mxu0 0.0
      %v1825 = vand.u32 %v1297, 4294901760
      %v1826 = vsub.f32 %v1297, %v1825
      %v1827 = vand.u32 %v1826, 4294901760
      %v1828 = vsub.f32 %v1826, %v1827
      %v1829 = vand.u32 %v1828, 4294901760
      %1830 = vmatpush1.msra.mxu0 %v1829
      %1831 = vmatprep.subr.mxu0 0.0
      %1832 = vmatpush1.msra.mxu0 0.0
      %1833 = vmatprep.subr.mxu0 0.0
      %1834 = vmatpush1.msra.mxu0 0.0
      %1835 = vmatprep.subr.mxu0 0.0
      %1836 = vmatpush1.msra.mxu0 0.0
      %1837 = vmatprep.subr.mxu0 0.0
      %1838 = vmatpush1.msra.mxu0 0.0
      %1839 = vmatprep.subr.mxu0 0.0
      %1840 = vmatpush1.msra.mxu0 0.0
      %1841 = vmatprep.subr.mxu0 0.0
      %1842 = vmatpush1.msra.mxu0 0.0
      %1843 = vmatprep.subr.mxu0 0.0
      %1844 = vmatpush1.msra.mxu0 0.0
      %1845 = vmatprep.subr.mxu0 0.0
      %1846 = vmatpush1.msra.mxu0 0.0
      %1847 = vmatprep.subr.mxu0 0.0
      %1848 = vmatpush1.msra.mxu0 0.0
      %1849 = vmatprep.subr.mxu0 0.0
      %1850 = vmatpush1.msra.mxu0 0.0
      %1851 = vmatprep.subr.mxu0 0.0
      %1852 = vmatpush1.msra.mxu0 0.0
      %1853 = vmatprep.subr.mxu0 0.0
      %1854 = vmatpush1.msra.mxu0 0.0
      %1855 = vmatprep.subr.mxu0 0.0
      %1856 = vmatpush1.msra.mxu0 0.0
      %1857 = vmatprep.subr.mxu0 0.0
      %1858 = vmatpush1.msra.mxu0 0.0
      %1859 = vmatprep.subr.mxu0 0.0
      %1860 = vmatpush1.msra.mxu0 0.0
      %1861 = vmatprep.subr.mxu0 0.0
      %1862 = vmatpush1.msra.mxu0 0.0
      %1863 = vmatprep.subr.mxu0 0.0
      %1864 = vmatpush1.msra.mxu0 0.0
      %1865 = vmatprep.subr.mxu0 0.0
      %1866 = vmatpush1.msra.mxu0 0.0
      %1867 = vmatprep.subr.mxu0 0.0
      %1868 = vmatpush1.msra.mxu0 0.0
      %1869 = vmatprep.subr.mxu0 0.0
      %1870 = vmatpush1.msra.mxu0 0.0
      %1871 = vmatprep.subr.mxu0 0.0
      %1872 = vmatpush1.msra.mxu0 0.0
      %1873 = vmatprep.subr.mxu0 0.0
      %1874 = vmatpush1.msra.mxu0 0.0
      %1875 = vmatprep.subr.mxu0 0.0
      %1876 = vmatpush1.msra.mxu0 0.0
      %1877 = vmatprep.subr.mxu0 0.0
      %1878 = vmatpush1.msra.mxu0 0.0
      %1879 = vmatprep.subr.mxu0 0.0
      %1880 = vmatpush1.msra.mxu0 0.0
      %1881 = vmatprep.subr.mxu0 0.0
      %1882 = vmatpush1.msra.mxu0 0.0
      %1883 = vmatprep.subr.mxu0 0.0
      %1884 = vmatpush1.msra.mxu0 0.0
      %1885 = vmatprep.subr.mxu0 0.0
      %1886 = vmatpush1.msra.mxu0 0.0
      %1887 = vmatprep.subr.mxu0 0.0
      %1888 = vmatpush1.msra.mxu0 0.0
      %1889 = vmatprep.subr.mxu0 0.0
      %1890 = vmatpush1.msra.mxu0 0.0
      %1891 = vmatprep.subr.mxu0 0.0
      %1892 = vmatpush1.msra.mxu0 0.0
      %1893 = vmatprep.mubr.f32.mxu0 0.0
      %v1894 = vand.u32 %v1746, 4294901760
      %1895 = vmatmul.mubr.f32.gmra.mrb[0].mxu0 %v1894
      %v1896 = vpop.f32.mrb[0].mxu0
      %v1897 = vadd.f32 %v1821, %v1896
      %v1898 = vpop.f32.mrb[0].mxu0
      %1899 = vdwg.mxu0
      %1900 = vmatprep.subr.mxu0 0.0
      %v1901 = vand.u32 %v1297, 4294901760
      %v1902 = vsub.f32 %v1297, %v1901
      %1903 = vmatpush1.msra.mxu0 %v1902
      %1904 = vmatprep.subr.mxu0 0.0
      %1905 = vmatpush1.msra.mxu0 0.0
      %1906 = vmatprep.subr.mxu0 0.0
      %1907 = vmatpush1.msra.mxu0 0.0
      %1908 = vmatprep.subr.mxu0 0.0
      %1909 = vmatpush1.msra.mxu0 0.0
      %1910 = vmatprep.subr.mxu0 0.0
      %1911 = vmatpush1.msra.mxu0 0.0
      %1912 = vmatprep.subr.mxu0 0.0
      %1913 = vmatpush1.msra.mxu0 0.0
      %1914 = vmatprep.subr.mxu0 0.0
      %1915 = vmatpush1.msra.mxu0 0.0
      %1916 = vmatprep.subr.mxu0 0.0
      %1917 = vmatpush1.msra.mxu0 0.0
      %1918 = vmatprep.subr.mxu0 0.0
      %1919 = vmatpush1.msra.mxu0 0.0
      %1920 = vmatprep.subr.mxu0 0.0
      %1921 = vmatpush1.msra.mxu0 0.0
      %1922 = vmatprep.subr.mxu0 0.0
      %1923 = vmatpush1.msra.mxu0 0.0
      %1924 = vmatprep.subr.mxu0 0.0
      %1925 = vmatpush1.msra.mxu0 0.0
      %1926 = vmatprep.subr.mxu0 0.0
      %1927 = vmatpush1.msra.mxu0 0.0
      %1928 = vmatprep.subr.mxu0 0.0
      %1929 = vmatpush1.msra.mxu0 0.0
      %1930 = vmatprep.subr.mxu0 0.0
      %1931 = vmatpush1.msra.mxu0 0.0
      %1932 = vmatprep.subr.mxu0 0.0
      %1933 = vmatpush1.msra.mxu0 0.0
      %1934 = vmatprep.subr.mxu0 0.0
      %1935 = vmatpush1.msra.mxu0 0.0
      %1936 = vmatprep.subr.mxu0 0.0
      %1937 = vmatpush1.msra.mxu0 0.0
      %1938 = vmatprep.subr.mxu0 0.0
      %1939 = vmatpush1.msra.mxu0 0.0
      %1940 = vmatprep.subr.mxu0 0.0
      %1941 = vmatpush1.msra.mxu0 0.0
      %1942 = vmatprep.subr.mxu0 0.0
      %1943 = vmatpush1.msra.mxu0 0.0
      %1944 = vmatprep.subr.mxu0 0.0
      %1945 = vmatpush1.msra.mxu0 0.0
      %1946 = vmatprep.subr.mxu0 0.0
      %1947 = vmatpush1.msra.mxu0 0.0
      %1948 = vmatprep.subr.mxu0 0.0
      %1949 = vmatpush1.msra.mxu0 0.0
      %1950 = vmatprep.subr.mxu0 0.0
      %1951 = vmatpush1.msra.mxu0 0.0
      %1952 = vmatprep.subr.mxu0 0.0
      %1953 = vmatpush1.msra.mxu0 0.0
      %1954 = vmatprep.subr.mxu0 0.0
      %1955 = vmatpush1.msra.mxu0 0.0
      %1956 = vmatprep.subr.mxu0 0.0
      %1957 = vmatpush1.msra.mxu0 0.0
      %1958 = vmatprep.subr.mxu0 0.0
      %1959 = vmatpush1.msra.mxu0 0.0
      %1960 = vmatprep.subr.mxu0 0.0
      %1961 = vmatpush1.msra.mxu0 0.0
      %1962 = vmatprep.subr.mxu0 0.0
      %1963 = vmatpush1.msra.mxu0 0.0
      %1964 = vmatprep.subr.mxu0 0.0
      %1965 = vmatpush1.msra.mxu0 0.0
      %1966 = vmatprep.mubr.f32.mxu0 0.0
      %v1967 = vand.u32 %v1746, 4294901760
      %v1968 = vsub.f32 %v1746, %v1967
      %1969 = vmatmul.mubr.f32.gmra.mrb[0].mxu0 %v1968
      %v1970 = vpop.f32.mrb[0].mxu0
      %v1971 = vadd.f32 %v1897, %v1970
      %v1972 = vpop.f32.mrb[0].mxu0
      %1973 = vdwg.mxu0
      %1974 = vmatprep.subr.mxu0 0.0
      %v1975 = vand.u32 %v1297, 4294901760
      %1976 = vmatpush1.msra.mxu0 %v1975
      %1977 = vmatprep.subr.mxu0 0.0
      %1978 = vmatpush1.msra.mxu0 0.0
      %1979 = vmatprep.subr.mxu0 0.0
      %1980 = vmatpush1.msra.mxu0 0.0
      %1981 = vmatprep.subr.mxu0 0.0
      %1982 = vmatpush1.msra.mxu0 0.0
      %1983 = vmatprep.subr.mxu0 0.0
      %1984 = vmatpush1.msra.mxu0 0.0
      %1985 = vmatprep.subr.mxu0 0.0
      %1986 = vmatpush1.msra.mxu0 0.0
      %1987 = vmatprep.subr.mxu0 0.0
      %1988 = vmatpush1.msra.mxu0 0.0
      %1989 = vmatprep.subr.mxu0 0.0
      %1990 = vmatpush1.msra.mxu0 0.0
      %1991 = vmatprep.subr.mxu0 0.0
      %1992 = vmatpush1.msra.mxu0 0.0
      %1993 = vmatprep.subr.mxu0 0.0
      %1994 = vmatpush1.msra.mxu0 0.0
      %1995 = vmatprep.subr.mxu0 0.0
      %1996 = vmatpush1.msra.mxu0 0.0
      %1997 = vmatprep.subr.mxu0 0.0
      %1998 = vmatpush1.msra.mxu0 0.0
      %1999 = vmatprep.subr.mxu0 0.0
      %2000 = vmatpush1.msra.mxu0 0.0
      %2001 = vmatprep.subr.mxu0 0.0
      %2002 = vmatpush1.msra.mxu0 0.0
      %2003 = vmatprep.subr.mxu0 0.0
      %2004 = vmatpush1.msra.mxu0 0.0
      %2005 = vmatprep.subr.mxu0 0.0
      %2006 = vmatpush1.msra.mxu0 0.0
      %2007 = vmatprep.subr.mxu0 0.0
      %2008 = vmatpush1.msra.mxu0 0.0
      %2009 = vmatprep.subr.mxu0 0.0
      %2010 = vmatpush1.msra.mxu0 0.0
      %2011 = vmatprep.subr.mxu0 0.0
      %2012 = vmatpush1.msra.mxu0 0.0
      %2013 = vmatprep.subr.mxu0 0.0
      %2014 = vmatpush1.msra.mxu0 0.0
      %2015 = vmatprep.subr.mxu0 0.0
      %2016 = vmatpush1.msra.mxu0 0.0
      %2017 = vmatprep.subr.mxu0 0.0
      %2018 = vmatpush1.msra.mxu0 0.0
      %2019 = vmatprep.subr.mxu0 0.0
      %2020 = vmatpush1.msra.mxu0 0.0
      %2021 = vmatprep.subr.mxu0 0.0
      %2022 = vmatpush1.msra.mxu0 0.0
      %2023 = vmatprep.subr.mxu0 0.0
      %2024 = vmatpush1.msra.mxu0 0.0
      %2025 = vmatprep.subr.mxu0 0.0
      %2026 = vmatpush1.msra.mxu0 0.0
      %2027 = vmatprep.subr.mxu0 0.0
      %2028 = vmatpush1.msra.mxu0 0.0
      %2029 = vmatprep.subr.mxu0 0.0
      %2030 = vmatpush1.msra.mxu0 0.0
      %2031 = vmatprep.subr.mxu0 0.0
      %2032 = vmatpush1.msra.mxu0 0.0
      %2033 = vmatprep.subr.mxu0 0.0
      %2034 = vmatpush1.msra.mxu0 0.0
      %2035 = vmatprep.subr.mxu0 0.0
      %2036 = vmatpush1.msra.mxu0 0.0
      %2037 = vmatprep.subr.mxu0 0.0
      %2038 = vmatpush1.msra.mxu0 0.0
      %2039 = vmatprep.mubr.f32.mxu0 0.0
      %v2040 = vand.u32 %v1746, 4294901760
      %v2041 = vsub.f32 %v1746, %v2040
      %v2042 = vand.u32 %v2041, 4294901760
      %2043 = vmatmul.mubr.f32.gmra.mrb[0].mxu0 %v2042
      %v2044 = vpop.f32.mrb[0].mxu0
      %v2045 = vadd.f32 %v1971, %v2044
      %v2046 = vpop.f32.mrb[0].mxu0
      %2047 = vdwg.mxu0
      %2048 = vmatprep.subr.mxu0 0.0
      %v2049 = vand.u32 %v1297, 4294901760
      %v2050 = vsub.f32 %v1297, %v2049
      %v2051 = vand.u32 %v2050, 4294901760
      %2052 = vmatpush1.msra.mxu0 %v2051
      %2053 = vmatprep.subr.mxu0 0.0
      %2054 = vmatpush1.msra.mxu0 0.0
      %2055 = vmatprep.subr.mxu0 0.0
      %2056 = vmatpush1.msra.mxu0 0.0
      %2057 = vmatprep.subr.mxu0 0.0
      %2058 = vmatpush1.msra.mxu0 0.0
      %2059 = vmatprep.subr.mxu0 0.0
      %2060 = vmatpush1.msra.mxu0 0.0
      %2061 = vmatprep.subr.mxu0 0.0
      %2062 = vmatpush1.msra.mxu0 0.0
      %2063 = vmatprep.subr.mxu0 0.0
      %2064 = vmatpush1.msra.mxu0 0.0
      %2065 = vmatprep.subr.mxu0 0.0
      %2066 = vmatpush1.msra.mxu0 0.0
      %2067 = vmatprep.subr.mxu0 0.0
      %2068 = vmatpush1.msra.mxu0 0.0
      %2069 = vmatprep.subr.mxu0 0.0
      %2070 = vmatpush1.msra.mxu0 0.0
      %2071 = vmatprep.subr.mxu0 0.0
      %2072 = vmatpush1.msra.mxu0 0.0
      %2073 = vmatprep.subr.mxu0 0.0
      %2074 = vmatpush1.msra.mxu0 0.0
      %2075 = vmatprep.subr.mxu0 0.0
      %2076 = vmatpush1.msra.mxu0 0.0
      %2077 = vmatprep.subr.mxu0 0.0
      %2078 = vmatpush1.msra.mxu0 0.0
      %2079 = vmatprep.subr.mxu0 0.0
      %2080 = vmatpush1.msra.mxu0 0.0
      %2081 = vmatprep.subr.mxu0 0.0
      %2082 = vmatpush1.msra.mxu0 0.0
      %2083 = vmatprep.subr.mxu0 0.0
      %2084 = vmatpush1.msra.mxu0 0.0
      %2085 = vmatprep.subr.mxu0 0.0
      %2086 = vmatpush1.msra.mxu0 0.0
      %2087 = vmatprep.subr.mxu0 0.0
      %2088 = vmatpush1.msra.mxu0 0.0
      %2089 = vmatprep.subr.mxu0 0.0
      %2090 = vmatpush1.msra.mxu0 0.0
      %2091 = vmatprep.subr.mxu0 0.0
      %2092 = vmatpush1.msra.mxu0 0.0
      %2093 = vmatprep.subr.mxu0 0.0
      %2094 = vmatpush1.msra.mxu0 0.0
      %2095 = vmatprep.subr.mxu0 0.0
      %2096 = vmatpush1.msra.mxu0 0.0
      %2097 = vmatprep.subr.mxu0 0.0
      %2098 = vmatpush1.msra.mxu0 0.0
      %2099 = vmatprep.subr.mxu0 0.0
      %2100 = vmatpush1.msra.mxu0 0.0
      %2101 = vmatprep.subr.mxu0 0.0
      %2102 = vmatpush1.msra.mxu0 0.0
      %2103 = vmatprep.subr.mxu0 0.0
      %2104 = vmatpush1.msra.mxu0 0.0
      %2105 = vmatprep.subr.mxu0 0.0
      %2106 = vmatpush1.msra.mxu0 0.0
      %2107 = vmatprep.subr.mxu0 0.0
      %2108 = vmatpush1.msra.mxu0 0.0
      %2109 = vmatprep.subr.mxu0 0.0
      %2110 = vmatpush1.msra.mxu0 0.0
      %2111 = vmatprep.subr.mxu0 0.0
      %2112 = vmatpush1.msra.mxu0 0.0
      %2113 = vmatprep.subr.mxu0 0.0
      %2114 = vmatpush1.msra.mxu0 0.0
      %2115 = vmatprep.mubr.f32.mxu0 0.0
      %v2116 = vand.u32 %v1746, 4294901760
      %2117 = vmatmul.mubr.f32.gmra.mrb[0].mxu0 %v2116
      %v2118 = vpop.f32.mrb[0].mxu0
      %v2119 = vadd.f32 %v2045, %v2118
      %v2120 = vpop.f32.mrb[0].mxu0
      %2121 = vdwg.mxu0
      %2122 = vmatprep.subr.mxu0 0.0
      %v2123 = vand.u32 %v1297, 4294901760
      %2124 = vmatpush1.msra.mxu0 %v2123
      %2125 = vmatprep.subr.mxu0 0.0
      %2126 = vmatpush1.msra.mxu0 0.0
      %2127 = vmatprep.subr.mxu0 0.0
      %2128 = vmatpush1.msra.mxu0 0.0
      %2129 = vmatprep.subr.mxu0 0.0
      %2130 = vmatpush1.msra.mxu0 0.0
      %2131 = vmatprep.subr.mxu0 0.0
      %2132 = vmatpush1.msra.mxu0 0.0
      %2133 = vmatprep.subr.mxu0 0.0
      %2134 = vmatpush1.msra.mxu0 0.0
      %2135 = vmatprep.subr.mxu0 0.0
      %2136 = vmatpush1.msra.mxu0 0.0
      %2137 = vmatprep.subr.mxu0 0.0
      %2138 = vmatpush1.msra.mxu0 0.0
      %2139 = vmatprep.subr.mxu0 0.0
      %2140 = vmatpush1.msra.mxu0 0.0
      %2141 = vmatprep.subr.mxu0 0.0
      %2142 = vmatpush1.msra.mxu0 0.0
      %2143 = vmatprep.subr.mxu0 0.0
      %2144 = vmatpush1.msra.mxu0 0.0
      %2145 = vmatprep.subr.mxu0 0.0
      %2146 = vmatpush1.msra.mxu0 0.0
      %2147 = vmatprep.subr.mxu0 0.0
      %2148 = vmatpush1.msra.mxu0 0.0
      %2149 = vmatprep.subr.mxu0 0.0
      %2150 = vmatpush1.msra.mxu0 0.0
      %2151 = vmatprep.subr.mxu0 0.0
      %2152 = vmatpush1.msra.mxu0 0.0
      %2153 = vmatprep.subr.mxu0 0.0
      %2154 = vmatpush1.msra.mxu0 0.0
      %2155 = vmatprep.subr.mxu0 0.0
      %2156 = vmatpush1.msra.mxu0 0.0
      %2157 = vmatprep.subr.mxu0 0.0
      %2158 = vmatpush1.msra.mxu0 0.0
      %2159 = vmatprep.subr.mxu0 0.0
      %2160 = vmatpush1.msra.mxu0 0.0
      %2161 = vmatprep.subr.mxu0 0.0
      %2162 = vmatpush1.msra.mxu0 0.0
      %2163 = vmatprep.subr.mxu0 0.0
      %2164 = vmatpush1.msra.mxu0 0.0
      %2165 = vmatprep.subr.mxu0 0.0
      %2166 = vmatpush1.msra.mxu0 0.0
      %2167 = vmatprep.subr.mxu0 0.0
      %2168 = vmatpush1.msra.mxu0 0.0
      %2169 = vmatprep.subr.mxu0 0.0
      %2170 = vmatpush1.msra.mxu0 0.0
      %2171 = vmatprep.subr.mxu0 0.0
      %2172 = vmatpush1.msra.mxu0 0.0
      %2173 = vmatprep.subr.mxu0 0.0
      %2174 = vmatpush1.msra.mxu0 0.0
      %2175 = vmatprep.subr.mxu0 0.0
      %2176 = vmatpush1.msra.mxu0 0.0
      %2177 = vmatprep.subr.mxu0 0.0
      %2178 = vmatpush1.msra.mxu0 0.0
      %2179 = vmatprep.subr.mxu0 0.0
      %2180 = vmatpush1.msra.mxu0 0.0
      %2181 = vmatprep.subr.mxu0 0.0
      %2182 = vmatpush1.msra.mxu0 0.0
      %2183 = vmatprep.subr.mxu0 0.0
      %2184 = vmatpush1.msra.mxu0 0.0
      %2185 = vmatprep.subr.mxu0 0.0
      %2186 = vmatpush1.msra.mxu0 0.0
      %2187 = vmatprep.mubr.f32.mxu0 0.0
      %v2188 = vand.u32 %v1746, 4294901760
      %2189 = vmatmul.mubr.f32.gmra.mrb[0].mxu0 %v2188
      %v2190 = vpop.f32.mrb[0].mxu0
      %v2191 = vadd.f32 %v2119, %v2190
      %v2192 = vpop.f32.mrb[0].mxu0
      %2193 = vdwg.mxu0
      %v2194 = vmul.f32 %v1742, 0.001953125
      %v2195 = vmul.f32 %v2191, 0.001953125
      %v2196 = vmul.f32 %v2194, %v2194
      %v2197 = vsub.f32 %v2195, %v2196
      %v2198 = vadd.f32 %v2197, 1e-05
      %v2199 = vrsqrt.pop %v2198
      %vm2200 = vcmask 15360
      %v2202 = vsel %vm2200, %v2194, 0
      %v2205 = vsel %vm953, %v1121, 0
      %2207 = vmatprep.subr.mxu0 0.0
      %v2208 = vand.u32 %v2205, 4294901760
      %2209 = vmatpush1.msra.mxu0 %v2208
      %2210 = vmatprep.subr.mxu0 0.0
      %2211 = vmatpush1.msra.mxu0 0.0
      %2212 = vmatprep.subr.mxu0 0.0
      %2213 = vmatpush1.msra.mxu0 0.0
      %2214 = vmatprep.subr.mxu0 0.0
      %2215 = vmatpush1.msra.mxu0 0.0
      %2216 = vmatprep.subr.mxu0 0.0
      %2217 = vmatpush1.msra.mxu0 0.0
      %2218 = vmatprep.subr.mxu0 0.0
      %2219 = vmatpush1.msra.mxu0 0.0
      %2220 = vmatprep.subr.mxu0 0.0
      %2221 = vmatpush1.msra.mxu0 0.0
      %2222 = vmatprep.subr.mxu0 0.0
      %2223 = vmatpush1.msra.mxu0 0.0
      %2224 = vmatprep.subr.mxu0 0.0
      %2225 = vmatpush1.msra.mxu0 0.0
      %2226 = vmatprep.subr.mxu0 0.0
      %2227 = vmatpush1.msra.mxu0 0.0
      %2228 = vmatprep.subr.mxu0 0.0
      %2229 = vmatpush1.msra.mxu0 0.0
      %2230 = vmatprep.subr.mxu0 0.0
      %2231 = vmatpush1.msra.mxu0 0.0
      %2232 = vmatprep.subr.mxu0 0.0
      %2233 = vmatpush1.msra.mxu0 0.0
      %2234 = vmatprep.subr.mxu0 0.0
      %2235 = vmatpush1.msra.mxu0 0.0
      %2236 = vmatprep.subr.mxu0 0.0
      %2237 = vmatpush1.msra.mxu0 0.0
      %2238 = vmatprep.subr.mxu0 0.0
      %2239 = vmatpush1.msra.mxu0 0.0
      %2240 = vmatprep.subr.mxu0 0.0
      %2241 = vmatpush1.msra.mxu0 0.0
      %2242 = vmatprep.subr.mxu0 0.0
      %2243 = vmatpush1.msra.mxu0 0.0
      %2244 = vmatprep.subr.mxu0 0.0
      %2245 = vmatpush1.msra.mxu0 0.0
      %2246 = vmatprep.subr.mxu0 0.0
      %2247 = vmatpush1.msra.mxu0 0.0
      %2248 = vmatprep.subr.mxu0 0.0
      %2249 = vmatpush1.msra.mxu0 0.0
      %2250 = vmatprep.subr.mxu0 0.0
      %2251 = vmatpush1.msra.mxu0 0.0
      %2252 = vmatprep.subr.mxu0 0.0
      %2253 = vmatpush1.msra.mxu0 0.0
      %2254 = vmatprep.subr.mxu0 0.0
      %2255 = vmatpush1.msra.mxu0 0.0
      %2256 = vmatprep.subr.mxu0 0.0
      %2257 = vmatpush1.msra.mxu0 0.0
      %2258 = vmatprep.subr.mxu0 0.0
      %2259 = vmatpush1.msra.mxu0 0.0
      %2260 = vmatprep.subr.mxu0 0.0
      %2261 = vmatpush1.msra.mxu0 0.0
      %2262 = vmatprep.subr.mxu0 0.0
      %2263 = vmatpush1.msra.mxu0 0.0
      %2264 = vmatprep.subr.mxu0 0.0
      %2265 = vmatpush1.msra.mxu0 0.0
      %2266 = vmatprep.subr.mxu0 0.0
      %2267 = vmatpush1.msra.mxu0 0.0
      %2268 = vmatprep.subr.mxu0 0.0
      %2269 = vmatpush1.msra.mxu0 0.0
      %2270 = vmatprep.subr.mxu0 0.0
      %2271 = vmatpush1.msra.mxu0 0.0
      %2272 = vmatprep.mubr.f32.mxu0 0.0
      %v2273 = vand.u32 %v2202, 4294901760
      %v2274 = vsub.f32 %v2202, %v2273
      %v2275 = vand.u32 %v2274, 4294901760
      %v2276 = vsub.f32 %v2274, %v2275
      %v2277 = vand.u32 %v2276, 4294901760
      %2278 = vmatmul.mubr.f32.gmra.mrb[0].mxu0 %v2277
      %v2279 = vpop.f32.mrb[0].mxu0
      %v2280 = vadd.f32 0.0, %v2279
      %v2281 = vpop.f32.mrb[0].mxu0
      %2282 = vdwg.mxu0
      %2283 = vmatprep.subr.mxu0 0.0
      %v2284 = vand.u32 %v2205, 4294901760
      %v2285 = vsub.f32 %v2205, %v2284
      %v2286 = vand.u32 %v2285, 4294901760
      %v2287 = vsub.f32 %v2285, %v2286
      %v2288 = vand.u32 %v2287, 4294901760
      %2289 = vmatpush1.msra.mxu0 %v2288
      %2290 = vmatprep.subr.mxu0 0.0
      %2291 = vmatpush1.msra.mxu0 0.0
      %2292 = vmatprep.subr.mxu0 0.0
      %2293 = vmatpush1.msra.mxu0 0.0
      %2294 = vmatprep.subr.mxu0 0.0
      %2295 = vmatpush1.msra.mxu0 0.0
      %2296 = vmatprep.subr.mxu0 0.0
      %2297 = vmatpush1.msra.mxu0 0.0
      %2298 = vmatprep.subr.mxu0 0.0
      %2299 = vmatpush1.msra.mxu0 0.0
      %2300 = vmatprep.subr.mxu0 0.0
      %2301 = vmatpush1.msra.mxu0 0.0
      %2302 = vmatprep.subr.mxu0 0.0
      %2303 = vmatpush1.msra.mxu0 0.0
      %2304 = vmatprep.subr.mxu0 0.0
      %2305 = vmatpush1.msra.mxu0 0.0
      %2306 = vmatprep.subr.mxu0 0.0
      %2307 = vmatpush1.msra.mxu0 0.0
      %2308 = vmatprep.subr.mxu0 0.0
      %2309 = vmatpush1.msra.mxu0 0.0
      %2310 = vmatprep.subr.mxu0 0.0
      %2311 = vmatpush1.msra.mxu0 0.0
      %2312 = vmatprep.subr.mxu0 0.0
      %2313 = vmatpush1.msra.mxu0 0.0
      %2314 = vmatprep.subr.mxu0 0.0
      %2315 = vmatpush1.msra.mxu0 0.0
      %2316 = vmatprep.subr.mxu0 0.0
      %2317 = vmatpush1.msra.mxu0 0.0
      %2318 = vmatprep.subr.mxu0 0.0
      %2319 = vmatpush1.msra.mxu0 0.0
      %2320 = vmatprep.subr.mxu0 0.0
      %2321 = vmatpush1.msra.mxu0 0.0
      %2322 = vmatprep.subr.mxu0 0.0
      %2323 = vmatpush1.msra.mxu0 0.0
      %2324 = vmatprep.subr.mxu0 0.0
      %2325 = vmatpush1.msra.mxu0 0.0
      %2326 = vmatprep.subr.mxu0 0.0
      %2327 = vmatpush1.msra.mxu0 0.0
      %2328 = vmatprep.subr.mxu0 0.0
      %2329 = vmatpush1.msra.mxu0 0.0
      %2330 = vmatprep.subr.mxu0 0.0
      %2331 = vmatpush1.msra.mxu0 0.0
      %2332 = vmatprep.subr.mxu0 0.0
      %2333 = vmatpush1.msra.mxu0 0.0
      %2334 = vmatprep.subr.mxu0 0.0
      %2335 = vmatpush1.msra.mxu0 0.0
      %2336 = vmatprep.subr.mxu0 0.0
      %2337 = vmatpush1.msra.mxu0 0.0
      %2338 = vmatprep.subr.mxu0 0.0
      %2339 = vmatpush1.msra.mxu0 0.0
      %2340 = vmatprep.subr.mxu0 0.0
      %2341 = vmatpush1.msra.mxu0 0.0
      %2342 = vmatprep.subr.mxu0 0.0
      %2343 = vmatpush1.msra.mxu0 0.0
      %2344 = vmatprep.subr.mxu0 0.0
      %2345 = vmatpush1.msra.mxu0 0.0
      %2346 = vmatprep.subr.mxu0 0.0
      %2347 = vmatpush1.msra.mxu0 0.0
      %2348 = vmatprep.subr.mxu0 0.0
      %2349 = vmatpush1.msra.mxu0 0.0
      %2350 = vmatprep.subr.mxu0 0.0
      %2351 = vmatpush1.msra.mxu0 0.0
      %2352 = vmatprep.mubr.f32.mxu0 0.0
      %v2353 = vand.u32 %v2202, 4294901760
      %2354 = vmatmul.mubr.f32.gmra.mrb[0].mxu0 %v2353
      %v2355 = vpop.f32.mrb[0].mxu0
      %v2356 = vadd.f32 %v2280, %v2355
      %v2357 = vpop.f32.mrb[0].mxu0
      %2358 = vdwg.mxu0
      %2359 = vmatprep.subr.mxu0 0.0
      %v2360 = vand.u32 %v2205, 4294901760
      %v2361 = vsub.f32 %v2205, %v2360
      %2362 = vmatpush1.msra.mxu0 %v2361
      %2363 = vmatprep.subr.mxu0 0.0
      %2364 = vmatpush1.msra.mxu0 0.0
      %2365 = vmatprep.subr.mxu0 0.0
      %2366 = vmatpush1.msra.mxu0 0.0
      %2367 = vmatprep.subr.mxu0 0.0
      %2368 = vmatpush1.msra.mxu0 0.0
      %2369 = vmatprep.subr.mxu0 0.0
      %2370 = vmatpush1.msra.mxu0 0.0
      %2371 = vmatprep.subr.mxu0 0.0
      %2372 = vmatpush1.msra.mxu0 0.0
      %2373 = vmatprep.subr.mxu0 0.0
      %2374 = vmatpush1.msra.mxu0 0.0
      %2375 = vmatprep.subr.mxu0 0.0
      %2376 = vmatpush1.msra.mxu0 0.0
      %2377 = vmatprep.subr.mxu0 0.0
      %2378 = vmatpush1.msra.mxu0 0.0
      %2379 = vmatprep.subr.mxu0 0.0
      %2380 = vmatpush1.msra.mxu0 0.0
      %2381 = vmatprep.subr.mxu0 0.0
      %2382 = vmatpush1.msra.mxu0 0.0
      %2383 = vmatprep.subr.mxu0 0.0
      %2384 = vmatpush1.msra.mxu0 0.0
      %2385 = vmatprep.subr.mxu0 0.0
      %2386 = vmatpush1.msra.mxu0 0.0
      %2387 = vmatprep.subr.mxu0 0.0
      %2388 = vmatpush1.msra.mxu0 0.0
      %2389 = vmatprep.subr.mxu0 0.0
      %2390 = vmatpush1.msra.mxu0 0.0
      %2391 = vmatprep.subr.mxu0 0.0
      %2392 = vmatpush1.msra.mxu0 0.0
      %2393 = vmatprep.subr.mxu0 0.0
      %2394 = vmatpush1.msra.mxu0 0.0
      %2395 = vmatprep.subr.mxu0 0.0
      %2396 = vmatpush1.msra.mxu0 0.0
      %2397 = vmatprep.subr.mxu0 0.0
      %2398 = vmatpush1.msra.mxu0 0.0
      %2399 = vmatprep.subr.mxu0 0.0
      %2400 = vmatpush1.msra.mxu0 0.0
      %2401 = vmatprep.subr.mxu0 0.0
      %2402 = vmatpush1.msra.mxu0 0.0
      %2403 = vmatprep.subr.mxu0 0.0
      %2404 = vmatpush1.msra.mxu0 0.0
      %2405 = vmatprep.subr.mxu0 0.0
      %2406 = vmatpush1.msra.mxu0 0.0
      %2407 = vmatprep.subr.mxu0 0.0
      %2408 = vmatpush1.msra.mxu0 0.0
      %2409 = vmatprep.subr.mxu0 0.0
      %2410 = vmatpush1.msra.mxu0 0.0
      %2411 = vmatprep.subr.mxu0 0.0
      %2412 = vmatpush1.msra.mxu0 0.0
      %2413 = vmatprep.subr.mxu0 0.0
      %2414 = vmatpush1.msra.mxu0 0.0
      %2415 = vmatprep.subr.mxu0 0.0
      %2416 = vmatpush1.msra.mxu0 0.0
      %2417 = vmatprep.subr.mxu0 0.0
      %2418 = vmatpush1.msra.mxu0 0.0
      %2419 = vmatprep.subr.mxu0 0.0
      %2420 = vmatpush1.msra.mxu0 0.0
      %2421 = vmatprep.subr.mxu0 0.0
      %2422 = vmatpush1.msra.mxu0 0.0
      %2423 = vmatprep.subr.mxu0 0.0
      %2424 = vmatpush1.msra.mxu0 0.0
      %2425 = vmatprep.mubr.f32.mxu0 0.0
      %v2426 = vand.u32 %v2202, 4294901760
      %v2427 = vsub.f32 %v2202, %v2426
      %2428 = vmatmul.mubr.f32.gmra.mrb[0].mxu0 %v2427
      %v2429 = vpop.f32.mrb[0].mxu0
      %v2430 = vadd.f32 %v2356, %v2429
      %v2431 = vpop.f32.mrb[0].mxu0
      %2432 = vdwg.mxu0
      %2433 = vmatprep.subr.mxu0 0.0
      %v2434 = vand.u32 %v2205, 4294901760
      %2435 = vmatpush1.msra.mxu0 %v2434
      %2436 = vmatprep.subr.mxu0 0.0
      %2437 = vmatpush1.msra.mxu0 0.0
      %2438 = vmatprep.subr.mxu0 0.0
      %2439 = vmatpush1.msra.mxu0 0.0
      %2440 = vmatprep.subr.mxu0 0.0
      %2441 = vmatpush1.msra.mxu0 0.0
      %2442 = vmatprep.subr.mxu0 0.0
      %2443 = vmatpush1.msra.mxu0 0.0
      %2444 = vmatprep.subr.mxu0 0.0
      %2445 = vmatpush1.msra.mxu0 0.0
      %2446 = vmatprep.subr.mxu0 0.0
      %2447 = vmatpush1.msra.mxu0 0.0
      %2448 = vmatprep.subr.mxu0 0.0
      %2449 = vmatpush1.msra.mxu0 0.0
      %2450 = vmatprep.subr.mxu0 0.0
      %2451 = vmatpush1.msra.mxu0 0.0
      %2452 = vmatprep.subr.mxu0 0.0
      %2453 = vmatpush1.msra.mxu0 0.0
      %2454 = vmatprep.subr.mxu0 0.0
      %2455 = vmatpush1.msra.mxu0 0.0
      %2456 = vmatprep.subr.mxu0 0.0
      %2457 = vmatpush1.msra.mxu0 0.0
      %2458 = vmatprep.subr.mxu0 0.0
      %2459 = vmatpush1.msra.mxu0 0.0
      %2460 = vmatprep.subr.mxu0 0.0
      %2461 = vmatpush1.msra.mxu0 0.0
      %2462 = vmatprep.subr.mxu0 0.0
      %2463 = vmatpush1.msra.mxu0 0.0
      %2464 = vmatprep.subr.mxu0 0.0
      %2465 = vmatpush1.msra.mxu0 0.0
      %2466 = vmatprep.subr.mxu0 0.0
      %2467 = vmatpush1.msra.mxu0 0.0
      %2468 = vmatprep.subr.mxu0 0.0
      %2469 = vmatpush1.msra.mxu0 0.0
      %2470 = vmatprep.subr.mxu0 0.0
      %2471 = vmatpush1.msra.mxu0 0.0
      %2472 = vmatprep.subr.mxu0 0.0
      %2473 = vmatpush1.msra.mxu0 0.0
      %2474 = vmatprep.subr.mxu0 0.0
      %2475 = vmatpush1.msra.mxu0 0.0
      %2476 = vmatprep.subr.mxu0 0.0
      %2477 = vmatpush1.msra.mxu0 0.0
      %2478 = vmatprep.subr.mxu0 0.0
      %2479 = vmatpush1.msra.mxu0 0.0
      %2480 = vmatprep.subr.mxu0 0.0
      %2481 = vmatpush1.msra.mxu0 0.0
      %2482 = vmatprep.subr.mxu0 0.0
      %2483 = vmatpush1.msra.mxu0 0.0
      %2484 = vmatprep.subr.mxu0 0.0
      %2485 = vmatpush1.msra.mxu0 0.0
      %2486 = vmatprep.subr.mxu0 0.0
      %2487 = vmatpush1.msra.mxu0 0.0
      %2488 = vmatprep.subr.mxu0 0.0
      %2489 = vmatpush1.msra.mxu0 0.0
      %2490 = vmatprep.subr.mxu0 0.0
      %2491 = vmatpush1.msra.mxu0 0.0
      %2492 = vmatprep.subr.mxu0 0.0
      %2493 = vmatpush1.msra.mxu0 0.0
      %2494 = vmatprep.subr.mxu0 0.0
      %2495 = vmatpush1.msra.mxu0 0.0
      %2496 = vmatprep.subr.mxu0 0.0
      %2497 = vmatpush1.msra.mxu0 0.0
      %2498 = vmatprep.mubr.f32.mxu0 0.0
      %v2499 = vand.u32 %v2202, 4294901760
      %v2500 = vsub.f32 %v2202, %v2499
      %v2501 = vand.u32 %v2500, 4294901760
      %2502 = vmatmul.mubr.f32.gmra.mrb[0].mxu0 %v2501
      %v2503 = vpop.f32.mrb[0].mxu0
      %v2504 = vadd.f32 %v2430, %v2503
      %v2505 = vpop.f32.mrb[0].mxu0
      %2506 = vdwg.mxu0
      %2507 = vmatprep.subr.mxu0 0.0
      %v2508 = vand.u32 %v2205, 4294901760
      %v2509 = vsub.f32 %v2205, %v2508
      %v2510 = vand.u32 %v2509, 4294901760
      %2511 = vmatpush1.msra.mxu0 %v2510
      %2512 = vmatprep.subr.mxu0 0.0
      %2513 = vmatpush1.msra.mxu0 0.0
      %2514 = vmatprep.subr.mxu0 0.0
      %2515 = vmatpush1.msra.mxu0 0.0
      %2516 = vmatprep.subr.mxu0 0.0
      %2517 = vmatpush1.msra.mxu0 0.0
      %2518 = vmatprep.subr.mxu0 0.0
      %2519 = vmatpush1.msra.mxu0 0.0
      %2520 = vmatprep.subr.mxu0 0.0
      %2521 = vmatpush1.msra.mxu0 0.0
      %2522 = vmatprep.subr.mxu0 0.0
      %2523 = vmatpush1.msra.mxu0 0.0
      %2524 = vmatprep.subr.mxu0 0.0
      %2525 = vmatpush1.msra.mxu0 0.0
      %2526 = vmatprep.subr.mxu0 0.0
      %2527 = vmatpush1.msra.mxu0 0.0
      %2528 = vmatprep.subr.mxu0 0.0
      %2529 = vmatpush1.msra.mxu0 0.0
      %2530 = vmatprep.subr.mxu0 0.0
      %2531 = vmatpush1.msra.mxu0 0.0
      %2532 = vmatprep.subr.mxu0 0.0
      %2533 = vmatpush1.msra.mxu0 0.0
      %2534 = vmatprep.subr.mxu0 0.0
      %2535 = vmatpush1.msra.mxu0 0.0
      %2536 = vmatprep.subr.mxu0 0.0
      %2537 = vmatpush1.msra.mxu0 0.0
      %2538 = vmatprep.subr.mxu0 0.0
      %2539 = vmatpush1.msra.mxu0 0.0
      %2540 = vmatprep.subr.mxu0 0.0
      %2541 = vmatpush1.msra.mxu0 0.0
      %2542 = vmatprep.subr.mxu0 0.0
      %2543 = vmatpush1.msra.mxu0 0.0
      %2544 = vmatprep.subr.mxu0 0.0
      %2545 = vmatpush1.msra.mxu0 0.0
      %2546 = vmatprep.subr.mxu0 0.0
      %2547 = vmatpush1.msra.mxu0 0.0
      %2548 = vmatprep.subr.mxu0 0.0
      %2549 = vmatpush1.msra.mxu0 0.0
      %2550 = vmatprep.subr.mxu0 0.0
      %2551 = vmatpush1.msra.mxu0 0.0
      %2552 = vmatprep.subr.mxu0 0.0
      %2553 = vmatpush1.msra.mxu0 0.0
      %2554 = vmatprep.subr.mxu0 0.0
      %2555 = vmatpush1.msra.mxu0 0.0
      %2556 = vmatprep.subr.mxu0 0.0
      %2557 = vmatpush1.msra.mxu0 0.0
      %2558 = vmatprep.subr.mxu0 0.0
      %2559 = vmatpush1.msra.mxu0 0.0
      %2560 = vmatprep.subr.mxu0 0.0
      %2561 = vmatpush1.msra.mxu0 0.0
      %2562 = vmatprep.subr.mxu0 0.0
      %2563 = vmatpush1.msra.mxu0 0.0
      %2564 = vmatprep.subr.mxu0 0.0
      %2565 = vmatpush1.msra.mxu0 0.0
      %2566 = vmatprep.subr.mxu0 0.0
      %2567 = vmatpush1.msra.mxu0 0.0
      %2568 = vmatprep.subr.mxu0 0.0
      %2569 = vmatpush1.msra.mxu0 0.0
      %2570 = vmatprep.subr.mxu0 0.0
      %2571 = vmatpush1.msra.mxu0 0.0
      %2572 = vmatprep.subr.mxu0 0.0
      %2573 = vmatpush1.msra.mxu0 0.0
      %2574 = vmatprep.mubr.f32.mxu0 0.0
      %v2575 = vand.u32 %v2202, 4294901760
      %2576 = vmatmul.mubr.f32.gmra.mrb[0].mxu0 %v2575
      %v2577 = vpop.f32.mrb[0].mxu0
      %v2578 = vadd.f32 %v2504, %v2577
      %v2579 = vpop.f32.mrb[0].mxu0
      %2580 = vdwg.mxu0
      %2581 = vmatprep.subr.mxu0 0.0
      %v2582 = vand.u32 %v2205, 4294901760
      %2583 = vmatpush1.msra.mxu0 %v2582
      %2584 = vmatprep.subr.mxu0 0.0
      %2585 = vmatpush1.msra.mxu0 0.0
      %2586 = vmatprep.subr.mxu0 0.0
      %2587 = vmatpush1.msra.mxu0 0.0
      %2588 = vmatprep.subr.mxu0 0.0
      %2589 = vmatpush1.msra.mxu0 0.0
      %2590 = vmatprep.subr.mxu0 0.0
      %2591 = vmatpush1.msra.mxu0 0.0
      %2592 = vmatprep.subr.mxu0 0.0
      %2593 = vmatpush1.msra.mxu0 0.0
      %2594 = vmatprep.subr.mxu0 0.0
      %2595 = vmatpush1.msra.mxu0 0.0
      %2596 = vmatprep.subr.mxu0 0.0
      %2597 = vmatpush1.msra.mxu0 0.0
      %2598 = vmatprep.subr.mxu0 0.0
      %2599 = vmatpush1.msra.mxu0 0.0
      %2600 = vmatprep.subr.mxu0 0.0
      %2601 = vmatpush1.msra.mxu0 0.0
      %2602 = vmatprep.subr.mxu0 0.0
      %2603 = vmatpush1.msra.mxu0 0.0
      %2604 = vmatprep.subr.mxu0 0.0
      %2605 = vmatpush1.msra.mxu0 0.0
      %2606 = vmatprep.subr.mxu0 0.0
      %2607 = vmatpush1.msra.mxu0 0.0
      %2608 = vmatprep.subr.mxu0 0.0
      %2609 = vmatpush1.msra.mxu0 0.0
      %2610 = vmatprep.subr.mxu0 0.0
      %2611 = vmatpush1.msra.mxu0 0.0
      %2612 = vmatprep.subr.mxu0 0.0
      %2613 = vmatpush1.msra.mxu0 0.0
      %2614 = vmatprep.subr.mxu0 0.0
      %2615 = vmatpush1.msra.mxu0 0.0
      %2616 = vmatprep.subr.mxu0 0.0
      %2617 = vmatpush1.msra.mxu0 0.0
      %2618 = vmatprep.subr.mxu0 0.0
      %2619 = vmatpush1.msra.mxu0 0.0
      %2620 = vmatprep.subr.mxu0 0.0
      %2621 = vmatpush1.msra.mxu0 0.0
      %2622 = vmatprep.subr.mxu0 0.0
      %2623 = vmatpush1.msra.mxu0 0.0
      %2624 = vmatprep.subr.mxu0 0.0
      %2625 = vmatpush1.msra.mxu0 0.0
      %2626 = vmatprep.subr.mxu0 0.0
      %2627 = vmatpush1.msra.mxu0 0.0
      %2628 = vmatprep.subr.mxu0 0.0
      %2629 = vmatpush1.msra.mxu0 0.0
      %2630 = vmatprep.subr.mxu0 0.0
      %2631 = vmatpush1.msra.mxu0 0.0
      %2632 = vmatprep.subr.mxu0 0.0
      %2633 = vmatpush1.msra.mxu0 0.0
      %2634 = vmatprep.subr.mxu0 0.0
      %2635 = vmatpush1.msra.mxu0 0.0
      %2636 = vmatprep.subr.mxu0 0.0
      %2637 = vmatpush1.msra.mxu0 0.0
      %2638 = vmatprep.subr.mxu0 0.0
      %2639 = vmatpush1.msra.mxu0 0.0
      %2640 = vmatprep.subr.mxu0 0.0
      %2641 = vmatpush1.msra.mxu0 0.0
      %2642 = vmatprep.subr.mxu0 0.0
      %2643 = vmatpush1.msra.mxu0 0.0
      %2644 = vmatprep.subr.mxu0 0.0
      %2645 = vmatpush1.msra.mxu0 0.0
      %2646 = vmatprep.mubr.f32.mxu0 0.0
      %v2647 = vand.u32 %v2202, 4294901760
      %2648 = vmatmul.mubr.f32.gmra.mrb[0].mxu0 %v2647
      %v2649 = vpop.f32.mrb[0].mxu0
      %v2650 = vadd.f32 %v2578, %v2649
      %v2651 = vpop.f32.mrb[0].mxu0
      %2652 = vdwg.mxu0
      %v2654 = vsel %vm2200, %v2199, 0
      %2656 = vmatprep.subr.mxu0 0.0
      %v2657 = vand.u32 %v2205, 4294901760
      %2658 = vmatpush1.msra.mxu0 %v2657
      %2659 = vmatprep.subr.mxu0 0.0
      %2660 = vmatpush1.msra.mxu0 0.0
      %2661 = vmatprep.subr.mxu0 0.0
      %2662 = vmatpush1.msra.mxu0 0.0
      %2663 = vmatprep.subr.mxu0 0.0
      %2664 = vmatpush1.msra.mxu0 0.0
      %2665 = vmatprep.subr.mxu0 0.0
      %2666 = vmatpush1.msra.mxu0 0.0
      %2667 = vmatprep.subr.mxu0 0.0
      %2668 = vmatpush1.msra.mxu0 0.0
      %2669 = vmatprep.subr.mxu0 0.0
      %2670 = vmatpush1.msra.mxu0 0.0
      %2671 = vmatprep.subr.mxu0 0.0
      %2672 = vmatpush1.msra.mxu0 0.0
      %2673 = vmatprep.subr.mxu0 0.0
      %2674 = vmatpush1.msra.mxu0 0.0
      %2675 = vmatprep.subr.mxu0 0.0
      %2676 = vmatpush1.msra.mxu0 0.0
      %2677 = vmatprep.subr.mxu0 0.0
      %2678 = vmatpush1.msra.mxu0 0.0
      %2679 = vmatprep.subr.mxu0 0.0
      %2680 = vmatpush1.msra.mxu0 0.0
      %2681 = vmatprep.subr.mxu0 0.0
      %2682 = vmatpush1.msra.mxu0 0.0
      %2683 = vmatprep.subr.mxu0 0.0
      %2684 = vmatpush1.msra.mxu0 0.0
      %2685 = vmatprep.subr.mxu0 0.0
      %2686 = vmatpush1.msra.mxu0 0.0
      %2687 = vmatprep.subr.mxu0 0.0
      %2688 = vmatpush1.msra.mxu0 0.0
      %2689 = vmatprep.subr.mxu0 0.0
      %2690 = vmatpush1.msra.mxu0 0.0
      %2691 = vmatprep.subr.mxu0 0.0
      %2692 = vmatpush1.msra.mxu0 0.0
      %2693 = vmatprep.subr.mxu0 0.0
      %2694 = vmatpush1.msra.mxu0 0.0
      %2695 = vmatprep.subr.mxu0 0.0
      %2696 = vmatpush1.msra.mxu0 0.0
      %2697 = vmatprep.subr.mxu0 0.0
      %2698 = vmatpush1.msra.mxu0 0.0
      %2699 = vmatprep.subr.mxu0 0.0
      %2700 = vmatpush1.msra.mxu0 0.0
      %2701 = vmatprep.subr.mxu0 0.0
      %2702 = vmatpush1.msra.mxu0 0.0
      %2703 = vmatprep.subr.mxu0 0.0
      %2704 = vmatpush1.msra.mxu0 0.0
      %2705 = vmatprep.subr.mxu0 0.0
      %2706 = vmatpush1.msra.mxu0 0.0
      %2707 = vmatprep.subr.mxu0 0.0
      %2708 = vmatpush1.msra.mxu0 0.0
      %2709 = vmatprep.subr.mxu0 0.0
      %2710 = vmatpush1.msra.mxu0 0.0
      %2711 = vmatprep.subr.mxu0 0.0
      %2712 = vmatpush1.msra.mxu0 0.0
      %2713 = vmatprep.subr.mxu0 0.0
      %2714 = vmatpush1.msra.mxu0 0.0
      %2715 = vmatprep.subr.mxu0 0.0
      %2716 = vmatpush1.msra.mxu0 0.0
      %2717 = vmatprep.subr.mxu0 0.0
      %2718 = vmatpush1.msra.mxu0 0.0
      %2719 = vmatprep.subr.mxu0 0.0
      %2720 = vmatpush1.msra.mxu0 0.0
      %2721 = vmatprep.mubr.f32.mxu0 0.0
      %v2722 = vand.u32 %v2654, 4294901760
      %v2723 = vsub.f32 %v2654, %v2722
      %v2724 = vand.u32 %v2723, 4294901760
      %v2725 = vsub.f32 %v2723, %v2724
      %v2726 = vand.u32 %v2725, 4294901760
      %2727 = vmatmul.mubr.f32.gmra.mrb[0].mxu0 %v2726
      %v2728 = vpop.f32.mrb[0].mxu0
      %v2729 = vadd.f32 0.0, %v2728
      %v2730 = vpop.f32.mrb[0].mxu0
      %2731 = vdwg.mxu0
      %2732 = vmatprep.subr.mxu0 0.0
      %v2733 = vand.u32 %v2205, 4294901760
      %v2734 = vsub.f32 %v2205, %v2733
      %v2735 = vand.u32 %v2734, 4294901760
      %v2736 = vsub.f32 %v2734, %v2735
      %v2737 = vand.u32 %v2736, 4294901760
      %2738 = vmatpush1.msra.mxu0 %v2737
      %2739 = vmatprep.subr.mxu0 0.0
      %2740 = vmatpush1.msra.mxu0 0.0
      %2741 = vmatprep.subr.mxu0 0.0
      %2742 = vmatpush1.msra.mxu0 0.0
      %2743 = vmatprep.subr.mxu0 0.0
      %2744 = vmatpush1.msra.mxu0 0.0
      %2745 = vmatprep.subr.mxu0 0.0
      %2746 = vmatpush1.msra.mxu0 0.0
      %2747 = vmatprep.subr.mxu0 0.0
      %2748 = vmatpush1.msra.mxu0 0.0
      %2749 = vmatprep.subr.mxu0 0.0
      %2750 = vmatpush1.msra.mxu0 0.0
      %2751 = vmatprep.subr.mxu0 0.0
      %2752 = vmatpush1.msra.mxu0 0.0
      %2753 = vmatprep.subr.mxu0 0.0
      %2754 = vmatpush1.msra.mxu0 0.0
      %2755 = vmatprep.subr.mxu0 0.0
      %2756 = vmatpush1.msra.mxu0 0.0
      %2757 = vmatprep.subr.mxu0 0.0
      %2758 = vmatpush1.msra.mxu0 0.0
      %2759 = vmatprep.subr.mxu0 0.0
      %2760 = vmatpush1.msra.mxu0 0.0
      %2761 = vmatprep.subr.mxu0 0.0
      %2762 = vmatpush1.msra.mxu0 0.0
      %2763 = vmatprep.subr.mxu0 0.0
      %2764 = vmatpush1.msra.mxu0 0.0
      %2765 = vmatprep.subr.mxu0 0.0
      %2766 = vmatpush1.msra.mxu0 0.0
      %2767 = vmatprep.subr.mxu0 0.0
      %2768 = vmatpush1.msra.mxu0 0.0
      %2769 = vmatprep.subr.mxu0 0.0
      %2770 = vmatpush1.msra.mxu0 0.0
      %2771 = vmatprep.subr.mxu0 0.0
      %2772 = vmatpush1.msra.mxu0 0.0
      %2773 = vmatprep.subr.mxu0 0.0
      %2774 = vmatpush1.msra.mxu0 0.0
      %2775 = vmatprep.subr.mxu0 0.0
      %2776 = vmatpush1.msra.mxu0 0.0
      %2777 = vmatprep.subr.mxu0 0.0
      %2778 = vmatpush1.msra.mxu0 0.0
      %2779 = vmatprep.subr.mxu0 0.0
      %2780 = vmatpush1.msra.mxu0 0.0
      %2781 = vmatprep.subr.mxu0 0.0
      %2782 = vmatpush1.msra.mxu0 0.0
      %2783 = vmatprep.subr.mxu0 0.0
      %2784 = vmatpush1.msra.mxu0 0.0
      %2785 = vmatprep.subr.mxu0 0.0
      %2786 = vmatpush1.msra.mxu0 0.0
      %2787 = vmatprep.subr.mxu0 0.0
      %2788 = vmatpush1.msra.mxu0 0.0
      %2789 = vmatprep.subr.mxu0 0.0
      %2790 = vmatpush1.msra.mxu0 0.0
      %2791 = vmatprep.subr.mxu0 0.0
      %2792 = vmatpush1.msra.mxu0 0.0
      %2793 = vmatprep.subr.mxu0 0.0
      %2794 = vmatpush1.msra.mxu0 0.0
      %2795 = vmatprep.subr.mxu0 0.0
      %2796 = vmatpush1.msra.mxu0 0.0
      %2797 = vmatprep.subr.mxu0 0.0
      %2798 = vmatpush1.msra.mxu0 0.0
      %2799 = vmatprep.subr.mxu0 0.0
      %2800 = vmatpush1.msra.mxu0 0.0
      %2801 = vmatprep.mubr.f32.mxu0 0.0
      %v2802 = vand.u32 %v2654, 4294901760
      %2803 = vmatmul.mubr.f32.gmra.mrb[0].mxu0 %v2802
      %v2804 = vpop.f32.mrb[0].mxu0
      %v2805 = vadd.f32 %v2729, %v2804
      %v2806 = vpop.f32.mrb[0].mxu0
      %2807 = vdwg.mxu0
      %2808 = vmatprep.subr.mxu0 0.0
      %v2809 = vand.u32 %v2205, 4294901760
      %v2810 = vsub.f32 %v2205, %v2809
      %2811 = vmatpush1.msra.mxu0 %v2810
      %2812 = vmatprep.subr.mxu0 0.0
      %2813 = vmatpush1.msra.mxu0 0.0
      %2814 = vmatprep.subr.mxu0 0.0
      %2815 = vmatpush1.msra.mxu0 0.0
      %2816 = vmatprep.subr.mxu0 0.0
      %2817 = vmatpush1.msra.mxu0 0.0
      %2818 = vmatprep.subr.mxu0 0.0
      %2819 = vmatpush1.msra.mxu0 0.0
      %2820 = vmatprep.subr.mxu0 0.0
      %2821 = vmatpush1.msra.mxu0 0.0
      %2822 = vmatprep.subr.mxu0 0.0
      %2823 = vmatpush1.msra.mxu0 0.0
      %2824 = vmatprep.subr.mxu0 0.0
      %2825 = vmatpush1.msra.mxu0 0.0
      %2826 = vmatprep.subr.mxu0 0.0
      %2827 = vmatpush1.msra.mxu0 0.0
      %2828 = vmatprep.subr.mxu0 0.0
      %2829 = vmatpush1.msra.mxu0 0.0
      %2830 = vmatprep.subr.mxu0 0.0
      %2831 = vmatpush1.msra.mxu0 0.0
      %2832 = vmatprep.subr.mxu0 0.0
      %2833 = vmatpush1.msra.mxu0 0.0
      %2834 = vmatprep.subr.mxu0 0.0
      %2835 = vmatpush1.msra.mxu0 0.0
      %2836 = vmatprep.subr.mxu0 0.0
      %2837 = vmatpush1.msra.mxu0 0.0
      %2838 = vmatprep.subr.mxu0 0.0
      %2839 = vmatpush1.msra.mxu0 0.0
      %2840 = vmatprep.subr.mxu0 0.0
      %2841 = vmatpush1.msra.mxu0 0.0
      %2842 = vmatprep.subr.mxu0 0.0
      %2843 = vmatpush1.msra.mxu0 0.0
      %2844 = vmatprep.subr.mxu0 0.0
      %2845 = vmatpush1.msra.mxu0 0.0
      %2846 = vmatprep.subr.mxu0 0.0
      %2847 = vmatpush1.msra.mxu0 0.0
      %2848 = vmatprep.subr.mxu0 0.0
      %2849 = vmatpush1.msra.mxu0 0.0
      %2850 = vmatprep.subr.mxu0 0.0
      %2851 = vmatpush1.msra.mxu0 0.0
      %2852 = vmatprep.subr.mxu0 0.0
      %2853 = vmatpush1.msra.mxu0 0.0
      %2854 = vmatprep.subr.mxu0 0.0
      %2855 = vmatpush1.msra.mxu0 0.0
      %2856 = vmatprep.subr.mxu0 0.0
      %2857 = vmatpush1.msra.mxu0 0.0
      %2858 = vmatprep.subr.mxu0 0.0
      %2859 = vmatpush1.msra.mxu0 0.0
      %2860 = vmatprep.subr.mxu0 0.0
      %2861 = vmatpush1.msra.mxu0 0.0
      %2862 = vmatprep.subr.mxu0 0.0
      %2863 = vmatpush1.msra.mxu0 0.0
      %2864 = vmatprep.subr.mxu0 0.0
      %2865 = vmatpush1.msra.mxu0 0.0
      %2866 = vmatprep.subr.mxu0 0.0
      %2867 = vmatpush1.msra.mxu0 0.0
      %2868 = vmatprep.subr.mxu0 0.0
      %2869 = vmatpush1.msra.mxu0 0.0
      %2870 = vmatprep.subr.mxu0 0.0
      %2871 = vmatpush1.msra.mxu0 0.0
      %2872 = vmatprep.subr.mxu0 0.0
      %2873 = vmatpush1.msra.mxu0 0.0
      %2874 = vmatprep.mubr.f32.mxu0 0.0
      %v2875 = vand.u32 %v2654, 4294901760
      %v2876 = vsub.f32 %v2654, %v2875
      %2877 = vmatmul.mubr.f32.gmra.mrb[0].mxu0 %v2876
      %v2878 = vpop.f32.mrb[0].mxu0
      %v2879 = vadd.f32 %v2805, %v2878
      %v2880 = vpop.f32.mrb[0].mxu0
      %2881 = vdwg.mxu0
      %2882 = vmatprep.subr.mxu0 0.0
      %v2883 = vand.u32 %v2205, 4294901760
      %2884 = vmatpush1.msra.mxu0 %v2883
      %2885 = vmatprep.subr.mxu0 0.0
      %2886 = vmatpush1.msra.mxu0 0.0
      %2887 = vmatprep.subr.mxu0 0.0
      %2888 = vmatpush1.msra.mxu0 0.0
      %2889 = vmatprep.subr.mxu0 0.0
      %2890 = vmatpush1.msra.mxu0 0.0
      %2891 = vmatprep.subr.mxu0 0.0
      %2892 = vmatpush1.msra.mxu0 0.0
      %2893 = vmatprep.subr.mxu0 0.0
      %2894 = vmatpush1.msra.mxu0 0.0
      %2895 = vmatprep.subr.mxu0 0.0
      %2896 = vmatpush1.msra.mxu0 0.0
      %2897 = vmatprep.subr.mxu0 0.0
      %2898 = vmatpush1.msra.mxu0 0.0
      %2899 = vmatprep.subr.mxu0 0.0
      %2900 = vmatpush1.msra.mxu0 0.0
      %2901 = vmatprep.subr.mxu0 0.0
      %2902 = vmatpush1.msra.mxu0 0.0
      %2903 = vmatprep.subr.mxu0 0.0
      %2904 = vmatpush1.msra.mxu0 0.0
      %2905 = vmatprep.subr.mxu0 0.0
      %2906 = vmatpush1.msra.mxu0 0.0
      %2907 = vmatprep.subr.mxu0 0.0
      %2908 = vmatpush1.msra.mxu0 0.0
      %2909 = vmatprep.subr.mxu0 0.0
      %2910 = vmatpush1.msra.mxu0 0.0
      %2911 = vmatprep.subr.mxu0 0.0
      %2912 = vmatpush1.msra.mxu0 0.0
      %2913 = vmatprep.subr.mxu0 0.0
      %2914 = vmatpush1.msra.mxu0 0.0
      %2915 = vmatprep.subr.mxu0 0.0
      %2916 = vmatpush1.msra.mxu0 0.0
      %2917 = vmatprep.subr.mxu0 0.0
      %2918 = vmatpush1.msra.mxu0 0.0
      %2919 = vmatprep.subr.mxu0 0.0
      %2920 = vmatpush1.msra.mxu0 0.0
      %2921 = vmatprep.subr.mxu0 0.0
      %2922 = vmatpush1.msra.mxu0 0.0
      %2923 = vmatprep.subr.mxu0 0.0
      %2924 = vmatpush1.msra.mxu0 0.0
      %2925 = vmatprep.subr.mxu0 0.0
      %2926 = vmatpush1.msra.mxu0 0.0
      %2927 = vmatprep.subr.mxu0 0.0
      %2928 = vmatpush1.msra.mxu0 0.0
      %2929 = vmatprep.subr.mxu0 0.0
      %2930 = vmatpush1.msra.mxu0 0.0
      %2931 = vmatprep.subr.mxu0 0.0
      %2932 = vmatpush1.msra.mxu0 0.0
      %2933 = vmatprep.subr.mxu0 0.0
      %2934 = vmatpush1.msra.mxu0 0.0
      %2935 = vmatprep.subr.mxu0 0.0
      %2936 = vmatpush1.msra.mxu0 0.0
      %2937 = vmatprep.subr.mxu0 0.0
      %2938 = vmatpush1.msra.mxu0 0.0
      %2939 = vmatprep.subr.mxu0 0.0
      %2940 = vmatpush1.msra.mxu0 0.0
      %2941 = vmatprep.subr.mxu0 0.0
      %2942 = vmatpush1.msra.mxu0 0.0
      %2943 = vmatprep.subr.mxu0 0.0
      %2944 = vmatpush1.msra.mxu0 0.0
      %2945 = vmatprep.subr.mxu0 0.0
      %2946 = vmatpush1.msra.mxu0 0.0
      %2947 = vmatprep.mubr.f32.mxu0 0.0
      %v2948 = vand.u32 %v2654, 4294901760
      %v2949 = vsub.f32 %v2654, %v2948
      %v2950 = vand.u32 %v2949, 4294901760
      %2951 = vmatmul.mubr.f32.gmra.mrb[0].mxu0 %v2950
      %v2952 = vpop.f32.mrb[0].mxu0
      %v2953 = vadd.f32 %v2879, %v2952
      %v2954 = vpop.f32.mrb[0].mxu0
      %2955 = vdwg.mxu0
      %2956 = vmatprep.subr.mxu0 0.0
      %v2957 = vand.u32 %v2205, 4294901760
      %v2958 = vsub.f32 %v2205, %v2957
      %v2959 = vand.u32 %v2958, 4294901760
      %2960 = vmatpush1.msra.mxu0 %v2959
      %2961 = vmatprep.subr.mxu0 0.0
      %2962 = vmatpush1.msra.mxu0 0.0
      %2963 = vmatprep.subr.mxu0 0.0
      %2964 = vmatpush1.msra.mxu0 0.0
      %2965 = vmatprep.subr.mxu0 0.0
      %2966 = vmatpush1.msra.mxu0 0.0
      %2967 = vmatprep.subr.mxu0 0.0
      %2968 = vmatpush1.msra.mxu0 0.0
      %2969 = vmatprep.subr.mxu0 0.0
      %2970 = vmatpush1.msra.mxu0 0.0
      %2971 = vmatprep.subr.mxu0 0.0
      %2972 = vmatpush1.msra.mxu0 0.0
      %2973 = vmatprep.subr.mxu0 0.0
      %2974 = vmatpush1.msra.mxu0 0.0
      %2975 = vmatprep.subr.mxu0 0.0
      %2976 = vmatpush1.msra.mxu0 0.0
      %2977 = vmatprep.subr.mxu0 0.0
      %2978 = vmatpush1.msra.mxu0 0.0
      %2979 = vmatprep.subr.mxu0 0.0
      %2980 = vmatpush1.msra.mxu0 0.0
      %2981 = vmatprep.subr.mxu0 0.0
      %2982 = vmatpush1.msra.mxu0 0.0
      %2983 = vmatprep.subr.mxu0 0.0
      %2984 = vmatpush1.msra.mxu0 0.0
      %2985 = vmatprep.subr.mxu0 0.0
      %2986 = vmatpush1.msra.mxu0 0.0
      %2987 = vmatprep.subr.mxu0 0.0
      %2988 = vmatpush1.msra.mxu0 0.0
      %2989 = vmatprep.subr.mxu0 0.0
      %2990 = vmatpush1.msra.mxu0 0.0
      %2991 = vmatprep.subr.mxu0 0.0
      %2992 = vmatpush1.msra.mxu0 0.0
      %2993 = vmatprep.subr.mxu0 0.0
      %2994 = vmatpush1.msra.mxu0 0.0
      %2995 = vmatprep.subr.mxu0 0.0
      %2996 = vmatpush1.msra.mxu0 0.0
      %2997 = vmatprep.subr.mxu0 0.0
      %2998 = vmatpush1.msra.mxu0 0.0
      %2999 = vmatprep.subr.mxu0 0.0
      %3000 = vmatpush1.msra.mxu0 0.0
      %3001 = vmatprep.subr.mxu0 0.0
      %3002 = vmatpush1.msra.mxu0 0.0
      %3003 = vmatprep.subr.mxu0 0.0
      %3004 = vmatpush1.msra.mxu0 0.0
      %3005 = vmatprep.subr.mxu0 0.0
      %3006 = vmatpush1.msra.mxu0 0.0
      %3007 = vmatprep.subr.mxu0 0.0
      %3008 = vmatpush1.msra.mxu0 0.0
      %3009 = vmatprep.subr.mxu0 0.0
      %3010 = vmatpush1.msra.mxu0 0.0
      %3011 = vmatprep.subr.mxu0 0.0
      %3012 = vmatpush1.msra.mxu0 0.0
      %3013 = vmatprep.subr.mxu0 0.0
      %3014 = vmatpush1.msra.mxu0 0.0
      %3015 = vmatprep.subr.mxu0 0.0
      %3016 = vmatpush1.msra.mxu0 0.0
      %3017 = vmatprep.subr.mxu0 0.0
      %3018 = vmatpush1.msra.mxu0 0.0
      %3019 = vmatprep.subr.mxu0 0.0
      %3020 = vmatpush1.msra.mxu0 0.0
      %3021 = vmatprep.subr.mxu0 0.0
      %3022 = vmatpush1.msra.mxu0 0.0
      %3023 = vmatprep.mubr.f32.mxu0 0.0
      %v3024 = vand.u32 %v2654, 4294901760
      %3025 = vmatmul.mubr.f32.gmra.mrb[0].mxu0 %v3024
      %v3026 = vpop.f32.mrb[0].mxu0
      %v3027 = vadd.f32 %v2953, %v3026
      %v3028 = vpop.f32.mrb[0].mxu0
      %3029 = vdwg.mxu0
      %3030 = vmatprep.subr.mxu0 0.0
      %v3031 = vand.u32 %v2205, 4294901760
      %3032 = vmatpush1.msra.mxu0 %v3031
      %3033 = vmatprep.subr.mxu0 0.0
      %3034 = vmatpush1.msra.mxu0 0.0
      %3035 = vmatprep.subr.mxu0 0.0
      %3036 = vmatpush1.msra.mxu0 0.0
      %3037 = vmatprep.subr.mxu0 0.0
      %3038 = vmatpush1.msra.mxu0 0.0
      %3039 = vmatprep.subr.mxu0 0.0
      %3040 = vmatpush1.msra.mxu0 0.0
      %3041 = vmatprep.subr.mxu0 0.0
      %3042 = vmatpush1.msra.mxu0 0.0
      %3043 = vmatprep.subr.mxu0 0.0
      %3044 = vmatpush1.msra.mxu0 0.0
      %3045 = vmatprep.subr.mxu0 0.0
      %3046 = vmatpush1.msra.mxu0 0.0
      %3047 = vmatprep.subr.mxu0 0.0
      %3048 = vmatpush1.msra.mxu0 0.0
      %3049 = vmatprep.subr.mxu0 0.0
      %3050 = vmatpush1.msra.mxu0 0.0
      %3051 = vmatprep.subr.mxu0 0.0
      %3052 = vmatpush1.msra.mxu0 0.0
      %3053 = vmatprep.subr.mxu0 0.0
      %3054 = vmatpush1.msra.mxu0 0.0
      %3055 = vmatprep.subr.mxu0 0.0
      %3056 = vmatpush1.msra.mxu0 0.0
      %3057 = vmatprep.subr.mxu0 0.0
      %3058 = vmatpush1.msra.mxu0 0.0
      %3059 = vmatprep.subr.mxu0 0.0
      %3060 = vmatpush1.msra.mxu0 0.0
      %3061 = vmatprep.subr.mxu0 0.0
      %3062 = vmatpush1.msra.mxu0 0.0
      %3063 = vmatprep.subr.mxu0 0.0
      %3064 = vmatpush1.msra.mxu0 0.0
      %3065 = vmatprep.subr.mxu0 0.0
      %3066 = vmatpush1.msra.mxu0 0.0
      %3067 = vmatprep.subr.mxu0 0.0
      %3068 = vmatpush1.msra.mxu0 0.0
      %3069 = vmatprep.subr.mxu0 0.0
      %3070 = vmatpush1.msra.mxu0 0.0
      %3071 = vmatprep.subr.mxu0 0.0
      %3072 = vmatpush1.msra.mxu0 0.0
      %3073 = vmatprep.subr.mxu0 0.0
      %3074 = vmatpush1.msra.mxu0 0.0
      %3075 = vmatprep.subr.mxu0 0.0
      %3076 = vmatpush1.msra.mxu0 0.0
      %3077 = vmatprep.subr.mxu0 0.0
      %3078 = vmatpush1.msra.mxu0 0.0
      %3079 = vmatprep.subr.mxu0 0.0
      %3080 = vmatpush1.msra.mxu0 0.0
      %3081 = vmatprep.subr.mxu0 0.0
      %3082 = vmatpush1.msra.mxu0 0.0
      %3083 = vmatprep.subr.mxu0 0.0
      %3084 = vmatpush1.msra.mxu0 0.0
      %3085 = vmatprep.subr.mxu0 0.0
      %3086 = vmatpush1.msra.mxu0 0.0
      %3087 = vmatprep.subr.mxu0 0.0
      %3088 = vmatpush1.msra.mxu0 0.0
      %3089 = vmatprep.subr.mxu0 0.0
      %3090 = vmatpush1.msra.mxu0 0.0
      %3091 = vmatprep.subr.mxu0 0.0
      %3092 = vmatpush1.msra.mxu0 0.0
      %3093 = vmatprep.subr.mxu0 0.0
      %3094 = vmatpush1.msra.mxu0 0.0
      %3095 = vmatprep.mubr.f32.mxu0 0.0
      %v3096 = vand.u32 %v2654, 4294901760
      %3097 = vmatmul.mubr.f32.gmra.mrb[0].mxu0 %v3096
      %v3098 = vpop.f32.mrb[0].mxu0
      %v3099 = vadd.f32 %v3027, %v3098
      %v3100 = vpop.f32.mrb[0].mxu0
      %3101 = vdwg.mxu0
      %v3102 = vlaneseq
      %v3103 = vshrl.u32 %v3102, 7
      %v3104 = vsub.s32 0, %v3103
      %v3105 = vrot.slane %v2650, %v3104
      %v3106 = vsub.f32 %v591, %v3105
      %v3107 = vsub.f32 %v592, %v3105
      %v3108 = vsub.f32 %v593, %v3105
      %v3109 = vsub.f32 %v594, %v3105
      %v3110 = vsub.f32 %v595, %v3105
      %v3111 = vsub.f32 %v596, %v3105
      %v3112 = vsub.f32 %v597, %v3105
      %v3113 = vsub.f32 %v598, %v3105
      %v3114 = vsub.f32 %v599, %v3105
      %v3115 = vsub.f32 %v600, %v3105
      %v3116 = vsub.f32 %v601, %v3105
      %v3117 = vsub.f32 %v602, %v3105
      %v3118 = vsub.f32 %v603, %v3105
      %v3119 = vsub.f32 %v604, %v3105
      %v3120 = vsub.f32 %v605, %v3105
      %v3121 = vsub.f32 %v606, %v3105
      %v3122 = vsub.f32 %v607, %v3105
      %v3123 = vsub.f32 %v608, %v3105
      %v3124 = vsub.f32 %v609, %v3105
      %v3125 = vsub.f32 %v610, %v3105
      %v3126 = vsub.f32 %v611, %v3105
      %v3127 = vsub.f32 %v612, %v3105
      %v3128 = vsub.f32 %v613, %v3105
      %v3129 = vsub.f32 %v614, %v3105
      %v3130 = vsub.f32 %v615, %v3105
      %v3131 = vsub.f32 %v616, %v3105
      %v3132 = vsub.f32 %v617, %v3105
      %v3133 = vsub.f32 %v618, %v3105
      %v3134 = vsub.f32 %v619, %v3105
      %v3135 = vsub.f32 %v620, %v3105
      %v3136 = vsub.f32 %v621, %v3105
      %v3137 = vsub.f32 %v622, %v3105
      %v3138 = vlaneseq
      %v3139 = vshrl.u32 %v3138, 7
      %v3140 = vsub.s32 0, %v3139
      %v3141 = vrot.slane %v3099, %v3140
      %v3142 = vmul.f32 %v3106, %v3141
      %v3143 = vmul.f32 %v3107, %v3141
      %v3144 = vmul.f32 %v3108, %v3141
      %v3145 = vmul.f32 %v3109, %v3141
      %v3146 = vmul.f32 %v3110, %v3141
      %v3147 = vmul.f32 %v3111, %v3141
      %v3148 = vmul.f32 %v3112, %v3141
      %v3149 = vmul.f32 %v3113, %v3141
      %v3150 = vmul.f32 %v3114, %v3141
      %v3151 = vmul.f32 %v3115, %v3141
      %v3152 = vmul.f32 %v3116, %v3141
      %v3153 = vmul.f32 %v3117, %v3141
      %v3154 = vmul.f32 %v3118, %v3141
      %v3155 = vmul.f32 %v3119, %v3141
      %v3156 = vmul.f32 %v3120, %v3141
      %v3157 = vmul.f32 %v3121, %v3141
      %v3158 = vmul.f32 %v3122, %v3141
      %v3159 = vmul.f32 %v3123, %v3141
      %v3160 = vmul.f32 %v3124, %v3141
      %v3161 = vmul.f32 %v3125, %v3141
      %v3162 = vmul.f32 %v3126, %v3141
      %v3163 = vmul.f32 %v3127, %v3141
      %v3164 = vmul.f32 %v3128, %v3141
      %v3165 = vmul.f32 %v3129, %v3141
      %v3166 = vmul.f32 %v3130, %v3141
      %v3167 = vmul.f32 %v3131, %v3141
      %v3168 = vmul.f32 %v3132, %v3141
      %v3169 = vmul.f32 %v3133, %v3141
      %v3170 = vmul.f32 %v3134, %v3141
      %v3171 = vmul.f32 %v3135, %v3141
      %v3172 = vmul.f32 %v3136, %v3141
      %v3173 = vmul.f32 %v3137, %v3141
      %v3175 = vlaneseq
      %v3176 = vshrl.u32 %v3175, 7
      %v3177 = vsub.s32 0, %v3176
      %v3178 = vrot.slane %v1118, %v3177
      %v3180 = vmul.f32 %v3142, %v3178
      %v3181 = vmul.f32 %v3143, %v3178
      %v3182 = vmul.f32 %v3144, %v3178
      %v3183 = vmul.f32 %v3145, %v3178
      %v3184 = vmul.f32 %v3146, %v3178
      %v3185 = vmul.f32 %v3147, %v3178
      %v3186 = vmul.f32 %v3148, %v3178
      %v3187 = vmul.f32 %v3149, %v3178
      %v3188 = vmul.f32 %v3150, %v3178
      %v3189 = vmul.f32 %v3151, %v3178
      %v3190 = vmul.f32 %v3152, %v3178
      %v3191 = vmul.f32 %v3153, %v3178
      %v3192 = vmul.f32 %v3154, %v3178
      %v3193 = vmul.f32 %v3155, %v3178
      %v3194 = vmul.f32 %v3156, %v3178
      %v3195 = vmul.f32 %v3157, %v3178
      %v3196 = vmul.f32 %v3158, %v3178
      %v3197 = vmul.f32 %v3159, %v3178
      %v3198 = vmul.f32 %v3160, %v3178
      %v3199 = vmul.f32 %v3161, %v3178
      %v3200 = vmul.f32 %v3162, %v3178
      %v3201 = vmul.f32 %v3163, %v3178
      %v3202 = vmul.f32 %v3164, %v3178
      %v3203 = vmul.f32 %v3165, %v3178
      %v3204 = vmul.f32 %v3166, %v3178
      %v3205 = vmul.f32 %v3167, %v3178
      %v3206 = vmul.f32 %v3168, %v3178
      %v3207 = vmul.f32 %v3169, %v3178
      %v3208 = vmul.f32 %v3170, %v3178
      %v3209 = vmul.f32 %v3171, %v3178
      %v3210 = vmul.f32 %v3172, %v3178
      %v3211 = vmul.f32 %v3173, %v3178
      %v3213 = vlaneseq
      %v3214 = vshrl.u32 %v3213, 7
      %v3215 = vsub.s32 0, %v3214
      %v3216 = vrot.slane %v1119, %v3215
      %v3218 = vadd.f32 %v3180, %v3216
      %v3219 = vadd.f32 %v3181, %v3216
      %v3220 = vadd.f32 %v3182, %v3216
      %v3221 = vadd.f32 %v3183, %v3216
      %v3222 = vadd.f32 %v3184, %v3216
      %v3223 = vadd.f32 %v3185, %v3216
      %v3224 = vadd.f32 %v3186, %v3216
      %v3225 = vadd.f32 %v3187, %v3216
      %v3226 = vadd.f32 %v3188, %v3216
      %v3227 = vadd.f32 %v3189, %v3216
      %v3228 = vadd.f32 %v3190, %v3216
      %v3229 = vadd.f32 %v3191, %v3216
      %v3230 = vadd.f32 %v3192, %v3216
      %v3231 = vadd.f32 %v3193, %v3216
      %v3232 = vadd.f32 %v3194, %v3216
      %v3233 = vadd.f32 %v3195, %v3216
      %v3234 = vadd.f32 %v3196, %v3216
      %v3235 = vadd.f32 %v3197, %v3216
      %v3236 = vadd.f32 %v3198, %v3216
      %v3237 = vadd.f32 %v3199, %v3216
      %v3238 = vadd.f32 %v3200, %v3216
      %v3239 = vadd.f32 %v3201, %v3216
      %v3240 = vadd.f32 %v3202, %v3216
      %v3241 = vadd.f32 %v3203, %v3216
      %v3242 = vadd.f32 %v3204, %v3216
      %v3243 = vadd.f32 %v3205, %v3216
      %v3244 = vadd.f32 %v3206, %v3216
      %v3245 = vadd.f32 %v3207, %v3216
      %v3246 = vadd.f32 %v3208, %v3216
      %v3247 = vadd.f32 %v3209, %v3216
      %v3248 = vadd.f32 %v3210, %v3216
      %v3249 = vadd.f32 %v3211, %v3216
      %v3250 = vxor.u32 %v3218, 2147483648
      %v3251 = vxor.u32 %v3219, 2147483648
      %v3252 = vxor.u32 %v3220, 2147483648
      %v3253 = vxor.u32 %v3221, 2147483648
      %v3254 = vxor.u32 %v3222, 2147483648
      %v3255 = vxor.u32 %v3223, 2147483648
      %v3256 = vxor.u32 %v3224, 2147483648
      %v3257 = vxor.u32 %v3225, 2147483648
      %v3258 = vxor.u32 %v3226, 2147483648
      %v3259 = vxor.u32 %v3227, 2147483648
      %v3260 = vxor.u32 %v3228, 2147483648
      %v3261 = vxor.u32 %v3229, 2147483648
      %v3262 = vxor.u32 %v3230, 2147483648
      %v3263 = vxor.u32 %v3231, 2147483648
      %v3264 = vxor.u32 %v3232, 2147483648
      %v3265 = vxor.u32 %v3233, 2147483648
      %v3266 = vxor.u32 %v3234, 2147483648
      %v3267 = vxor.u32 %v3235, 2147483648
      %v3268 = vxor.u32 %v3236, 2147483648
      %v3269 = vxor.u32 %v3237, 2147483648
      %v3270 = vxor.u32 %v3238, 2147483648
      %v3271 = vxor.u32 %v3239, 2147483648
      %v3272 = vxor.u32 %v3240, 2147483648
      %v3273 = vxor.u32 %v3241, 2147483648
      %v3274 = vxor.u32 %v3242, 2147483648
      %v3275 = vxor.u32 %v3243, 2147483648
      %v3276 = vxor.u32 %v3244, 2147483648
      %v3277 = vxor.u32 %v3245, 2147483648
      %v3278 = vxor.u32 %v3246, 2147483648
      %v3279 = vxor.u32 %v3247, 2147483648
      %v3280 = vxor.u32 %v3248, 2147483648
      %v3281 = vxor.u32 %v3249, 2147483648
      %v3282 = vmul.f32 %v3250, 1.442695
      %v3283 = vpow.pop %v3282
      %v3284 = vmul.f32 %v3251, 1.442695
      %v3285 = vpow.pop %v3284
      %v3286 = vmul.f32 %v3252, 1.442695
      %v3287 = vpow.pop %v3286
      %v3288 = vmul.f32 %v3253, 1.442695
      %v3289 = vpow.pop %v3288
      %v3290 = vmul.f32 %v3254, 1.442695
      %v3291 = vpow.pop %v3290
      %v3292 = vmul.f32 %v3255, 1.442695
      %v3293 = vpow.pop %v3292
      %v3294 = vmul.f32 %v3256, 1.442695
      %v3295 = vpow.pop %v3294
      %v3296 = vmul.f32 %v3257, 1.442695
      %v3297 = vpow.pop %v3296
      %v3298 = vmul.f32 %v3258, 1.442695
      %v3299 = vpow.pop %v3298
      %v3300 = vmul.f32 %v3259, 1.442695
      %v3301 = vpow.pop %v3300
      %v3302 = vmul.f32 %v3260, 1.442695
      %v3303 = vpow.pop %v3302
      %v3304 = vmul.f32 %v3261, 1.442695
      %v3305 = vpow.pop %v3304
      %v3306 = vmul.f32 %v3262, 1.442695
      %v3307 = vpow.pop %v3306
      %v3308 = vmul.f32 %v3263, 1.442695
      %v3309 = vpow.pop %v3308
      %v3310 = vmul.f32 %v3264, 1.442695
      %v3311 = vpow.pop %v3310
      %v3312 = vmul.f32 %v3265, 1.442695
      %v3313 = vpow.pop %v3312
      %v3314 = vmul.f32 %v3266, 1.442695
      %v3315 = vpow.pop %v3314
      %v3316 = vmul.f32 %v3267, 1.442695
      %v3317 = vpow.pop %v3316
      %v3318 = vmul.f32 %v3268, 1.442695
      %v3319 = vpow.pop %v3318
      %v3320 = vmul.f32 %v3269, 1.442695
      %v3321 = vpow.pop %v3320
      %v3322 = vmul.f32 %v3270, 1.442695
      %v3323 = vpow.pop %v3322
      %v3324 = vmul.f32 %v3271, 1.442695
      %v3325 = vpow.pop %v3324
      %v3326 = vmul.f32 %v3272, 1.442695
      %v3327 = vpow.pop %v3326
      %v3328 = vmul.f32 %v3273, 1.442695
      %v3329 = vpow.pop %v3328
      %v3330 = vmul.f32 %v3274, 1.442695
      %v3331 = vpow.pop %v3330
      %v3332 = vmul.f32 %v3275, 1.442695
      %v3333 = vpow.pop %v3332
      %v3334 = vmul.f32 %v3276, 1.442695
      %v3335 = vpow.pop %v3334
      %v3336 = vmul.f32 %v3277, 1.442695
      %v3337 = vpow.pop %v3336
      %v3338 = vmul.f32 %v3278, 1.442695
      %v3339 = vpow.pop %v3338
      %v3340 = vmul.f32 %v3279, 1.442695
      %v3341 = vpow.pop %v3340
      %v3342 = vmul.f32 %v3280, 1.442695
      %v3343 = vpow.pop %v3342
      %v3344 = vmul.f32 %v3281, 1.442695
      %v3345 = vpow.pop %v3344
      %v3346 = vadd.f32 %v3283, 1.0
      %v3347 = vadd.f32 %v3285, 1.0
      %v3348 = vadd.f32 %v3287, 1.0
      %v3349 = vadd.f32 %v3289, 1.0
      %v3350 = vadd.f32 %v3291, 1.0
      %v3351 = vadd.f32 %v3293, 1.0
      %v3352 = vadd.f32 %v3295, 1.0
      %v3353 = vadd.f32 %v3297, 1.0
      %v3354 = vadd.f32 %v3299, 1.0
      %v3355 = vadd.f32 %v3301, 1.0
      %v3356 = vadd.f32 %v3303, 1.0
      %v3357 = vadd.f32 %v3305, 1.0
      %v3358 = vadd.f32 %v3307, 1.0
      %v3359 = vadd.f32 %v3309, 1.0
      %v3360 = vadd.f32 %v3311, 1.0
      %v3361 = vadd.f32 %v3313, 1.0
      %v3362 = vadd.f32 %v3315, 1.0
      %v3363 = vadd.f32 %v3317, 1.0
      %v3364 = vadd.f32 %v3319, 1.0
      %v3365 = vadd.f32 %v3321, 1.0
      %v3366 = vadd.f32 %v3323, 1.0
      %v3367 = vadd.f32 %v3325, 1.0
      %v3368 = vadd.f32 %v3327, 1.0
      %v3369 = vadd.f32 %v3329, 1.0
      %v3370 = vadd.f32 %v3331, 1.0
      %v3371 = vadd.f32 %v3333, 1.0
      %v3372 = vadd.f32 %v3335, 1.0
      %v3373 = vadd.f32 %v3337, 1.0
      %v3374 = vadd.f32 %v3339, 1.0
      %v3375 = vadd.f32 %v3341, 1.0
      %v3376 = vadd.f32 %v3343, 1.0
      %v3377 = vadd.f32 %v3345, 1.0
      %v3378 = vrcp.pop %v3346
      %v3379 = vmul.f32 1.0, %v3378
      %v3380 = vrcp.pop %v3347
      %v3381 = vmul.f32 1.0, %v3380
      %v3382 = vrcp.pop %v3348
      %v3383 = vmul.f32 1.0, %v3382
      %v3384 = vrcp.pop %v3349
      %v3385 = vmul.f32 1.0, %v3384
      %v3386 = vrcp.pop %v3350
      %v3387 = vmul.f32 1.0, %v3386
      %v3388 = vrcp.pop %v3351
      %v3389 = vmul.f32 1.0, %v3388
      %v3390 = vrcp.pop %v3352
      %v3391 = vmul.f32 1.0, %v3390
      %v3392 = vrcp.pop %v3353
      %v3393 = vmul.f32 1.0, %v3392
      %v3394 = vrcp.pop %v3354
      %v3395 = vmul.f32 1.0, %v3394
      %v3396 = vrcp.pop %v3355
      %v3397 = vmul.f32 1.0, %v3396
      %v3398 = vrcp.pop %v3356
      %v3399 = vmul.f32 1.0, %v3398
      %v3400 = vrcp.pop %v3357
      %v3401 = vmul.f32 1.0, %v3400
      %v3402 = vrcp.pop %v3358
      %v3403 = vmul.f32 1.0, %v3402
      %v3404 = vrcp.pop %v3359
      %v3405 = vmul.f32 1.0, %v3404
      %v3406 = vrcp.pop %v3360
      %v3407 = vmul.f32 1.0, %v3406
      %v3408 = vrcp.pop %v3361
      %v3409 = vmul.f32 1.0, %v3408
      %v3410 = vrcp.pop %v3362
      %v3411 = vmul.f32 1.0, %v3410
      %v3412 = vrcp.pop %v3363
      %v3413 = vmul.f32 1.0, %v3412
      %v3414 = vrcp.pop %v3364
      %v3415 = vmul.f32 1.0, %v3414
      %v3416 = vrcp.pop %v3365
      %v3417 = vmul.f32 1.0, %v3416
      %v3418 = vrcp.pop %v3366
      %v3419 = vmul.f32 1.0, %v3418
      %v3420 = vrcp.pop %v3367
      %v3421 = vmul.f32 1.0, %v3420
      %v3422 = vrcp.pop %v3368
      %v3423 = vmul.f32 1.0, %v3422
      %v3424 = vrcp.pop %v3369
      %v3425 = vmul.f32 1.0, %v3424
      %v3426 = vrcp.pop %v3370
      %v3427 = vmul.f32 1.0, %v3426
      %v3428 = vrcp.pop %v3371
      %v3429 = vmul.f32 1.0, %v3428
      %v3430 = vrcp.pop %v3372
      %v3431 = vmul.f32 1.0, %v3430
      %v3432 = vrcp.pop %v3373
      %v3433 = vmul.f32 1.0, %v3432
      %v3434 = vrcp.pop %v3374
      %v3435 = vmul.f32 1.0, %v3434
      %v3436 = vrcp.pop %v3375
      %v3437 = vmul.f32 1.0, %v3436
      %v3438 = vrcp.pop %v3376
      %v3439 = vmul.f32 1.0, %v3438
      %v3440 = vrcp.pop %v3377
      %v3441 = vmul.f32 1.0, %v3440
      %v3442 = vmul.f32 %v3218, %v3379
      %v3443 = vmul.f32 %v3219, %v3381
      %v3444 = vmul.f32 %v3220, %v3383
      %v3445 = vmul.f32 %v3221, %v3385
      %v3446 = vmul.f32 %v3222, %v3387
      %v3447 = vmul.f32 %v3223, %v3389
      %v3448 = vmul.f32 %v3224, %v3391
      %v3449 = vmul.f32 %v3225, %v3393
      %v3450 = vmul.f32 %v3226, %v3395
      %v3451 = vmul.f32 %v3227, %v3397
      %v3452 = vmul.f32 %v3228, %v3399
      %v3453 = vmul.f32 %v3229, %v3401
      %v3454 = vmul.f32 %v3230, %v3403
      %v3455 = vmul.f32 %v3231, %v3405
      %v3456 = vmul.f32 %v3232, %v3407
      %v3457 = vmul.f32 %v3233, %v3409
      %v3458 = vmul.f32 %v3234, %v3411
      %v3459 = vmul.f32 %v3235, %v3413
      %v3460 = vmul.f32 %v3236, %v3415
      %v3461 = vmul.f32 %v3237, %v3417
      %v3462 = vmul.f32 %v3238, %v3419
      %v3463 = vmul.f32 %v3239, %v3421
      %v3464 = vmul.f32 %v3240, %v3423
      %v3465 = vmul.f32 %v3241, %v3425
      %v3466 = vmul.f32 %v3242, %v3427
      %v3467 = vmul.f32 %v3243, %v3429
      %v3468 = vmul.f32 %v3244, %v3431
      %v3469 = vmul.f32 %v3245, %v3433
      %v3470 = vmul.f32 %v3246, %v3435
      %v3471 = vmul.f32 %v3247, %v3437
      %v3472 = vmul.f32 %v3248, %v3439
      %v3473 = vmul.f32 %v3249, %v3441
      %v3474 = vld [vmem:[%s7] sm:$0x1]
      %vm3475 = vcmask 97280
      %3476 = vst.msk [vmem:[#allocation2] sm:$0xff] %vm3475, 0
      %vm3477 = vcmask 90112
      %vm3478 = vsmask.f32 256
      %vm3479 = vmand %vm3477, %vm3478
      %v3480 = vld [vmem:[#allocation2 + $0x8] sm:$0x1]
      %v3481 = vsel %vm3479, 0, %v3480
      %3482 = vst [vmem:[#allocation2 + $0x8] sm:$0x1] %v3481
      %vm3483 = vcmask 97287
      %vm3484 = vsmask.f32 7966
      %vm3485 = vmand %vm3483, %vm3484
      %v3486 = vld [vmem:[#allocation2 + $0x80] sm:$0x80]
      %v3487 = vsel %vm3485, 0, %v3486
      %3488 = vst [vmem:[#allocation2 + $0x80] sm:$0x80] %v3487
      %3489 = vst.msk [vmem:[#allocation2 + $0x88] sm:$0xff] %vm3475, 0
      %v3490 = vmul.f32 %v3442, %v848
      %v3491 = vmul.f32 %v3443, %v849
      %v3492 = vmul.f32 %v3444, %v850
      %v3493 = vmul.f32 %v3445, %v851
      %v3494 = vmul.f32 %v3446, %v852
      %v3495 = vmul.f32 %v3447, %v853
      %v3496 = vmul.f32 %v3448, %v854
      %v3497 = vmul.f32 %v3449, %v855
      %v3498 = vmul.f32 %v3450, %v856
      %v3499 = vmul.f32 %v3451, %v857
      %v3500 = vmul.f32 %v3452, %v858
      %v3501 = vmul.f32 %v3453, %v859
      %v3502 = vmul.f32 %v3454, %v860
      %v3503 = vmul.f32 %v3455, %v861
      %v3504 = vmul.f32 %v3456, %v862
      %v3505 = vmul.f32 %v3457, %v863
      %v3506 = vmul.f32 %v3458, %v864
      %v3507 = vmul.f32 %v3459, %v865
      %v3508 = vmul.f32 %v3460, %v866
      %v3509 = vmul.f32 %v3461, %v867
      %v3510 = vmul.f32 %v3462, %v868
      %v3511 = vmul.f32 %v3463, %v869
      %v3512 = vmul.f32 %v3464, %v870
      %v3513 = vmul.f32 %v3465, %v871
      %v3514 = vmul.f32 %v3466, %v872
      %v3515 = vmul.f32 %v3467, %v873
      %v3516 = vmul.f32 %v3468, %v874
      %v3517 = vmul.f32 %v3469, %v875
      %v3518 = vmul.f32 %v3470, %v876
      %v3519 = vmul.f32 %v3471, %v877
      %v3520 = vmul.f32 %v3472, %v878
      %v3521 = vmul.f32 %v3473, %v879
      %v3522 = vpack.c.bf16 %v3491, %v3490
      %v3523 = vpack.c.bf16 %v3493, %v3492
      %v3524 = vpack.c.bf16 %v3495, %v3494
      %v3525 = vpack.c.bf16 %v3497, %v3496
      %v3526 = vpack.c.bf16 %v3499, %v3498
      %v3527 = vpack.c.bf16 %v3501, %v3500
      %v3528 = vpack.c.bf16 %v3503, %v3502
      %v3529 = vpack.c.bf16 %v3505, %v3504
      %v3530 = vpack.c.bf16 %v3507, %v3506
      %v3531 = vpack.c.bf16 %v3509, %v3508
      %v3532 = vpack.c.bf16 %v3511, %v3510
      %v3533 = vpack.c.bf16 %v3513, %v3512
      %v3534 = vpack.c.bf16 %v3515, %v3514
      %v3535 = vpack.c.bf16 %v3517, %v3516
      %v3536 = vpack.c.bf16 %v3519, %v3518
      %v3537 = vpack.c.bf16 %v3521, %v3520
      %v3539 = vshrl.u32 %v3522, 16
      %v3541 = vrot.slane %v3539, 7
      %v3542 = vshll.u32 %v3522, 16
      %v3544 = vor.u32 %v3541, %v3542
      %v3546 = vshrl.u32 %v3523, 16
      %v3548 = vrot.slane %v3546, 7
      %v3549 = vshll.u32 %v3523, 16
      %v3551 = vor.u32 %v3548, %v3549
      %v3552 = vsel %vm3478, %v3541, %v3551
      %v3554 = vshrl.u32 %v3524, 16
      %v3556 = vrot.slane %v3554, 7
      %v3557 = vshll.u32 %v3524, 16
      %v3559 = vor.u32 %v3556, %v3557
      %v3560 = vsel %vm3478, %v3548, %v3559
      %v3562 = vshrl.u32 %v3525, 16
      %v3564 = vrot.slane %v3562, 7
      %v3565 = vshll.u32 %v3525, 16
      %v3567 = vor.u32 %v3564, %v3565
      %v3568 = vsel %vm3478, %v3556, %v3567
      %v3570 = vshrl.u32 %v3526, 16
      %v3572 = vrot.slane %v3570, 7
      %v3573 = vshll.u32 %v3526, 16
      %v3575 = vor.u32 %v3572, %v3573
      %v3576 = vsel %vm3478, %v3564, %v3575
      %v3578 = vshrl.u32 %v3527, 16
      %v3580 = vrot.slane %v3578, 7
      %v3581 = vshll.u32 %v3527, 16
      %v3583 = vor.u32 %v3580, %v3581
      %v3584 = vsel %vm3478, %v3572, %v3583
      %v3586 = vshrl.u32 %v3528, 16
      %v3588 = vrot.slane %v3586, 7
      %v3589 = vshll.u32 %v3528, 16
      %v3591 = vor.u32 %v3588, %v3589
      %v3592 = vsel %vm3478, %v3580, %v3591
      %v3594 = vshrl.u32 %v3529, 16
      %v3596 = vrot.slane %v3594, 7
      %v3597 = vshll.u32 %v3529, 16
      %v3599 = vor.u32 %v3596, %v3597
      %v3600 = vsel %vm3478, %v3588, %v3599
      %v3602 = vshrl.u32 %v3530, 16
      %v3604 = vrot.slane %v3602, 7
      %v3605 = vshll.u32 %v3530, 16
      %v3607 = vor.u32 %v3604, %v3605
      %v3608 = vsel %vm3478, %v3596, %v3607
      %v3610 = vshrl.u32 %v3531, 16
      %v3612 = vrot.slane %v3610, 7
      %v3613 = vshll.u32 %v3531, 16
      %v3615 = vor.u32 %v3612, %v3613
      %v3616 = vsel %vm3478, %v3604, %v3615
      %v3618 = vshrl.u32 %v3532, 16
      %v3620 = vrot.slane %v3618, 7
      %v3621 = vshll.u32 %v3532, 16
      %v3623 = vor.u32 %v3620, %v3621
      %v3624 = vsel %vm3478, %v3612, %v3623
      %v3626 = vshrl.u32 %v3533, 16
      %v3628 = vrot.slane %v3626, 7
      %v3629 = vshll.u32 %v3533, 16
      %v3631 = vor.u32 %v3628, %v3629
      %v3632 = vsel %vm3478, %v3620, %v3631
      %v3634 = vshrl.u32 %v3534, 16
      %v3636 = vrot.slane %v3634, 7
      %v3637 = vshll.u32 %v3534, 16
      %v3639 = vor.u32 %v3636, %v3637
      %v3640 = vsel %vm3478, %v3628, %v3639
      %v3642 = vshrl.u32 %v3535, 16
      %v3644 = vrot.slane %v3642, 7
      %v3645 = vshll.u32 %v3535, 16
      %v3647 = vor.u32 %v3644, %v3645
      %v3648 = vsel %vm3478, %v3636, %v3647
      %v3650 = vshrl.u32 %v3536, 16
      %v3652 = vrot.slane %v3650, 7
      %v3653 = vshll.u32 %v3536, 16
      %v3655 = vor.u32 %v3652, %v3653
      %v3656 = vsel %vm3478, %v3644, %v3655
      %v3658 = vshrl.u32 %v3537, 16
      %v3660 = vrot.slane %v3658, 7
      %v3661 = vshll.u32 %v3537, 16
      %v3663 = vor.u32 %v3660, %v3661
      %v3664 = vsel %vm3478, %v3652, %v3663
      %vm3682 = vcmask 31744
      %vm3683 = vsmask.f32 7938
      %vm3684 = vmand %vm3682, %vm3683
      %v3685 = vld [vmem:[#allocation2 + $0x8] sm:$0xff]
      %v3686 = vsel %vm3684, %v3544, %v3685
      %3687 = vst [vmem:[#allocation2 + $0x8] sm:$0xff] %v3686
      %3688 = vst.msk [vmem:[#allocation2 + $0x10] sm:$0xff] %vm904, %v3552
      %3689 = vst.msk [vmem:[#allocation2 + $0x18] sm:$0xff] %vm904, %v3560
      %3690 = vst.msk [vmem:[#allocation2 + $0x20] sm:$0xff] %vm904, %v3568
      %3691 = vst.msk [vmem:[#allocation2 + $0x28] sm:$0xff] %vm904, %v3576
      %3692 = vst.msk [vmem:[#allocation2 + $0x30] sm:$0xff] %vm904, %v3584
      %3693 = vst.msk [vmem:[#allocation2 + $0x38] sm:$0xff] %vm904, %v3592
      %3694 = vst.msk [vmem:[#allocation2 + $0x40] sm:$0xff] %vm904, %v3600
      %3695 = vst.msk [vmem:[#allocation2 + $0x48] sm:$0xff] %vm904, %v3608
      %3696 = vst.msk [vmem:[#allocation2 + $0x50] sm:$0xff] %vm904, %v3616
      %3697 = vst.msk [vmem:[#allocation2 + $0x58] sm:$0xff] %vm904, %v3624
      %3698 = vst.msk [vmem:[#allocation2 + $0x60] sm:$0xff] %vm904, %v3632
      %3699 = vst.msk [vmem:[#allocation2 + $0x68] sm:$0xff] %vm904, %v3640
      %3700 = vst.msk [vmem:[#allocation2 + $0x70] sm:$0xff] %vm904, %v3648
      %3701 = vst.msk [vmem:[#allocation2 + $0x78] sm:$0xff] %vm904, %v3656
      %3702 = vst.msk [vmem:[#allocation2 + $0x80] sm:$0xff] %vm904, %v3664
      %vm3703 = vcmask 24576
      %vm3704 = vmand %vm3703, %vm3478
      %v3705 = vld [vmem:[#allocation2 + $0x88] sm:$0x1]
      %v3706 = vsel %vm3704, %v3660, %v3705
      %3707 = vst [vmem:[#allocation2 + $0x88] sm:$0x1] %v3706
      %v3708 = vpack.c.bf16 %v3443, %v3442
      %v3709 = vpack.c.bf16 %v3445, %v3444
      %v3710 = vpack.c.bf16 %v3447, %v3446
      %v3711 = vpack.c.bf16 %v3449, %v3448
      %v3712 = vpack.c.bf16 %v3451, %v3450
      %v3713 = vpack.c.bf16 %v3453, %v3452
      %v3714 = vpack.c.bf16 %v3455, %v3454
      %v3715 = vpack.c.bf16 %v3457, %v3456
      %v3716 = vpack.c.bf16 %v3459, %v3458
      %v3717 = vpack.c.bf16 %v3461, %v3460
      %v3718 = vpack.c.bf16 %v3463, %v3462
      %v3719 = vpack.c.bf16 %v3465, %v3464
      %v3720 = vpack.c.bf16 %v3467, %v3466
      %v3721 = vpack.c.bf16 %v3469, %v3468
      %v3722 = vpack.c.bf16 %v3471, %v3470
      %v3723 = vpack.c.bf16 %v3473, %v3472
      %3740 = vrot.lane.b32.xlu0 %v3708, 4
      %v3741 = vpop.permute.xlu0 %3740
      %3742 = vrot.lane.b32.xlu0 %v3709, 4
      %v3743 = vpop.permute.xlu0 %3742
      %3744 = vrot.lane.b32.xlu0 %v3710, 4
      %v3745 = vpop.permute.xlu0 %3744
      %3746 = vrot.lane.b32.xlu0 %v3711, 4
      %v3747 = vpop.permute.xlu0 %3746
      %3748 = vrot.lane.b32.xlu0 %v3712, 4
      %v3749 = vpop.permute.xlu0 %3748
      %3750 = vrot.lane.b32.xlu0 %v3713, 4
      %v3751 = vpop.permute.xlu0 %3750
      %3752 = vrot.lane.b32.xlu0 %v3714, 4
      %v3753 = vpop.permute.xlu0 %3752
      %3754 = vrot.lane.b32.xlu0 %v3715, 4
      %v3755 = vpop.permute.xlu0 %3754
      %3756 = vrot.lane.b32.xlu0 %v3716, 4
      %v3757 = vpop.permute.xlu0 %3756
      %3758 = vrot.lane.b32.xlu0 %v3717, 4
      %v3759 = vpop.permute.xlu0 %3758
      %3760 = vrot.lane.b32.xlu0 %v3718, 4
      %v3761 = vpop.permute.xlu0 %3760
      %3762 = vrot.lane.b32.xlu0 %v3719, 4
      %v3763 = vpop.permute.xlu0 %3762
      %3764 = vrot.lane.b32.xlu0 %v3720, 4
      %v3765 = vpop.permute.xlu0 %3764
      %3766 = vrot.lane.b32.xlu0 %v3721, 4
      %v3767 = vpop.permute.xlu0 %3766
      %3768 = vrot.lane.b32.xlu0 %v3722, 4
      %v3769 = vpop.permute.xlu0 %3768
      %3770 = vrot.lane.b32.xlu0 %v3723, 4
      %v3771 = vpop.permute.xlu0 %3770
      %vm3788 = vcmask 64544
      %3789 = vst.msk [vmem:[#allocation2 + $0x8] sm:$0xff] %vm3788, %v3741
      %3790 = vst.msk [vmem:[#allocation2 + $0x10] sm:$0xff] %vm3788, %v3743
      %3791 = vst.msk [vmem:[#allocation2 + $0x18] sm:$0xff] %vm3788, %v3745
      %3792 = vst.msk [vmem:[#allocation2 + $0x20] sm:$0xff] %vm3788, %v3747
      %3793 = vst.msk [vmem:[#allocation2 + $0x28] sm:$0xff] %vm3788, %v3749
      %3794 = vst.msk [vmem:[#allocation2 + $0x30] sm:$0xff] %vm3788, %v3751
      %3795 = vst.msk [vmem:[#allocation2 + $0x38] sm:$0xff] %vm3788, %v3753
      %3796 = vst.msk [vmem:[#allocation2 + $0x40] sm:$0xff] %vm3788, %v3755
      %3797 = vst.msk [vmem:[#allocation2 + $0x48] sm:$0xff] %vm3788, %v3757
      %3798 = vst.msk [vmem:[#allocation2 + $0x50] sm:$0xff] %vm3788, %v3759
      %3799 = vst.msk [vmem:[#allocation2 + $0x58] sm:$0xff] %vm3788, %v3761
      %3800 = vst.msk [vmem:[#allocation2 + $0x60] sm:$0xff] %vm3788, %v3763
      %3801 = vst.msk [vmem:[#allocation2 + $0x68] sm:$0xff] %vm3788, %v3765
      %3802 = vst.msk [vmem:[#allocation2 + $0x70] sm:$0xff] %vm3788, %v3767
      %3803 = vst.msk [vmem:[#allocation2 + $0x78] sm:$0xff] %vm3788, %v3769
      %3804 = vst.msk [vmem:[#allocation2 + $0x80] sm:$0xff] %vm3788, %v3771
      %v3805 = vmul.f32 %v3442, %v752
      %v3806 = vmul.f32 %v3443, %v753
      %v3807 = vmul.f32 %v3444, %v754
      %v3808 = vmul.f32 %v3445, %v755
      %v3809 = vmul.f32 %v3446, %v756
      %v3810 = vmul.f32 %v3447, %v757
      %v3811 = vmul.f32 %v3448, %v758
      %v3812 = vmul.f32 %v3449, %v759
      %v3813 = vmul.f32 %v3450, %v760
      %v3814 = vmul.f32 %v3451, %v761
      %v3815 = vmul.f32 %v3452, %v762
      %v3816 = vmul.f32 %v3453, %v763
      %v3817 = vmul.f32 %v3454, %v764
      %v3818 = vmul.f32 %v3455, %v765
      %v3819 = vmul.f32 %v3456, %v766
      %v3820 = vmul.f32 %v3457, %v767
      %v3821 = vmul.f32 %v3458, %v768
      %v3822 = vmul.f32 %v3459, %v769
      %v3823 = vmul.f32 %v3460, %v770
      %v3824 = vmul.f32 %v3461, %v771
      %v3825 = vmul.f32 %v3462, %v772
      %v3826 = vmul.f32 %v3463, %v773
      %v3827 = vmul.f32 %v3464, %v774
      %v3828 = vmul.f32 %v3465, %v775
      %v3829 = vmul.f32 %v3466, %v776
      %v3830 = vmul.f32 %v3467, %v777
      %v3831 = vmul.f32 %v3468, %v778
      %v3832 = vmul.f32 %v3469, %v779
      %v3833 = vmul.f32 %v3470, %v780
      %v3834 = vmul.f32 %v3471, %v781
      %v3835 = vmul.f32 %v3472, %v782
      %v3836 = vmul.f32 %v3473, %v783
      %v3837 = vpack.c.bf16 %v3806, %v3805
      %v3838 = vpack.c.bf16 %v3808, %v3807
      %v3839 = vpack.c.bf16 %v3810, %v3809
      %v3840 = vpack.c.bf16 %v3812, %v3811
      %v3841 = vpack.c.bf16 %v3814, %v3813
      %v3842 = vpack.c.bf16 %v3816, %v3815
      %v3843 = vpack.c.bf16 %v3818, %v3817
      %v3844 = vpack.c.bf16 %v3820, %v3819
      %v3845 = vpack.c.bf16 %v3822, %v3821
      %v3846 = vpack.c.bf16 %v3824, %v3823
      %v3847 = vpack.c.bf16 %v3826, %v3825
      %v3848 = vpack.c.bf16 %v3828, %v3827
      %v3849 = vpack.c.bf16 %v3830, %v3829
      %v3850 = vpack.c.bf16 %v3832, %v3831
      %v3851 = vpack.c.bf16 %v3834, %v3833
      %v3852 = vpack.c.bf16 %v3836, %v3835
      %vm3853 = vsmask.f32 7424
      %v3855 = vshll.u32 %v3837, 16
      %v3857 = vrot.slane %v3855, 1
      %v3858 = vshrl.u32 %v3837, 16
      %v3860 = vor.u32 %v3858, %v3857
      %v3862 = vshll.u32 %v3838, 16
      %v3864 = vrot.slane %v3862, 1
      %v3865 = vsel %vm3853, %v3860, %v3864
      %v3866 = vshrl.u32 %v3838, 16
      %v3868 = vor.u32 %v3866, %v3864
      %v3870 = vshll.u32 %v3839, 16
      %v3872 = vrot.slane %v3870, 1
      %v3873 = vsel %vm3853, %v3868, %v3872
      %v3874 = vshrl.u32 %v3839, 16
      %v3876 = vor.u32 %v3874, %v3872
      %v3878 = vshll.u32 %v3840, 16
      %v3880 = vrot.slane %v3878, 1
      %v3881 = vsel %vm3853, %v3876, %v3880
      %v3882 = vshrl.u32 %v3840, 16
      %v3884 = vor.u32 %v3882, %v3880
      %v3886 = vshll.u32 %v3841, 16
      %v3888 = vrot.slane %v3886, 1
      %v3889 = vsel %vm3853, %v3884, %v3888
      %v3890 = vshrl.u32 %v3841, 16
      %v3892 = vor.u32 %v3890, %v3888
      %v3894 = vshll.u32 %v3842, 16
      %v3896 = vrot.slane %v3894, 1
      %v3897 = vsel %vm3853, %v3892, %v3896
      %v3898 = vshrl.u32 %v3842, 16
      %v3900 = vor.u32 %v3898, %v3896
      %v3902 = vshll.u32 %v3843, 16
      %v3904 = vrot.slane %v3902, 1
      %v3905 = vsel %vm3853, %v3900, %v3904
      %v3906 = vshrl.u32 %v3843, 16
      %v3908 = vor.u32 %v3906, %v3904
      %v3910 = vshll.u32 %v3844, 16
      %v3912 = vrot.slane %v3910, 1
      %v3913 = vsel %vm3853, %v3908, %v3912
      %v3914 = vshrl.u32 %v3844, 16
      %v3916 = vor.u32 %v3914, %v3912
      %v3918 = vshll.u32 %v3845, 16
      %v3920 = vrot.slane %v3918, 1
      %v3921 = vsel %vm3853, %v3916, %v3920
      %v3922 = vshrl.u32 %v3845, 16
      %v3924 = vor.u32 %v3922, %v3920
      %v3926 = vshll.u32 %v3846, 16
      %v3928 = vrot.slane %v3926, 1
      %v3929 = vsel %vm3853, %v3924, %v3928
      %v3930 = vshrl.u32 %v3846, 16
      %v3932 = vor.u32 %v3930, %v3928
      %v3934 = vshll.u32 %v3847, 16
      %v3936 = vrot.slane %v3934, 1
      %v3937 = vsel %vm3853, %v3932, %v3936
      %v3938 = vshrl.u32 %v3847, 16
      %v3940 = vor.u32 %v3938, %v3936
      %v3942 = vshll.u32 %v3848, 16
      %v3944 = vrot.slane %v3942, 1
      %v3945 = vsel %vm3853, %v3940, %v3944
      %v3946 = vshrl.u32 %v3848, 16
      %v3948 = vor.u32 %v3946, %v3944
      %v3950 = vshll.u32 %v3849, 16
      %v3952 = vrot.slane %v3950, 1
      %v3953 = vsel %vm3853, %v3948, %v3952
      %v3954 = vshrl.u32 %v3849, 16
      %v3956 = vor.u32 %v3954, %v3952
      %v3958 = vshll.u32 %v3850, 16
      %v3960 = vrot.slane %v3958, 1
      %v3961 = vsel %vm3853, %v3956, %v3960
      %v3962 = vshrl.u32 %v3850, 16
      %v3964 = vor.u32 %v3962, %v3960
      %v3966 = vshll.u32 %v3851, 16
      %v3968 = vrot.slane %v3966, 1
      %v3969 = vsel %vm3853, %v3964, %v3968
      %v3970 = vshrl.u32 %v3851, 16
      %v3972 = vor.u32 %v3970, %v3968
      %v3974 = vshll.u32 %v3852, 16
      %v3976 = vrot.slane %v3974, 1
      %v3977 = vsel %vm3853, %v3972, %v3976
      %v3978 = vshrl.u32 %v3852, 16
      %v3980 = vor.u32 %v3978, %v3976
      %3981 = vrot.lane.b32.xlu0 %v3857, 8
      %v3982 = vpop.permute.xlu0 %3981
      %3983 = vrot.lane.b32.xlu0 %v3865, 8
      %v3984 = vpop.permute.xlu0 %3983
      %3985 = vrot.lane.b32.xlu0 %v3873, 8
      %v3986 = vpop.permute.xlu0 %3985
      %3987 = vrot.lane.b32.xlu0 %v3881, 8
      %v3988 = vpop.permute.xlu0 %3987
      %3989 = vrot.lane.b32.xlu0 %v3889, 8
      %v3990 = vpop.permute.xlu0 %3989
      %3991 = vrot.lane.b32.xlu0 %v3897, 8
      %v3992 = vpop.permute.xlu0 %3991
      %3993 = vrot.lane.b32.xlu0 %v3905, 8
      %v3994 = vpop.permute.xlu0 %3993
      %3995 = vrot.lane.b32.xlu0 %v3913, 8
      %v3996 = vpop.permute.xlu0 %3995
      %3997 = vrot.lane.b32.xlu0 %v3921, 8
      %v3998 = vpop.permute.xlu0 %3997
      %3999 = vrot.lane.b32.xlu0 %v3929, 8
      %v4000 = vpop.permute.xlu0 %3999
      %4001 = vrot.lane.b32.xlu0 %v3937, 8
      %v4002 = vpop.permute.xlu0 %4001
      %4003 = vrot.lane.b32.xlu0 %v3945, 8
      %v4004 = vpop.permute.xlu0 %4003
      %4005 = vrot.lane.b32.xlu0 %v3953, 8
      %v4006 = vpop.permute.xlu0 %4005
      %4007 = vrot.lane.b32.xlu0 %v3961, 8
      %v4008 = vpop.permute.xlu0 %4007
      %4009 = vrot.lane.b32.xlu0 %v3969, 8
      %v4010 = vpop.permute.xlu0 %4009
      %4011 = vrot.lane.b32.xlu0 %v3977, 8
      %v4012 = vpop.permute.xlu0 %4011
      %4013 = vrot.lane.b32.xlu0 %v3980, 8
      %v4014 = vpop.permute.xlu0 %4013
      %vm4032 = vcmask 97351
      %vm4033 = vmand %vm4032, %vm3484
      %v4034 = vld [vmem:[#allocation2] sm:$0x80]
      %v4035 = vsel %vm4033, %v3982, %v4034
      %4036 = vst [vmem:[#allocation2] sm:$0x80] %v4035
      %vm4037 = vcmask 97344
      %4038 = vst.msk [vmem:[#allocation2 + $0x8] sm:$0xff] %vm4037, %v3984
      %4039 = vst.msk [vmem:[#allocation2 + $0x10] sm:$0xff] %vm4037, %v3986
      %4040 = vst.msk [vmem:[#allocation2 + $0x18] sm:$0xff] %vm4037, %v3988
      %4041 = vst.msk [vmem:[#allocation2 + $0x20] sm:$0xff] %vm4037, %v3990
      %4042 = vst.msk [vmem:[#allocation2 + $0x28] sm:$0xff] %vm4037, %v3992
      %4043 = vst.msk [vmem:[#allocation2 + $0x30] sm:$0xff] %vm4037, %v3994
      %4044 = vst.msk [vmem:[#allocation2 + $0x38] sm:$0xff] %vm4037, %v3996
      %4045 = vst.msk [vmem:[#allocation2 + $0x40] sm:$0xff] %vm4037, %v3998
      %4046 = vst.msk [vmem:[#allocation2 + $0x48] sm:$0xff] %vm4037, %v4000
      %4047 = vst.msk [vmem:[#allocation2 + $0x50] sm:$0xff] %vm4037, %v4002
      %4048 = vst.msk [vmem:[#allocation2 + $0x58] sm:$0xff] %vm4037, %v4004
      %4049 = vst.msk [vmem:[#allocation2 + $0x60] sm:$0xff] %vm4037, %v4006
      %4050 = vst.msk [vmem:[#allocation2 + $0x68] sm:$0xff] %vm4037, %v4008
      %4051 = vst.msk [vmem:[#allocation2 + $0x70] sm:$0xff] %vm4037, %v4010
      %4052 = vst.msk [vmem:[#allocation2 + $0x78] sm:$0xff] %vm4037, %v4012
      %vm4053 = vcmask 97344
      %vm4054 = vmand %vm4053, %vm3853
      %v4055 = vld [vmem:[#allocation2 + $0x80] sm:$0xff]
      %v4056 = vsel %vm4054, %v4014, %v4055
      %4057 = vst [vmem:[#allocation2 + $0x80] sm:$0xff] %v4056
      %v4058 = vld [vmem:[#allocation2] sm:$0xff]
      %v4059 = vld [vmem:[#allocation2 + $0x8] sm:$0xff]
      %v4060 = vld [vmem:[#allocation2 + $0x10] sm:$0xff]
      %v4061 = vld [vmem:[#allocation2 + $0x18] sm:$0xff]
      %v4062 = vld [vmem:[#allocation2 + $0x20] sm:$0xff]
      %v4063 = vld [vmem:[#allocation2 + $0x28] sm:$0xff]
      %v4064 = vld [vmem:[#allocation2 + $0x30] sm:$0xff]
      %v4065 = vld [vmem:[#allocation2 + $0x38] sm:$0xff]
      %v4066 = vld [vmem:[#allocation2 + $0x40] sm:$0xff]
      %v4067 = vld [vmem:[#allocation2 + $0x48] sm:$0xff]
      %v4068 = vld [vmem:[#allocation2 + $0x50] sm:$0xff]
      %v4069 = vld [vmem:[#allocation2 + $0x58] sm:$0xff]
      %v4070 = vld [vmem:[#allocation2 + $0x60] sm:$0xff]
      %v4071 = vld [vmem:[#allocation2 + $0x68] sm:$0xff]
      %v4072 = vld [vmem:[#allocation2 + $0x70] sm:$0xff]
      %v4073 = vld [vmem:[#allocation2 + $0x78] sm:$0xff]
      %v4074 = vld [vmem:[%s6] sm:$0xf]
      %v4075 = vld [vmem:[%s6 + $0x4] sm:$0x3]
      %v4076 = vld [vmem:[#allocation2 + $0x80] sm:$0xff]
      %s4077 = scalar_lea.vmem %s6, 8
      %v4078 = vld [vmem:[%s4077] sm:$0xf]
      %v4079 = vld [vmem:[%s4077 + $0x4] sm:$0x3]
      %v4082 = vunpack.c.l.b16 %v4078
      %v4083 = vunpack.c.l.b16 %v4079
      %v4084 = vpack.c.b16 %v4083, %v4082
      %v4086 = vsel %vm3475, %v4059, 0
      %v4089 = vsel %vm3475, %v4060, 0
      %v4092 = vsel %vm3475, %v4061, 0
      %v4095 = vsel %vm3475, %v4062, 0
      %v4098 = vsel %vm3475, %v4063, 0
      %v4101 = vsel %vm3475, %v4064, 0
      %v4104 = vsel %vm3475, %v4065, 0
      %v4107 = vsel %vm3475, %v4066, 0
      %v4110 = vsel %vm3475, %v4067, 0
      %v4113 = vsel %vm3475, %v4068, 0
      %v4116 = vsel %vm3475, %v4069, 0
      %v4119 = vsel %vm3475, %v4070, 0
      %v4122 = vsel %vm3475, %v4071, 0
      %v4125 = vsel %vm3475, %v4072, 0
      %v4128 = vsel %vm3475, %v4073, 0
      %v4131 = vsel %vm3475, %v4076, 0
      %vm4133 = vcmask 1045504
      %v4135 = vsel %vm4133, %v4084, 0
      %4137 = vmatprep.subr.bf16.mxu0 0
      %4138 = vmatpush1.bf16.msra.mxu0 %v4135
      %4139 = vmatprep.subr.bf16.mxu0 0
      %4140 = vmatpush1.bf16.msra.mxu0 0
      %4141 = vmatprep.subr.bf16.mxu0 0
      %4142 = vmatpush1.bf16.msra.mxu0 0
      %4143 = vmatprep.subr.bf16.mxu0 0
      %4144 = vmatpush1.bf16.msra.mxu0 0
      %4145 = vmatprep.subr.bf16.mxu0 0
      %4146 = vmatpush1.bf16.msra.mxu0 0
      %4147 = vmatprep.subr.bf16.mxu0 0
      %4148 = vmatpush1.bf16.msra.mxu0 0
      %4149 = vmatprep.subr.bf16.mxu0 0
      %4150 = vmatpush1.bf16.msra.mxu0 0
      %4151 = vmatprep.subr.bf16.mxu0 0
      %4152 = vmatpush1.bf16.msra.mxu0 0
      %4153 = vmatprep.subr.bf16.mxu0 0
      %4154 = vmatpush1.bf16.msra.mxu0 0
      %4155 = vmatprep.subr.bf16.mxu0 0
      %4156 = vmatpush1.bf16.msra.mxu0 0
      %4157 = vmatprep.subr.bf16.mxu0 0
      %4158 = vmatpush1.bf16.msra.mxu0 0
      %4159 = vmatprep.subr.bf16.mxu0 0
      %4160 = vmatpush1.bf16.msra.mxu0 0
      %4161 = vmatprep.subr.bf16.mxu0 0
      %4162 = vmatpush1.bf16.msra.mxu0 0
      %4163 = vmatprep.subr.bf16.mxu0 0
      %4164 = vmatpush1.bf16.msra.mxu0 0
      %4165 = vmatprep.subr.bf16.mxu0 0
      %4166 = vmatpush1.bf16.msra.mxu0 0
      %4167 = vmatprep.subr.bf16.mxu0 0
      %4168 = vmatpush1.bf16.msra.mxu0 0
      %4169 = vmatprep.mubr.bf16.mxu0 0
      %4170 = vmatmul.mubr.bf16.gmra.mrb[0].mxu0 %v4086
      %v4171 = vpop.f32.mrb[0].mxu0
      %v4172 = vadd.f32 0.0, %v4171
      %v4173 = vpop.f32.mrb[0].mxu0
      %v4174 = vpop.f32.mrb[0].mxu0
      %v4175 = vadd.f32 0.0, %v4174
      %v4176 = vpop.f32.mrb[0].mxu0
      %4177 = vmatprep.mubr.bf16.mxu0 0
      %4178 = vmatmul.mubr.bf16.gmra.mrb[0].mxu0 %v4089
      %v4179 = vpop.f32.mrb[0].mxu0
      %v4180 = vadd.f32 0.0, %v4179
      %v4181 = vpop.f32.mrb[0].mxu0
      %v4182 = vpop.f32.mrb[0].mxu0
      %v4183 = vadd.f32 0.0, %v4182
      %v4184 = vpop.f32.mrb[0].mxu0
      %4185 = vmatprep.mubr.bf16.mxu0 0
      %4186 = vmatmul.mubr.bf16.gmra.mrb[0].mxu0 %v4092
      %v4187 = vpop.f32.mrb[0].mxu0
      %v4188 = vadd.f32 0.0, %v4187
      %v4189 = vpop.f32.mrb[0].mxu0
      %v4190 = vpop.f32.mrb[0].mxu0
      %v4191 = vadd.f32 0.0, %v4190
      %v4192 = vpop.f32.mrb[0].mxu0
      %4193 = vmatprep.mubr.bf16.mxu0 0
      %4194 = vmatmul.mubr.bf16.gmra.mrb[0].mxu0 %v4095
      %v4195 = vpop.f32.mrb[0].mxu0
      %v4196 = vadd.f32 0.0, %v4195
      %v4197 = vpop.f32.mrb[0].mxu0
      %v4198 = vpop.f32.mrb[0].mxu0
      %v4199 = vadd.f32 0.0, %v4198
      %v4200 = vpop.f32.mrb[0].mxu0
      %4201 = vmatprep.mubr.bf16.mxu0 0
      %4202 = vmatmul.mubr.bf16.gmra.mrb[0].mxu0 %v4098
      %v4203 = vpop.f32.mrb[0].mxu0
      %v4204 = vadd.f32 0.0, %v4203
      %v4205 = vpop.f32.mrb[0].mxu0
      %v4206 = vpop.f32.mrb[0].mxu0
      %v4207 = vadd.f32 0.0, %v4206
      %v4208 = vpop.f32.mrb[0].mxu0
      %4209 = vmatprep.mubr.bf16.mxu0 0
      %4210 = vmatmul.mubr.bf16.gmra.mrb[0].mxu0 %v4101
      %v4211 = vpop.f32.mrb[0].mxu0
      %v4212 = vadd.f32 0.0, %v4211
      %v4213 = vpop.f32.mrb[0].mxu0
      %v4214 = vpop.f32.mrb[0].mxu0
      %v4215 = vadd.f32 0.0, %v4214
      %v4216 = vpop.f32.mrb[0].mxu0
      %4217 = vmatprep.mubr.bf16.mxu0 0
      %4218 = vmatmul.mubr.bf16.gmra.mrb[0].mxu0 %v4104
      %v4219 = vpop.f32.mrb[0].mxu0
      %v4220 = vadd.f32 0.0, %v4219
      %v4221 = vpop.f32.mrb[0].mxu0
      %v4222 = vpop.f32.mrb[0].mxu0
      %v4223 = vadd.f32 0.0, %v4222
      %v4224 = vpop.f32.mrb[0].mxu0
      %4225 = vmatprep.mubr.bf16.mxu0 0
      %4226 = vmatmul.mubr.bf16.gmra.mrb[0].mxu0 %v4107
      %v4227 = vpop.f32.mrb[0].mxu0
      %v4228 = vadd.f32 0.0, %v4227
      %v4229 = vpop.f32.mrb[0].mxu0
      %v4230 = vpop.f32.mrb[0].mxu0
      %v4231 = vadd.f32 0.0, %v4230
      %v4232 = vpop.f32.mrb[0].mxu0
      %4233 = vmatprep.mubr.bf16.mxu0 0
      %4234 = vmatmul.mubr.bf16.gmra.mrb[0].mxu0 %v4110
      %v4235 = vpop.f32.mrb[0].mxu0
      %v4236 = vadd.f32 0.0, %v4235
      %v4237 = vpop.f32.mrb[0].mxu0
      %v4238 = vpop.f32.mrb[0].mxu0
      %v4239 = vadd.f32 0.0, %v4238
      %v4240 = vpop.f32.mrb[0].mxu0
      %4241 = vmatprep.mubr.bf16.mxu0 0
      %4242 = vmatmul.mubr.bf16.gmra.mrb[0].mxu0 %v4113
      %v4243 = vpop.f32.mrb[0].mxu0
      %v4244 = vadd.f32 0.0, %v4243
      %v4245 = vpop.f32.mrb[0].mxu0
      %v4246 = vpop.f32.mrb[0].mxu0
      %v4247 = vadd.f32 0.0, %v4246
      %v4248 = vpop.f32.mrb[0].mxu0
      %4249 = vmatprep.mubr.bf16.mxu0 0
      %4250 = vmatmul.mubr.bf16.gmra.mrb[0].mxu0 %v4116
      %v4251 = vpop.f32.mrb[0].mxu0
      %v4252 = vadd.f32 0.0, %v4251
      %v4253 = vpop.f32.mrb[0].mxu0
      %v4254 = vpop.f32.mrb[0].mxu0
      %v4255 = vadd.f32 0.0, %v4254
      %v4256 = vpop.f32.mrb[0].mxu0
      %4257 = vmatprep.mubr.bf16.mxu0 0
      %4258 = vmatmul.mubr.bf16.gmra.mrb[0].mxu0 %v4119
      %v4259 = vpop.f32.mrb[0].mxu0
      %v4260 = vadd.f32 0.0, %v4259
      %v4261 = vpop.f32.mrb[0].mxu0
      %v4262 = vpop.f32.mrb[0].mxu0
      %v4263 = vadd.f32 0.0, %v4262
      %v4264 = vpop.f32.mrb[0].mxu0
      %4265 = vmatprep.mubr.bf16.mxu0 0
      %4266 = vmatmul.mubr.bf16.gmra.mrb[0].mxu0 %v4122
      %v4267 = vpop.f32.mrb[0].mxu0
      %v4268 = vadd.f32 0.0, %v4267
      %v4269 = vpop.f32.mrb[0].mxu0
      %v4270 = vpop.f32.mrb[0].mxu0
      %v4271 = vadd.f32 0.0, %v4270
      %v4272 = vpop.f32.mrb[0].mxu0
      %4273 = vmatprep.mubr.bf16.mxu0 0
      %4274 = vmatmul.mubr.bf16.gmra.mrb[0].mxu0 %v4125
      %v4275 = vpop.f32.mrb[0].mxu0
      %v4276 = vadd.f32 0.0, %v4275
      %v4277 = vpop.f32.mrb[0].mxu0
      %v4278 = vpop.f32.mrb[0].mxu0
      %v4279 = vadd.f32 0.0, %v4278
      %v4280 = vpop.f32.mrb[0].mxu0
      %4281 = vmatprep.mubr.bf16.mxu0 0
      %4282 = vmatmul.mubr.bf16.gmra.mrb[0].mxu0 %v4128
      %v4283 = vpop.f32.mrb[0].mxu0
      %v4284 = vadd.f32 0.0, %v4283
      %v4285 = vpop.f32.mrb[0].mxu0
      %v4286 = vpop.f32.mrb[0].mxu0
      %v4287 = vadd.f32 0.0, %v4286
      %v4288 = vpop.f32.mrb[0].mxu0
      %4289 = vmatprep.mubr.bf16.mxu0 0
      %4290 = vmatmul.mubr.bf16.gmra.mrb[0].mxu0 %v4131
      %v4291 = vpop.f32.mrb[0].mxu0
      %v4292 = vadd.f32 0.0, %v4291
      %v4293 = vpop.f32.mrb[0].mxu0
      %v4294 = vpop.f32.mrb[0].mxu0
      %v4295 = vadd.f32 0.0, %v4294
      %v4296 = vpop.f32.mrb[0].mxu0
      %4297 = vdwg.mxu0
      %v4300 = vunpack.c.l.b16 %v4074
      %v4301 = vunpack.c.l.b16 %v4075
      %v4302 = vpack.c.b16 %v4301, %v4300
      %v4304 = vsel %vm3475, %v4058, 0
      %v4307 = vsel %vm4133, %v4302, 0
      %4309 = vmatprep.subr.bf16.mxu0 0
      %4310 = vmatpush1.bf16.msra.mxu0 %v4307
      %4311 = vmatprep.subr.bf16.mxu0 0
      %4312 = vmatpush1.bf16.msra.mxu0 0
      %4313 = vmatprep.subr.bf16.mxu0 0
      %4314 = vmatpush1.bf16.msra.mxu0 0
      %4315 = vmatprep.subr.bf16.mxu0 0
      %4316 = vmatpush1.bf16.msra.mxu0 0
      %4317 = vmatprep.subr.bf16.mxu0 0
      %4318 = vmatpush1.bf16.msra.mxu0 0
      %4319 = vmatprep.subr.bf16.mxu0 0
      %4320 = vmatpush1.bf16.msra.mxu0 0
      %4321 = vmatprep.subr.bf16.mxu0 0
      %4322 = vmatpush1.bf16.msra.mxu0 0
      %4323 = vmatprep.subr.bf16.mxu0 0
      %4324 = vmatpush1.bf16.msra.mxu0 0
      %4325 = vmatprep.subr.bf16.mxu0 0
      %4326 = vmatpush1.bf16.msra.mxu0 0
      %4327 = vmatprep.subr.bf16.mxu0 0
      %4328 = vmatpush1.bf16.msra.mxu0 0
      %4329 = vmatprep.subr.bf16.mxu0 0
      %4330 = vmatpush1.bf16.msra.mxu0 0
      %4331 = vmatprep.subr.bf16.mxu0 0
      %4332 = vmatpush1.bf16.msra.mxu0 0
      %4333 = vmatprep.subr.bf16.mxu0 0
      %4334 = vmatpush1.bf16.msra.mxu0 0
      %4335 = vmatprep.subr.bf16.mxu0 0
      %4336 = vmatpush1.bf16.msra.mxu0 0
      %4337 = vmatprep.subr.bf16.mxu0 0
      %4338 = vmatpush1.bf16.msra.mxu0 0
      %4339 = vmatprep.subr.bf16.mxu0 0
      %4340 = vmatpush1.bf16.msra.mxu0 0
      %4341 = vmatprep.mubr.bf16.mxu0 0
      %4342 = vmatmul.mubr.bf16.gmra.mrb[0].mxu0 %v4304
      %v4343 = vpop.f32.mrb[0].mxu0
      %v4344 = vadd.f32 %v4172, %v4343
      %v4345 = vpop.f32.mrb[0].mxu0
      %v4346 = vpop.f32.mrb[0].mxu0
      %v4347 = vadd.f32 %v4175, %v4346
      %v4348 = vpop.f32.mrb[0].mxu0
      %4349 = vmatprep.mubr.bf16.mxu0 0
      %4350 = vmatmul.mubr.bf16.gmra.mrb[0].mxu0 %v4086
      %v4351 = vpop.f32.mrb[0].mxu0
      %v4352 = vadd.f32 %v4180, %v4351
      %v4353 = vpop.f32.mrb[0].mxu0
      %v4354 = vpop.f32.mrb[0].mxu0
      %v4355 = vadd.f32 %v4183, %v4354
      %v4356 = vpop.f32.mrb[0].mxu0
      %4357 = vmatprep.mubr.bf16.mxu0 0
      %4358 = vmatmul.mubr.bf16.gmra.mrb[0].mxu0 %v4089
      %v4359 = vpop.f32.mrb[0].mxu0
      %v4360 = vadd.f32 %v4188, %v4359
      %v4361 = vpop.f32.mrb[0].mxu0
      %v4362 = vpop.f32.mrb[0].mxu0
      %v4363 = vadd.f32 %v4191, %v4362
      %v4364 = vpop.f32.mrb[0].mxu0
      %4365 = vmatprep.mubr.bf16.mxu0 0
      %4366 = vmatmul.mubr.bf16.gmra.mrb[0].mxu0 %v4092
      %v4367 = vpop.f32.mrb[0].mxu0
      %v4368 = vadd.f32 %v4196, %v4367
      %v4369 = vpop.f32.mrb[0].mxu0
      %v4370 = vpop.f32.mrb[0].mxu0
      %v4371 = vadd.f32 %v4199, %v4370
      %v4372 = vpop.f32.mrb[0].mxu0
      %4373 = vmatprep.mubr.bf16.mxu0 0
      %4374 = vmatmul.mubr.bf16.gmra.mrb[0].mxu0 %v4095
      %v4375 = vpop.f32.mrb[0].mxu0
      %v4376 = vadd.f32 %v4204, %v4375
      %v4377 = vpop.f32.mrb[0].mxu0
      %v4378 = vpop.f32.mrb[0].mxu0
      %v4379 = vadd.f32 %v4207, %v4378
      %v4380 = vpop.f32.mrb[0].mxu0
      %4381 = vmatprep.mubr.bf16.mxu0 0
      %4382 = vmatmul.mubr.bf16.gmra.mrb[0].mxu0 %v4098
      %v4383 = vpop.f32.mrb[0].mxu0
      %v4384 = vadd.f32 %v4212, %v4383
      %v4385 = vpop.f32.mrb[0].mxu0
      %v4386 = vpop.f32.mrb[0].mxu0
      %v4387 = vadd.f32 %v4215, %v4386
      %v4388 = vpop.f32.mrb[0].mxu0
      %4389 = vmatprep.mubr.bf16.mxu0 0
      %4390 = vmatmul.mubr.bf16.gmra.mrb[0].mxu0 %v4101
      %v4391 = vpop.f32.mrb[0].mxu0
      %v4392 = vadd.f32 %v4220, %v4391
      %v4393 = vpop.f32.mrb[0].mxu0
      %v4394 = vpop.f32.mrb[0].mxu0
      %v4395 = vadd.f32 %v4223, %v4394
      %v4396 = vpop.f32.mrb[0].mxu0
      %4397 = vmatprep.mubr.bf16.mxu0 0
      %4398 = vmatmul.mubr.bf16.gmra.mrb[0].mxu0 %v4104
      %v4399 = vpop.f32.mrb[0].mxu0
      %v4400 = vadd.f32 %v4228, %v4399
      %v4401 = vpop.f32.mrb[0].mxu0
      %v4402 = vpop.f32.mrb[0].mxu0
      %v4403 = vadd.f32 %v4231, %v4402
      %v4404 = vpop.f32.mrb[0].mxu0
      %4405 = vmatprep.mubr.bf16.mxu0 0
      %4406 = vmatmul.mubr.bf16.gmra.mrb[0].mxu0 %v4107
      %v4407 = vpop.f32.mrb[0].mxu0
      %v4408 = vadd.f32 %v4236, %v4407
      %v4409 = vpop.f32.mrb[0].mxu0
      %v4410 = vpop.f32.mrb[0].mxu0
      %v4411 = vadd.f32 %v4239, %v4410
      %v4412 = vpop.f32.mrb[0].mxu0
      %4413 = vmatprep.mubr.bf16.mxu0 0
      %4414 = vmatmul.mubr.bf16.gmra.mrb[0].mxu0 %v4110
      %v4415 = vpop.f32.mrb[0].mxu0
      %v4416 = vadd.f32 %v4244, %v4415
      %v4417 = vpop.f32.mrb[0].mxu0
      %v4418 = vpop.f32.mrb[0].mxu0
      %v4419 = vadd.f32 %v4247, %v4418
      %v4420 = vpop.f32.mrb[0].mxu0
      %4421 = vmatprep.mubr.bf16.mxu0 0
      %4422 = vmatmul.mubr.bf16.gmra.mrb[0].mxu0 %v4113
      %v4423 = vpop.f32.mrb[0].mxu0
      %v4424 = vadd.f32 %v4252, %v4423
      %v4425 = vpop.f32.mrb[0].mxu0
      %v4426 = vpop.f32.mrb[0].mxu0
      %v4427 = vadd.f32 %v4255, %v4426
      %v4428 = vpop.f32.mrb[0].mxu0
      %4429 = vmatprep.mubr.bf16.mxu0 0
      %4430 = vmatmul.mubr.bf16.gmra.mrb[0].mxu0 %v4116
      %v4431 = vpop.f32.mrb[0].mxu0
      %v4432 = vadd.f32 %v4260, %v4431
      %v4433 = vpop.f32.mrb[0].mxu0
      %v4434 = vpop.f32.mrb[0].mxu0
      %v4435 = vadd.f32 %v4263, %v4434
      %v4436 = vpop.f32.mrb[0].mxu0
      %4437 = vmatprep.mubr.bf16.mxu0 0
      %4438 = vmatmul.mubr.bf16.gmra.mrb[0].mxu0 %v4119
      %v4439 = vpop.f32.mrb[0].mxu0
      %v4440 = vadd.f32 %v4268, %v4439
      %v4441 = vpop.f32.mrb[0].mxu0
      %v4442 = vpop.f32.mrb[0].mxu0
      %v4443 = vadd.f32 %v4271, %v4442
      %v4444 = vpop.f32.mrb[0].mxu0
      %4445 = vmatprep.mubr.bf16.mxu0 0
      %4446 = vmatmul.mubr.bf16.gmra.mrb[0].mxu0 %v4122
      %v4447 = vpop.f32.mrb[0].mxu0
      %v4448 = vadd.f32 %v4276, %v4447
      %v4449 = vpop.f32.mrb[0].mxu0
      %v4450 = vpop.f32.mrb[0].mxu0
      %v4451 = vadd.f32 %v4279, %v4450
      %v4452 = vpop.f32.mrb[0].mxu0
      %4453 = vmatprep.mubr.bf16.mxu0 0
      %4454 = vmatmul.mubr.bf16.gmra.mrb[0].mxu0 %v4125
      %v4455 = vpop.f32.mrb[0].mxu0
      %v4456 = vadd.f32 %v4284, %v4455
      %v4457 = vpop.f32.mrb[0].mxu0
      %v4458 = vpop.f32.mrb[0].mxu0
      %v4459 = vadd.f32 %v4287, %v4458
      %v4460 = vpop.f32.mrb[0].mxu0
      %4461 = vmatprep.mubr.bf16.mxu0 0
      %4462 = vmatmul.mubr.bf16.gmra.mrb[0].mxu0 %v4128
      %v4463 = vpop.f32.mrb[0].mxu0
      %v4464 = vadd.f32 %v4292, %v4463
      %v4465 = vpop.f32.mrb[0].mxu0
      %v4466 = vpop.f32.mrb[0].mxu0
      %v4467 = vadd.f32 %v4295, %v4466
      %v4468 = vpop.f32.mrb[0].mxu0
      %4469 = vdwg.mxu0
      %v4470 = vld [vmem:[#allocation2 + $0x10] sm:$0xff]
      %v4471 = vld [vmem:[#allocation2 + $0x18] sm:$0xff]
      %v4472 = vld [vmem:[#allocation2 + $0x20] sm:$0xff]
      %v4473 = vld [vmem:[#allocation2 + $0x28] sm:$0xff]
      %v4474 = vld [vmem:[#allocation2 + $0x30] sm:$0xff]
      %v4475 = vld [vmem:[#allocation2 + $0x38] sm:$0xff]
      %v4476 = vld [vmem:[#allocation2 + $0x40] sm:$0xff]
      %v4477 = vld [vmem:[#allocation2 + $0x48] sm:$0xff]
      %v4478 = vld [vmem:[#allocation2 + $0x50] sm:$0xff]
      %v4479 = vld [vmem:[#allocation2 + $0x58] sm:$0xff]
      %v4480 = vld [vmem:[#allocation2 + $0x60] sm:$0xff]
      %v4481 = vld [vmem:[#allocation2 + $0x68] sm:$0xff]
      %v4482 = vld [vmem:[#allocation2 + $0x70] sm:$0xff]
      %v4483 = vld [vmem:[#allocation2 + $0x78] sm:$0xff]
      %v4484 = vld [vmem:[#allocation2 + $0x80] sm:$0xff]
      %v4485 = vld [vmem:[#allocation2 + $0x88] sm:$0xff]
      %s4486 = scalar_lea.vmem %s6, 16
      %v4487 = vld [vmem:[%s4486] sm:$0xf]
      %v4488 = vld [vmem:[%s4486 + $0x4] sm:$0x3]
      %v4491 = vunpack.c.l.b16 %v4487
      %v4492 = vunpack.c.l.b16 %v4488
      %v4493 = vpack.c.b16 %v4492, %v4491
      %v4495 = vsel %vm3475, %v4470, 0
      %v4498 = vsel %vm3475, %v4471, 0
      %v4501 = vsel %vm3475, %v4472, 0
      %v4504 = vsel %vm3475, %v4473, 0
      %v4507 = vsel %vm3475, %v4474, 0
      %v4510 = vsel %vm3475, %v4475, 0
      %v4513 = vsel %vm3475, %v4476, 0
      %v4516 = vsel %vm3475, %v4477, 0
      %v4519 = vsel %vm3475, %v4478, 0
      %v4522 = vsel %vm3475, %v4479, 0
      %v4525 = vsel %vm3475, %v4480, 0
      %v4528 = vsel %vm3475, %v4481, 0
      %v4531 = vsel %vm3475, %v4482, 0
      %v4534 = vsel %vm3475, %v4483, 0
      %v4537 = vsel %vm3475, %v4484, 0
      %v4540 = vsel %vm3475, %v4485, 0
      %v4543 = vsel %vm4133, %v4493, 0
      %4545 = vmatprep.subr.bf16.mxu0 0
      %4546 = vmatpush1.bf16.msra.mxu0 %v4543
      %4547 = vmatprep.subr.bf16.mxu0 0
      %4548 = vmatpush1.bf16.msra.mxu0 0
      %4549 = vmatprep.subr.bf16.mxu0 0
      %4550 = vmatpush1.bf16.msra.mxu0 0
      %4551 = vmatprep.subr.bf16.mxu0 0
      %4552 = vmatpush1.bf16.msra.mxu0 0
      %4553 = vmatprep.subr.bf16.mxu0 0
      %4554 = vmatpush1.bf16.msra.mxu0 0
      %4555 = vmatprep.subr.bf16.mxu0 0
      %4556 = vmatpush1.bf16.msra.mxu0 0
      %4557 = vmatprep.subr.bf16.mxu0 0
      %4558 = vmatpush1.bf16.msra.mxu0 0
      %4559 = vmatprep.subr.bf16.mxu0 0
      %4560 = vmatpush1.bf16.msra.mxu0 0
      %4561 = vmatprep.subr.bf16.mxu0 0
      %4562 = vmatpush1.bf16.msra.mxu0 0
      %4563 = vmatprep.subr.bf16.mxu0 0
      %4564 = vmatpush1.bf16.msra.mxu0 0
      %4565 = vmatprep.subr.bf16.mxu0 0
      %4566 = vmatpush1.bf16.msra.mxu0 0
      %4567 = vmatprep.subr.bf16.mxu0 0
      %4568 = vmatpush1.bf16.msra.mxu0 0
      %4569 = vmatprep.subr.bf16.mxu0 0
      %4570 = vmatpush1.bf16.msra.mxu0 0
      %4571 = vmatprep.subr.bf16.mxu0 0
      %4572 = vmatpush1.bf16.msra.mxu0 0
      %4573 = vmatprep.subr.bf16.mxu0 0
      %4574 = vmatpush1.bf16.msra.mxu0 0
      %4575 = vmatprep.subr.bf16.mxu0 0
      %4576 = vmatpush1.bf16.msra.mxu0 0
      %4577 = vmatprep.mubr.bf16.mxu0 0
      %4578 = vmatmul.mubr.bf16.gmra.mrb[0].mxu0 %v4495
      %v4579 = vpop.f32.mrb[0].mxu0
      %v4580 = vadd.f32 0.0, %v4579
      %v4581 = vpop.f32.mrb[0].mxu0
      %v4582 = vpop.f32.mrb[0].mxu0
      %v4583 = vadd.f32 0.0, %v4582
      %v4584 = vpop.f32.mrb[0].mxu0
      %4585 = vmatprep.mubr.bf16.mxu0 0
      %4586 = vmatmul.mubr.bf16.gmra.mrb[0].mxu0 %v4498
      %v4587 = vpop.f32.mrb[0].mxu0
      %v4588 = vadd.f32 0.0, %v4587
      %v4589 = vpop.f32.mrb[0].mxu0
      %v4590 = vpop.f32.mrb[0].mxu0
      %v4591 = vadd.f32 0.0, %v4590
      %v4592 = vpop.f32.mrb[0].mxu0
      %4593 = vmatprep.mubr.bf16.mxu0 0
      %4594 = vmatmul.mubr.bf16.gmra.mrb[0].mxu0 %v4501
      %v4595 = vpop.f32.mrb[0].mxu0
      %v4596 = vadd.f32 0.0, %v4595
      %v4597 = vpop.f32.mrb[0].mxu0
      %v4598 = vpop.f32.mrb[0].mxu0
      %v4599 = vadd.f32 0.0, %v4598
      %v4600 = vpop.f32.mrb[0].mxu0
      %4601 = vmatprep.mubr.bf16.mxu0 0
      %4602 = vmatmul.mubr.bf16.gmra.mrb[0].mxu0 %v4504
      %v4603 = vpop.f32.mrb[0].mxu0
      %v4604 = vadd.f32 0.0, %v4603
      %v4605 = vpop.f32.mrb[0].mxu0
      %v4606 = vpop.f32.mrb[0].mxu0
      %v4607 = vadd.f32 0.0, %v4606
      %v4608 = vpop.f32.mrb[0].mxu0
      %4609 = vmatprep.mubr.bf16.mxu0 0
      %4610 = vmatmul.mubr.bf16.gmra.mrb[0].mxu0 %v4507
      %v4611 = vpop.f32.mrb[0].mxu0
      %v4612 = vadd.f32 0.0, %v4611
      %v4613 = vpop.f32.mrb[0].mxu0
      %v4614 = vpop.f32.mrb[0].mxu0
      %v4615 = vadd.f32 0.0, %v4614
      %v4616 = vpop.f32.mrb[0].mxu0
      %4617 = vmatprep.mubr.bf16.mxu0 0
      %4618 = vmatmul.mubr.bf16.gmra.mrb[0].mxu0 %v4510
      %v4619 = vpop.f32.mrb[0].mxu0
      %v4620 = vadd.f32 0.0, %v4619
      %v4621 = vpop.f32.mrb[0].mxu0
      %v4622 = vpop.f32.mrb[0].mxu0
      %v4623 = vadd.f32 0.0, %v4622
      %v4624 = vpop.f32.mrb[0].mxu0
      %4625 = vmatprep.mubr.bf16.mxu0 0
      %4626 = vmatmul.mubr.bf16.gmra.mrb[0].mxu0 %v4513
      %v4627 = vpop.f32.mrb[0].mxu0
      %v4628 = vadd.f32 0.0, %v4627
      %v4629 = vpop.f32.mrb[0].mxu0
      %v4630 = vpop.f32.mrb[0].mxu0
      %v4631 = vadd.f32 0.0, %v4630
      %v4632 = vpop.f32.mrb[0].mxu0
      %4633 = vmatprep.mubr.bf16.mxu0 0
      %4634 = vmatmul.mubr.bf16.gmra.mrb[0].mxu0 %v4516
      %v4635 = vpop.f32.mrb[0].mxu0
      %v4636 = vadd.f32 0.0, %v4635
      %v4637 = vpop.f32.mrb[0].mxu0
      %v4638 = vpop.f32.mrb[0].mxu0
      %v4639 = vadd.f32 0.0, %v4638
      %v4640 = vpop.f32.mrb[0].mxu0
      %4641 = vmatprep.mubr.bf16.mxu0 0
      %4642 = vmatmul.mubr.bf16.gmra.mrb[0].mxu0 %v4519
      %v4643 = vpop.f32.mrb[0].mxu0
      %v4644 = vadd.f32 0.0, %v4643
      %v4645 = vpop.f32.mrb[0].mxu0
      %v4646 = vpop.f32.mrb[0].mxu0
      %v4647 = vadd.f32 0.0, %v4646
      %v4648 = vpop.f32.mrb[0].mxu0
      %4649 = vmatprep.mubr.bf16.mxu0 0
      %4650 = vmatmul.mubr.bf16.gmra.mrb[0].mxu0 %v4522
      %v4651 = vpop.f32.mrb[0].mxu0
      %v4652 = vadd.f32 0.0, %v4651
      %v4653 = vpop.f32.mrb[0].mxu0
      %v4654 = vpop.f32.mrb[0].mxu0
      %v4655 = vadd.f32 0.0, %v4654
      %v4656 = vpop.f32.mrb[0].mxu0
      %4657 = vmatprep.mubr.bf16.mxu0 0
      %4658 = vmatmul.mubr.bf16.gmra.mrb[0].mxu0 %v4525
      %v4659 = vpop.f32.mrb[0].mxu0
      %v4660 = vadd.f32 0.0, %v4659
      %v4661 = vpop.f32.mrb[0].mxu0
      %v4662 = vpop.f32.mrb[0].mxu0
      %v4663 = vadd.f32 0.0, %v4662
      %v4664 = vpop.f32.mrb[0].mxu0
      %4665 = vmatprep.mubr.bf16.mxu0 0
      %4666 = vmatmul.mubr.bf16.gmra.mrb[0].mxu0 %v4528
      %v4667 = vpop.f32.mrb[0].mxu0
      %v4668 = vadd.f32 0.0, %v4667
      %v4669 = vpop.f32.mrb[0].mxu0
      %v4670 = vpop.f32.mrb[0].mxu0
      %v4671 = vadd.f32 0.0, %v4670
      %v4672 = vpop.f32.mrb[0].mxu0
      %4673 = vmatprep.mubr.bf16.mxu0 0
      %4674 = vmatmul.mubr.bf16.gmra.mrb[0].mxu0 %v4531
      %v4675 = vpop.f32.mrb[0].mxu0
      %v4676 = vadd.f32 0.0, %v4675
      %v4677 = vpop.f32.mrb[0].mxu0
      %v4678 = vpop.f32.mrb[0].mxu0
      %v4679 = vadd.f32 0.0, %v4678
      %v4680 = vpop.f32.mrb[0].mxu0
      %4681 = vmatprep.mubr.bf16.mxu0 0
      %4682 = vmatmul.mubr.bf16.gmra.mrb[0].mxu0 %v4534
      %v4683 = vpop.f32.mrb[0].mxu0
      %v4684 = vadd.f32 0.0, %v4683
      %v4685 = vpop.f32.mrb[0].mxu0
      %v4686 = vpop.f32.mrb[0].mxu0
      %v4687 = vadd.f32 0.0, %v4686
      %v4688 = vpop.f32.mrb[0].mxu0
      %4689 = vmatprep.mubr.bf16.mxu0 0
      %4690 = vmatmul.mubr.bf16.gmra.mrb[0].mxu0 %v4537
      %v4691 = vpop.f32.mrb[0].mxu0
      %v4692 = vadd.f32 0.0, %v4691
      %v4693 = vpop.f32.mrb[0].mxu0
      %v4694 = vpop.f32.mrb[0].mxu0
      %v4695 = vadd.f32 0.0, %v4694
      %v4696 = vpop.f32.mrb[0].mxu0
      %4697 = vmatprep.mubr.bf16.mxu0 0
      %4698 = vmatmul.mubr.bf16.gmra.mrb[0].mxu0 %v4540
      %v4699 = vpop.f32.mrb[0].mxu0
      %v4700 = vadd.f32 0.0, %v4699
      %v4701 = vpop.f32.mrb[0].mxu0
      %v4702 = vpop.f32.mrb[0].mxu0
      %v4703 = vadd.f32 0.0, %v4702
      %v4704 = vpop.f32.mrb[0].mxu0
      %4705 = vdwg.mxu0
      %v4706 = vadd.f32 %v4344, %v4580
      %v4707 = vadd.f32 %v4347, %v4583
      %v4708 = vadd.f32 %v4352, %v4588
      %v4709 = vadd.f32 %v4355, %v4591
      %v4710 = vadd.f32 %v4360, %v4596
      %v4711 = vadd.f32 %v4363, %v4599
      %v4712 = vadd.f32 %v4368, %v4604
      %v4713 = vadd.f32 %v4371, %v4607
      %v4714 = vadd.f32 %v4376, %v4612
      %v4715 = vadd.f32 %v4379, %v4615
      %v4716 = vadd.f32 %v4384, %v4620
      %v4717 = vadd.f32 %v4387, %v4623
      %v4718 = vadd.f32 %v4392, %v4628
      %v4719 = vadd.f32 %v4395, %v4631
      %v4720 = vadd.f32 %v4400, %v4636
      %v4721 = vadd.f32 %v4403, %v4639
      %v4722 = vadd.f32 %v4408, %v4644
      %v4723 = vadd.f32 %v4411, %v4647
      %v4724 = vadd.f32 %v4416, %v4652
      %v4725 = vadd.f32 %v4419, %v4655
      %v4726 = vadd.f32 %v4424, %v4660
      %v4727 = vadd.f32 %v4427, %v4663
      %v4728 = vadd.f32 %v4432, %v4668
      %v4729 = vadd.f32 %v4435, %v4671
      %v4730 = vadd.f32 %v4440, %v4676
      %v4731 = vadd.f32 %v4443, %v4679
      %v4732 = vadd.f32 %v4448, %v4684
      %v4733 = vadd.f32 %v4451, %v4687
      %v4734 = vadd.f32 %v4456, %v4692
      %v4735 = vadd.f32 %v4459, %v4695
      %v4736 = vadd.f32 %v4464, %v4700
      %v4737 = vadd.f32 %v4467, %v4703
      %v4739 = vlaneseq
      %v4740 = vshrl.u32 %v4739, 7
      %v4741 = vsub.s32 0, %v4740
      %v4742 = vrot.slane %v3474, %v4741
      %v4744 = vadd.f32 %v4706, %v4742
      %v4745 = vadd.f32 %v4707, %v4742
      %v4746 = vadd.f32 %v4708, %v4742
      %v4747 = vadd.f32 %v4709, %v4742
      %v4748 = vadd.f32 %v4710, %v4742
      %v4749 = vadd.f32 %v4711, %v4742
      %v4750 = vadd.f32 %v4712, %v4742
      %v4751 = vadd.f32 %v4713, %v4742
      %v4752 = vadd.f32 %v4714, %v4742
      %v4753 = vadd.f32 %v4715, %v4742
      %v4754 = vadd.f32 %v4716, %v4742
      %v4755 = vadd.f32 %v4717, %v4742
      %v4756 = vadd.f32 %v4718, %v4742
      %v4757 = vadd.f32 %v4719, %v4742
      %v4758 = vadd.f32 %v4720, %v4742
      %v4759 = vadd.f32 %v4721, %v4742
      %v4760 = vadd.f32 %v4722, %v4742
      %v4761 = vadd.f32 %v4723, %v4742
      %v4762 = vadd.f32 %v4724, %v4742
      %v4763 = vadd.f32 %v4725, %v4742
      %v4764 = vadd.f32 %v4726, %v4742
      %v4765 = vadd.f32 %v4727, %v4742
      %v4766 = vadd.f32 %v4728, %v4742
      %v4767 = vadd.f32 %v4729, %v4742
      %v4768 = vadd.f32 %v4730, %v4742
      %v4769 = vadd.f32 %v4731, %v4742
      %v4770 = vadd.f32 %v4732, %v4742
      %v4771 = vadd.f32 %v4733, %v4742
      %v4772 = vadd.f32 %v4734, %v4742
      %v4773 = vadd.f32 %v4735, %v4742
      %v4774 = vadd.f32 %v4736, %v4742
      %v4775 = vadd.f32 %v4737, %v4742
      %v4776 = vld [vmem:[%s584] sm:$0x1]
      %v4777 = vxor.u32 %v4776, 2147483648
      %v4778 = vmul.f32 %v4777, 1.442695
      %v4779 = vpow.pop %v4778
      %v4780 = vadd.f32 %v4779, 1.0
      %v4781 = vrcp.pop %v4780
      %v4782 = vmul.f32 1.0, %v4781
      %v4783 = vmul.f32 %v4776, %v4782
      %v4784 = vpack.c.bf16 %v4783, %v4783
      %v4785 = vld [vmem:[%s8] sm:$0xf]
      %v4786 = vld [vmem:[%s8 + $0x4] sm:$0xf]
      %v4787 = vld [vmem:[%s9] sm:$0x1]
      %v4790 = vunpack.c.l.b16 %v4785
      %v4791 = vunpack.c.l.b16 %v4786
      %v4792 = vpack.c.b16 %v4791, %v4790
      %vm4794 = vcmask 130048
      %v4796 = vsel %vm4794, %v4784, 0
      %4798 = vmatprep.subr.bf16.mxu0 0
      %4799 = vmatpush1.bf16.msra.mxu0 %v4792
      %4800 = vmatprep.subr.bf16.mxu0 0
      %4801 = vmatpush1.bf16.msra.mxu0 0
      %4802 = vmatprep.subr.bf16.mxu0 0
      %4803 = vmatpush1.bf16.msra.mxu0 0
      %4804 = vmatprep.subr.bf16.mxu0 0
      %4805 = vmatpush1.bf16.msra.mxu0 0
      %4806 = vmatprep.subr.bf16.mxu0 0
      %4807 = vmatpush1.bf16.msra.mxu0 0
      %4808 = vmatprep.subr.bf16.mxu0 0
      %4809 = vmatpush1.bf16.msra.mxu0 0
      %4810 = vmatprep.subr.bf16.mxu0 0
      %4811 = vmatpush1.bf16.msra.mxu0 0
      %4812 = vmatprep.subr.bf16.mxu0 0
      %4813 = vmatpush1.bf16.msra.mxu0 0
      %4814 = vmatprep.subr.bf16.mxu0 0
      %4815 = vmatpush1.bf16.msra.mxu0 0
      %4816 = vmatprep.subr.bf16.mxu0 0
      %4817 = vmatpush1.bf16.msra.mxu0 0
      %4818 = vmatprep.subr.bf16.mxu0 0
      %4819 = vmatpush1.bf16.msra.mxu0 0
      %4820 = vmatprep.subr.bf16.mxu0 0
      %4821 = vmatpush1.bf16.msra.mxu0 0
      %4822 = vmatprep.subr.bf16.mxu0 0
      %4823 = vmatpush1.bf16.msra.mxu0 0
      %4824 = vmatprep.subr.bf16.mxu0 0
      %4825 = vmatpush1.bf16.msra.mxu0 0
      %4826 = vmatprep.subr.bf16.mxu0 0
      %4827 = vmatpush1.bf16.msra.mxu0 0
      %4828 = vmatprep.subr.bf16.mxu0 0
      %4829 = vmatpush1.bf16.msra.mxu0 0
      %4830 = vmatprep.mubr.bf16.mxu0 0
      %4831 = vmatmul.mubr.bf16.gmra.mrb[0].mxu0 %v4796
      %v4832 = vpop.f32.mrb[0].mxu0
      %v4833 = vadd.f32 %v4787, %v4832
      %v4834 = vpop.f32.mrb[0].mxu0
      %v4835 = vpop.f32.mrb[0].mxu0
      %v4836 = vpop.f32.mrb[0].mxu0
      %4837 = vdwg.mxu0
      %v4838 = vlaneseq
      %v4839 = vshrl.u32 %v4838, 7
      %v4840 = vsub.s32 0, %v4839
      %v4841 = vrot.slane %v4833, %v4840
      %v4842 = vadd.f32 %v4744, %v4841
      %v4843 = vadd.f32 %v4745, %v4841
      %v4844 = vadd.f32 %v4746, %v4841
      %v4845 = vadd.f32 %v4747, %v4841
      %v4846 = vadd.f32 %v4748, %v4841
      %v4847 = vadd.f32 %v4749, %v4841
      %v4848 = vadd.f32 %v4750, %v4841
      %v4849 = vadd.f32 %v4751, %v4841
      %v4850 = vadd.f32 %v4752, %v4841
      %v4851 = vadd.f32 %v4753, %v4841
      %v4852 = vadd.f32 %v4754, %v4841
      %v4853 = vadd.f32 %v4755, %v4841
      %v4854 = vadd.f32 %v4756, %v4841
      %v4855 = vadd.f32 %v4757, %v4841
      %v4856 = vadd.f32 %v4758, %v4841
      %v4857 = vadd.f32 %v4759, %v4841
      %v4858 = vadd.f32 %v4760, %v4841
      %v4859 = vadd.f32 %v4761, %v4841
      %v4860 = vadd.f32 %v4762, %v4841
      %v4861 = vadd.f32 %v4763, %v4841
      %v4862 = vadd.f32 %v4764, %v4841
      %v4863 = vadd.f32 %v4765, %v4841
      %v4864 = vadd.f32 %v4766, %v4841
      %v4865 = vadd.f32 %v4767, %v4841
      %v4866 = vadd.f32 %v4768, %v4841
      %v4867 = vadd.f32 %v4769, %v4841
      %v4868 = vadd.f32 %v4770, %v4841
      %v4869 = vadd.f32 %v4771, %v4841
      %v4870 = vadd.f32 %v4772, %v4841
      %v4871 = vadd.f32 %v4773, %v4841
      %v4872 = vadd.f32 %v4774, %v4841
      %v4873 = vadd.f32 %v4775, %v4841
      %v4874 = vld [vmem:[%s12] sm:$0x1]
      %v4875 = vld [vmem:[%s13] sm:$0x1]
      %v4876 = vld [vmem:[%s10] sm:$0xff]
      %v4877 = vld [vmem:[%s11] sm:$0x3]
      %vm4878 = vcmask 64512
      %v4879 = vsel %vm4878, %v4842, 0.0
      %v4880 = vsel %vm4878, %v4843, 0.0
      %v4881 = vadd.f32 %v4879, %v4880
      %v4882 = vsel %vm4878, %v4844, 0.0
      %v4883 = vadd.f32 %v4881, %v4882
      %v4884 = vsel %vm4878, %v4845, 0.0
      %v4885 = vadd.f32 %v4883, %v4884
      %v4886 = vsel %vm4878, %v4846, 0.0
      %v4887 = vadd.f32 %v4885, %v4886
      %v4888 = vsel %vm4878, %v4847, 0.0
      %v4889 = vadd.f32 %v4887, %v4888
      %v4890 = vsel %vm4878, %v4848, 0.0
      %v4891 = vadd.f32 %v4889, %v4890
      %v4892 = vsel %vm4878, %v4849, 0.0
      %v4893 = vadd.f32 %v4891, %v4892
      %v4894 = vsel %vm4878, %v4850, 0.0
      %v4895 = vadd.f32 %v4893, %v4894
      %v4896 = vsel %vm4878, %v4851, 0.0
      %v4897 = vadd.f32 %v4895, %v4896
      %v4898 = vsel %vm4878, %v4852, 0.0
      %v4899 = vadd.f32 %v4897, %v4898
      %v4900 = vsel %vm4878, %v4853, 0.0
      %v4901 = vadd.f32 %v4899, %v4900
      %v4902 = vsel %vm4878, %v4854, 0.0
      %v4903 = vadd.f32 %v4901, %v4902
      %v4904 = vsel %vm4878, %v4855, 0.0
      %v4905 = vadd.f32 %v4903, %v4904
      %v4906 = vsel %vm4878, %v4856, 0.0
      %v4907 = vadd.f32 %v4905, %v4906
      %v4908 = vsel %vm4878, %v4857, 0.0
      %v4909 = vadd.f32 %v4907, %v4908
      %v4910 = vsel %vm4878, %v4858, 0.0
      %v4911 = vadd.f32 %v4909, %v4910
      %v4912 = vsel %vm4878, %v4859, 0.0
      %v4913 = vadd.f32 %v4911, %v4912
      %v4914 = vsel %vm4878, %v4860, 0.0
      %v4915 = vadd.f32 %v4913, %v4914
      %v4916 = vsel %vm4878, %v4861, 0.0
      %v4917 = vadd.f32 %v4915, %v4916
      %v4918 = vsel %vm4878, %v4862, 0.0
      %v4919 = vadd.f32 %v4917, %v4918
      %v4920 = vsel %vm4878, %v4863, 0.0
      %v4921 = vadd.f32 %v4919, %v4920
      %v4922 = vsel %vm4878, %v4864, 0.0
      %v4923 = vadd.f32 %v4921, %v4922
      %v4924 = vsel %vm4878, %v4865, 0.0
      %v4925 = vadd.f32 %v4923, %v4924
      %v4926 = vsel %vm4878, %v4866, 0.0
      %v4927 = vadd.f32 %v4925, %v4926
      %v4928 = vsel %vm4878, %v4867, 0.0
      %v4929 = vadd.f32 %v4927, %v4928
      %v4930 = vsel %vm4878, %v4868, 0.0
      %v4931 = vadd.f32 %v4929, %v4930
      %v4932 = vsel %vm4878, %v4869, 0.0
      %v4933 = vadd.f32 %v4931, %v4932
      %v4934 = vsel %vm4878, %v4870, 0.0
      %v4935 = vadd.f32 %v4933, %v4934
      %v4936 = vsel %vm4878, %v4871, 0.0
      %v4937 = vadd.f32 %v4935, %v4936
      %v4938 = vsel %vm4878, %v4872, 0.0
      %v4939 = vadd.f32 %v4937, %v4938
      %v4940 = vsel %vm4878, %v4873, 0.0
      %v4941 = vadd.f32 %v4939, %v4940
      %v4942 = vrot.slane %v4941, 4
      %v4943 = vadd.f32 %v4941, %v4942
      %v4944 = vrot.slane %v4943, 2
      %v4945 = vadd.f32 %v4943, %v4944
      %v4946 = vrot.slane %v4945, 1
      %v4947 = vadd.f32 %v4945, %v4946
      %v4948 = vmul.f32 %v4842, %v4842
      %v4949 = vmul.f32 %v4843, %v4843
      %v4950 = vmul.f32 %v4844, %v4844
      %v4951 = vmul.f32 %v4845, %v4845
      %v4952 = vmul.f32 %v4846, %v4846
      %v4953 = vmul.f32 %v4847, %v4847
      %v4954 = vmul.f32 %v4848, %v4848
      %v4955 = vmul.f32 %v4849, %v4849
      %v4956 = vmul.f32 %v4850, %v4850
      %v4957 = vmul.f32 %v4851, %v4851
      %v4958 = vmul.f32 %v4852, %v4852
      %v4959 = vmul.f32 %v4853, %v4853
      %v4960 = vmul.f32 %v4854, %v4854
      %v4961 = vmul.f32 %v4855, %v4855
      %v4962 = vmul.f32 %v4856, %v4856
      %v4963 = vmul.f32 %v4857, %v4857
      %v4964 = vmul.f32 %v4858, %v4858
      %v4965 = vmul.f32 %v4859, %v4859
      %v4966 = vmul.f32 %v4860, %v4860
      %v4967 = vmul.f32 %v4861, %v4861
      %v4968 = vmul.f32 %v4862, %v4862
      %v4969 = vmul.f32 %v4863, %v4863
      %v4970 = vmul.f32 %v4864, %v4864
      %v4971 = vmul.f32 %v4865, %v4865
      %v4972 = vmul.f32 %v4866, %v4866
      %v4973 = vmul.f32 %v4867, %v4867
      %v4974 = vmul.f32 %v4868, %v4868
      %v4975 = vmul.f32 %v4869, %v4869
      %v4976 = vmul.f32 %v4870, %v4870
      %v4977 = vmul.f32 %v4871, %v4871
      %v4978 = vmul.f32 %v4872, %v4872
      %v4979 = vmul.f32 %v4873, %v4873
      %v4980 = vsel %vm4878, %v4948, 0.0
      %v4981 = vsel %vm4878, %v4949, 0.0
      %v4982 = vadd.f32 %v4980, %v4981
      %v4983 = vsel %vm4878, %v4950, 0.0
      %v4984 = vadd.f32 %v4982, %v4983
      %v4985 = vsel %vm4878, %v4951, 0.0
      %v4986 = vadd.f32 %v4984, %v4985
      %v4987 = vsel %vm4878, %v4952, 0.0
      %v4988 = vadd.f32 %v4986, %v4987
      %v4989 = vsel %vm4878, %v4953, 0.0
      %v4990 = vadd.f32 %v4988, %v4989
      %v4991 = vsel %vm4878, %v4954, 0.0
      %v4992 = vadd.f32 %v4990, %v4991
      %v4993 = vsel %vm4878, %v4955, 0.0
      %v4994 = vadd.f32 %v4992, %v4993
      %v4995 = vsel %vm4878, %v4956, 0.0
      %v4996 = vadd.f32 %v4994, %v4995
      %v4997 = vsel %vm4878, %v4957, 0.0
      %v4998 = vadd.f32 %v4996, %v4997
      %v4999 = vsel %vm4878, %v4958, 0.0
      %v5000 = vadd.f32 %v4998, %v4999
      %v5001 = vsel %vm4878, %v4959, 0.0
      %v5002 = vadd.f32 %v5000, %v5001
      %v5003 = vsel %vm4878, %v4960, 0.0
      %v5004 = vadd.f32 %v5002, %v5003
      %v5005 = vsel %vm4878, %v4961, 0.0
      %v5006 = vadd.f32 %v5004, %v5005
      %v5007 = vsel %vm4878, %v4962, 0.0
      %v5008 = vadd.f32 %v5006, %v5007
      %v5009 = vsel %vm4878, %v4963, 0.0
      %v5010 = vadd.f32 %v5008, %v5009
      %v5011 = vsel %vm4878, %v4964, 0.0
      %v5012 = vadd.f32 %v5010, %v5011
      %v5013 = vsel %vm4878, %v4965, 0.0
      %v5014 = vadd.f32 %v5012, %v5013
      %v5015 = vsel %vm4878, %v4966, 0.0
      %v5016 = vadd.f32 %v5014, %v5015
      %v5017 = vsel %vm4878, %v4967, 0.0
      %v5018 = vadd.f32 %v5016, %v5017
      %v5019 = vsel %vm4878, %v4968, 0.0
      %v5020 = vadd.f32 %v5018, %v5019
      %v5021 = vsel %vm4878, %v4969, 0.0
      %v5022 = vadd.f32 %v5020, %v5021
      %v5023 = vsel %vm4878, %v4970, 0.0
      %v5024 = vadd.f32 %v5022, %v5023
      %v5025 = vsel %vm4878, %v4971, 0.0
      %v5026 = vadd.f32 %v5024, %v5025
      %v5027 = vsel %vm4878, %v4972, 0.0
      %v5028 = vadd.f32 %v5026, %v5027
      %v5029 = vsel %vm4878, %v4973, 0.0
      %v5030 = vadd.f32 %v5028, %v5029
      %v5031 = vsel %vm4878, %v4974, 0.0
      %v5032 = vadd.f32 %v5030, %v5031
      %v5033 = vsel %vm4878, %v4975, 0.0
      %v5034 = vadd.f32 %v5032, %v5033
      %v5035 = vsel %vm4878, %v4976, 0.0
      %v5036 = vadd.f32 %v5034, %v5035
      %v5037 = vsel %vm4878, %v4977, 0.0
      %v5038 = vadd.f32 %v5036, %v5037
      %v5039 = vsel %vm4878, %v4978, 0.0
      %v5040 = vadd.f32 %v5038, %v5039
      %v5041 = vsel %vm4878, %v4979, 0.0
      %v5042 = vadd.f32 %v5040, %v5041
      %v5043 = vrot.slane %v5042, 4
      %v5044 = vadd.f32 %v5042, %v5043
      %v5045 = vrot.slane %v5044, 2
      %v5046 = vadd.f32 %v5044, %v5045
      %v5047 = vrot.slane %v5046, 1
      %v5048 = vadd.f32 %v5046, %v5047
      %v5050 = vsel %vm4878, %v4947, 0
      %5052 = vmatprep.subr.mxu0 0.0
      %v5053 = vand.u32 %v4876, 4294901760
      %5054 = vmatpush1.msra.mxu0 %v5053
      %5055 = vmatprep.subr.mxu0 0.0
      %5056 = vmatpush1.msra.mxu0 0.0
      %5057 = vmatprep.subr.mxu0 0.0
      %5058 = vmatpush1.msra.mxu0 0.0
      %5059 = vmatprep.subr.mxu0 0.0
      %5060 = vmatpush1.msra.mxu0 0.0
      %5061 = vmatprep.subr.mxu0 0.0
      %5062 = vmatpush1.msra.mxu0 0.0
      %5063 = vmatprep.subr.mxu0 0.0
      %5064 = vmatpush1.msra.mxu0 0.0
      %5065 = vmatprep.subr.mxu0 0.0
      %5066 = vmatpush1.msra.mxu0 0.0
      %5067 = vmatprep.subr.mxu0 0.0
      %5068 = vmatpush1.msra.mxu0 0.0
      %5069 = vmatprep.subr.mxu0 0.0
      %5070 = vmatpush1.msra.mxu0 0.0
      %5071 = vmatprep.subr.mxu0 0.0
      %5072 = vmatpush1.msra.mxu0 0.0
      %5073 = vmatprep.subr.mxu0 0.0
      %5074 = vmatpush1.msra.mxu0 0.0
      %5075 = vmatprep.subr.mxu0 0.0
      %5076 = vmatpush1.msra.mxu0 0.0
      %5077 = vmatprep.subr.mxu0 0.0
      %5078 = vmatpush1.msra.mxu0 0.0
      %5079 = vmatprep.subr.mxu0 0.0
      %5080 = vmatpush1.msra.mxu0 0.0
      %5081 = vmatprep.subr.mxu0 0.0
      %5082 = vmatpush1.msra.mxu0 0.0
      %5083 = vmatprep.subr.mxu0 0.0
      %5084 = vmatpush1.msra.mxu0 0.0
      %5085 = vmatprep.subr.mxu0 0.0
      %5086 = vmatpush1.msra.mxu0 0.0
      %5087 = vmatprep.subr.mxu0 0.0
      %5088 = vmatpush1.msra.mxu0 0.0
      %5089 = vmatprep.subr.mxu0 0.0
      %5090 = vmatpush1.msra.mxu0 0.0
      %5091 = vmatprep.subr.mxu0 0.0
      %5092 = vmatpush1.msra.mxu0 0.0
      %5093 = vmatprep.subr.mxu0 0.0
      %5094 = vmatpush1.msra.mxu0 0.0
      %5095 = vmatprep.subr.mxu0 0.0
      %5096 = vmatpush1.msra.mxu0 0.0
      %5097 = vmatprep.subr.mxu0 0.0
      %5098 = vmatpush1.msra.mxu0 0.0
      %5099 = vmatprep.subr.mxu0 0.0
      %5100 = vmatpush1.msra.mxu0 0.0
      %5101 = vmatprep.subr.mxu0 0.0
      %5102 = vmatpush1.msra.mxu0 0.0
      %5103 = vmatprep.subr.mxu0 0.0
      %5104 = vmatpush1.msra.mxu0 0.0
      %5105 = vmatprep.subr.mxu0 0.0
      %5106 = vmatpush1.msra.mxu0 0.0
      %5107 = vmatprep.subr.mxu0 0.0
      %5108 = vmatpush1.msra.mxu0 0.0
      %5109 = vmatprep.subr.mxu0 0.0
      %5110 = vmatpush1.msra.mxu0 0.0
      %5111 = vmatprep.subr.mxu0 0.0
      %5112 = vmatpush1.msra.mxu0 0.0
      %5113 = vmatprep.subr.mxu0 0.0
      %5114 = vmatpush1.msra.mxu0 0.0
      %5115 = vmatprep.subr.mxu0 0.0
      %5116 = vmatpush1.msra.mxu0 0.0
      %5117 = vmatprep.mubr.f32.mxu0 0.0
      %v5118 = vand.u32 %v5050, 4294901760
      %v5119 = vsub.f32 %v5050, %v5118
      %v5120 = vand.u32 %v5119, 4294901760
      %v5121 = vsub.f32 %v5119, %v5120
      %v5122 = vand.u32 %v5121, 4294901760
      %5123 = vmatmul.mubr.f32.gmra.mrb[0].mxu0 %v5122
      %v5124 = vpop.f32.mrb[0].mxu0
      %v5125 = vadd.f32 0.0, %v5124
      %v5126 = vpop.f32.mrb[0].mxu0
      %5127 = vdwg.mxu0
      %5128 = vmatprep.subr.mxu0 0.0
      %v5129 = vand.u32 %v4876, 4294901760
      %v5130 = vsub.f32 %v4876, %v5129
      %v5131 = vand.u32 %v5130, 4294901760
      %v5132 = vsub.f32 %v5130, %v5131
      %v5133 = vand.u32 %v5132, 4294901760
      %5134 = vmatpush1.msra.mxu0 %v5133
      %5135 = vmatprep.subr.mxu0 0.0
      %5136 = vmatpush1.msra.mxu0 0.0
      %5137 = vmatprep.subr.mxu0 0.0
      %5138 = vmatpush1.msra.mxu0 0.0
      %5139 = vmatprep.subr.mxu0 0.0
      %5140 = vmatpush1.msra.mxu0 0.0
      %5141 = vmatprep.subr.mxu0 0.0
      %5142 = vmatpush1.msra.mxu0 0.0
      %5143 = vmatprep.subr.mxu0 0.0
      %5144 = vmatpush1.msra.mxu0 0.0
      %5145 = vmatprep.subr.mxu0 0.0
      %5146 = vmatpush1.msra.mxu0 0.0
      %5147 = vmatprep.subr.mxu0 0.0
      %5148 = vmatpush1.msra.mxu0 0.0
      %5149 = vmatprep.subr.mxu0 0.0
      %5150 = vmatpush1.msra.mxu0 0.0
      %5151 = vmatprep.subr.mxu0 0.0
      %5152 = vmatpush1.msra.mxu0 0.0
      %5153 = vmatprep.subr.mxu0 0.0
      %5154 = vmatpush1.msra.mxu0 0.0
      %5155 = vmatprep.subr.mxu0 0.0
      %5156 = vmatpush1.msra.mxu0 0.0
      %5157 = vmatprep.subr.mxu0 0.0
      %5158 = vmatpush1.msra.mxu0 0.0
      %5159 = vmatprep.subr.mxu0 0.0
      %5160 = vmatpush1.msra.mxu0 0.0
      %5161 = vmatprep.subr.mxu0 0.0
      %5162 = vmatpush1.msra.mxu0 0.0
      %5163 = vmatprep.subr.mxu0 0.0
      %5164 = vmatpush1.msra.mxu0 0.0
      %5165 = vmatprep.subr.mxu0 0.0
      %5166 = vmatpush1.msra.mxu0 0.0
      %5167 = vmatprep.subr.mxu0 0.0
      %5168 = vmatpush1.msra.mxu0 0.0
      %5169 = vmatprep.subr.mxu0 0.0
      %5170 = vmatpush1.msra.mxu0 0.0
      %5171 = vmatprep.subr.mxu0 0.0
      %5172 = vmatpush1.msra.mxu0 0.0
      %5173 = vmatprep.subr.mxu0 0.0
      %5174 = vmatpush1.msra.mxu0 0.0
      %5175 = vmatprep.subr.mxu0 0.0
      %5176 = vmatpush1.msra.mxu0 0.0
      %5177 = vmatprep.subr.mxu0 0.0
      %5178 = vmatpush1.msra.mxu0 0.0
      %5179 = vmatprep.subr.mxu0 0.0
      %5180 = vmatpush1.msra.mxu0 0.0
      %5181 = vmatprep.subr.mxu0 0.0
      %5182 = vmatpush1.msra.mxu0 0.0
      %5183 = vmatprep.subr.mxu0 0.0
      %5184 = vmatpush1.msra.mxu0 0.0
      %5185 = vmatprep.subr.mxu0 0.0
      %5186 = vmatpush1.msra.mxu0 0.0
      %5187 = vmatprep.subr.mxu0 0.0
      %5188 = vmatpush1.msra.mxu0 0.0
      %5189 = vmatprep.subr.mxu0 0.0
      %5190 = vmatpush1.msra.mxu0 0.0
      %5191 = vmatprep.subr.mxu0 0.0
      %5192 = vmatpush1.msra.mxu0 0.0
      %5193 = vmatprep.subr.mxu0 0.0
      %5194 = vmatpush1.msra.mxu0 0.0
      %5195 = vmatprep.subr.mxu0 0.0
      %5196 = vmatpush1.msra.mxu0 0.0
      %5197 = vmatprep.mubr.f32.mxu0 0.0
      %v5198 = vand.u32 %v5050, 4294901760
      %5199 = vmatmul.mubr.f32.gmra.mrb[0].mxu0 %v5198
      %v5200 = vpop.f32.mrb[0].mxu0
      %v5201 = vadd.f32 %v5125, %v5200
      %v5202 = vpop.f32.mrb[0].mxu0
      %5203 = vdwg.mxu0
      %5204 = vmatprep.subr.mxu0 0.0
      %v5205 = vand.u32 %v4876, 4294901760
      %v5206 = vsub.f32 %v4876, %v5205
      %5207 = vmatpush1.msra.mxu0 %v5206
      %5208 = vmatprep.subr.mxu0 0.0
      %5209 = vmatpush1.msra.mxu0 0.0
      %5210 = vmatprep.subr.mxu0 0.0
      %5211 = vmatpush1.msra.mxu0 0.0
      %5212 = vmatprep.subr.mxu0 0.0
      %5213 = vmatpush1.msra.mxu0 0.0
      %5214 = vmatprep.subr.mxu0 0.0
      %5215 = vmatpush1.msra.mxu0 0.0
      %5216 = vmatprep.subr.mxu0 0.0
      %5217 = vmatpush1.msra.mxu0 0.0
      %5218 = vmatprep.subr.mxu0 0.0
      %5219 = vmatpush1.msra.mxu0 0.0
      %5220 = vmatprep.subr.mxu0 0.0
      %5221 = vmatpush1.msra.mxu0 0.0
      %5222 = vmatprep.subr.mxu0 0.0
      %5223 = vmatpush1.msra.mxu0 0.0
      %5224 = vmatprep.subr.mxu0 0.0
      %5225 = vmatpush1.msra.mxu0 0.0
      %5226 = vmatprep.subr.mxu0 0.0
      %5227 = vmatpush1.msra.mxu0 0.0
      %5228 = vmatprep.subr.mxu0 0.0
      %5229 = vmatpush1.msra.mxu0 0.0
      %5230 = vmatprep.subr.mxu0 0.0
      %5231 = vmatpush1.msra.mxu0 0.0
      %5232 = vmatprep.subr.mxu0 0.0
      %5233 = vmatpush1.msra.mxu0 0.0
      %5234 = vmatprep.subr.mxu0 0.0
      %5235 = vmatpush1.msra.mxu0 0.0
      %5236 = vmatprep.subr.mxu0 0.0
      %5237 = vmatpush1.msra.mxu0 0.0
      %5238 = vmatprep.subr.mxu0 0.0
      %5239 = vmatpush1.msra.mxu0 0.0
      %5240 = vmatprep.subr.mxu0 0.0
      %5241 = vmatpush1.msra.mxu0 0.0
      %5242 = vmatprep.subr.mxu0 0.0
      %5243 = vmatpush1.msra.mxu0 0.0
      %5244 = vmatprep.subr.mxu0 0.0
      %5245 = vmatpush1.msra.mxu0 0.0
      %5246 = vmatprep.subr.mxu0 0.0
      %5247 = vmatpush1.msra.mxu0 0.0
      %5248 = vmatprep.subr.mxu0 0.0
      %5249 = vmatpush1.msra.mxu0 0.0
      %5250 = vmatprep.subr.mxu0 0.0
      %5251 = vmatpush1.msra.mxu0 0.0
      %5252 = vmatprep.subr.mxu0 0.0
      %5253 = vmatpush1.msra.mxu0 0.0
      %5254 = vmatprep.subr.mxu0 0.0
      %5255 = vmatpush1.msra.mxu0 0.0
      %5256 = vmatprep.subr.mxu0 0.0
      %5257 = vmatpush1.msra.mxu0 0.0
      %5258 = vmatprep.subr.mxu0 0.0
      %5259 = vmatpush1.msra.mxu0 0.0
      %5260 = vmatprep.subr.mxu0 0.0
      %5261 = vmatpush1.msra.mxu0 0.0
      %5262 = vmatprep.subr.mxu0 0.0
      %5263 = vmatpush1.msra.mxu0 0.0
      %5264 = vmatprep.subr.mxu0 0.0
      %5265 = vmatpush1.msra.mxu0 0.0
      %5266 = vmatprep.subr.mxu0 0.0
      %5267 = vmatpush1.msra.mxu0 0.0
      %5268 = vmatprep.subr.mxu0 0.0
      %5269 = vmatpush1.msra.mxu0 0.0
      %5270 = vmatprep.mubr.f32.mxu0 0.0
      %v5271 = vand.u32 %v5050, 4294901760
      %v5272 = vsub.f32 %v5050, %v5271
      %5273 = vmatmul.mubr.f32.gmra.mrb[0].mxu0 %v5272
      %v5274 = vpop.f32.mrb[0].mxu0
      %v5275 = vadd.f32 %v5201, %v5274
      %v5276 = vpop.f32.mrb[0].mxu0
      %5277 = vdwg.mxu0
      %5278 = vmatprep.subr.mxu0 0.0
      %v5279 = vand.u32 %v4876, 4294901760
      %5280 = vmatpush1.msra.mxu0 %v5279
      %5281 = vmatprep.subr.mxu0 0.0
      %5282 = vmatpush1.msra.mxu0 0.0
      %5283 = vmatprep.subr.mxu0 0.0
      %5284 = vmatpush1.msra.mxu0 0.0
      %5285 = vmatprep.subr.mxu0 0.0
      %5286 = vmatpush1.msra.mxu0 0.0
      %5287 = vmatprep.subr.mxu0 0.0
      %5288 = vmatpush1.msra.mxu0 0.0
      %5289 = vmatprep.subr.mxu0 0.0
      %5290 = vmatpush1.msra.mxu0 0.0
      %5291 = vmatprep.subr.mxu0 0.0
      %5292 = vmatpush1.msra.mxu0 0.0
      %5293 = vmatprep.subr.mxu0 0.0
      %5294 = vmatpush1.msra.mxu0 0.0
      %5295 = vmatprep.subr.mxu0 0.0
      %5296 = vmatpush1.msra.mxu0 0.0
      %5297 = vmatprep.subr.mxu0 0.0
      %5298 = vmatpush1.msra.mxu0 0.0
      %5299 = vmatprep.subr.mxu0 0.0
      %5300 = vmatpush1.msra.mxu0 0.0
      %5301 = vmatprep.subr.mxu0 0.0
      %5302 = vmatpush1.msra.mxu0 0.0
      %5303 = vmatprep.subr.mxu0 0.0
      %5304 = vmatpush1.msra.mxu0 0.0
      %5305 = vmatprep.subr.mxu0 0.0
      %5306 = vmatpush1.msra.mxu0 0.0
      %5307 = vmatprep.subr.mxu0 0.0
      %5308 = vmatpush1.msra.mxu0 0.0
      %5309 = vmatprep.subr.mxu0 0.0
      %5310 = vmatpush1.msra.mxu0 0.0
      %5311 = vmatprep.subr.mxu0 0.0
      %5312 = vmatpush1.msra.mxu0 0.0
      %5313 = vmatprep.subr.mxu0 0.0
      %5314 = vmatpush1.msra.mxu0 0.0
      %5315 = vmatprep.subr.mxu0 0.0
      %5316 = vmatpush1.msra.mxu0 0.0
      %5317 = vmatprep.subr.mxu0 0.0
      %5318 = vmatpush1.msra.mxu0 0.0
      %5319 = vmatprep.subr.mxu0 0.0
      %5320 = vmatpush1.msra.mxu0 0.0
      %5321 = vmatprep.subr.mxu0 0.0
      %5322 = vmatpush1.msra.mxu0 0.0
      %5323 = vmatprep.subr.mxu0 0.0
      %5324 = vmatpush1.msra.mxu0 0.0
      %5325 = vmatprep.subr.mxu0 0.0
      %5326 = vmatpush1.msra.mxu0 0.0
      %5327 = vmatprep.subr.mxu0 0.0
      %5328 = vmatpush1.msra.mxu0 0.0
      %5329 = vmatprep.subr.mxu0 0.0
      %5330 = vmatpush1.msra.mxu0 0.0
      %5331 = vmatprep.subr.mxu0 0.0
      %5332 = vmatpush1.msra.mxu0 0.0
      %5333 = vmatprep.subr.mxu0 0.0
      %5334 = vmatpush1.msra.mxu0 0.0
      %5335 = vmatprep.subr.mxu0 0.0
      %5336 = vmatpush1.msra.mxu0 0.0
      %5337 = vmatprep.subr.mxu0 0.0
      %5338 = vmatpush1.msra.mxu0 0.0
      %5339 = vmatprep.subr.mxu0 0.0
      %5340 = vmatpush1.msra.mxu0 0.0
      %5341 = vmatprep.subr.mxu0 0.0
      %5342 = vmatpush1.msra.mxu0 0.0
      %5343 = vmatprep.mubr.f32.mxu0 0.0
      %v5344 = vand.u32 %v5050, 4294901760
      %v5345 = vsub.f32 %v5050, %v5344
      %v5346 = vand.u32 %v5345, 4294901760
      %5347 = vmatmul.mubr.f32.gmra.mrb[0].mxu0 %v5346
      %v5348 = vpop.f32.mrb[0].mxu0
      %v5349 = vadd.f32 %v5275, %v5348
      %v5350 = vpop.f32.mrb[0].mxu0
      %5351 = vdwg.mxu0
      %5352 = vmatprep.subr.mxu0 0.0
      %v5353 = vand.u32 %v4876, 4294901760
      %v5354 = vsub.f32 %v4876, %v5353
      %v5355 = vand.u32 %v5354, 4294901760
      %5356 = vmatpush1.msra.mxu0 %v5355
      %5357 = vmatprep.subr.mxu0 0.0
      %5358 = vmatpush1.msra.mxu0 0.0
      %5359 = vmatprep.subr.mxu0 0.0
      %5360 = vmatpush1.msra.mxu0 0.0
      %5361 = vmatprep.subr.mxu0 0.0
      %5362 = vmatpush1.msra.mxu0 0.0
      %5363 = vmatprep.subr.mxu0 0.0
      %5364 = vmatpush1.msra.mxu0 0.0
      %5365 = vmatprep.subr.mxu0 0.0
      %5366 = vmatpush1.msra.mxu0 0.0
      %5367 = vmatprep.subr.mxu0 0.0
      %5368 = vmatpush1.msra.mxu0 0.0
      %5369 = vmatprep.subr.mxu0 0.0
      %5370 = vmatpush1.msra.mxu0 0.0
      %5371 = vmatprep.subr.mxu0 0.0
      %5372 = vmatpush1.msra.mxu0 0.0
      %5373 = vmatprep.subr.mxu0 0.0
      %5374 = vmatpush1.msra.mxu0 0.0
      %5375 = vmatprep.subr.mxu0 0.0
      %5376 = vmatpush1.msra.mxu0 0.0
      %5377 = vmatprep.subr.mxu0 0.0
      %5378 = vmatpush1.msra.mxu0 0.0
      %5379 = vmatprep.subr.mxu0 0.0
      %5380 = vmatpush1.msra.mxu0 0.0
      %5381 = vmatprep.subr.mxu0 0.0
      %5382 = vmatpush1.msra.mxu0 0.0
      %5383 = vmatprep.subr.mxu0 0.0
      %5384 = vmatpush1.msra.mxu0 0.0
      %5385 = vmatprep.subr.mxu0 0.0
      %5386 = vmatpush1.msra.mxu0 0.0
      %5387 = vmatprep.subr.mxu0 0.0
      %5388 = vmatpush1.msra.mxu0 0.0
      %5389 = vmatprep.subr.mxu0 0.0
      %5390 = vmatpush1.msra.mxu0 0.0
      %5391 = vmatprep.subr.mxu0 0.0
      %5392 = vmatpush1.msra.mxu0 0.0
      %5393 = vmatprep.subr.mxu0 0.0
      %5394 = vmatpush1.msra.mxu0 0.0
      %5395 = vmatprep.subr.mxu0 0.0
      %5396 = vmatpush1.msra.mxu0 0.0
      %5397 = vmatprep.subr.mxu0 0.0
      %5398 = vmatpush1.msra.mxu0 0.0
      %5399 = vmatprep.subr.mxu0 0.0
      %5400 = vmatpush1.msra.mxu0 0.0
      %5401 = vmatprep.subr.mxu0 0.0
      %5402 = vmatpush1.msra.mxu0 0.0
      %5403 = vmatprep.subr.mxu0 0.0
      %5404 = vmatpush1.msra.mxu0 0.0
      %5405 = vmatprep.subr.mxu0 0.0
      %5406 = vmatpush1.msra.mxu0 0.0
      %5407 = vmatprep.subr.mxu0 0.0
      %5408 = vmatpush1.msra.mxu0 0.0
      %5409 = vmatprep.subr.mxu0 0.0
      %5410 = vmatpush1.msra.mxu0 0.0
      %5411 = vmatprep.subr.mxu0 0.0
      %5412 = vmatpush1.msra.mxu0 0.0
      %5413 = vmatprep.subr.mxu0 0.0
      %5414 = vmatpush1.msra.mxu0 0.0
      %5415 = vmatprep.subr.mxu0 0.0
      %5416 = vmatpush1.msra.mxu0 0.0
      %5417 = vmatprep.subr.mxu0 0.0
      %5418 = vmatpush1.msra.mxu0 0.0
      %5419 = vmatprep.mubr.f32.mxu0 0.0
      %v5420 = vand.u32 %v5050, 4294901760
      %5421 = vmatmul.mubr.f32.gmra.mrb[0].mxu0 %v5420
      %v5422 = vpop.f32.mrb[0].mxu0
      %v5423 = vadd.f32 %v5349, %v5422
      %v5424 = vpop.f32.mrb[0].mxu0
      %5425 = vdwg.mxu0
      %5426 = vmatprep.subr.mxu0 0.0
      %v5427 = vand.u32 %v4876, 4294901760
      %5428 = vmatpush1.msra.mxu0 %v5427
      %5429 = vmatprep.subr.mxu0 0.0
      %5430 = vmatpush1.msra.mxu0 0.0
      %5431 = vmatprep.subr.mxu0 0.0
      %5432 = vmatpush1.msra.mxu0 0.0
      %5433 = vmatprep.subr.mxu0 0.0
      %5434 = vmatpush1.msra.mxu0 0.0
      %5435 = vmatprep.subr.mxu0 0.0
      %5436 = vmatpush1.msra.mxu0 0.0
      %5437 = vmatprep.subr.mxu0 0.0
      %5438 = vmatpush1.msra.mxu0 0.0
      %5439 = vmatprep.subr.mxu0 0.0
      %5440 = vmatpush1.msra.mxu0 0.0
      %5441 = vmatprep.subr.mxu0 0.0
      %5442 = vmatpush1.msra.mxu0 0.0
      %5443 = vmatprep.subr.mxu0 0.0
      %5444 = vmatpush1.msra.mxu0 0.0
      %5445 = vmatprep.subr.mxu0 0.0
      %5446 = vmatpush1.msra.mxu0 0.0
      %5447 = vmatprep.subr.mxu0 0.0
      %5448 = vmatpush1.msra.mxu0 0.0
      %5449 = vmatprep.subr.mxu0 0.0
      %5450 = vmatpush1.msra.mxu0 0.0
      %5451 = vmatprep.subr.mxu0 0.0
      %5452 = vmatpush1.msra.mxu0 0.0
      %5453 = vmatprep.subr.mxu0 0.0
      %5454 = vmatpush1.msra.mxu0 0.0
      %5455 = vmatprep.subr.mxu0 0.0
      %5456 = vmatpush1.msra.mxu0 0.0
      %5457 = vmatprep.subr.mxu0 0.0
      %5458 = vmatpush1.msra.mxu0 0.0
      %5459 = vmatprep.subr.mxu0 0.0
      %5460 = vmatpush1.msra.mxu0 0.0
      %5461 = vmatprep.subr.mxu0 0.0
      %5462 = vmatpush1.msra.mxu0 0.0
      %5463 = vmatprep.subr.mxu0 0.0
      %5464 = vmatpush1.msra.mxu0 0.0
      %5465 = vmatprep.subr.mxu0 0.0
      %5466 = vmatpush1.msra.mxu0 0.0
      %5467 = vmatprep.subr.mxu0 0.0
      %5468 = vmatpush1.msra.mxu0 0.0
      %5469 = vmatprep.subr.mxu0 0.0
      %5470 = vmatpush1.msra.mxu0 0.0
      %5471 = vmatprep.subr.mxu0 0.0
      %5472 = vmatpush1.msra.mxu0 0.0
      %5473 = vmatprep.subr.mxu0 0.0
      %5474 = vmatpush1.msra.mxu0 0.0
      %5475 = vmatprep.subr.mxu0 0.0
      %5476 = vmatpush1.msra.mxu0 0.0
      %5477 = vmatprep.subr.mxu0 0.0
      %5478 = vmatpush1.msra.mxu0 0.0
      %5479 = vmatprep.subr.mxu0 0.0
      %5480 = vmatpush1.msra.mxu0 0.0
      %5481 = vmatprep.subr.mxu0 0.0
      %5482 = vmatpush1.msra.mxu0 0.0
      %5483 = vmatprep.subr.mxu0 0.0
      %5484 = vmatpush1.msra.mxu0 0.0
      %5485 = vmatprep.subr.mxu0 0.0
      %5486 = vmatpush1.msra.mxu0 0.0
      %5487 = vmatprep.subr.mxu0 0.0
      %5488 = vmatpush1.msra.mxu0 0.0
      %5489 = vmatprep.subr.mxu0 0.0
      %5490 = vmatpush1.msra.mxu0 0.0
      %5491 = vmatprep.mubr.f32.mxu0 0.0
      %v5492 = vand.u32 %v5050, 4294901760
      %5493 = vmatmul.mubr.f32.gmra.mrb[0].mxu0 %v5492
      %v5494 = vpop.f32.mrb[0].mxu0
      %v5495 = vadd.f32 %v5423, %v5494
      %v5496 = vpop.f32.mrb[0].mxu0
      %5497 = vdwg.mxu0
      %v5499 = vsel %vm4878, %v5048, 0
      %5501 = vmatprep.subr.mxu0 0.0
      %v5502 = vand.u32 %v4876, 4294901760
      %5503 = vmatpush1.msra.mxu0 %v5502
      %5504 = vmatprep.subr.mxu0 0.0
      %5505 = vmatpush1.msra.mxu0 0.0
      %5506 = vmatprep.subr.mxu0 0.0
      %5507 = vmatpush1.msra.mxu0 0.0
      %5508 = vmatprep.subr.mxu0 0.0
      %5509 = vmatpush1.msra.mxu0 0.0
      %5510 = vmatprep.subr.mxu0 0.0
      %5511 = vmatpush1.msra.mxu0 0.0
      %5512 = vmatprep.subr.mxu0 0.0
      %5513 = vmatpush1.msra.mxu0 0.0
      %5514 = vmatprep.subr.mxu0 0.0
      %5515 = vmatpush1.msra.mxu0 0.0
      %5516 = vmatprep.subr.mxu0 0.0
      %5517 = vmatpush1.msra.mxu0 0.0
      %5518 = vmatprep.subr.mxu0 0.0
      %5519 = vmatpush1.msra.mxu0 0.0
      %5520 = vmatprep.subr.mxu0 0.0
      %5521 = vmatpush1.msra.mxu0 0.0
      %5522 = vmatprep.subr.mxu0 0.0
      %5523 = vmatpush1.msra.mxu0 0.0
      %5524 = vmatprep.subr.mxu0 0.0
      %5525 = vmatpush1.msra.mxu0 0.0
      %5526 = vmatprep.subr.mxu0 0.0
      %5527 = vmatpush1.msra.mxu0 0.0
      %5528 = vmatprep.subr.mxu0 0.0
      %5529 = vmatpush1.msra.mxu0 0.0
      %5530 = vmatprep.subr.mxu0 0.0
      %5531 = vmatpush1.msra.mxu0 0.0
      %5532 = vmatprep.subr.mxu0 0.0
      %5533 = vmatpush1.msra.mxu0 0.0
      %5534 = vmatprep.subr.mxu0 0.0
      %5535 = vmatpush1.msra.mxu0 0.0
      %5536 = vmatprep.subr.mxu0 0.0
      %5537 = vmatpush1.msra.mxu0 0.0
      %5538 = vmatprep.subr.mxu0 0.0
      %5539 = vmatpush1.msra.mxu0 0.0
      %5540 = vmatprep.subr.mxu0 0.0
      %5541 = vmatpush1.msra.mxu0 0.0
      %5542 = vmatprep.subr.mxu0 0.0
      %5543 = vmatpush1.msra.mxu0 0.0
      %5544 = vmatprep.subr.mxu0 0.0
      %5545 = vmatpush1.msra.mxu0 0.0
      %5546 = vmatprep.subr.mxu0 0.0
      %5547 = vmatpush1.msra.mxu0 0.0
      %5548 = vmatprep.subr.mxu0 0.0
      %5549 = vmatpush1.msra.mxu0 0.0
      %5550 = vmatprep.subr.mxu0 0.0
      %5551 = vmatpush1.msra.mxu0 0.0
      %5552 = vmatprep.subr.mxu0 0.0
      %5553 = vmatpush1.msra.mxu0 0.0
      %5554 = vmatprep.subr.mxu0 0.0
      %5555 = vmatpush1.msra.mxu0 0.0
      %5556 = vmatprep.subr.mxu0 0.0
      %5557 = vmatpush1.msra.mxu0 0.0
      %5558 = vmatprep.subr.mxu0 0.0
      %5559 = vmatpush1.msra.mxu0 0.0
      %5560 = vmatprep.subr.mxu0 0.0
      %5561 = vmatpush1.msra.mxu0 0.0
      %5562 = vmatprep.subr.mxu0 0.0
      %5563 = vmatpush1.msra.mxu0 0.0
      %5564 = vmatprep.subr.mxu0 0.0
      %5565 = vmatpush1.msra.mxu0 0.0
      %5566 = vmatprep.mubr.f32.mxu0 0.0
      %v5567 = vand.u32 %v5499, 4294901760
      %v5568 = vsub.f32 %v5499, %v5567
      %v5569 = vand.u32 %v5568, 4294901760
      %v5570 = vsub.f32 %v5568, %v5569
      %v5571 = vand.u32 %v5570, 4294901760
      %5572 = vmatmul.mubr.f32.gmra.mrb[0].mxu0 %v5571
      %v5573 = vpop.f32.mrb[0].mxu0
      %v5574 = vadd.f32 0.0, %v5573
      %v5575 = vpop.f32.mrb[0].mxu0
      %5576 = vdwg.mxu0
      %5577 = vmatprep.subr.mxu0 0.0
      %v5578 = vand.u32 %v4876, 4294901760
      %v5579 = vsub.f32 %v4876, %v5578
      %v5580 = vand.u32 %v5579, 4294901760
      %v5581 = vsub.f32 %v5579, %v5580
      %v5582 = vand.u32 %v5581, 4294901760
      %5583 = vmatpush1.msra.mxu0 %v5582
      %5584 = vmatprep.subr.mxu0 0.0
      %5585 = vmatpush1.msra.mxu0 0.0
      %5586 = vmatprep.subr.mxu0 0.0
      %5587 = vmatpush1.msra.mxu0 0.0
      %5588 = vmatprep.subr.mxu0 0.0
      %5589 = vmatpush1.msra.mxu0 0.0
      %5590 = vmatprep.subr.mxu0 0.0
      %5591 = vmatpush1.msra.mxu0 0.0
      %5592 = vmatprep.subr.mxu0 0.0
      %5593 = vmatpush1.msra.mxu0 0.0
      %5594 = vmatprep.subr.mxu0 0.0
      %5595 = vmatpush1.msra.mxu0 0.0
      %5596 = vmatprep.subr.mxu0 0.0
      %5597 = vmatpush1.msra.mxu0 0.0
      %5598 = vmatprep.subr.mxu0 0.0
      %5599 = vmatpush1.msra.mxu0 0.0
      %5600 = vmatprep.subr.mxu0 0.0
      %5601 = vmatpush1.msra.mxu0 0.0
      %5602 = vmatprep.subr.mxu0 0.0
      %5603 = vmatpush1.msra.mxu0 0.0
      %5604 = vmatprep.subr.mxu0 0.0
      %5605 = vmatpush1.msra.mxu0 0.0
      %5606 = vmatprep.subr.mxu0 0.0
      %5607 = vmatpush1.msra.mxu0 0.0
      %5608 = vmatprep.subr.mxu0 0.0
      %5609 = vmatpush1.msra.mxu0 0.0
      %5610 = vmatprep.subr.mxu0 0.0
      %5611 = vmatpush1.msra.mxu0 0.0
      %5612 = vmatprep.subr.mxu0 0.0
      %5613 = vmatpush1.msra.mxu0 0.0
      %5614 = vmatprep.subr.mxu0 0.0
      %5615 = vmatpush1.msra.mxu0 0.0
      %5616 = vmatprep.subr.mxu0 0.0
      %5617 = vmatpush1.msra.mxu0 0.0
      %5618 = vmatprep.subr.mxu0 0.0
      %5619 = vmatpush1.msra.mxu0 0.0
      %5620 = vmatprep.subr.mxu0 0.0
      %5621 = vmatpush1.msra.mxu0 0.0
      %5622 = vmatprep.subr.mxu0 0.0
      %5623 = vmatpush1.msra.mxu0 0.0
      %5624 = vmatprep.subr.mxu0 0.0
      %5625 = vmatpush1.msra.mxu0 0.0
      %5626 = vmatprep.subr.mxu0 0.0
      %5627 = vmatpush1.msra.mxu0 0.0
      %5628 = vmatprep.subr.mxu0 0.0
      %5629 = vmatpush1.msra.mxu0 0.0
      %5630 = vmatprep.subr.mxu0 0.0
      %5631 = vmatpush1.msra.mxu0 0.0
      %5632 = vmatprep.subr.mxu0 0.0
      %5633 = vmatpush1.msra.mxu0 0.0
      %5634 = vmatprep.subr.mxu0 0.0
      %5635 = vmatpush1.msra.mxu0 0.0
      %5636 = vmatprep.subr.mxu0 0.0
      %5637 = vmatpush1.msra.mxu0 0.0
      %5638 = vmatprep.subr.mxu0 0.0
      %5639 = vmatpush1.msra.mxu0 0.0
      %5640 = vmatprep.subr.mxu0 0.0
      %5641 = vmatpush1.msra.mxu0 0.0
      %5642 = vmatprep.subr.mxu0 0.0
      %5643 = vmatpush1.msra.mxu0 0.0
      %5644 = vmatprep.subr.mxu0 0.0
      %5645 = vmatpush1.msra.mxu0 0.0
      %5646 = vmatprep.mubr.f32.mxu0 0.0
      %v5647 = vand.u32 %v5499, 4294901760
      %5648 = vmatmul.mubr.f32.gmra.mrb[0].mxu0 %v5647
      %v5649 = vpop.f32.mrb[0].mxu0
      %v5650 = vadd.f32 %v5574, %v5649
      %v5651 = vpop.f32.mrb[0].mxu0
      %5652 = vdwg.mxu0
      %5653 = vmatprep.subr.mxu0 0.0
      %v5654 = vand.u32 %v4876, 4294901760
      %v5655 = vsub.f32 %v4876, %v5654
      %5656 = vmatpush1.msra.mxu0 %v5655
      %5657 = vmatprep.subr.mxu0 0.0
      %5658 = vmatpush1.msra.mxu0 0.0
      %5659 = vmatprep.subr.mxu0 0.0
      %5660 = vmatpush1.msra.mxu0 0.0
      %5661 = vmatprep.subr.mxu0 0.0
      %5662 = vmatpush1.msra.mxu0 0.0
      %5663 = vmatprep.subr.mxu0 0.0
      %5664 = vmatpush1.msra.mxu0 0.0
      %5665 = vmatprep.subr.mxu0 0.0
      %5666 = vmatpush1.msra.mxu0 0.0
      %5667 = vmatprep.subr.mxu0 0.0
      %5668 = vmatpush1.msra.mxu0 0.0
      %5669 = vmatprep.subr.mxu0 0.0
      %5670 = vmatpush1.msra.mxu0 0.0
      %5671 = vmatprep.subr.mxu0 0.0
      %5672 = vmatpush1.msra.mxu0 0.0
      %5673 = vmatprep.subr.mxu0 0.0
      %5674 = vmatpush1.msra.mxu0 0.0
      %5675 = vmatprep.subr.mxu0 0.0
      %5676 = vmatpush1.msra.mxu0 0.0
      %5677 = vmatprep.subr.mxu0 0.0
      %5678 = vmatpush1.msra.mxu0 0.0
      %5679 = vmatprep.subr.mxu0 0.0
      %5680 = vmatpush1.msra.mxu0 0.0
      %5681 = vmatprep.subr.mxu0 0.0
      %5682 = vmatpush1.msra.mxu0 0.0
      %5683 = vmatprep.subr.mxu0 0.0
      %5684 = vmatpush1.msra.mxu0 0.0
      %5685 = vmatprep.subr.mxu0 0.0
      %5686 = vmatpush1.msra.mxu0 0.0
      %5687 = vmatprep.subr.mxu0 0.0
      %5688 = vmatpush1.msra.mxu0 0.0
      %5689 = vmatprep.subr.mxu0 0.0
      %5690 = vmatpush1.msra.mxu0 0.0
      %5691 = vmatprep.subr.mxu0 0.0
      %5692 = vmatpush1.msra.mxu0 0.0
      %5693 = vmatprep.subr.mxu0 0.0
      %5694 = vmatpush1.msra.mxu0 0.0
      %5695 = vmatprep.subr.mxu0 0.0
      %5696 = vmatpush1.msra.mxu0 0.0
      %5697 = vmatprep.subr.mxu0 0.0
      %5698 = vmatpush1.msra.mxu0 0.0
      %5699 = vmatprep.subr.mxu0 0.0
      %5700 = vmatpush1.msra.mxu0 0.0
      %5701 = vmatprep.subr.mxu0 0.0
      %5702 = vmatpush1.msra.mxu0 0.0
      %5703 = vmatprep.subr.mxu0 0.0
      %5704 = vmatpush1.msra.mxu0 0.0
      %5705 = vmatprep.subr.mxu0 0.0
      %5706 = vmatpush1.msra.mxu0 0.0
      %5707 = vmatprep.subr.mxu0 0.0
      %5708 = vmatpush1.msra.mxu0 0.0
      %5709 = vmatprep.subr.mxu0 0.0
      %5710 = vmatpush1.msra.mxu0 0.0
      %5711 = vmatprep.subr.mxu0 0.0
      %5712 = vmatpush1.msra.mxu0 0.0
      %5713 = vmatprep.subr.mxu0 0.0
      %5714 = vmatpush1.msra.mxu0 0.0
      %5715 = vmatprep.subr.mxu0 0.0
      %5716 = vmatpush1.msra.mxu0 0.0
      %5717 = vmatprep.subr.mxu0 0.0
      %5718 = vmatpush1.msra.mxu0 0.0
      %5719 = vmatprep.mubr.f32.mxu0 0.0
      %v5720 = vand.u32 %v5499, 4294901760
      %v5721 = vsub.f32 %v5499, %v5720
      %5722 = vmatmul.mubr.f32.gmra.mrb[0].mxu0 %v5721
      %v5723 = vpop.f32.mrb[0].mxu0
      %v5724 = vadd.f32 %v5650, %v5723
      %v5725 = vpop.f32.mrb[0].mxu0
      %5726 = vdwg.mxu0
      %5727 = vmatprep.subr.mxu0 0.0
      %v5728 = vand.u32 %v4876, 4294901760
      %5729 = vmatpush1.msra.mxu0 %v5728
      %5730 = vmatprep.subr.mxu0 0.0
      %5731 = vmatpush1.msra.mxu0 0.0
      %5732 = vmatprep.subr.mxu0 0.0
      %5733 = vmatpush1.msra.mxu0 0.0
      %5734 = vmatprep.subr.mxu0 0.0
      %5735 = vmatpush1.msra.mxu0 0.0
      %5736 = vmatprep.subr.mxu0 0.0
      %5737 = vmatpush1.msra.mxu0 0.0
      %5738 = vmatprep.subr.mxu0 0.0
      %5739 = vmatpush1.msra.mxu0 0.0
      %5740 = vmatprep.subr.mxu0 0.0
      %5741 = vmatpush1.msra.mxu0 0.0
      %5742 = vmatprep.subr.mxu0 0.0
      %5743 = vmatpush1.msra.mxu0 0.0
      %5744 = vmatprep.subr.mxu0 0.0
      %5745 = vmatpush1.msra.mxu0 0.0
      %5746 = vmatprep.subr.mxu0 0.0
      %5747 = vmatpush1.msra.mxu0 0.0
      %5748 = vmatprep.subr.mxu0 0.0
      %5749 = vmatpush1.msra.mxu0 0.0
      %5750 = vmatprep.subr.mxu0 0.0
      %5751 = vmatpush1.msra.mxu0 0.0
      %5752 = vmatprep.subr.mxu0 0.0
      %5753 = vmatpush1.msra.mxu0 0.0
      %5754 = vmatprep.subr.mxu0 0.0
      %5755 = vmatpush1.msra.mxu0 0.0
      %5756 = vmatprep.subr.mxu0 0.0
      %5757 = vmatpush1.msra.mxu0 0.0
      %5758 = vmatprep.subr.mxu0 0.0
      %5759 = vmatpush1.msra.mxu0 0.0
      %5760 = vmatprep.subr.mxu0 0.0
      %5761 = vmatpush1.msra.mxu0 0.0
      %5762 = vmatprep.subr.mxu0 0.0
      %5763 = vmatpush1.msra.mxu0 0.0
      %5764 = vmatprep.subr.mxu0 0.0
      %5765 = vmatpush1.msra.mxu0 0.0
      %5766 = vmatprep.subr.mxu0 0.0
      %5767 = vmatpush1.msra.mxu0 0.0
      %5768 = vmatprep.subr.mxu0 0.0
      %5769 = vmatpush1.msra.mxu0 0.0
      %5770 = vmatprep.subr.mxu0 0.0
      %5771 = vmatpush1.msra.mxu0 0.0
      %5772 = vmatprep.subr.mxu0 0.0
      %5773 = vmatpush1.msra.mxu0 0.0
      %5774 = vmatprep.subr.mxu0 0.0
      %5775 = vmatpush1.msra.mxu0 0.0
      %5776 = vmatprep.subr.mxu0 0.0
      %5777 = vmatpush1.msra.mxu0 0.0
      %5778 = vmatprep.subr.mxu0 0.0
      %5779 = vmatpush1.msra.mxu0 0.0
      %5780 = vmatprep.subr.mxu0 0.0
      %5781 = vmatpush1.msra.mxu0 0.0
      %5782 = vmatprep.subr.mxu0 0.0
      %5783 = vmatpush1.msra.mxu0 0.0
      %5784 = vmatprep.subr.mxu0 0.0
      %5785 = vmatpush1.msra.mxu0 0.0
      %5786 = vmatprep.subr.mxu0 0.0
      %5787 = vmatpush1.msra.mxu0 0.0
      %5788 = vmatprep.subr.mxu0 0.0
      %5789 = vmatpush1.msra.mxu0 0.0
      %5790 = vmatprep.subr.mxu0 0.0
      %5791 = vmatpush1.msra.mxu0 0.0
      %5792 = vmatprep.mubr.f32.mxu0 0.0
      %v5793 = vand.u32 %v5499, 4294901760
      %v5794 = vsub.f32 %v5499, %v5793
      %v5795 = vand.u32 %v5794, 4294901760
      %5796 = vmatmul.mubr.f32.gmra.mrb[0].mxu0 %v5795
      %v5797 = vpop.f32.mrb[0].mxu0
      %v5798 = vadd.f32 %v5724, %v5797
      %v5799 = vpop.f32.mrb[0].mxu0
      %5800 = vdwg.mxu0
      %5801 = vmatprep.subr.mxu0 0.0
      %v5802 = vand.u32 %v4876, 4294901760
      %v5803 = vsub.f32 %v4876, %v5802
      %v5804 = vand.u32 %v5803, 4294901760
      %5805 = vmatpush1.msra.mxu0 %v5804
      %5806 = vmatprep.subr.mxu0 0.0
      %5807 = vmatpush1.msra.mxu0 0.0
      %5808 = vmatprep.subr.mxu0 0.0
      %5809 = vmatpush1.msra.mxu0 0.0
      %5810 = vmatprep.subr.mxu0 0.0
      %5811 = vmatpush1.msra.mxu0 0.0
      %5812 = vmatprep.subr.mxu0 0.0
      %5813 = vmatpush1.msra.mxu0 0.0
      %5814 = vmatprep.subr.mxu0 0.0
      %5815 = vmatpush1.msra.mxu0 0.0
      %5816 = vmatprep.subr.mxu0 0.0
      %5817 = vmatpush1.msra.mxu0 0.0
      %5818 = vmatprep.subr.mxu0 0.0
      %5819 = vmatpush1.msra.mxu0 0.0
      %5820 = vmatprep.subr.mxu0 0.0
      %5821 = vmatpush1.msra.mxu0 0.0
      %5822 = vmatprep.subr.mxu0 0.0
      %5823 = vmatpush1.msra.mxu0 0.0
      %5824 = vmatprep.subr.mxu0 0.0
      %5825 = vmatpush1.msra.mxu0 0.0
      %5826 = vmatprep.subr.mxu0 0.0
      %5827 = vmatpush1.msra.mxu0 0.0
      %5828 = vmatprep.subr.mxu0 0.0
      %5829 = vmatpush1.msra.mxu0 0.0
      %5830 = vmatprep.subr.mxu0 0.0
      %5831 = vmatpush1.msra.mxu0 0.0
      %5832 = vmatprep.subr.mxu0 0.0
      %5833 = vmatpush1.msra.mxu0 0.0
      %5834 = vmatprep.subr.mxu0 0.0
      %5835 = vmatpush1.msra.mxu0 0.0
      %5836 = vmatprep.subr.mxu0 0.0
      %5837 = vmatpush1.msra.mxu0 0.0
      %5838 = vmatprep.subr.mxu0 0.0
      %5839 = vmatpush1.msra.mxu0 0.0
      %5840 = vmatprep.subr.mxu0 0.0
      %5841 = vmatpush1.msra.mxu0 0.0
      %5842 = vmatprep.subr.mxu0 0.0
      %5843 = vmatpush1.msra.mxu0 0.0
      %5844 = vmatprep.subr.mxu0 0.0
      %5845 = vmatpush1.msra.mxu0 0.0
      %5846 = vmatprep.subr.mxu0 0.0
      %5847 = vmatpush1.msra.mxu0 0.0
      %5848 = vmatprep.subr.mxu0 0.0
      %5849 = vmatpush1.msra.mxu0 0.0
      %5850 = vmatprep.subr.mxu0 0.0
      %5851 = vmatpush1.msra.mxu0 0.0
      %5852 = vmatprep.subr.mxu0 0.0
      %5853 = vmatpush1.msra.mxu0 0.0
      %5854 = vmatprep.subr.mxu0 0.0
      %5855 = vmatpush1.msra.mxu0 0.0
      %5856 = vmatprep.subr.mxu0 0.0
      %5857 = vmatpush1.msra.mxu0 0.0
      %5858 = vmatprep.subr.mxu0 0.0
      %5859 = vmatpush1.msra.mxu0 0.0
      %5860 = vmatprep.subr.mxu0 0.0
      %5861 = vmatpush1.msra.mxu0 0.0
      %5862 = vmatprep.subr.mxu0 0.0
      %5863 = vmatpush1.msra.mxu0 0.0
      %5864 = vmatprep.subr.mxu0 0.0
      %5865 = vmatpush1.msra.mxu0 0.0
      %5866 = vmatprep.subr.mxu0 0.0
      %5867 = vmatpush1.msra.mxu0 0.0
      %5868 = vmatprep.mubr.f32.mxu0 0.0
      %v5869 = vand.u32 %v5499, 4294901760
      %5870 = vmatmul.mubr.f32.gmra.mrb[0].mxu0 %v5869
      %v5871 = vpop.f32.mrb[0].mxu0
      %v5872 = vadd.f32 %v5798, %v5871
      %v5873 = vpop.f32.mrb[0].mxu0
      %5874 = vdwg.mxu0
      %5875 = vmatprep.subr.mxu0 0.0
      %v5876 = vand.u32 %v4876, 4294901760
      %5877 = vmatpush1.msra.mxu0 %v5876
      %5878 = vmatprep.subr.mxu0 0.0
      %5879 = vmatpush1.msra.mxu0 0.0
      %5880 = vmatprep.subr.mxu0 0.0
      %5881 = vmatpush1.msra.mxu0 0.0
      %5882 = vmatprep.subr.mxu0 0.0
      %5883 = vmatpush1.msra.mxu0 0.0
      %5884 = vmatprep.subr.mxu0 0.0
      %5885 = vmatpush1.msra.mxu0 0.0
      %5886 = vmatprep.subr.mxu0 0.0
      %5887 = vmatpush1.msra.mxu0 0.0
      %5888 = vmatprep.subr.mxu0 0.0
      %5889 = vmatpush1.msra.mxu0 0.0
      %5890 = vmatprep.subr.mxu0 0.0
      %5891 = vmatpush1.msra.mxu0 0.0
      %5892 = vmatprep.subr.mxu0 0.0
      %5893 = vmatpush1.msra.mxu0 0.0
      %5894 = vmatprep.subr.mxu0 0.0
      %5895 = vmatpush1.msra.mxu0 0.0
      %5896 = vmatprep.subr.mxu0 0.0
      %5897 = vmatpush1.msra.mxu0 0.0
      %5898 = vmatprep.subr.mxu0 0.0
      %5899 = vmatpush1.msra.mxu0 0.0
      %5900 = vmatprep.subr.mxu0 0.0
      %5901 = vmatpush1.msra.mxu0 0.0
      %5902 = vmatprep.subr.mxu0 0.0
      %5903 = vmatpush1.msra.mxu0 0.0
      %5904 = vmatprep.subr.mxu0 0.0
      %5905 = vmatpush1.msra.mxu0 0.0
      %5906 = vmatprep.subr.mxu0 0.0
      %5907 = vmatpush1.msra.mxu0 0.0
      %5908 = vmatprep.subr.mxu0 0.0
      %5909 = vmatpush1.msra.mxu0 0.0
      %5910 = vmatprep.subr.mxu0 0.0
      %5911 = vmatpush1.msra.mxu0 0.0
      %5912 = vmatprep.subr.mxu0 0.0
      %5913 = vmatpush1.msra.mxu0 0.0
      %5914 = vmatprep.subr.mxu0 0.0
      %5915 = vmatpush1.msra.mxu0 0.0
      %5916 = vmatprep.subr.mxu0 0.0
      %5917 = vmatpush1.msra.mxu0 0.0
      %5918 = vmatprep.subr.mxu0 0.0
      %5919 = vmatpush1.msra.mxu0 0.0
      %5920 = vmatprep.subr.mxu0 0.0
      %5921 = vmatpush1.msra.mxu0 0.0
      %5922 = vmatprep.subr.mxu0 0.0
      %5923 = vmatpush1.msra.mxu0 0.0
      %5924 = vmatprep.subr.mxu0 0.0
      %5925 = vmatpush1.msra.mxu0 0.0
      %5926 = vmatprep.subr.mxu0 0.0
      %5927 = vmatpush1.msra.mxu0 0.0
      %5928 = vmatprep.subr.mxu0 0.0
      %5929 = vmatpush1.msra.mxu0 0.0
      %5930 = vmatprep.subr.mxu0 0.0
      %5931 = vmatpush1.msra.mxu0 0.0
      %5932 = vmatprep.subr.mxu0 0.0
      %5933 = vmatpush1.msra.mxu0 0.0
      %5934 = vmatprep.subr.mxu0 0.0
      %5935 = vmatpush1.msra.mxu0 0.0
      %5936 = vmatprep.subr.mxu0 0.0
      %5937 = vmatpush1.msra.mxu0 0.0
      %5938 = vmatprep.subr.mxu0 0.0
      %5939 = vmatpush1.msra.mxu0 0.0
      %5940 = vmatprep.mubr.f32.mxu0 0.0
      %v5941 = vand.u32 %v5499, 4294901760
      %5942 = vmatmul.mubr.f32.gmra.mrb[0].mxu0 %v5941
      %v5943 = vpop.f32.mrb[0].mxu0
      %v5944 = vadd.f32 %v5872, %v5943
      %v5945 = vpop.f32.mrb[0].mxu0
      %5946 = vdwg.mxu0
      %v5947 = vmul.f32 %v5495, 0.0009765625
      %v5948 = vmul.f32 %v5944, 0.0009765625
      %v5949 = vmul.f32 %v5947, %v5947
      %v5950 = vsub.f32 %v5948, %v5949
      %v5951 = vadd.f32 %v5950, 1e-05
      %v5952 = vrsqrt.pop %v5951
      %v5954 = vsel %vm2200, %v5947, 0
      %v5957 = vsel %vm953, %v4877, 0
      %5959 = vmatprep.subr.mxu0 0.0
      %v5960 = vand.u32 %v5957, 4294901760
      %5961 = vmatpush1.msra.mxu0 %v5960
      %5962 = vmatprep.subr.mxu0 0.0
      %5963 = vmatpush1.msra.mxu0 0.0
      %5964 = vmatprep.subr.mxu0 0.0
      %5965 = vmatpush1.msra.mxu0 0.0
      %5966 = vmatprep.subr.mxu0 0.0
      %5967 = vmatpush1.msra.mxu0 0.0
      %5968 = vmatprep.subr.mxu0 0.0
      %5969 = vmatpush1.msra.mxu0 0.0
      %5970 = vmatprep.subr.mxu0 0.0
      %5971 = vmatpush1.msra.mxu0 0.0
      %5972 = vmatprep.subr.mxu0 0.0
      %5973 = vmatpush1.msra.mxu0 0.0
      %5974 = vmatprep.subr.mxu0 0.0
      %5975 = vmatpush1.msra.mxu0 0.0
      %5976 = vmatprep.subr.mxu0 0.0
      %5977 = vmatpush1.msra.mxu0 0.0
      %5978 = vmatprep.subr.mxu0 0.0
      %5979 = vmatpush1.msra.mxu0 0.0
      %5980 = vmatprep.subr.mxu0 0.0
      %5981 = vmatpush1.msra.mxu0 0.0
      %5982 = vmatprep.subr.mxu0 0.0
      %5983 = vmatpush1.msra.mxu0 0.0
      %5984 = vmatprep.subr.mxu0 0.0
      %5985 = vmatpush1.msra.mxu0 0.0
      %5986 = vmatprep.subr.mxu0 0.0
      %5987 = vmatpush1.msra.mxu0 0.0
      %5988 = vmatprep.subr.mxu0 0.0
      %5989 = vmatpush1.msra.mxu0 0.0
      %5990 = vmatprep.subr.mxu0 0.0
      %5991 = vmatpush1.msra.mxu0 0.0
      %5992 = vmatprep.subr.mxu0 0.0
      %5993 = vmatpush1.msra.mxu0 0.0
      %5994 = vmatprep.subr.mxu0 0.0
      %5995 = vmatpush1.msra.mxu0 0.0
      %5996 = vmatprep.subr.mxu0 0.0
      %5997 = vmatpush1.msra.mxu0 0.0
      %5998 = vmatprep.subr.mxu0 0.0
      %5999 = vmatpush1.msra.mxu0 0.0
      %6000 = vmatprep.subr.mxu0 0.0
      %6001 = vmatpush1.msra.mxu0 0.0
      %6002 = vmatprep.subr.mxu0 0.0
      %6003 = vmatpush1.msra.mxu0 0.0
      %6004 = vmatprep.subr.mxu0 0.0
      %6005 = vmatpush1.msra.mxu0 0.0
      %6006 = vmatprep.subr.mxu0 0.0
      %6007 = vmatpush1.msra.mxu0 0.0
      %6008 = vmatprep.subr.mxu0 0.0
      %6009 = vmatpush1.msra.mxu0 0.0
      %6010 = vmatprep.subr.mxu0 0.0
      %6011 = vmatpush1.msra.mxu0 0.0
      %6012 = vmatprep.subr.mxu0 0.0
      %6013 = vmatpush1.msra.mxu0 0.0
      %6014 = vmatprep.subr.mxu0 0.0
      %6015 = vmatpush1.msra.mxu0 0.0
      %6016 = vmatprep.subr.mxu0 0.0
      %6017 = vmatpush1.msra.mxu0 0.0
      %6018 = vmatprep.subr.mxu0 0.0
      %6019 = vmatpush1.msra.mxu0 0.0
      %6020 = vmatprep.subr.mxu0 0.0
      %6021 = vmatpush1.msra.mxu0 0.0
      %6022 = vmatprep.subr.mxu0 0.0
      %6023 = vmatpush1.msra.mxu0 0.0
      %6024 = vmatprep.mubr.f32.mxu0 0.0
      %v6025 = vand.u32 %v5954, 4294901760
      %v6026 = vsub.f32 %v5954, %v6025
      %v6027 = vand.u32 %v6026, 4294901760
      %v6028 = vsub.f32 %v6026, %v6027
      %v6029 = vand.u32 %v6028, 4294901760
      %6030 = vmatmul.mubr.f32.gmra.mrb[0].mxu0 %v6029
      %v6031 = vpop.f32.mrb[0].mxu0
      %v6032 = vadd.f32 0.0, %v6031
      %v6033 = vpop.f32.mrb[0].mxu0
      %6034 = vdwg.mxu0
      %6035 = vmatprep.subr.mxu0 0.0
      %v6036 = vand.u32 %v5957, 4294901760
      %v6037 = vsub.f32 %v5957, %v6036
      %v6038 = vand.u32 %v6037, 4294901760
      %v6039 = vsub.f32 %v6037, %v6038
      %v6040 = vand.u32 %v6039, 4294901760
      %6041 = vmatpush1.msra.mxu0 %v6040
      %6042 = vmatprep.subr.mxu0 0.0
      %6043 = vmatpush1.msra.mxu0 0.0
      %6044 = vmatprep.subr.mxu0 0.0
      %6045 = vmatpush1.msra.mxu0 0.0
      %6046 = vmatprep.subr.mxu0 0.0
      %6047 = vmatpush1.msra.mxu0 0.0
      %6048 = vmatprep.subr.mxu0 0.0
      %6049 = vmatpush1.msra.mxu0 0.0
      %6050 = vmatprep.subr.mxu0 0.0
      %6051 = vmatpush1.msra.mxu0 0.0
      %6052 = vmatprep.subr.mxu0 0.0
      %6053 = vmatpush1.msra.mxu0 0.0
      %6054 = vmatprep.subr.mxu0 0.0
      %6055 = vmatpush1.msra.mxu0 0.0
      %6056 = vmatprep.subr.mxu0 0.0
      %6057 = vmatpush1.msra.mxu0 0.0
      %6058 = vmatprep.subr.mxu0 0.0
      %6059 = vmatpush1.msra.mxu0 0.0
      %6060 = vmatprep.subr.mxu0 0.0
      %6061 = vmatpush1.msra.mxu0 0.0
      %6062 = vmatprep.subr.mxu0 0.0
      %6063 = vmatpush1.msra.mxu0 0.0
      %6064 = vmatprep.subr.mxu0 0.0
      %6065 = vmatpush1.msra.mxu0 0.0
      %6066 = vmatprep.subr.mxu0 0.0
      %6067 = vmatpush1.msra.mxu0 0.0
      %6068 = vmatprep.subr.mxu0 0.0
      %6069 = vmatpush1.msra.mxu0 0.0
      %6070 = vmatprep.subr.mxu0 0.0
      %6071 = vmatpush1.msra.mxu0 0.0
      %6072 = vmatprep.subr.mxu0 0.0
      %6073 = vmatpush1.msra.mxu0 0.0
      %6074 = vmatprep.subr.mxu0 0.0
      %6075 = vmatpush1.msra.mxu0 0.0
      %6076 = vmatprep.subr.mxu0 0.0
      %6077 = vmatpush1.msra.mxu0 0.0
      %6078 = vmatprep.subr.mxu0 0.0
      %6079 = vmatpush1.msra.mxu0 0.0
      %6080 = vmatprep.subr.mxu0 0.0
      %6081 = vmatpush1.msra.mxu0 0.0
      %6082 = vmatprep.subr.mxu0 0.0
      %6083 = vmatpush1.msra.mxu0 0.0
      %6084 = vmatprep.subr.mxu0 0.0
      %6085 = vmatpush1.msra.mxu0 0.0
      %6086 = vmatprep.subr.mxu0 0.0
      %6087 = vmatpush1.msra.mxu0 0.0
      %6088 = vmatprep.subr.mxu0 0.0
      %6089 = vmatpush1.msra.mxu0 0.0
      %6090 = vmatprep.subr.mxu0 0.0
      %6091 = vmatpush1.msra.mxu0 0.0
      %6092 = vmatprep.subr.mxu0 0.0
      %6093 = vmatpush1.msra.mxu0 0.0
      %6094 = vmatprep.subr.mxu0 0.0
      %6095 = vmatpush1.msra.mxu0 0.0
      %6096 = vmatprep.subr.mxu0 0.0
      %6097 = vmatpush1.msra.mxu0 0.0
      %6098 = vmatprep.subr.mxu0 0.0
      %6099 = vmatpush1.msra.mxu0 0.0
      %6100 = vmatprep.subr.mxu0 0.0
      %6101 = vmatpush1.msra.mxu0 0.0
      %6102 = vmatprep.subr.mxu0 0.0
      %6103 = vmatpush1.msra.mxu0 0.0
      %6104 = vmatprep.mubr.f32.mxu0 0.0
      %v6105 = vand.u32 %v5954, 4294901760
      %6106 = vmatmul.mubr.f32.gmra.mrb[0].mxu0 %v6105
      %v6107 = vpop.f32.mrb[0].mxu0
      %v6108 = vadd.f32 %v6032, %v6107
      %v6109 = vpop.f32.mrb[0].mxu0
      %6110 = vdwg.mxu0
      %6111 = vmatprep.subr.mxu0 0.0
      %v6112 = vand.u32 %v5957, 4294901760
      %v6113 = vsub.f32 %v5957, %v6112
      %6114 = vmatpush1.msra.mxu0 %v6113
      %6115 = vmatprep.subr.mxu0 0.0
      %6116 = vmatpush1.msra.mxu0 0.0
      %6117 = vmatprep.subr.mxu0 0.0
      %6118 = vmatpush1.msra.mxu0 0.0
      %6119 = vmatprep.subr.mxu0 0.0
      %6120 = vmatpush1.msra.mxu0 0.0
      %6121 = vmatprep.subr.mxu0 0.0
      %6122 = vmatpush1.msra.mxu0 0.0
      %6123 = vmatprep.subr.mxu0 0.0
      %6124 = vmatpush1.msra.mxu0 0.0
      %6125 = vmatprep.subr.mxu0 0.0
      %6126 = vmatpush1.msra.mxu0 0.0
      %6127 = vmatprep.subr.mxu0 0.0
      %6128 = vmatpush1.msra.mxu0 0.0
      %6129 = vmatprep.subr.mxu0 0.0
      %6130 = vmatpush1.msra.mxu0 0.0
      %6131 = vmatprep.subr.mxu0 0.0
      %6132 = vmatpush1.msra.mxu0 0.0
      %6133 = vmatprep.subr.mxu0 0.0
      %6134 = vmatpush1.msra.mxu0 0.0
      %6135 = vmatprep.subr.mxu0 0.0
      %6136 = vmatpush1.msra.mxu0 0.0
      %6137 = vmatprep.subr.mxu0 0.0
      %6138 = vmatpush1.msra.mxu0 0.0
      %6139 = vmatprep.subr.mxu0 0.0
      %6140 = vmatpush1.msra.mxu0 0.0
      %6141 = vmatprep.subr.mxu0 0.0
      %6142 = vmatpush1.msra.mxu0 0.0
      %6143 = vmatprep.subr.mxu0 0.0
      %6144 = vmatpush1.msra.mxu0 0.0
      %6145 = vmatprep.subr.mxu0 0.0
      %6146 = vmatpush1.msra.mxu0 0.0
      %6147 = vmatprep.subr.mxu0 0.0
      %6148 = vmatpush1.msra.mxu0 0.0
      %6149 = vmatprep.subr.mxu0 0.0
      %6150 = vmatpush1.msra.mxu0 0.0
      %6151 = vmatprep.subr.mxu0 0.0
      %6152 = vmatpush1.msra.mxu0 0.0
      %6153 = vmatprep.subr.mxu0 0.0
      %6154 = vmatpush1.msra.mxu0 0.0
      %6155 = vmatprep.subr.mxu0 0.0
      %6156 = vmatpush1.msra.mxu0 0.0
      %6157 = vmatprep.subr.mxu0 0.0
      %6158 = vmatpush1.msra.mxu0 0.0
      %6159 = vmatprep.subr.mxu0 0.0
      %6160 = vmatpush1.msra.mxu0 0.0
      %6161 = vmatprep.subr.mxu0 0.0
      %6162 = vmatpush1.msra.mxu0 0.0
      %6163 = vmatprep.subr.mxu0 0.0
      %6164 = vmatpush1.msra.mxu0 0.0
      %6165 = vmatprep.subr.mxu0 0.0
      %6166 = vmatpush1.msra.mxu0 0.0
      %6167 = vmatprep.subr.mxu0 0.0
      %6168 = vmatpush1.msra.mxu0 0.0
      %6169 = vmatprep.subr.mxu0 0.0
      %6170 = vmatpush1.msra.mxu0 0.0
      %6171 = vmatprep.subr.mxu0 0.0
      %6172 = vmatpush1.msra.mxu0 0.0
      %6173 = vmatprep.subr.mxu0 0.0
      %6174 = vmatpush1.msra.mxu0 0.0
      %6175 = vmatprep.subr.mxu0 0.0
      %6176 = vmatpush1.msra.mxu0 0.0
      %6177 = vmatprep.mubr.f32.mxu0 0.0
      %v6178 = vand.u32 %v5954, 4294901760
      %v6179 = vsub.f32 %v5954, %v6178
      %6180 = vmatmul.mubr.f32.gmra.mrb[0].mxu0 %v6179
      %v6181 = vpop.f32.mrb[0].mxu0
      %v6182 = vadd.f32 %v6108, %v6181
      %v6183 = vpop.f32.mrb[0].mxu0
      %6184 = vdwg.mxu0
      %6185 = vmatprep.subr.mxu0 0.0
      %v6186 = vand.u32 %v5957, 4294901760
      %6187 = vmatpush1.msra.mxu0 %v6186
      %6188 = vmatprep.subr.mxu0 0.0
      %6189 = vmatpush1.msra.mxu0 0.0
      %6190 = vmatprep.subr.mxu0 0.0
      %6191 = vmatpush1.msra.mxu0 0.0
      %6192 = vmatprep.subr.mxu0 0.0
      %6193 = vmatpush1.msra.mxu0 0.0
      %6194 = vmatprep.subr.mxu0 0.0
      %6195 = vmatpush1.msra.mxu0 0.0
      %6196 = vmatprep.subr.mxu0 0.0
      %6197 = vmatpush1.msra.mxu0 0.0
      %6198 = vmatprep.subr.mxu0 0.0
      %6199 = vmatpush1.msra.mxu0 0.0
      %6200 = vmatprep.subr.mxu0 0.0
      %6201 = vmatpush1.msra.mxu0 0.0
      %6202 = vmatprep.subr.mxu0 0.0
      %6203 = vmatpush1.msra.mxu0 0.0
      %6204 = vmatprep.subr.mxu0 0.0
      %6205 = vmatpush1.msra.mxu0 0.0
      %6206 = vmatprep.subr.mxu0 0.0
      %6207 = vmatpush1.msra.mxu0 0.0
      %6208 = vmatprep.subr.mxu0 0.0
      %6209 = vmatpush1.msra.mxu0 0.0
      %6210 = vmatprep.subr.mxu0 0.0
      %6211 = vmatpush1.msra.mxu0 0.0
      %6212 = vmatprep.subr.mxu0 0.0
      %6213 = vmatpush1.msra.mxu0 0.0
      %6214 = vmatprep.subr.mxu0 0.0
      %6215 = vmatpush1.msra.mxu0 0.0
      %6216 = vmatprep.subr.mxu0 0.0
      %6217 = vmatpush1.msra.mxu0 0.0
      %6218 = vmatprep.subr.mxu0 0.0
      %6219 = vmatpush1.msra.mxu0 0.0
      %6220 = vmatprep.subr.mxu0 0.0
      %6221 = vmatpush1.msra.mxu0 0.0
      %6222 = vmatprep.subr.mxu0 0.0
      %6223 = vmatpush1.msra.mxu0 0.0
      %6224 = vmatprep.subr.mxu0 0.0
      %6225 = vmatpush1.msra.mxu0 0.0
      %6226 = vmatprep.subr.mxu0 0.0
      %6227 = vmatpush1.msra.mxu0 0.0
      %6228 = vmatprep.subr.mxu0 0.0
      %6229 = vmatpush1.msra.mxu0 0.0
      %6230 = vmatprep.subr.mxu0 0.0
      %6231 = vmatpush1.msra.mxu0 0.0
      %6232 = vmatprep.subr.mxu0 0.0
      %6233 = vmatpush1.msra.mxu0 0.0
      %6234 = vmatprep.subr.mxu0 0.0
      %6235 = vmatpush1.msra.mxu0 0.0
      %6236 = vmatprep.subr.mxu0 0.0
      %6237 = vmatpush1.msra.mxu0 0.0
      %6238 = vmatprep.subr.mxu0 0.0
      %6239 = vmatpush1.msra.mxu0 0.0
      %6240 = vmatprep.subr.mxu0 0.0
      %6241 = vmatpush1.msra.mxu0 0.0
      %6242 = vmatprep.subr.mxu0 0.0
      %6243 = vmatpush1.msra.mxu0 0.0
      %6244 = vmatprep.subr.mxu0 0.0
      %6245 = vmatpush1.msra.mxu0 0.0
      %6246 = vmatprep.subr.mxu0 0.0
      %6247 = vmatpush1.msra.mxu0 0.0
      %6248 = vmatprep.subr.mxu0 0.0
      %6249 = vmatpush1.msra.mxu0 0.0
      %6250 = vmatprep.mubr.f32.mxu0 0.0
      %v6251 = vand.u32 %v5954, 4294901760
      %v6252 = vsub.f32 %v5954, %v6251
      %v6253 = vand.u32 %v6252, 4294901760
      %6254 = vmatmul.mubr.f32.gmra.mrb[0].mxu0 %v6253
      %v6255 = vpop.f32.mrb[0].mxu0
      %v6256 = vadd.f32 %v6182, %v6255
      %v6257 = vpop.f32.mrb[0].mxu0
      %6258 = vdwg.mxu0
      %6259 = vmatprep.subr.mxu0 0.0
      %v6260 = vand.u32 %v5957, 4294901760
      %v6261 = vsub.f32 %v5957, %v6260
      %v6262 = vand.u32 %v6261, 4294901760
      %6263 = vmatpush1.msra.mxu0 %v6262
      %6264 = vmatprep.subr.mxu0 0.0
      %6265 = vmatpush1.msra.mxu0 0.0
      %6266 = vmatprep.subr.mxu0 0.0
      %6267 = vmatpush1.msra.mxu0 0.0
      %6268 = vmatprep.subr.mxu0 0.0
      %6269 = vmatpush1.msra.mxu0 0.0
      %6270 = vmatprep.subr.mxu0 0.0
      %6271 = vmatpush1.msra.mxu0 0.0
      %6272 = vmatprep.subr.mxu0 0.0
      %6273 = vmatpush1.msra.mxu0 0.0
      %6274 = vmatprep.subr.mxu0 0.0
      %6275 = vmatpush1.msra.mxu0 0.0
      %6276 = vmatprep.subr.mxu0 0.0
      %6277 = vmatpush1.msra.mxu0 0.0
      %6278 = vmatprep.subr.mxu0 0.0
      %6279 = vmatpush1.msra.mxu0 0.0
      %6280 = vmatprep.subr.mxu0 0.0
      %6281 = vmatpush1.msra.mxu0 0.0
      %6282 = vmatprep.subr.mxu0 0.0
      %6283 = vmatpush1.msra.mxu0 0.0
      %6284 = vmatprep.subr.mxu0 0.0
      %6285 = vmatpush1.msra.mxu0 0.0
      %6286 = vmatprep.subr.mxu0 0.0
      %6287 = vmatpush1.msra.mxu0 0.0
      %6288 = vmatprep.subr.mxu0 0.0
      %6289 = vmatpush1.msra.mxu0 0.0
      %6290 = vmatprep.subr.mxu0 0.0
      %6291 = vmatpush1.msra.mxu0 0.0
      %6292 = vmatprep.subr.mxu0 0.0
      %6293 = vmatpush1.msra.mxu0 0.0
      %6294 = vmatprep.subr.mxu0 0.0
      %6295 = vmatpush1.msra.mxu0 0.0
      %6296 = vmatprep.subr.mxu0 0.0
      %6297 = vmatpush1.msra.mxu0 0.0
      %6298 = vmatprep.subr.mxu0 0.0
      %6299 = vmatpush1.msra.mxu0 0.0
      %6300 = vmatprep.subr.mxu0 0.0
      %6301 = vmatpush1.msra.mxu0 0.0
      %6302 = vmatprep.subr.mxu0 0.0
      %6303 = vmatpush1.msra.mxu0 0.0
      %6304 = vmatprep.subr.mxu0 0.0
      %6305 = vmatpush1.msra.mxu0 0.0
      %6306 = vmatprep.subr.mxu0 0.0
      %6307 = vmatpush1.msra.mxu0 0.0
      %6308 = vmatprep.subr.mxu0 0.0
      %6309 = vmatpush1.msra.mxu0 0.0
      %6310 = vmatprep.subr.mxu0 0.0
      %6311 = vmatpush1.msra.mxu0 0.0
      %6312 = vmatprep.subr.mxu0 0.0
      %6313 = vmatpush1.msra.mxu0 0.0
      %6314 = vmatprep.subr.mxu0 0.0
      %6315 = vmatpush1.msra.mxu0 0.0
      %6316 = vmatprep.subr.mxu0 0.0
      %6317 = vmatpush1.msra.mxu0 0.0
      %6318 = vmatprep.subr.mxu0 0.0
      %6319 = vmatpush1.msra.mxu0 0.0
      %6320 = vmatprep.subr.mxu0 0.0
      %6321 = vmatpush1.msra.mxu0 0.0
      %6322 = vmatprep.subr.mxu0 0.0
      %6323 = vmatpush1.msra.mxu0 0.0
      %6324 = vmatprep.subr.mxu0 0.0
      %6325 = vmatpush1.msra.mxu0 0.0
      %6326 = vmatprep.mubr.f32.mxu0 0.0
      %v6327 = vand.u32 %v5954, 4294901760
      %6328 = vmatmul.mubr.f32.gmra.mrb[0].mxu0 %v6327
      %v6329 = vpop.f32.mrb[0].mxu0
      %v6330 = vadd.f32 %v6256, %v6329
      %v6331 = vpop.f32.mrb[0].mxu0
      %6332 = vdwg.mxu0
      %6333 = vmatprep.subr.mxu0 0.0
      %v6334 = vand.u32 %v5957, 4294901760
      %6335 = vmatpush1.msra.mxu0 %v6334
      %6336 = vmatprep.subr.mxu0 0.0
      %6337 = vmatpush1.msra.mxu0 0.0
      %6338 = vmatprep.subr.mxu0 0.0
      %6339 = vmatpush1.msra.mxu0 0.0
      %6340 = vmatprep.subr.mxu0 0.0
      %6341 = vmatpush1.msra.mxu0 0.0
      %6342 = vmatprep.subr.mxu0 0.0
      %6343 = vmatpush1.msra.mxu0 0.0
      %6344 = vmatprep.subr.mxu0 0.0
      %6345 = vmatpush1.msra.mxu0 0.0
      %6346 = vmatprep.subr.mxu0 0.0
      %6347 = vmatpush1.msra.mxu0 0.0
      %6348 = vmatprep.subr.mxu0 0.0
      %6349 = vmatpush1.msra.mxu0 0.0
      %6350 = vmatprep.subr.mxu0 0.0
      %6351 = vmatpush1.msra.mxu0 0.0
      %6352 = vmatprep.subr.mxu0 0.0
      %6353 = vmatpush1.msra.mxu0 0.0
      %6354 = vmatprep.subr.mxu0 0.0
      %6355 = vmatpush1.msra.mxu0 0.0
      %6356 = vmatprep.subr.mxu0 0.0
      %6357 = vmatpush1.msra.mxu0 0.0
      %6358 = vmatprep.subr.mxu0 0.0
      %6359 = vmatpush1.msra.mxu0 0.0
      %6360 = vmatprep.subr.mxu0 0.0
      %6361 = vmatpush1.msra.mxu0 0.0
      %6362 = vmatprep.subr.mxu0 0.0
      %6363 = vmatpush1.msra.mxu0 0.0
      %6364 = vmatprep.subr.mxu0 0.0
      %6365 = vmatpush1.msra.mxu0 0.0
      %6366 = vmatprep.subr.mxu0 0.0
      %6367 = vmatpush1.msra.mxu0 0.0
      %6368 = vmatprep.subr.mxu0 0.0
      %6369 = vmatpush1.msra.mxu0 0.0
      %6370 = vmatprep.subr.mxu0 0.0
      %6371 = vmatpush1.msra.mxu0 0.0
      %6372 = vmatprep.subr.mxu0 0.0
      %6373 = vmatpush1.msra.mxu0 0.0
      %6374 = vmatprep.subr.mxu0 0.0
      %6375 = vmatpush1.msra.mxu0 0.0
      %6376 = vmatprep.subr.mxu0 0.0
      %6377 = vmatpush1.msra.mxu0 0.0
      %6378 = vmatprep.subr.mxu0 0.0
      %6379 = vmatpush1.msra.mxu0 0.0
      %6380 = vmatprep.subr.mxu0 0.0
      %6381 = vmatpush1.msra.mxu0 0.0
      %6382 = vmatprep.subr.mxu0 0.0
      %6383 = vmatpush1.msra.mxu0 0.0
      %6384 = vmatprep.subr.mxu0 0.0
      %6385 = vmatpush1.msra.mxu0 0.0
      %6386 = vmatprep.subr.mxu0 0.0
      %6387 = vmatpush1.msra.mxu0 0.0
      %6388 = vmatprep.subr.mxu0 0.0
      %6389 = vmatpush1.msra.mxu0 0.0
      %6390 = vmatprep.subr.mxu0 0.0
      %6391 = vmatpush1.msra.mxu0 0.0
      %6392 = vmatprep.subr.mxu0 0.0
      %6393 = vmatpush1.msra.mxu0 0.0
      %6394 = vmatprep.subr.mxu0 0.0
      %6395 = vmatpush1.msra.mxu0 0.0
      %6396 = vmatprep.subr.mxu0 0.0
      %6397 = vmatpush1.msra.mxu0 0.0
      %6398 = vmatprep.mubr.f32.mxu0 0.0
      %v6399 = vand.u32 %v5954, 4294901760
      %6400 = vmatmul.mubr.f32.gmra.mrb[0].mxu0 %v6399
      %v6401 = vpop.f32.mrb[0].mxu0
      %v6402 = vadd.f32 %v6330, %v6401
      %v6403 = vpop.f32.mrb[0].mxu0
      %6404 = vdwg.mxu0
      %v6406 = vsel %vm2200, %v5952, 0
      %6408 = vmatprep.subr.mxu0 0.0
      %v6409 = vand.u32 %v5957, 4294901760
      %6410 = vmatpush1.msra.mxu0 %v6409
      %6411 = vmatprep.subr.mxu0 0.0
      %6412 = vmatpush1.msra.mxu0 0.0
      %6413 = vmatprep.subr.mxu0 0.0
      %6414 = vmatpush1.msra.mxu0 0.0
      %6415 = vmatprep.subr.mxu0 0.0
      %6416 = vmatpush1.msra.mxu0 0.0
      %6417 = vmatprep.subr.mxu0 0.0
      %6418 = vmatpush1.msra.mxu0 0.0
      %6419 = vmatprep.subr.mxu0 0.0
      %6420 = vmatpush1.msra.mxu0 0.0
      %6421 = vmatprep.subr.mxu0 0.0
      %6422 = vmatpush1.msra.mxu0 0.0
      %6423 = vmatprep.subr.mxu0 0.0
      %6424 = vmatpush1.msra.mxu0 0.0
      %6425 = vmatprep.subr.mxu0 0.0
      %6426 = vmatpush1.msra.mxu0 0.0
      %6427 = vmatprep.subr.mxu0 0.0
      %6428 = vmatpush1.msra.mxu0 0.0
      %6429 = vmatprep.subr.mxu0 0.0
      %6430 = vmatpush1.msra.mxu0 0.0
      %6431 = vmatprep.subr.mxu0 0.0
      %6432 = vmatpush1.msra.mxu0 0.0
      %6433 = vmatprep.subr.mxu0 0.0
      %6434 = vmatpush1.msra.mxu0 0.0
      %6435 = vmatprep.subr.mxu0 0.0
      %6436 = vmatpush1.msra.mxu0 0.0
      %6437 = vmatprep.subr.mxu0 0.0
      %6438 = vmatpush1.msra.mxu0 0.0
      %6439 = vmatprep.subr.mxu0 0.0
      %6440 = vmatpush1.msra.mxu0 0.0
      %6441 = vmatprep.subr.mxu0 0.0
      %6442 = vmatpush1.msra.mxu0 0.0
      %6443 = vmatprep.subr.mxu0 0.0
      %6444 = vmatpush1.msra.mxu0 0.0
      %6445 = vmatprep.subr.mxu0 0.0
      %6446 = vmatpush1.msra.mxu0 0.0
      %6447 = vmatprep.subr.mxu0 0.0
      %6448 = vmatpush1.msra.mxu0 0.0
      %6449 = vmatprep.subr.mxu0 0.0
      %6450 = vmatpush1.msra.mxu0 0.0
      %6451 = vmatprep.subr.mxu0 0.0
      %6452 = vmatpush1.msra.mxu0 0.0
      %6453 = vmatprep.subr.mxu0 0.0
      %6454 = vmatpush1.msra.mxu0 0.0
      %6455 = vmatprep.subr.mxu0 0.0
      %6456 = vmatpush1.msra.mxu0 0.0
      %6457 = vmatprep.subr.mxu0 0.0
      %6458 = vmatpush1.msra.mxu0 0.0
      %6459 = vmatprep.subr.mxu0 0.0
      %6460 = vmatpush1.msra.mxu0 0.0
      %6461 = vmatprep.subr.mxu0 0.0
      %6462 = vmatpush1.msra.mxu0 0.0
      %6463 = vmatprep.subr.mxu0 0.0
      %6464 = vmatpush1.msra.mxu0 0.0
      %6465 = vmatprep.subr.mxu0 0.0
      %6466 = vmatpush1.msra.mxu0 0.0
      %6467 = vmatprep.subr.mxu0 0.0
      %6468 = vmatpush1.msra.mxu0 0.0
      %6469 = vmatprep.subr.mxu0 0.0
      %6470 = vmatpush1.msra.mxu0 0.0
      %6471 = vmatprep.subr.mxu0 0.0
      %6472 = vmatpush1.msra.mxu0 0.0
      %6473 = vmatprep.mubr.f32.mxu0 0.0
      %v6474 = vand.u32 %v6406, 4294901760
      %v6475 = vsub.f32 %v6406, %v6474
      %v6476 = vand.u32 %v6475, 4294901760
      %v6477 = vsub.f32 %v6475, %v6476
      %v6478 = vand.u32 %v6477, 4294901760
      %6479 = vmatmul.mubr.f32.gmra.mrb[0].mxu0 %v6478
      %v6480 = vpop.f32.mrb[0].mxu0
      %v6481 = vadd.f32 0.0, %v6480
      %v6482 = vpop.f32.mrb[0].mxu0
      %6483 = vdwg.mxu0
      %6484 = vmatprep.subr.mxu0 0.0
      %v6485 = vand.u32 %v5957, 4294901760
      %v6486 = vsub.f32 %v5957, %v6485
      %v6487 = vand.u32 %v6486, 4294901760
      %v6488 = vsub.f32 %v6486, %v6487
      %v6489 = vand.u32 %v6488, 4294901760
      %6490 = vmatpush1.msra.mxu0 %v6489
      %6491 = vmatprep.subr.mxu0 0.0
      %6492 = vmatpush1.msra.mxu0 0.0
      %6493 = vmatprep.subr.mxu0 0.0
      %6494 = vmatpush1.msra.mxu0 0.0
      %6495 = vmatprep.subr.mxu0 0.0
      %6496 = vmatpush1.msra.mxu0 0.0
      %6497 = vmatprep.subr.mxu0 0.0
      %6498 = vmatpush1.msra.mxu0 0.0
      %6499 = vmatprep.subr.mxu0 0.0
      %6500 = vmatpush1.msra.mxu0 0.0
      %6501 = vmatprep.subr.mxu0 0.0
      %6502 = vmatpush1.msra.mxu0 0.0
      %6503 = vmatprep.subr.mxu0 0.0
      %6504 = vmatpush1.msra.mxu0 0.0
      %6505 = vmatprep.subr.mxu0 0.0
      %6506 = vmatpush1.msra.mxu0 0.0
      %6507 = vmatprep.subr.mxu0 0.0
      %6508 = vmatpush1.msra.mxu0 0.0
      %6509 = vmatprep.subr.mxu0 0.0
      %6510 = vmatpush1.msra.mxu0 0.0
      %6511 = vmatprep.subr.mxu0 0.0
      %6512 = vmatpush1.msra.mxu0 0.0
      %6513 = vmatprep.subr.mxu0 0.0
      %6514 = vmatpush1.msra.mxu0 0.0
      %6515 = vmatprep.subr.mxu0 0.0
      %6516 = vmatpush1.msra.mxu0 0.0
      %6517 = vmatprep.subr.mxu0 0.0
      %6518 = vmatpush1.msra.mxu0 0.0
      %6519 = vmatprep.subr.mxu0 0.0
      %6520 = vmatpush1.msra.mxu0 0.0
      %6521 = vmatprep.subr.mxu0 0.0
      %6522 = vmatpush1.msra.mxu0 0.0
      %6523 = vmatprep.subr.mxu0 0.0
      %6524 = vmatpush1.msra.mxu0 0.0
      %6525 = vmatprep.subr.mxu0 0.0
      %6526 = vmatpush1.msra.mxu0 0.0
      %6527 = vmatprep.subr.mxu0 0.0
      %6528 = vmatpush1.msra.mxu0 0.0
      %6529 = vmatprep.subr.mxu0 0.0
      %6530 = vmatpush1.msra.mxu0 0.0
      %6531 = vmatprep.subr.mxu0 0.0
      %6532 = vmatpush1.msra.mxu0 0.0
      %6533 = vmatprep.subr.mxu0 0.0
      %6534 = vmatpush1.msra.mxu0 0.0
      %6535 = vmatprep.subr.mxu0 0.0
      %6536 = vmatpush1.msra.mxu0 0.0
      %6537 = vmatprep.subr.mxu0 0.0
      %6538 = vmatpush1.msra.mxu0 0.0
      %6539 = vmatprep.subr.mxu0 0.0
      %6540 = vmatpush1.msra.mxu0 0.0
      %6541 = vmatprep.subr.mxu0 0.0
      %6542 = vmatpush1.msra.mxu0 0.0
      %6543 = vmatprep.subr.mxu0 0.0
      %6544 = vmatpush1.msra.mxu0 0.0
      %6545 = vmatprep.subr.mxu0 0.0
      %6546 = vmatpush1.msra.mxu0 0.0
      %6547 = vmatprep.subr.mxu0 0.0
      %6548 = vmatpush1.msra.mxu0 0.0
      %6549 = vmatprep.subr.mxu0 0.0
      %6550 = vmatpush1.msra.mxu0 0.0
      %6551 = vmatprep.subr.mxu0 0.0
      %6552 = vmatpush1.msra.mxu0 0.0
      %6553 = vmatprep.mubr.f32.mxu0 0.0
      %v6554 = vand.u32 %v6406, 4294901760
      %6555 = vmatmul.mubr.f32.gmra.mrb[0].mxu0 %v6554
      %v6556 = vpop.f32.mrb[0].mxu0
      %v6557 = vadd.f32 %v6481, %v6556
      %v6558 = vpop.f32.mrb[0].mxu0
      %6559 = vdwg.mxu0
      %6560 = vmatprep.subr.mxu0 0.0
      %v6561 = vand.u32 %v5957, 4294901760
      %v6562 = vsub.f32 %v5957, %v6561
      %6563 = vmatpush1.msra.mxu0 %v6562
      %6564 = vmatprep.subr.mxu0 0.0
      %6565 = vmatpush1.msra.mxu0 0.0
      %6566 = vmatprep.subr.mxu0 0.0
      %6567 = vmatpush1.msra.mxu0 0.0
      %6568 = vmatprep.subr.mxu0 0.0
      %6569 = vmatpush1.msra.mxu0 0.0
      %6570 = vmatprep.subr.mxu0 0.0
      %6571 = vmatpush1.msra.mxu0 0.0
      %6572 = vmatprep.subr.mxu0 0.0
      %6573 = vmatpush1.msra.mxu0 0.0
      %6574 = vmatprep.subr.mxu0 0.0
      %6575 = vmatpush1.msra.mxu0 0.0
      %6576 = vmatprep.subr.mxu0 0.0
      %6577 = vmatpush1.msra.mxu0 0.0
      %6578 = vmatprep.subr.mxu0 0.0
      %6579 = vmatpush1.msra.mxu0 0.0
      %6580 = vmatprep.subr.mxu0 0.0
      %6581 = vmatpush1.msra.mxu0 0.0
      %6582 = vmatprep.subr.mxu0 0.0
      %6583 = vmatpush1.msra.mxu0 0.0
      %6584 = vmatprep.subr.mxu0 0.0
      %6585 = vmatpush1.msra.mxu0 0.0
      %6586 = vmatprep.subr.mxu0 0.0
      %6587 = vmatpush1.msra.mxu0 0.0
      %6588 = vmatprep.subr.mxu0 0.0
      %6589 = vmatpush1.msra.mxu0 0.0
      %6590 = vmatprep.subr.mxu0 0.0
      %6591 = vmatpush1.msra.mxu0 0.0
      %6592 = vmatprep.subr.mxu0 0.0
      %6593 = vmatpush1.msra.mxu0 0.0
      %6594 = vmatprep.subr.mxu0 0.0
      %6595 = vmatpush1.msra.mxu0 0.0
      %6596 = vmatprep.subr.mxu0 0.0
      %6597 = vmatpush1.msra.mxu0 0.0
      %6598 = vmatprep.subr.mxu0 0.0
      %6599 = vmatpush1.msra.mxu0 0.0
      %6600 = vmatprep.subr.mxu0 0.0
      %6601 = vmatpush1.msra.mxu0 0.0
      %6602 = vmatprep.subr.mxu0 0.0
      %6603 = vmatpush1.msra.mxu0 0.0
      %6604 = vmatprep.subr.mxu0 0.0
      %6605 = vmatpush1.msra.mxu0 0.0
      %6606 = vmatprep.subr.mxu0 0.0
      %6607 = vmatpush1.msra.mxu0 0.0
      %6608 = vmatprep.subr.mxu0 0.0
      %6609 = vmatpush1.msra.mxu0 0.0
      %6610 = vmatprep.subr.mxu0 0.0
      %6611 = vmatpush1.msra.mxu0 0.0
      %6612 = vmatprep.subr.mxu0 0.0
      %6613 = vmatpush1.msra.mxu0 0.0
      %6614 = vmatprep.subr.mxu0 0.0
      %6615 = vmatpush1.msra.mxu0 0.0
      %6616 = vmatprep.subr.mxu0 0.0
      %6617 = vmatpush1.msra.mxu0 0.0
      %6618 = vmatprep.subr.mxu0 0.0
      %6619 = vmatpush1.msra.mxu0 0.0
      %6620 = vmatprep.subr.mxu0 0.0
      %6621 = vmatpush1.msra.mxu0 0.0
      %6622 = vmatprep.subr.mxu0 0.0
      %6623 = vmatpush1.msra.mxu0 0.0
      %6624 = vmatprep.subr.mxu0 0.0
      %6625 = vmatpush1.msra.mxu0 0.0
      %6626 = vmatprep.mubr.f32.mxu0 0.0
      %v6627 = vand.u32 %v6406, 4294901760
      %v6628 = vsub.f32 %v6406, %v6627
      %6629 = vmatmul.mubr.f32.gmra.mrb[0].mxu0 %v6628
      %v6630 = vpop.f32.mrb[0].mxu0
      %v6631 = vadd.f32 %v6557, %v6630
      %v6632 = vpop.f32.mrb[0].mxu0
      %6633 = vdwg.mxu0
      %6634 = vmatprep.subr.mxu0 0.0
      %v6635 = vand.u32 %v5957, 4294901760
      %6636 = vmatpush1.msra.mxu0 %v6635
      %6637 = vmatprep.subr.mxu0 0.0
      %6638 = vmatpush1.msra.mxu0 0.0
      %6639 = vmatprep.subr.mxu0 0.0
      %6640 = vmatpush1.msra.mxu0 0.0
      %6641 = vmatprep.subr.mxu0 0.0
      %6642 = vmatpush1.msra.mxu0 0.0
      %6643 = vmatprep.subr.mxu0 0.0
      %6644 = vmatpush1.msra.mxu0 0.0
      %6645 = vmatprep.subr.mxu0 0.0
      %6646 = vmatpush1.msra.mxu0 0.0
      %6647 = vmatprep.subr.mxu0 0.0
      %6648 = vmatpush1.msra.mxu0 0.0
      %6649 = vmatprep.subr.mxu0 0.0
      %6650 = vmatpush1.msra.mxu0 0.0
      %6651 = vmatprep.subr.mxu0 0.0
      %6652 = vmatpush1.msra.mxu0 0.0
      %6653 = vmatprep.subr.mxu0 0.0
      %6654 = vmatpush1.msra.mxu0 0.0
      %6655 = vmatprep.subr.mxu0 0.0
      %6656 = vmatpush1.msra.mxu0 0.0
      %6657 = vmatprep.subr.mxu0 0.0
      %6658 = vmatpush1.msra.mxu0 0.0
      %6659 = vmatprep.subr.mxu0 0.0
      %6660 = vmatpush1.msra.mxu0 0.0
      %6661 = vmatprep.subr.mxu0 0.0
      %6662 = vmatpush1.msra.mxu0 0.0
      %6663 = vmatprep.subr.mxu0 0.0
      %6664 = vmatpush1.msra.mxu0 0.0
      %6665 = vmatprep.subr.mxu0 0.0
      %6666 = vmatpush1.msra.mxu0 0.0
      %6667 = vmatprep.subr.mxu0 0.0
      %6668 = vmatpush1.msra.mxu0 0.0
      %6669 = vmatprep.subr.mxu0 0.0
      %6670 = vmatpush1.msra.mxu0 0.0
      %6671 = vmatprep.subr.mxu0 0.0
      %6672 = vmatpush1.msra.mxu0 0.0
      %6673 = vmatprep.subr.mxu0 0.0
      %6674 = vmatpush1.msra.mxu0 0.0
      %6675 = vmatprep.subr.mxu0 0.0
      %6676 = vmatpush1.msra.mxu0 0.0
      %6677 = vmatprep.subr.mxu0 0.0
      %6678 = vmatpush1.msra.mxu0 0.0
      %6679 = vmatprep.subr.mxu0 0.0
      %6680 = vmatpush1.msra.mxu0 0.0
      %6681 = vmatprep.subr.mxu0 0.0
      %6682 = vmatpush1.msra.mxu0 0.0
      %6683 = vmatprep.subr.mxu0 0.0
      %6684 = vmatpush1.msra.mxu0 0.0
      %6685 = vmatprep.subr.mxu0 0.0
      %6686 = vmatpush1.msra.mxu0 0.0
      %6687 = vmatprep.subr.mxu0 0.0
      %6688 = vmatpush1.msra.mxu0 0.0
      %6689 = vmatprep.subr.mxu0 0.0
      %6690 = vmatpush1.msra.mxu0 0.0
      %6691 = vmatprep.subr.mxu0 0.0
      %6692 = vmatpush1.msra.mxu0 0.0
      %6693 = vmatprep.subr.mxu0 0.0
      %6694 = vmatpush1.msra.mxu0 0.0
      %6695 = vmatprep.subr.mxu0 0.0
      %6696 = vmatpush1.msra.mxu0 0.0
      %6697 = vmatprep.subr.mxu0 0.0
      %6698 = vmatpush1.msra.mxu0 0.0
      %6699 = vmatprep.mubr.f32.mxu0 0.0
      %v6700 = vand.u32 %v6406, 4294901760
      %v6701 = vsub.f32 %v6406, %v6700
      %v6702 = vand.u32 %v6701, 4294901760
      %6703 = vmatmul.mubr.f32.gmra.mrb[0].mxu0 %v6702
      %v6704 = vpop.f32.mrb[0].mxu0
      %v6705 = vadd.f32 %v6631, %v6704
      %v6706 = vpop.f32.mrb[0].mxu0
      %6707 = vdwg.mxu0
      %6708 = vmatprep.subr.mxu0 0.0
      %v6709 = vand.u32 %v5957, 4294901760
      %v6710 = vsub.f32 %v5957, %v6709
      %v6711 = vand.u32 %v6710, 4294901760
      %6712 = vmatpush1.msra.mxu0 %v6711
      %6713 = vmatprep.subr.mxu0 0.0
      %6714 = vmatpush1.msra.mxu0 0.0
      %6715 = vmatprep.subr.mxu0 0.0
      %6716 = vmatpush1.msra.mxu0 0.0
      %6717 = vmatprep.subr.mxu0 0.0
      %6718 = vmatpush1.msra.mxu0 0.0
      %6719 = vmatprep.subr.mxu0 0.0
      %6720 = vmatpush1.msra.mxu0 0.0
      %6721 = vmatprep.subr.mxu0 0.0
      %6722 = vmatpush1.msra.mxu0 0.0
      %6723 = vmatprep.subr.mxu0 0.0
      %6724 = vmatpush1.msra.mxu0 0.0
      %6725 = vmatprep.subr.mxu0 0.0
      %6726 = vmatpush1.msra.mxu0 0.0
      %6727 = vmatprep.subr.mxu0 0.0
      %6728 = vmatpush1.msra.mxu0 0.0
      %6729 = vmatprep.subr.mxu0 0.0
      %6730 = vmatpush1.msra.mxu0 0.0
      %6731 = vmatprep.subr.mxu0 0.0
      %6732 = vmatpush1.msra.mxu0 0.0
      %6733 = vmatprep.subr.mxu0 0.0
      %6734 = vmatpush1.msra.mxu0 0.0
      %6735 = vmatprep.subr.mxu0 0.0
      %6736 = vmatpush1.msra.mxu0 0.0
      %6737 = vmatprep.subr.mxu0 0.0
      %6738 = vmatpush1.msra.mxu0 0.0
      %6739 = vmatprep.subr.mxu0 0.0
      %6740 = vmatpush1.msra.mxu0 0.0
      %6741 = vmatprep.subr.mxu0 0.0
      %6742 = vmatpush1.msra.mxu0 0.0
      %6743 = vmatprep.subr.mxu0 0.0
      %6744 = vmatpush1.msra.mxu0 0.0
      %6745 = vmatprep.subr.mxu0 0.0
      %6746 = vmatpush1.msra.mxu0 0.0
      %6747 = vmatprep.subr.mxu0 0.0
      %6748 = vmatpush1.msra.mxu0 0.0
      %6749 = vmatprep.subr.mxu0 0.0
      %6750 = vmatpush1.msra.mxu0 0.0
      %6751 = vmatprep.subr.mxu0 0.0
      %6752 = vmatpush1.msra.mxu0 0.0
      %6753 = vmatprep.subr.mxu0 0.0
      %6754 = vmatpush1.msra.mxu0 0.0
      %6755 = vmatprep.subr.mxu0 0.0
      %6756 = vmatpush1.msra.mxu0 0.0
      %6757 = vmatprep.subr.mxu0 0.0
      %6758 = vmatpush1.msra.mxu0 0.0
      %6759 = vmatprep.subr.mxu0 0.0
      %6760 = vmatpush1.msra.mxu0 0.0
      %6761 = vmatprep.subr.mxu0 0.0
      %6762 = vmatpush1.msra.mxu0 0.0
      %6763 = vmatprep.subr.mxu0 0.0
      %6764 = vmatpush1.msra.mxu0 0.0
      %6765 = vmatprep.subr.mxu0 0.0
      %6766 = vmatpush1.msra.mxu0 0.0
      %6767 = vmatprep.subr.mxu0 0.0
      %6768 = vmatpush1.msra.mxu0 0.0
      %6769 = vmatprep.subr.mxu0 0.0
      %6770 = vmatpush1.msra.mxu0 0.0
      %6771 = vmatprep.subr.mxu0 0.0
      %6772 = vmatpush1.msra.mxu0 0.0
      %6773 = vmatprep.subr.mxu0 0.0
      %6774 = vmatpush1.msra.mxu0 0.0
      %6775 = vmatprep.mubr.f32.mxu0 0.0
      %v6776 = vand.u32 %v6406, 4294901760
      %6777 = vmatmul.mubr.f32.gmra.mrb[0].mxu0 %v6776
      %v6778 = vpop.f32.mrb[0].mxu0
      %v6779 = vadd.f32 %v6705, %v6778
      %v6780 = vpop.f32.mrb[0].mxu0
      %6781 = vdwg.mxu0
      %6782 = vmatprep.subr.mxu0 0.0
      %v6783 = vand.u32 %v5957, 4294901760
      %6784 = vmatpush1.msra.mxu0 %v6783
      %6785 = vmatprep.subr.mxu0 0.0
      %6786 = vmatpush1.msra.mxu0 0.0
      %6787 = vmatprep.subr.mxu0 0.0
      %6788 = vmatpush1.msra.mxu0 0.0
      %6789 = vmatprep.subr.mxu0 0.0
      %6790 = vmatpush1.msra.mxu0 0.0
      %6791 = vmatprep.subr.mxu0 0.0
      %6792 = vmatpush1.msra.mxu0 0.0
      %6793 = vmatprep.subr.mxu0 0.0
      %6794 = vmatpush1.msra.mxu0 0.0
      %6795 = vmatprep.subr.mxu0 0.0
      %6796 = vmatpush1.msra.mxu0 0.0
      %6797 = vmatprep.subr.mxu0 0.0
      %6798 = vmatpush1.msra.mxu0 0.0
      %6799 = vmatprep.subr.mxu0 0.0
      %6800 = vmatpush1.msra.mxu0 0.0
      %6801 = vmatprep.subr.mxu0 0.0
      %6802 = vmatpush1.msra.mxu0 0.0
      %6803 = vmatprep.subr.mxu0 0.0
      %6804 = vmatpush1.msra.mxu0 0.0
      %6805 = vmatprep.subr.mxu0 0.0
      %6806 = vmatpush1.msra.mxu0 0.0
      %6807 = vmatprep.subr.mxu0 0.0
      %6808 = vmatpush1.msra.mxu0 0.0
      %6809 = vmatprep.subr.mxu0 0.0
      %6810 = vmatpush1.msra.mxu0 0.0
      %6811 = vmatprep.subr.mxu0 0.0
      %6812 = vmatpush1.msra.mxu0 0.0
      %6813 = vmatprep.subr.mxu0 0.0
      %6814 = vmatpush1.msra.mxu0 0.0
      %6815 = vmatprep.subr.mxu0 0.0
      %6816 = vmatpush1.msra.mxu0 0.0
      %6817 = vmatprep.subr.mxu0 0.0
      %6818 = vmatpush1.msra.mxu0 0.0
      %6819 = vmatprep.subr.mxu0 0.0
      %6820 = vmatpush1.msra.mxu0 0.0
      %6821 = vmatprep.subr.mxu0 0.0
      %6822 = vmatpush1.msra.mxu0 0.0
      %6823 = vmatprep.subr.mxu0 0.0
      %6824 = vmatpush1.msra.mxu0 0.0
      %6825 = vmatprep.subr.mxu0 0.0
      %6826 = vmatpush1.msra.mxu0 0.0
      %6827 = vmatprep.subr.mxu0 0.0
      %6828 = vmatpush1.msra.mxu0 0.0
      %6829 = vmatprep.subr.mxu0 0.0
      %6830 = vmatpush1.msra.mxu0 0.0
      %6831 = vmatprep.subr.mxu0 0.0
      %6832 = vmatpush1.msra.mxu0 0.0
      %6833 = vmatprep.subr.mxu0 0.0
      %6834 = vmatpush1.msra.mxu0 0.0
      %6835 = vmatprep.subr.mxu0 0.0
      %6836 = vmatpush1.msra.mxu0 0.0
      %6837 = vmatprep.subr.mxu0 0.0
      %6838 = vmatpush1.msra.mxu0 0.0
      %6839 = vmatprep.subr.mxu0 0.0
      %6840 = vmatpush1.msra.mxu0 0.0
      %6841 = vmatprep.subr.mxu0 0.0
      %6842 = vmatpush1.msra.mxu0 0.0
      %6843 = vmatprep.subr.mxu0 0.0
      %6844 = vmatpush1.msra.mxu0 0.0
      %6845 = vmatprep.subr.mxu0 0.0
      %6846 = vmatpush1.msra.mxu0 0.0
      %6847 = vmatprep.mubr.f32.mxu0 0.0
      %v6848 = vand.u32 %v6406, 4294901760
      %6849 = vmatmul.mubr.f32.gmra.mrb[0].mxu0 %v6848
      %v6850 = vpop.f32.mrb[0].mxu0
      %v6851 = vadd.f32 %v6779, %v6850
      %v6852 = vpop.f32.mrb[0].mxu0
      %6853 = vdwg.mxu0
      %v6854 = vlaneseq
      %v6855 = vshrl.u32 %v6854, 7
      %v6856 = vsub.s32 0, %v6855
      %v6857 = vrot.slane %v6402, %v6856
      %v6858 = vsub.f32 %v4842, %v6857
      %v6859 = vsub.f32 %v4843, %v6857
      %v6860 = vsub.f32 %v4844, %v6857
      %v6861 = vsub.f32 %v4845, %v6857
      %v6862 = vsub.f32 %v4846, %v6857
      %v6863 = vsub.f32 %v4847, %v6857
      %v6864 = vsub.f32 %v4848, %v6857
      %v6865 = vsub.f32 %v4849, %v6857
      %v6866 = vsub.f32 %v4850, %v6857
      %v6867 = vsub.f32 %v4851, %v6857
      %v6868 = vsub.f32 %v4852, %v6857
      %v6869 = vsub.f32 %v4853, %v6857
      %v6870 = vsub.f32 %v4854, %v6857
      %v6871 = vsub.f32 %v4855, %v6857
      %v6872 = vsub.f32 %v4856, %v6857
      %v6873 = vsub.f32 %v4857, %v6857
      %v6874 = vsub.f32 %v4858, %v6857
      %v6875 = vsub.f32 %v4859, %v6857
      %v6876 = vsub.f32 %v4860, %v6857
      %v6877 = vsub.f32 %v4861, %v6857
      %v6878 = vsub.f32 %v4862, %v6857
      %v6879 = vsub.f32 %v4863, %v6857
      %v6880 = vsub.f32 %v4864, %v6857
      %v6881 = vsub.f32 %v4865, %v6857
      %v6882 = vsub.f32 %v4866, %v6857
      %v6883 = vsub.f32 %v4867, %v6857
      %v6884 = vsub.f32 %v4868, %v6857
      %v6885 = vsub.f32 %v4869, %v6857
      %v6886 = vsub.f32 %v4870, %v6857
      %v6887 = vsub.f32 %v4871, %v6857
      %v6888 = vsub.f32 %v4872, %v6857
      %v6889 = vsub.f32 %v4873, %v6857
      %v6890 = vlaneseq
      %v6891 = vshrl.u32 %v6890, 7
      %v6892 = vsub.s32 0, %v6891
      %v6893 = vrot.slane %v6851, %v6892
      %v6894 = vmul.f32 %v6858, %v6893
      %v6895 = vmul.f32 %v6859, %v6893
      %v6896 = vmul.f32 %v6860, %v6893
      %v6897 = vmul.f32 %v6861, %v6893
      %v6898 = vmul.f32 %v6862, %v6893
      %v6899 = vmul.f32 %v6863, %v6893
      %v6900 = vmul.f32 %v6864, %v6893
      %v6901 = vmul.f32 %v6865, %v6893
      %v6902 = vmul.f32 %v6866, %v6893
      %v6903 = vmul.f32 %v6867, %v6893
      %v6904 = vmul.f32 %v6868, %v6893
      %v6905 = vmul.f32 %v6869, %v6893
      %v6906 = vmul.f32 %v6870, %v6893
      %v6907 = vmul.f32 %v6871, %v6893
      %v6908 = vmul.f32 %v6872, %v6893
      %v6909 = vmul.f32 %v6873, %v6893
      %v6910 = vmul.f32 %v6874, %v6893
      %v6911 = vmul.f32 %v6875, %v6893
      %v6912 = vmul.f32 %v6876, %v6893
      %v6913 = vmul.f32 %v6877, %v6893
      %v6914 = vmul.f32 %v6878, %v6893
      %v6915 = vmul.f32 %v6879, %v6893
      %v6916 = vmul.f32 %v6880, %v6893
      %v6917 = vmul.f32 %v6881, %v6893
      %v6918 = vmul.f32 %v6882, %v6893
      %v6919 = vmul.f32 %v6883, %v6893
      %v6920 = vmul.f32 %v6884, %v6893
      %v6921 = vmul.f32 %v6885, %v6893
      %v6922 = vmul.f32 %v6886, %v6893
      %v6923 = vmul.f32 %v6887, %v6893
      %v6924 = vmul.f32 %v6888, %v6893
      %v6925 = vmul.f32 %v6889, %v6893
      %v6927 = vlaneseq
      %v6928 = vshrl.u32 %v6927, 7
      %v6929 = vsub.s32 0, %v6928
      %v6930 = vrot.slane %v4874, %v6929
      %v6932 = vmul.f32 %v6894, %v6930
      %v6933 = vmul.f32 %v6895, %v6930
      %v6934 = vmul.f32 %v6896, %v6930
      %v6935 = vmul.f32 %v6897, %v6930
      %v6936 = vmul.f32 %v6898, %v6930
      %v6937 = vmul.f32 %v6899, %v6930
      %v6938 = vmul.f32 %v6900, %v6930
      %v6939 = vmul.f32 %v6901, %v6930
      %v6940 = vmul.f32 %v6902, %v6930
      %v6941 = vmul.f32 %v6903, %v6930
      %v6942 = vmul.f32 %v6904, %v6930
      %v6943 = vmul.f32 %v6905, %v6930
      %v6944 = vmul.f32 %v6906, %v6930
      %v6945 = vmul.f32 %v6907, %v6930
      %v6946 = vmul.f32 %v6908, %v6930
      %v6947 = vmul.f32 %v6909, %v6930
      %v6948 = vmul.f32 %v6910, %v6930
      %v6949 = vmul.f32 %v6911, %v6930
      %v6950 = vmul.f32 %v6912, %v6930
      %v6951 = vmul.f32 %v6913, %v6930
      %v6952 = vmul.f32 %v6914, %v6930
      %v6953 = vmul.f32 %v6915, %v6930
      %v6954 = vmul.f32 %v6916, %v6930
      %v6955 = vmul.f32 %v6917, %v6930
      %v6956 = vmul.f32 %v6918, %v6930
      %v6957 = vmul.f32 %v6919, %v6930
      %v6958 = vmul.f32 %v6920, %v6930
      %v6959 = vmul.f32 %v6921, %v6930
      %v6960 = vmul.f32 %v6922, %v6930
      %v6961 = vmul.f32 %v6923, %v6930
      %v6962 = vmul.f32 %v6924, %v6930
      %v6963 = vmul.f32 %v6925, %v6930
      %v6965 = vlaneseq
      %v6966 = vshrl.u32 %v6965, 7
      %v6967 = vsub.s32 0, %v6966
      %v6968 = vrot.slane %v4875, %v6967
      %v6970 = vadd.f32 %v6932, %v6968
      %v6971 = vadd.f32 %v6933, %v6968
      %v6972 = vadd.f32 %v6934, %v6968
      %v6973 = vadd.f32 %v6935, %v6968
      %v6974 = vadd.f32 %v6936, %v6968
      %v6975 = vadd.f32 %v6937, %v6968
      %v6976 = vadd.f32 %v6938, %v6968
      %v6977 = vadd.f32 %v6939, %v6968
      %v6978 = vadd.f32 %v6940, %v6968
      %v6979 = vadd.f32 %v6941, %v6968
      %v6980 = vadd.f32 %v6942, %v6968
      %v6981 = vadd.f32 %v6943, %v6968
      %v6982 = vadd.f32 %v6944, %v6968
      %v6983 = vadd.f32 %v6945, %v6968
      %v6984 = vadd.f32 %v6946, %v6968
      %v6985 = vadd.f32 %v6947, %v6968
      %v6986 = vadd.f32 %v6948, %v6968
      %v6987 = vadd.f32 %v6949, %v6968
      %v6988 = vadd.f32 %v6950, %v6968
      %v6989 = vadd.f32 %v6951, %v6968
      %v6990 = vadd.f32 %v6952, %v6968
      %v6991 = vadd.f32 %v6953, %v6968
      %v6992 = vadd.f32 %v6954, %v6968
      %v6993 = vadd.f32 %v6955, %v6968
      %v6994 = vadd.f32 %v6956, %v6968
      %v6995 = vadd.f32 %v6957, %v6968
      %v6996 = vadd.f32 %v6958, %v6968
      %v6997 = vadd.f32 %v6959, %v6968
      %v6998 = vadd.f32 %v6960, %v6968
      %v6999 = vadd.f32 %v6961, %v6968
      %v7000 = vadd.f32 %v6962, %v6968
      %v7001 = vadd.f32 %v6963, %v6968
      %v7002 = vxor.u32 %v6970, 2147483648
      %v7003 = vxor.u32 %v6971, 2147483648
      %v7004 = vxor.u32 %v6972, 2147483648
      %v7005 = vxor.u32 %v6973, 2147483648
      %v7006 = vxor.u32 %v6974, 2147483648
      %v7007 = vxor.u32 %v6975, 2147483648
      %v7008 = vxor.u32 %v6976, 2147483648
      %v7009 = vxor.u32 %v6977, 2147483648
      %v7010 = vxor.u32 %v6978, 2147483648
      %v7011 = vxor.u32 %v6979, 2147483648
      %v7012 = vxor.u32 %v6980, 2147483648
      %v7013 = vxor.u32 %v6981, 2147483648
      %v7014 = vxor.u32 %v6982, 2147483648
      %v7015 = vxor.u32 %v6983, 2147483648
      %v7016 = vxor.u32 %v6984, 2147483648
      %v7017 = vxor.u32 %v6985, 2147483648
      %v7018 = vxor.u32 %v6986, 2147483648
      %v7019 = vxor.u32 %v6987, 2147483648
      %v7020 = vxor.u32 %v6988, 2147483648
      %v7021 = vxor.u32 %v6989, 2147483648
      %v7022 = vxor.u32 %v6990, 2147483648
      %v7023 = vxor.u32 %v6991, 2147483648
      %v7024 = vxor.u32 %v6992, 2147483648
      %v7025 = vxor.u32 %v6993, 2147483648
      %v7026 = vxor.u32 %v6994, 2147483648
      %v7027 = vxor.u32 %v6995, 2147483648
      %v7028 = vxor.u32 %v6996, 2147483648
      %v7029 = vxor.u32 %v6997, 2147483648
      %v7030 = vxor.u32 %v6998, 2147483648
      %v7031 = vxor.u32 %v6999, 2147483648
      %v7032 = vxor.u32 %v7000, 2147483648
      %v7033 = vxor.u32 %v7001, 2147483648
      %v7034 = vmul.f32 %v7002, 1.442695
      %v7035 = vpow.pop %v7034
      %v7036 = vmul.f32 %v7003, 1.442695
      %v7037 = vpow.pop %v7036
      %v7038 = vmul.f32 %v7004, 1.442695
      %v7039 = vpow.pop %v7038
      %v7040 = vmul.f32 %v7005, 1.442695
      %v7041 = vpow.pop %v7040
      %v7042 = vmul.f32 %v7006, 1.442695
      %v7043 = vpow.pop %v7042
      %v7044 = vmul.f32 %v7007, 1.442695
      %v7045 = vpow.pop %v7044
      %v7046 = vmul.f32 %v7008, 1.442695
      %v7047 = vpow.pop %v7046
      %v7048 = vmul.f32 %v7009, 1.442695
      %v7049 = vpow.pop %v7048
      %v7050 = vmul.f32 %v7010, 1.442695
      %v7051 = vpow.pop %v7050
      %v7052 = vmul.f32 %v7011, 1.442695
      %v7053 = vpow.pop %v7052
      %v7054 = vmul.f32 %v7012, 1.442695
      %v7055 = vpow.pop %v7054
      %v7056 = vmul.f32 %v7013, 1.442695
      %v7057 = vpow.pop %v7056
      %v7058 = vmul.f32 %v7014, 1.442695
      %v7059 = vpow.pop %v7058
      %v7060 = vmul.f32 %v7015, 1.442695
      %v7061 = vpow.pop %v7060
      %v7062 = vmul.f32 %v7016, 1.442695
      %v7063 = vpow.pop %v7062
      %v7064 = vmul.f32 %v7017, 1.442695
      %v7065 = vpow.pop %v7064
      %v7066 = vmul.f32 %v7018, 1.442695
      %v7067 = vpow.pop %v7066
      %v7068 = vmul.f32 %v7019, 1.442695
      %v7069 = vpow.pop %v7068
      %v7070 = vmul.f32 %v7020, 1.442695
      %v7071 = vpow.pop %v7070
      %v7072 = vmul.f32 %v7021, 1.442695
      %v7073 = vpow.pop %v7072
      %v7074 = vmul.f32 %v7022, 1.442695
      %v7075 = vpow.pop %v7074
      %v7076 = vmul.f32 %v7023, 1.442695
      %v7077 = vpow.pop %v7076
      %v7078 = vmul.f32 %v7024, 1.442695
      %v7079 = vpow.pop %v7078
      %v7080 = vmul.f32 %v7025, 1.442695
      %v7081 = vpow.pop %v7080
      %v7082 = vmul.f32 %v7026, 1.442695
      %v7083 = vpow.pop %v7082
      %v7084 = vmul.f32 %v7027, 1.442695
      %v7085 = vpow.pop %v7084
      %v7086 = vmul.f32 %v7028, 1.442695
      %v7087 = vpow.pop %v7086
      %v7088 = vmul.f32 %v7029, 1.442695
      %v7089 = vpow.pop %v7088
      %v7090 = vmul.f32 %v7030, 1.442695
      %v7091 = vpow.pop %v7090
      %v7092 = vmul.f32 %v7031, 1.442695
      %v7093 = vpow.pop %v7092
      %v7094 = vmul.f32 %v7032, 1.442695
      %v7095 = vpow.pop %v7094
      %v7096 = vmul.f32 %v7033, 1.442695
      %v7097 = vpow.pop %v7096
      %v7098 = vadd.f32 %v7035, 1.0
      %v7099 = vadd.f32 %v7037, 1.0
      %v7100 = vadd.f32 %v7039, 1.0
      %v7101 = vadd.f32 %v7041, 1.0
      %v7102 = vadd.f32 %v7043, 1.0
      %v7103 = vadd.f32 %v7045, 1.0
      %v7104 = vadd.f32 %v7047, 1.0
      %v7105 = vadd.f32 %v7049, 1.0
      %v7106 = vadd.f32 %v7051, 1.0
      %v7107 = vadd.f32 %v7053, 1.0
      %v7108 = vadd.f32 %v7055, 1.0
      %v7109 = vadd.f32 %v7057, 1.0
      %v7110 = vadd.f32 %v7059, 1.0
      %v7111 = vadd.f32 %v7061, 1.0
      %v7112 = vadd.f32 %v7063, 1.0
      %v7113 = vadd.f32 %v7065, 1.0
      %v7114 = vadd.f32 %v7067, 1.0
      %v7115 = vadd.f32 %v7069, 1.0
      %v7116 = vadd.f32 %v7071, 1.0
      %v7117 = vadd.f32 %v7073, 1.0
      %v7118 = vadd.f32 %v7075, 1.0
      %v7119 = vadd.f32 %v7077, 1.0
      %v7120 = vadd.f32 %v7079, 1.0
      %v7121 = vadd.f32 %v7081, 1.0
      %v7122 = vadd.f32 %v7083, 1.0
      %v7123 = vadd.f32 %v7085, 1.0
      %v7124 = vadd.f32 %v7087, 1.0
      %v7125 = vadd.f32 %v7089, 1.0
      %v7126 = vadd.f32 %v7091, 1.0
      %v7127 = vadd.f32 %v7093, 1.0
      %v7128 = vadd.f32 %v7095, 1.0
      %v7129 = vadd.f32 %v7097, 1.0
      %v7130 = vrcp.pop %v7098
      %v7131 = vmul.f32 1.0, %v7130
      %v7132 = vrcp.pop %v7099
      %v7133 = vmul.f32 1.0, %v7132
      %v7134 = vrcp.pop %v7100
      %v7135 = vmul.f32 1.0, %v7134
      %v7136 = vrcp.pop %v7101
      %v7137 = vmul.f32 1.0, %v7136
      %v7138 = vrcp.pop %v7102
      %v7139 = vmul.f32 1.0, %v7138
      %v7140 = vrcp.pop %v7103
      %v7141 = vmul.f32 1.0, %v7140
      %v7142 = vrcp.pop %v7104
      %v7143 = vmul.f32 1.0, %v7142
      %v7144 = vrcp.pop %v7105
      %v7145 = vmul.f32 1.0, %v7144
      %v7146 = vrcp.pop %v7106
      %v7147 = vmul.f32 1.0, %v7146
      %v7148 = vrcp.pop %v7107
      %v7149 = vmul.f32 1.0, %v7148
      %v7150 = vrcp.pop %v7108
      %v7151 = vmul.f32 1.0, %v7150
      %v7152 = vrcp.pop %v7109
      %v7153 = vmul.f32 1.0, %v7152
      %v7154 = vrcp.pop %v7110
      %v7155 = vmul.f32 1.0, %v7154
      %v7156 = vrcp.pop %v7111
      %v7157 = vmul.f32 1.0, %v7156
      %v7158 = vrcp.pop %v7112
      %v7159 = vmul.f32 1.0, %v7158
      %v7160 = vrcp.pop %v7113
      %v7161 = vmul.f32 1.0, %v7160
      %v7162 = vrcp.pop %v7114
      %v7163 = vmul.f32 1.0, %v7162
      %v7164 = vrcp.pop %v7115
      %v7165 = vmul.f32 1.0, %v7164
      %v7166 = vrcp.pop %v7116
      %v7167 = vmul.f32 1.0, %v7166
      %v7168 = vrcp.pop %v7117
      %v7169 = vmul.f32 1.0, %v7168
      %v7170 = vrcp.pop %v7118
      %v7171 = vmul.f32 1.0, %v7170
      %v7172 = vrcp.pop %v7119
      %v7173 = vmul.f32 1.0, %v7172
      %v7174 = vrcp.pop %v7120
      %v7175 = vmul.f32 1.0, %v7174
      %v7176 = vrcp.pop %v7121
      %v7177 = vmul.f32 1.0, %v7176
      %v7178 = vrcp.pop %v7122
      %v7179 = vmul.f32 1.0, %v7178
      %v7180 = vrcp.pop %v7123
      %v7181 = vmul.f32 1.0, %v7180
      %v7182 = vrcp.pop %v7124
      %v7183 = vmul.f32 1.0, %v7182
      %v7184 = vrcp.pop %v7125
      %v7185 = vmul.f32 1.0, %v7184
      %v7186 = vrcp.pop %v7126
      %v7187 = vmul.f32 1.0, %v7186
      %v7188 = vrcp.pop %v7127
      %v7189 = vmul.f32 1.0, %v7188
      %v7190 = vrcp.pop %v7128
      %v7191 = vmul.f32 1.0, %v7190
      %v7192 = vrcp.pop %v7129
      %v7193 = vmul.f32 1.0, %v7192
      %v7194 = vmul.f32 %v6970, %v7131
      %v7195 = vmul.f32 %v6971, %v7133
      %v7196 = vmul.f32 %v6972, %v7135
      %v7197 = vmul.f32 %v6973, %v7137
      %v7198 = vmul.f32 %v6974, %v7139
      %v7199 = vmul.f32 %v6975, %v7141
      %v7200 = vmul.f32 %v6976, %v7143
      %v7201 = vmul.f32 %v6977, %v7145
      %v7202 = vmul.f32 %v6978, %v7147
      %v7203 = vmul.f32 %v6979, %v7149
      %v7204 = vmul.f32 %v6980, %v7151
      %v7205 = vmul.f32 %v6981, %v7153
      %v7206 = vmul.f32 %v6982, %v7155
      %v7207 = vmul.f32 %v6983, %v7157
      %v7208 = vmul.f32 %v6984, %v7159
      %v7209 = vmul.f32 %v6985, %v7161
      %v7210 = vmul.f32 %v6986, %v7163
      %v7211 = vmul.f32 %v6987, %v7165
      %v7212 = vmul.f32 %v6988, %v7167
      %v7213 = vmul.f32 %v6989, %v7169
      %v7214 = vmul.f32 %v6990, %v7171
      %v7215 = vmul.f32 %v6991, %v7173
      %v7216 = vmul.f32 %v6992, %v7175
      %v7217 = vmul.f32 %v6993, %v7177
      %v7218 = vmul.f32 %v6994, %v7179
      %v7219 = vmul.f32 %v6995, %v7181
      %v7220 = vmul.f32 %v6996, %v7183
      %v7221 = vmul.f32 %v6997, %v7185
      %v7222 = vmul.f32 %v6998, %v7187
      %v7223 = vmul.f32 %v6999, %v7189
      %v7224 = vmul.f32 %v7000, %v7191
      %v7225 = vmul.f32 %v7001, %v7193
      %v7226 = vld [vmem:[%s15] sm:$0x1]
      %vm7227 = vcmask 195584
      %7228 = vst.msk [vmem:[#allocation3] sm:$0xff] %vm7227, 0
      %vm7229 = vcmask 188416
      %vm7230 = vmand %vm7229, %vm3478
      %v7231 = vld [vmem:[#allocation3 + $0x8] sm:$0x1]
      %v7232 = vsel %vm7230, 0, %v7231
      %7233 = vst [vmem:[#allocation3 + $0x8] sm:$0x1] %v7232
      %vm7234 = vcmask 195591
      %vm7235 = vmand %vm7234, %vm3484
      %v7236 = vld [vmem:[#allocation3 + $0x80] sm:$0x80]
      %v7237 = vsel %vm7235, 0, %v7236
      %7238 = vst [vmem:[#allocation3 + $0x80] sm:$0x80] %v7237
      %7239 = vst.msk [vmem:[#allocation3 + $0x88] sm:$0xff] %vm7227, 0
      %v7240 = vmul.f32 %v7194, %v848
      %v7241 = vmul.f32 %v7195, %v849
      %v7242 = vmul.f32 %v7196, %v850
      %v7243 = vmul.f32 %v7197, %v851
      %v7244 = vmul.f32 %v7198, %v852
      %v7245 = vmul.f32 %v7199, %v853
      %v7246 = vmul.f32 %v7200, %v854
      %v7247 = vmul.f32 %v7201, %v855
      %v7248 = vmul.f32 %v7202, %v856
      %v7249 = vmul.f32 %v7203, %v857
      %v7250 = vmul.f32 %v7204, %v858
      %v7251 = vmul.f32 %v7205, %v859
      %v7252 = vmul.f32 %v7206, %v860
      %v7253 = vmul.f32 %v7207, %v861
      %v7254 = vmul.f32 %v7208, %v862
      %v7255 = vmul.f32 %v7209, %v863
      %v7256 = vmul.f32 %v7210, %v864
      %v7257 = vmul.f32 %v7211, %v865
      %v7258 = vmul.f32 %v7212, %v866
      %v7259 = vmul.f32 %v7213, %v867
      %v7260 = vmul.f32 %v7214, %v868
      %v7261 = vmul.f32 %v7215, %v869
      %v7262 = vmul.f32 %v7216, %v870
      %v7263 = vmul.f32 %v7217, %v871
      %v7264 = vmul.f32 %v7218, %v872
      %v7265 = vmul.f32 %v7219, %v873
      %v7266 = vmul.f32 %v7220, %v874
      %v7267 = vmul.f32 %v7221, %v875
      %v7268 = vmul.f32 %v7222, %v876
      %v7269 = vmul.f32 %v7223, %v877
      %v7270 = vmul.f32 %v7224, %v878
      %v7271 = vmul.f32 %v7225, %v879
      %v7272 = vpack.c.bf16 %v7241, %v7240
      %v7273 = vpack.c.bf16 %v7243, %v7242
      %v7274 = vpack.c.bf16 %v7245, %v7244
      %v7275 = vpack.c.bf16 %v7247, %v7246
      %v7276 = vpack.c.bf16 %v7249, %v7248
      %v7277 = vpack.c.bf16 %v7251, %v7250
      %v7278 = vpack.c.bf16 %v7253, %v7252
      %v7279 = vpack.c.bf16 %v7255, %v7254
      %v7280 = vpack.c.bf16 %v7257, %v7256
      %v7281 = vpack.c.bf16 %v7259, %v7258
      %v7282 = vpack.c.bf16 %v7261, %v7260
      %v7283 = vpack.c.bf16 %v7263, %v7262
      %v7284 = vpack.c.bf16 %v7265, %v7264
      %v7285 = vpack.c.bf16 %v7267, %v7266
      %v7286 = vpack.c.bf16 %v7269, %v7268
      %v7287 = vpack.c.bf16 %v7271, %v7270
      %v7289 = vshrl.u32 %v7272, 16
      %v7291 = vrot.slane %v7289, 7
      %v7292 = vshll.u32 %v7272, 16
      %v7294 = vor.u32 %v7291, %v7292
      %v7296 = vshrl.u32 %v7273, 16
      %v7298 = vrot.slane %v7296, 7
      %v7299 = vshll.u32 %v7273, 16
      %v7301 = vor.u32 %v7298, %v7299
      %v7302 = vsel %vm3478, %v7291, %v7301
      %v7304 = vshrl.u32 %v7274, 16
      %v7306 = vrot.slane %v7304, 7
      %v7307 = vshll.u32 %v7274, 16
      %v7309 = vor.u32 %v7306, %v7307
      %v7310 = vsel %vm3478, %v7298, %v7309
      %v7312 = vshrl.u32 %v7275, 16
      %v7314 = vrot.slane %v7312, 7
      %v7315 = vshll.u32 %v7275, 16
      %v7317 = vor.u32 %v7314, %v7315
      %v7318 = vsel %vm3478, %v7306, %v7317
      %v7320 = vshrl.u32 %v7276, 16
      %v7322 = vrot.slane %v7320, 7
      %v7323 = vshll.u32 %v7276, 16
      %v7325 = vor.u32 %v7322, %v7323
      %v7326 = vsel %vm3478, %v7314, %v7325
      %v7328 = vshrl.u32 %v7277, 16
      %v7330 = vrot.slane %v7328, 7
      %v7331 = vshll.u32 %v7277, 16
      %v7333 = vor.u32 %v7330, %v7331
      %v7334 = vsel %vm3478, %v7322, %v7333
      %v7336 = vshrl.u32 %v7278, 16
      %v7338 = vrot.slane %v7336, 7
      %v7339 = vshll.u32 %v7278, 16
      %v7341 = vor.u32 %v7338, %v7339
      %v7342 = vsel %vm3478, %v7330, %v7341
      %v7344 = vshrl.u32 %v7279, 16
      %v7346 = vrot.slane %v7344, 7
      %v7347 = vshll.u32 %v7279, 16
      %v7349 = vor.u32 %v7346, %v7347
      %v7350 = vsel %vm3478, %v7338, %v7349
      %v7352 = vshrl.u32 %v7280, 16
      %v7354 = vrot.slane %v7352, 7
      %v7355 = vshll.u32 %v7280, 16
      %v7357 = vor.u32 %v7354, %v7355
      %v7358 = vsel %vm3478, %v7346, %v7357
      %v7360 = vshrl.u32 %v7281, 16
      %v7362 = vrot.slane %v7360, 7
      %v7363 = vshll.u32 %v7281, 16
      %v7365 = vor.u32 %v7362, %v7363
      %v7366 = vsel %vm3478, %v7354, %v7365
      %v7368 = vshrl.u32 %v7282, 16
      %v7370 = vrot.slane %v7368, 7
      %v7371 = vshll.u32 %v7282, 16
      %v7373 = vor.u32 %v7370, %v7371
      %v7374 = vsel %vm3478, %v7362, %v7373
      %v7376 = vshrl.u32 %v7283, 16
      %v7378 = vrot.slane %v7376, 7
      %v7379 = vshll.u32 %v7283, 16
      %v7381 = vor.u32 %v7378, %v7379
      %v7382 = vsel %vm3478, %v7370, %v7381
      %v7384 = vshrl.u32 %v7284, 16
      %v7386 = vrot.slane %v7384, 7
      %v7387 = vshll.u32 %v7284, 16
      %v7389 = vor.u32 %v7386, %v7387
      %v7390 = vsel %vm3478, %v7378, %v7389
      %v7392 = vshrl.u32 %v7285, 16
      %v7394 = vrot.slane %v7392, 7
      %v7395 = vshll.u32 %v7285, 16
      %v7397 = vor.u32 %v7394, %v7395
      %v7398 = vsel %vm3478, %v7386, %v7397
      %v7400 = vshrl.u32 %v7286, 16
      %v7402 = vrot.slane %v7400, 7
      %v7403 = vshll.u32 %v7286, 16
      %v7405 = vor.u32 %v7402, %v7403
      %v7406 = vsel %vm3478, %v7394, %v7405
      %v7408 = vshrl.u32 %v7287, 16
      %v7410 = vrot.slane %v7408, 7
      %v7411 = vshll.u32 %v7287, 16
      %v7413 = vor.u32 %v7410, %v7411
      %v7414 = vsel %vm3478, %v7402, %v7413
      %vm7432 = vcmask 64512
      %vm7433 = vmand %vm7432, %vm3683
      %v7434 = vld [vmem:[#allocation3 + $0x8] sm:$0xff]
      %v7435 = vsel %vm7433, %v7294, %v7434
      %7436 = vst [vmem:[#allocation3 + $0x8] sm:$0xff] %v7435
      %7437 = vst.msk [vmem:[#allocation3 + $0x10] sm:$0xff] %vm4878, %v7302
      %7438 = vst.msk [vmem:[#allocation3 + $0x18] sm:$0xff] %vm4878, %v7310
      %7439 = vst.msk [vmem:[#allocation3 + $0x20] sm:$0xff] %vm4878, %v7318
      %7440 = vst.msk [vmem:[#allocation3 + $0x28] sm:$0xff] %vm4878, %v7326
      %7441 = vst.msk [vmem:[#allocation3 + $0x30] sm:$0xff] %vm4878, %v7334
      %7442 = vst.msk [vmem:[#allocation3 + $0x38] sm:$0xff] %vm4878, %v7342
      %7443 = vst.msk [vmem:[#allocation3 + $0x40] sm:$0xff] %vm4878, %v7350
      %7444 = vst.msk [vmem:[#allocation3 + $0x48] sm:$0xff] %vm4878, %v7358
      %7445 = vst.msk [vmem:[#allocation3 + $0x50] sm:$0xff] %vm4878, %v7366
      %7446 = vst.msk [vmem:[#allocation3 + $0x58] sm:$0xff] %vm4878, %v7374
      %7447 = vst.msk [vmem:[#allocation3 + $0x60] sm:$0xff] %vm4878, %v7382
      %7448 = vst.msk [vmem:[#allocation3 + $0x68] sm:$0xff] %vm4878, %v7390
      %7449 = vst.msk [vmem:[#allocation3 + $0x70] sm:$0xff] %vm4878, %v7398
      %7450 = vst.msk [vmem:[#allocation3 + $0x78] sm:$0xff] %vm4878, %v7406
      %7451 = vst.msk [vmem:[#allocation3 + $0x80] sm:$0xff] %vm4878, %v7414
      %vm7452 = vcmask 57344
      %vm7453 = vmand %vm7452, %vm3478
      %v7454 = vld [vmem:[#allocation3 + $0x88] sm:$0x1]
      %v7455 = vsel %vm7453, %v7410, %v7454
      %7456 = vst [vmem:[#allocation3 + $0x88] sm:$0x1] %v7455
      %v7457 = vpack.c.bf16 %v7195, %v7194
      %v7458 = vpack.c.bf16 %v7197, %v7196
      %v7459 = vpack.c.bf16 %v7199, %v7198
      %v7460 = vpack.c.bf16 %v7201, %v7200
      %v7461 = vpack.c.bf16 %v7203, %v7202
      %v7462 = vpack.c.bf16 %v7205, %v7204
      %v7463 = vpack.c.bf16 %v7207, %v7206
      %v7464 = vpack.c.bf16 %v7209, %v7208
      %v7465 = vpack.c.bf16 %v7211, %v7210
      %v7466 = vpack.c.bf16 %v7213, %v7212
      %v7467 = vpack.c.bf16 %v7215, %v7214
      %v7468 = vpack.c.bf16 %v7217, %v7216
      %v7469 = vpack.c.bf16 %v7219, %v7218
      %v7470 = vpack.c.bf16 %v7221, %v7220
      %v7471 = vpack.c.bf16 %v7223, %v7222
      %v7472 = vpack.c.bf16 %v7225, %v7224
      %7489 = vrot.lane.b32.xlu0 %v7457, 8
      %v7490 = vpop.permute.xlu0 %7489
      %7491 = vrot.lane.b32.xlu0 %v7458, 8
      %v7492 = vpop.permute.xlu0 %7491
      %7493 = vrot.lane.b32.xlu0 %v7459, 8
      %v7494 = vpop.permute.xlu0 %7493
      %7495 = vrot.lane.b32.xlu0 %v7460, 8
      %v7496 = vpop.permute.xlu0 %7495
      %7497 = vrot.lane.b32.xlu0 %v7461, 8
      %v7498 = vpop.permute.xlu0 %7497
      %7499 = vrot.lane.b32.xlu0 %v7462, 8
      %v7500 = vpop.permute.xlu0 %7499
      %7501 = vrot.lane.b32.xlu0 %v7463, 8
      %v7502 = vpop.permute.xlu0 %7501
      %7503 = vrot.lane.b32.xlu0 %v7464, 8
      %v7504 = vpop.permute.xlu0 %7503
      %7505 = vrot.lane.b32.xlu0 %v7465, 8
      %v7506 = vpop.permute.xlu0 %7505
      %7507 = vrot.lane.b32.xlu0 %v7466, 8
      %v7508 = vpop.permute.xlu0 %7507
      %7509 = vrot.lane.b32.xlu0 %v7467, 8
      %v7510 = vpop.permute.xlu0 %7509
      %7511 = vrot.lane.b32.xlu0 %v7468, 8
      %v7512 = vpop.permute.xlu0 %7511
      %7513 = vrot.lane.b32.xlu0 %v7469, 8
      %v7514 = vpop.permute.xlu0 %7513
      %7515 = vrot.lane.b32.xlu0 %v7470, 8
      %v7516 = vpop.permute.xlu0 %7515
      %7517 = vrot.lane.b32.xlu0 %v7471, 8
      %v7518 = vpop.permute.xlu0 %7517
      %7519 = vrot.lane.b32.xlu0 %v7472, 8
      %v7520 = vpop.permute.xlu0 %7519
      %vm7537 = vcmask 130112
      %7538 = vst.msk [vmem:[#allocation3 + $0x8] sm:$0xff] %vm7537, %v7490
      %7539 = vst.msk [vmem:[#allocation3 + $0x10] sm:$0xff] %vm7537, %v7492
      %7540 = vst.msk [vmem:[#allocation3 + $0x18] sm:$0xff] %vm7537, %v7494
      %7541 = vst.msk [vmem:[#allocation3 + $0x20] sm:$0xff] %vm7537, %v7496
      %7542 = vst.msk [vmem:[#allocation3 + $0x28] sm:$0xff] %vm7537, %v7498
      %7543 = vst.msk [vmem:[#allocation3 + $0x30] sm:$0xff] %vm7537, %v7500
      %7544 = vst.msk [vmem:[#allocation3 + $0x38] sm:$0xff] %vm7537, %v7502
      %7545 = vst.msk [vmem:[#allocation3 + $0x40] sm:$0xff] %vm7537, %v7504
      %7546 = vst.msk [vmem:[#allocation3 + $0x48] sm:$0xff] %vm7537, %v7506
      %7547 = vst.msk [vmem:[#allocation3 + $0x50] sm:$0xff] %vm7537, %v7508
      %7548 = vst.msk [vmem:[#allocation3 + $0x58] sm:$0xff] %vm7537, %v7510
      %7549 = vst.msk [vmem:[#allocation3 + $0x60] sm:$0xff] %vm7537, %v7512
      %7550 = vst.msk [vmem:[#allocation3 + $0x68] sm:$0xff] %vm7537, %v7514
      %7551 = vst.msk [vmem:[#allocation3 + $0x70] sm:$0xff] %vm7537, %v7516
      %7552 = vst.msk [vmem:[#allocation3 + $0x78] sm:$0xff] %vm7537, %v7518
      %7553 = vst.msk [vmem:[#allocation3 + $0x80] sm:$0xff] %vm7537, %v7520
      %v7554 = vmul.f32 %v7194, %v752
      %v7555 = vmul.f32 %v7195, %v753
      %v7556 = vmul.f32 %v7196, %v754
      %v7557 = vmul.f32 %v7197, %v755
      %v7558 = vmul.f32 %v7198, %v756
      %v7559 = vmul.f32 %v7199, %v757
      %v7560 = vmul.f32 %v7200, %v758
      %v7561 = vmul.f32 %v7201, %v759
      %v7562 = vmul.f32 %v7202, %v760
      %v7563 = vmul.f32 %v7203, %v761
      %v7564 = vmul.f32 %v7204, %v762
      %v7565 = vmul.f32 %v7205, %v763
      %v7566 = vmul.f32 %v7206, %v764
      %v7567 = vmul.f32 %v7207, %v765
      %v7568 = vmul.f32 %v7208, %v766
      %v7569 = vmul.f32 %v7209, %v767
      %v7570 = vmul.f32 %v7210, %v768
      %v7571 = vmul.f32 %v7211, %v769
      %v7572 = vmul.f32 %v7212, %v770
      %v7573 = vmul.f32 %v7213, %v771
      %v7574 = vmul.f32 %v7214, %v772
      %v7575 = vmul.f32 %v7215, %v773
      %v7576 = vmul.f32 %v7216, %v774
      %v7577 = vmul.f32 %v7217, %v775
      %v7578 = vmul.f32 %v7218, %v776
      %v7579 = vmul.f32 %v7219, %v777
      %v7580 = vmul.f32 %v7220, %v778
      %v7581 = vmul.f32 %v7221, %v779
      %v7582 = vmul.f32 %v7222, %v780
      %v7583 = vmul.f32 %v7223, %v781
      %v7584 = vmul.f32 %v7224, %v782
      %v7585 = vmul.f32 %v7225, %v783
      %v7586 = vpack.c.bf16 %v7555, %v7554
      %v7587 = vpack.c.bf16 %v7557, %v7556
      %v7588 = vpack.c.bf16 %v7559, %v7558
      %v7589 = vpack.c.bf16 %v7561, %v7560
      %v7590 = vpack.c.bf16 %v7563, %v7562
      %v7591 = vpack.c.bf16 %v7565, %v7564
      %v7592 = vpack.c.bf16 %v7567, %v7566
      %v7593 = vpack.c.bf16 %v7569, %v7568
      %v7594 = vpack.c.bf16 %v7571, %v7570
      %v7595 = vpack.c.bf16 %v7573, %v7572
      %v7596 = vpack.c.bf16 %v7575, %v7574
      %v7597 = vpack.c.bf16 %v7577, %v7576
      %v7598 = vpack.c.bf16 %v7579, %v7578
      %v7599 = vpack.c.bf16 %v7581, %v7580
      %v7600 = vpack.c.bf16 %v7583, %v7582
      %v7601 = vpack.c.bf16 %v7585, %v7584
      %v7603 = vshll.u32 %v7586, 16
      %v7605 = vrot.slane %v7603, 1
      %v7606 = vshrl.u32 %v7586, 16
      %v7608 = vor.u32 %v7606, %v7605
      %v7610 = vshll.u32 %v7587, 16
      %v7612 = vrot.slane %v7610, 1
      %v7613 = vsel %vm3853, %v7608, %v7612
      %v7614 = vshrl.u32 %v7587, 16
      %v7616 = vor.u32 %v7614, %v7612
      %v7618 = vshll.u32 %v7588, 16
      %v7620 = vrot.slane %v7618, 1
      %v7621 = vsel %vm3853, %v7616, %v7620
      %v7622 = vshrl.u32 %v7588, 16
      %v7624 = vor.u32 %v7622, %v7620
      %v7626 = vshll.u32 %v7589, 16
      %v7628 = vrot.slane %v7626, 1
      %v7629 = vsel %vm3853, %v7624, %v7628
      %v7630 = vshrl.u32 %v7589, 16
      %v7632 = vor.u32 %v7630, %v7628
      %v7634 = vshll.u32 %v7590, 16
      %v7636 = vrot.slane %v7634, 1
      %v7637 = vsel %vm3853, %v7632, %v7636
      %v7638 = vshrl.u32 %v7590, 16
      %v7640 = vor.u32 %v7638, %v7636
      %v7642 = vshll.u32 %v7591, 16
      %v7644 = vrot.slane %v7642, 1
      %v7645 = vsel %vm3853, %v7640, %v7644
      %v7646 = vshrl.u32 %v7591, 16
      %v7648 = vor.u32 %v7646, %v7644
      %v7650 = vshll.u32 %v7592, 16
      %v7652 = vrot.slane %v7650, 1
      %v7653 = vsel %vm3853, %v7648, %v7652
      %v7654 = vshrl.u32 %v7592, 16
      %v7656 = vor.u32 %v7654, %v7652
      %v7658 = vshll.u32 %v7593, 16
      %v7660 = vrot.slane %v7658, 1
      %v7661 = vsel %vm3853, %v7656, %v7660
      %v7662 = vshrl.u32 %v7593, 16
      %v7664 = vor.u32 %v7662, %v7660
      %v7666 = vshll.u32 %v7594, 16
      %v7668 = vrot.slane %v7666, 1
      %v7669 = vsel %vm3853, %v7664, %v7668
      %v7670 = vshrl.u32 %v7594, 16
      %v7672 = vor.u32 %v7670, %v7668
      %v7674 = vshll.u32 %v7595, 16
      %v7676 = vrot.slane %v7674, 1
      %v7677 = vsel %vm3853, %v7672, %v7676
      %v7678 = vshrl.u32 %v7595, 16
      %v7680 = vor.u32 %v7678, %v7676
      %v7682 = vshll.u32 %v7596, 16
      %v7684 = vrot.slane %v7682, 1
      %v7685 = vsel %vm3853, %v7680, %v7684
      %v7686 = vshrl.u32 %v7596, 16
      %v7688 = vor.u32 %v7686, %v7684
      %v7690 = vshll.u32 %v7597, 16
      %v7692 = vrot.slane %v7690, 1
      %v7693 = vsel %vm3853, %v7688, %v7692
      %v7694 = vshrl.u32 %v7597, 16
      %v7696 = vor.u32 %v7694, %v7692
      %v7698 = vshll.u32 %v7598, 16
      %v7700 = vrot.slane %v7698, 1
      %v7701 = vsel %vm3853, %v7696, %v7700
      %v7702 = vshrl.u32 %v7598, 16
      %v7704 = vor.u32 %v7702, %v7700
      %v7706 = vshll.u32 %v7599, 16
      %v7708 = vrot.slane %v7706, 1
      %v7709 = vsel %vm3853, %v7704, %v7708
      %v7710 = vshrl.u32 %v7599, 16
      %v7712 = vor.u32 %v7710, %v7708
      %v7714 = vshll.u32 %v7600, 16
      %v7716 = vrot.slane %v7714, 1
      %v7717 = vsel %vm3853, %v7712, %v7716
      %v7718 = vshrl.u32 %v7600, 16
      %v7720 = vor.u32 %v7718, %v7716
      %v7722 = vshll.u32 %v7601, 16
      %v7724 = vrot.slane %v7722, 1
      %v7725 = vsel %vm3853, %v7720, %v7724
      %v7726 = vshrl.u32 %v7601, 16
      %v7728 = vor.u32 %v7726, %v7724
      %7729 = vrot.lane.b32.xlu0 %v7605, 16
      %v7730 = vpop.permute.xlu0 %7729
      %7731 = vrot.lane.b32.xlu0 %v7613, 16
      %v7732 = vpop.permute.xlu0 %7731
      %7733 = vrot.lane.b32.xlu0 %v7621, 16
      %v7734 = vpop.permute.xlu0 %7733
      %7735 = vrot.lane.b32.xlu0 %v7629, 16
      %v7736 = vpop.permute.xlu0 %7735
      %7737 = vrot.lane.b32.xlu0 %v7637, 16
      %v7738 = vpop.permute.xlu0 %7737
      %7739 = vrot.lane.b32.xlu0 %v7645, 16
      %v7740 = vpop.permute.xlu0 %7739
      %7741 = vrot.lane.b32.xlu0 %v7653, 16
      %v7742 = vpop.permute.xlu0 %7741
      %7743 = vrot.lane.b32.xlu0 %v7661, 16
      %v7744 = vpop.permute.xlu0 %7743
      %7745 = vrot.lane.b32.xlu0 %v7669, 16
      %v7746 = vpop.permute.xlu0 %7745
      %7747 = vrot.lane.b32.xlu0 %v7677, 16
      %v7748 = vpop.permute.xlu0 %7747
      %7749 = vrot.lane.b32.xlu0 %v7685, 16
      %v7750 = vpop.permute.xlu0 %7749
      %7751 = vrot.lane.b32.xlu0 %v7693, 16
      %v7752 = vpop.permute.xlu0 %7751
      %7753 = vrot.lane.b32.xlu0 %v7701, 16
      %v7754 = vpop.permute.xlu0 %7753
      %7755 = vrot.lane.b32.xlu0 %v7709, 16
      %v7756 = vpop.permute.xlu0 %7755
      %7757 = vrot.lane.b32.xlu0 %v7717, 16
      %v7758 = vpop.permute.xlu0 %7757
      %7759 = vrot.lane.b32.xlu0 %v7725, 16
      %v7760 = vpop.permute.xlu0 %7759
      %7761 = vrot.lane.b32.xlu0 %v7728, 16
      %v7762 = vpop.permute.xlu0 %7761
      %vm7780 = vcmask 195719
      %vm7781 = vmand %vm7780, %vm3484
      %v7782 = vld [vmem:[#allocation3] sm:$0x80]
      %v7783 = vsel %vm7781, %v7730, %v7782
      %7784 = vst [vmem:[#allocation3] sm:$0x80] %v7783
      %vm7785 = vcmask 195712
      %7786 = vst.msk [vmem:[#allocation3 + $0x8] sm:$0xff] %vm7785, %v7732
      %7787 = vst.msk [vmem:[#allocation3 + $0x10] sm:$0xff] %vm7785, %v7734
      %7788 = vst.msk [vmem:[#allocation3 + $0x18] sm:$0xff] %vm7785, %v7736
      %7789 = vst.msk [vmem:[#allocation3 + $0x20] sm:$0xff] %vm7785, %v7738
      %7790 = vst.msk [vmem:[#allocation3 + $0x28] sm:$0xff] %vm7785, %v7740
      %7791 = vst.msk [vmem:[#allocation3 + $0x30] sm:$0xff] %vm7785, %v7742
      %7792 = vst.msk [vmem:[#allocation3 + $0x38] sm:$0xff] %vm7785, %v7744
      %7793 = vst.msk [vmem:[#allocation3 + $0x40] sm:$0xff] %vm7785, %v7746
      %7794 = vst.msk [vmem:[#allocation3 + $0x48] sm:$0xff] %vm7785, %v7748
      %7795 = vst.msk [vmem:[#allocation3 + $0x50] sm:$0xff] %vm7785, %v7750
      %7796 = vst.msk [vmem:[#allocation3 + $0x58] sm:$0xff] %vm7785, %v7752
      %7797 = vst.msk [vmem:[#allocation3 + $0x60] sm:$0xff] %vm7785, %v7754
      %7798 = vst.msk [vmem:[#allocation3 + $0x68] sm:$0xff] %vm7785, %v7756
      %7799 = vst.msk [vmem:[#allocation3 + $0x70] sm:$0xff] %vm7785, %v7758
      %7800 = vst.msk [vmem:[#allocation3 + $0x78] sm:$0xff] %vm7785, %v7760
      %vm7801 = vcmask 195712
      %vm7802 = vmand %vm7801, %vm3853
      %v7803 = vld [vmem:[#allocation3 + $0x80] sm:$0xff]
      %v7804 = vsel %vm7802, %v7762, %v7803
      %7805 = vst [vmem:[#allocation3 + $0x80] sm:$0xff] %v7804
      %v7806 = vld [vmem:[#allocation3] sm:$0xff]
      %v7807 = vld [vmem:[#allocation3 + $0x8] sm:$0xff]
      %v7808 = vld [vmem:[#allocation3 + $0x10] sm:$0xff]
      %v7809 = vld [vmem:[#allocation3 + $0x18] sm:$0xff]
      %v7810 = vld [vmem:[#allocation3 + $0x20] sm:$0xff]
      %v7811 = vld [vmem:[#allocation3 + $0x28] sm:$0xff]
      %v7812 = vld [vmem:[#allocation3 + $0x30] sm:$0xff]
      %v7813 = vld [vmem:[#allocation3 + $0x38] sm:$0xff]
      %v7814 = vld [vmem:[#allocation3 + $0x40] sm:$0xff]
      %v7815 = vld [vmem:[#allocation3 + $0x48] sm:$0xff]
      %v7816 = vld [vmem:[#allocation3 + $0x50] sm:$0xff]
      %v7817 = vld [vmem:[#allocation3 + $0x58] sm:$0xff]
      %v7818 = vld [vmem:[#allocation3 + $0x60] sm:$0xff]
      %v7819 = vld [vmem:[#allocation3 + $0x68] sm:$0xff]
      %v7820 = vld [vmem:[#allocation3 + $0x70] sm:$0xff]
      %v7821 = vld [vmem:[#allocation3 + $0x78] sm:$0xff]
      %v7822 = vld [vmem:[%s14] sm:$0xf]
      %v7823 = vld [vmem:[%s14 + $0x4] sm:$0xf]
      %v7824 = vld [vmem:[%s14 + $0x8] sm:$0xf]
      %v7825 = vld [vmem:[#allocation3 + $0x80] sm:$0xff]
      %s7826 = scalar_lea.vmem %s14, 12
      %v7827 = vld [vmem:[%s7826] sm:$0xf]
      %v7828 = vld [vmem:[%s7826 + $0x4] sm:$0xf]
      %v7829 = vld [vmem:[%s7826 + $0x8] sm:$0xf]
      %v7833 = vunpack.c.l.b16 %v7827
      %v7834 = vunpack.c.l.b16 %v7828
      %v7835 = vunpack.c.l.b16 %v7829
      %v7836 = vpack.c.b16 %v7834, %v7833
      %v7837 = vpack.c.b16 %v7835, %v7835
      %v7840 = vsel %vm7227, %v7807, 0
      %v7843 = vsel %vm7227, %v7808, 0
      %v7846 = vsel %vm7227, %v7809, 0
      %v7849 = vsel %vm7227, %v7810, 0
      %v7852 = vsel %vm7227, %v7811, 0
      %v7855 = vsel %vm7227, %v7812, 0
      %v7858 = vsel %vm7227, %v7813, 0
      %v7861 = vsel %vm7227, %v7814, 0
      %v7864 = vsel %vm7227, %v7815, 0
      %v7867 = vsel %vm7227, %v7816, 0
      %v7870 = vsel %vm7227, %v7817, 0
      %v7873 = vsel %vm7227, %v7818, 0
      %v7876 = vsel %vm7227, %v7819, 0
      %v7879 = vsel %vm7227, %v7820, 0
      %v7882 = vsel %vm7227, %v7821, 0
      %v7885 = vsel %vm7227, %v7825, 0
      %v7888 = vsel %vm1295, %v7837, 0
      %7890 = vmatprep.subr.bf16.mxu0 0
      %7891 = vmatpush1.bf16.msra.mxu0 %v7836
      %7892 = vmatprep.subr.bf16.mxu0 0
      %7893 = vmatpush1.bf16.msra.mxu0 %v7888
      %7894 = vmatprep.subr.bf16.mxu0 0
      %7895 = vmatpush1.bf16.msra.mxu0 0
      %7896 = vmatprep.subr.bf16.mxu0 0
      %7897 = vmatpush1.bf16.msra.mxu0 0
      %7898 = vmatprep.subr.bf16.mxu0 0
      %7899 = vmatpush1.bf16.msra.mxu0 0
      %7900 = vmatprep.subr.bf16.mxu0 0
      %7901 = vmatpush1.bf16.msra.mxu0 0
      %7902 = vmatprep.subr.bf16.mxu0 0
      %7903 = vmatpush1.bf16.msra.mxu0 0
      %7904 = vmatprep.subr.bf16.mxu0 0
      %7905 = vmatpush1.bf16.msra.mxu0 0
      %7906 = vmatprep.subr.bf16.mxu0 0
      %7907 = vmatpush1.bf16.msra.mxu0 0
      %7908 = vmatprep.subr.bf16.mxu0 0
      %7909 = vmatpush1.bf16.msra.mxu0 0
      %7910 = vmatprep.subr.bf16.mxu0 0
      %7911 = vmatpush1.bf16.msra.mxu0 0
      %7912 = vmatprep.subr.bf16.mxu0 0
      %7913 = vmatpush1.bf16.msra.mxu0 0
      %7914 = vmatprep.subr.bf16.mxu0 0
      %7915 = vmatpush1.bf16.msra.mxu0 0
      %7916 = vmatprep.subr.bf16.mxu0 0
      %7917 = vmatpush1.bf16.msra.mxu0 0
      %7918 = vmatprep.subr.bf16.mxu0 0
      %7919 = vmatpush1.bf16.msra.mxu0 0
      %7920 = vmatprep.subr.bf16.mxu0 0
      %7921 = vmatpush1.bf16.msra.mxu0 0
      %7922 = vmatprep.mubr.bf16.mxu0 0
      %7923 = vmatmul.mubr.bf16.gmra.mrb[0].mxu0 %v7840
      %v7924 = vpop.f32.mrb[0].mxu0
      %v7925 = vadd.f32 0.0, %v7924
      %v7926 = vpop.f32.mrb[0].mxu0
      %v7927 = vpop.f32.mrb[0].mxu0
      %v7928 = vadd.f32 0.0, %v7927
      %v7929 = vpop.f32.mrb[0].mxu0
      %7930 = vmatprep.mubr.bf16.mxu0 0
      %7931 = vmatmul.mubr.bf16.gmra.mrb[0].mxu0 %v7843
      %v7932 = vpop.f32.mrb[0].mxu0
      %v7933 = vadd.f32 0.0, %v7932
      %v7934 = vpop.f32.mrb[0].mxu0
      %v7935 = vpop.f32.mrb[0].mxu0
      %v7936 = vadd.f32 0.0, %v7935
      %v7937 = vpop.f32.mrb[0].mxu0
      %7938 = vmatprep.mubr.bf16.mxu0 0
      %7939 = vmatmul.mubr.bf16.gmra.mrb[0].mxu0 %v7846
      %v7940 = vpop.f32.mrb[0].mxu0
      %v7941 = vadd.f32 0.0, %v7940
      %v7942 = vpop.f32.mrb[0].mxu0
      %v7943 = vpop.f32.mrb[0].mxu0
      %v7944 = vadd.f32 0.0, %v7943
      %v7945 = vpop.f32.mrb[0].mxu0
      %7946 = vmatprep.mubr.bf16.mxu0 0
      %7947 = vmatmul.mubr.bf16.gmra.mrb[0].mxu0 %v7849
      %v7948 = vpop.f32.mrb[0].mxu0
      %v7949 = vadd.f32 0.0, %v7948
      %v7950 = vpop.f32.mrb[0].mxu0
      %v7951 = vpop.f32.mrb[0].mxu0
      %v7952 = vadd.f32 0.0, %v7951
      %v7953 = vpop.f32.mrb[0].mxu0
      %7954 = vmatprep.mubr.bf16.mxu0 0
      %7955 = vmatmul.mubr.bf16.gmra.mrb[0].mxu0 %v7852
      %v7956 = vpop.f32.mrb[0].mxu0
      %v7957 = vadd.f32 0.0, %v7956
      %v7958 = vpop.f32.mrb[0].mxu0
      %v7959 = vpop.f32.mrb[0].mxu0
      %v7960 = vadd.f32 0.0, %v7959
      %v7961 = vpop.f32.mrb[0].mxu0
      %7962 = vmatprep.mubr.bf16.mxu0 0
      %7963 = vmatmul.mubr.bf16.gmra.mrb[0].mxu0 %v7855
      %v7964 = vpop.f32.mrb[0].mxu0
      %v7965 = vadd.f32 0.0, %v7964
      %v7966 = vpop.f32.mrb[0].mxu0
      %v7967 = vpop.f32.mrb[0].mxu0
      %v7968 = vadd.f32 0.0, %v7967
      %v7969 = vpop.f32.mrb[0].mxu0
      %7970 = vmatprep.mubr.bf16.mxu0 0
      %7971 = vmatmul.mubr.bf16.gmra.mrb[0].mxu0 %v7858
      %v7972 = vpop.f32.mrb[0].mxu0
      %v7973 = vadd.f32 0.0, %v7972
      %v7974 = vpop.f32.mrb[0].mxu0
      %v7975 = vpop.f32.mrb[0].mxu0
      %v7976 = vadd.f32 0.0, %v7975
      %v7977 = vpop.f32.mrb[0].mxu0
      %7978 = vmatprep.mubr.bf16.mxu0 0
      %7979 = vmatmul.mubr.bf16.gmra.mrb[0].mxu0 %v7861
      %v7980 = vpop.f32.mrb[0].mxu0
      %v7981 = vadd.f32 0.0, %v7980
      %v7982 = vpop.f32.mrb[0].mxu0
      %v7983 = vpop.f32.mrb[0].mxu0
      %v7984 = vadd.f32 0.0, %v7983
      %v7985 = vpop.f32.mrb[0].mxu0
      %7986 = vmatprep.mubr.bf16.mxu0 0
      %7987 = vmatmul.mubr.bf16.gmra.mrb[0].mxu0 %v7864
      %v7988 = vpop.f32.mrb[0].mxu0
      %v7989 = vadd.f32 0.0, %v7988
      %v7990 = vpop.f32.mrb[0].mxu0
      %v7991 = vpop.f32.mrb[0].mxu0
      %v7992 = vadd.f32 0.0, %v7991
      %v7993 = vpop.f32.mrb[0].mxu0
      %7994 = vmatprep.mubr.bf16.mxu0 0
      %7995 = vmatmul.mubr.bf16.gmra.mrb[0].mxu0 %v7867
      %v7996 = vpop.f32.mrb[0].mxu0
      %v7997 = vadd.f32 0.0, %v7996
      %v7998 = vpop.f32.mrb[0].mxu0
      %v7999 = vpop.f32.mrb[0].mxu0
      %v8000 = vadd.f32 0.0, %v7999
      %v8001 = vpop.f32.mrb[0].mxu0
      %8002 = vmatprep.mubr.bf16.mxu0 0
      %8003 = vmatmul.mubr.bf16.gmra.mrb[0].mxu0 %v7870
      %v8004 = vpop.f32.mrb[0].mxu0
      %v8005 = vadd.f32 0.0, %v8004
      %v8006 = vpop.f32.mrb[0].mxu0
      %v8007 = vpop.f32.mrb[0].mxu0
      %v8008 = vadd.f32 0.0, %v8007
      %v8009 = vpop.f32.mrb[0].mxu0
      %8010 = vmatprep.mubr.bf16.mxu0 0
      %8011 = vmatmul.mubr.bf16.gmra.mrb[0].mxu0 %v7873
      %v8012 = vpop.f32.mrb[0].mxu0
      %v8013 = vadd.f32 0.0, %v8012
      %v8014 = vpop.f32.mrb[0].mxu0
      %v8015 = vpop.f32.mrb[0].mxu0
      %v8016 = vadd.f32 0.0, %v8015
      %v8017 = vpop.f32.mrb[0].mxu0
      %8018 = vmatprep.mubr.bf16.mxu0 0
      %8019 = vmatmul.mubr.bf16.gmra.mrb[0].mxu0 %v7876
      %v8020 = vpop.f32.mrb[0].mxu0
      %v8021 = vadd.f32 0.0, %v8020
      %v8022 = vpop.f32.mrb[0].mxu0
      %v8023 = vpop.f32.mrb[0].mxu0
      %v8024 = vadd.f32 0.0, %v8023
      %v8025 = vpop.f32.mrb[0].mxu0
      %8026 = vmatprep.mubr.bf16.mxu0 0
      %8027 = vmatmul.mubr.bf16.gmra.mrb[0].mxu0 %v7879
      %v8028 = vpop.f32.mrb[0].mxu0
      %v8029 = vadd.f32 0.0, %v8028
      %v8030 = vpop.f32.mrb[0].mxu0
      %v8031 = vpop.f32.mrb[0].mxu0
      %v8032 = vadd.f32 0.0, %v8031
      %v8033 = vpop.f32.mrb[0].mxu0
      %8034 = vmatprep.mubr.bf16.mxu0 0
      %8035 = vmatmul.mubr.bf16.gmra.mrb[0].mxu0 %v7882
      %v8036 = vpop.f32.mrb[0].mxu0
      %v8037 = vadd.f32 0.0, %v8036
      %v8038 = vpop.f32.mrb[0].mxu0
      %v8039 = vpop.f32.mrb[0].mxu0
      %v8040 = vadd.f32 0.0, %v8039
      %v8041 = vpop.f32.mrb[0].mxu0
      %8042 = vmatprep.mubr.bf16.mxu0 0
      %8043 = vmatmul.mubr.bf16.gmra.mrb[0].mxu0 %v7885
      %v8044 = vpop.f32.mrb[0].mxu0
      %v8045 = vadd.f32 0.0, %v8044
      %v8046 = vpop.f32.mrb[0].mxu0
      %v8047 = vpop.f32.mrb[0].mxu0
      %v8048 = vadd.f32 0.0, %v8047
      %v8049 = vpop.f32.mrb[0].mxu0
      %8050 = vdwg.mxu0
      %v8054 = vunpack.c.l.b16 %v7822
      %v8055 = vunpack.c.l.b16 %v7823
      %v8056 = vunpack.c.l.b16 %v7824
      %v8057 = vpack.c.b16 %v8055, %v8054
      %v8058 = vpack.c.b16 %v8056, %v8056
      %v8061 = vsel %vm7227, %v7806, 0
      %v8064 = vsel %vm1295, %v8058, 0
      %8066 = vmatprep.subr.bf16.mxu0 0
      %8067 = vmatpush1.bf16.msra.mxu0 %v8057
      %8068 = vmatprep.subr.bf16.mxu0 0
      %8069 = vmatpush1.bf16.msra.mxu0 %v8064
      %8070 = vmatprep.subr.bf16.mxu0 0
      %8071 = vmatpush1.bf16.msra.mxu0 0
      %8072 = vmatprep.subr.bf16.mxu0 0
      %8073 = vmatpush1.bf16.msra.mxu0 0
      %8074 = vmatprep.subr.bf16.mxu0 0
      %8075 = vmatpush1.bf16.msra.mxu0 0
      %8076 = vmatprep.subr.bf16.mxu0 0
      %8077 = vmatpush1.bf16.msra.mxu0 0
      %8078 = vmatprep.subr.bf16.mxu0 0
      %8079 = vmatpush1.bf16.msra.mxu0 0
      %8080 = vmatprep.subr.bf16.mxu0 0
      %8081 = vmatpush1.bf16.msra.mxu0 0
      %8082 = vmatprep.subr.bf16.mxu0 0
      %8083 = vmatpush1.bf16.msra.mxu0 0
      %8084 = vmatprep.subr.bf16.mxu0 0
      %8085 = vmatpush1.bf16.msra.mxu0 0
      %8086 = vmatprep.subr.bf16.mxu0 0
      %8087 = vmatpush1.bf16.msra.mxu0 0
      %8088 = vmatprep.subr.bf16.mxu0 0
      %8089 = vmatpush1.bf16.msra.mxu0 0
      %8090 = vmatprep.subr.bf16.mxu0 0
      %8091 = vmatpush1.bf16.msra.mxu0 0
      %8092 = vmatprep.subr.bf16.mxu0 0
      %8093 = vmatpush1.bf16.msra.mxu0 0
      %8094 = vmatprep.subr.bf16.mxu0 0
      %8095 = vmatpush1.bf16.msra.mxu0 0
      %8096 = vmatprep.subr.bf16.mxu0 0
      %8097 = vmatpush1.bf16.msra.mxu0 0
      %8098 = vmatprep.mubr.bf16.mxu0 0
      %8099 = vmatmul.mubr.bf16.gmra.mrb[0].mxu0 %v8061
      %v8100 = vpop.f32.mrb[0].mxu0
      %v8101 = vadd.f32 %v7925, %v8100
      %v8102 = vpop.f32.mrb[0].mxu0
      %v8103 = vpop.f32.mrb[0].mxu0
      %v8104 = vadd.f32 %v7928, %v8103
      %v8105 = vpop.f32.mrb[0].mxu0
      %8106 = vmatprep.mubr.bf16.mxu0 0
      %8107 = vmatmul.mubr.bf16.gmra.mrb[0].mxu0 %v7840
      %v8108 = vpop.f32.mrb[0].mxu0
      %v8109 = vadd.f32 %v7933, %v8108
      %v8110 = vpop.f32.mrb[0].mxu0
      %v8111 = vpop.f32.mrb[0].mxu0
      %v8112 = vadd.f32 %v7936, %v8111
      %v8113 = vpop.f32.mrb[0].mxu0
      %8114 = vmatprep.mubr.bf16.mxu0 0
      %8115 = vmatmul.mubr.bf16.gmra.mrb[0].mxu0 %v7843
      %v8116 = vpop.f32.mrb[0].mxu0
      %v8117 = vadd.f32 %v7941, %v8116
      %v8118 = vpop.f32.mrb[0].mxu0
      %v8119 = vpop.f32.mrb[0].mxu0
      %v8120 = vadd.f32 %v7944, %v8119
      %v8121 = vpop.f32.mrb[0].mxu0
      %8122 = vmatprep.mubr.bf16.mxu0 0
      %8123 = vmatmul.mubr.bf16.gmra.mrb[0].mxu0 %v7846
      %v8124 = vpop.f32.mrb[0].mxu0
      %v8125 = vadd.f32 %v7949, %v8124
      %v8126 = vpop.f32.mrb[0].mxu0
      %v8127 = vpop.f32.mrb[0].mxu0
      %v8128 = vadd.f32 %v7952, %v8127
      %v8129 = vpop.f32.mrb[0].mxu0
      %8130 = vmatprep.mubr.bf16.mxu0 0
      %8131 = vmatmul.mubr.bf16.gmra.mrb[0].mxu0 %v7849
      %v8132 = vpop.f32.mrb[0].mxu0
      %v8133 = vadd.f32 %v7957, %v8132
      %v8134 = vpop.f32.mrb[0].mxu0
      %v8135 = vpop.f32.mrb[0].mxu0
      %v8136 = vadd.f32 %v7960, %v8135
      %v8137 = vpop.f32.mrb[0].mxu0
      %8138 = vmatprep.mubr.bf16.mxu0 0
      %8139 = vmatmul.mubr.bf16.gmra.mrb[0].mxu0 %v7852
      %v8140 = vpop.f32.mrb[0].mxu0
      %v8141 = vadd.f32 %v7965, %v8140
      %v8142 = vpop.f32.mrb[0].mxu0
      %v8143 = vpop.f32.mrb[0].mxu0
      %v8144 = vadd.f32 %v7968, %v8143
      %v8145 = vpop.f32.mrb[0].mxu0
      %8146 = vmatprep.mubr.bf16.mxu0 0
      %8147 = vmatmul.mubr.bf16.gmra.mrb[0].mxu0 %v7855
      %v8148 = vpop.f32.mrb[0].mxu0
      %v8149 = vadd.f32 %v7973, %v8148
      %v8150 = vpop.f32.mrb[0].mxu0
      %v8151 = vpop.f32.mrb[0].mxu0
      %v8152 = vadd.f32 %v7976, %v8151
      %v8153 = vpop.f32.mrb[0].mxu0
      %8154 = vmatprep.mubr.bf16.mxu0 0
      %8155 = vmatmul.mubr.bf16.gmra.mrb[0].mxu0 %v7858
      %v8156 = vpop.f32.mrb[0].mxu0
      %v8157 = vadd.f32 %v7981, %v8156
      %v8158 = vpop.f32.mrb[0].mxu0
      %v8159 = vpop.f32.mrb[0].mxu0
      %v8160 = vadd.f32 %v7984, %v8159
      %v8161 = vpop.f32.mrb[0].mxu0
      %8162 = vmatprep.mubr.bf16.mxu0 0
      %8163 = vmatmul.mubr.bf16.gmra.mrb[0].mxu0 %v7861
      %v8164 = vpop.f32.mrb[0].mxu0
      %v8165 = vadd.f32 %v7989, %v8164
      %v8166 = vpop.f32.mrb[0].mxu0
      %v8167 = vpop.f32.mrb[0].mxu0
      %v8168 = vadd.f32 %v7992, %v8167
      %v8169 = vpop.f32.mrb[0].mxu0
      %8170 = vmatprep.mubr.bf16.mxu0 0
      %8171 = vmatmul.mubr.bf16.gmra.mrb[0].mxu0 %v7864
      %v8172 = vpop.f32.mrb[0].mxu0
      %v8173 = vadd.f32 %v7997, %v8172
      %v8174 = vpop.f32.mrb[0].mxu0
      %v8175 = vpop.f32.mrb[0].mxu0
      %v8176 = vadd.f32 %v8000, %v8175
      %v8177 = vpop.f32.mrb[0].mxu0
      %8178 = vmatprep.mubr.bf16.mxu0 0
      %8179 = vmatmul.mubr.bf16.gmra.mrb[0].mxu0 %v7867
      %v8180 = vpop.f32.mrb[0].mxu0
      %v8181 = vadd.f32 %v8005, %v8180
      %v8182 = vpop.f32.mrb[0].mxu0
      %v8183 = vpop.f32.mrb[0].mxu0
      %v8184 = vadd.f32 %v8008, %v8183
      %v8185 = vpop.f32.mrb[0].mxu0
      %8186 = vmatprep.mubr.bf16.mxu0 0
      %8187 = vmatmul.mubr.bf16.gmra.mrb[0].mxu0 %v7870
      %v8188 = vpop.f32.mrb[0].mxu0
      %v8189 = vadd.f32 %v8013, %v8188
      %v8190 = vpop.f32.mrb[0].mxu0
      %v8191 = vpop.f32.mrb[0].mxu0
      %v8192 = vadd.f32 %v8016, %v8191
      %v8193 = vpop.f32.mrb[0].mxu0
      %8194 = vmatprep.mubr.bf16.mxu0 0
      %8195 = vmatmul.mubr.bf16.gmra.mrb[0].mxu0 %v7873
      %v8196 = vpop.f32.mrb[0].mxu0
      %v8197 = vadd.f32 %v8021, %v8196
      %v8198 = vpop.f32.mrb[0].mxu0
      %v8199 = vpop.f32.mrb[0].mxu0
      %v8200 = vadd.f32 %v8024, %v8199
      %v8201 = vpop.f32.mrb[0].mxu0
      %8202 = vmatprep.mubr.bf16.mxu0 0
      %8203 = vmatmul.mubr.bf16.gmra.mrb[0].mxu0 %v7876
      %v8204 = vpop.f32.mrb[0].mxu0
      %v8205 = vadd.f32 %v8029, %v8204
      %v8206 = vpop.f32.mrb[0].mxu0
      %v8207 = vpop.f32.mrb[0].mxu0
      %v8208 = vadd.f32 %v8032, %v8207
      %v8209 = vpop.f32.mrb[0].mxu0
      %8210 = vmatprep.mubr.bf16.mxu0 0
      %8211 = vmatmul.mubr.bf16.gmra.mrb[0].mxu0 %v7879
      %v8212 = vpop.f32.mrb[0].mxu0
      %v8213 = vadd.f32 %v8037, %v8212
      %v8214 = vpop.f32.mrb[0].mxu0
      %v8215 = vpop.f32.mrb[0].mxu0
      %v8216 = vadd.f32 %v8040, %v8215
      %v8217 = vpop.f32.mrb[0].mxu0
      %8218 = vmatprep.mubr.bf16.mxu0 0
      %8219 = vmatmul.mubr.bf16.gmra.mrb[0].mxu0 %v7882
      %v8220 = vpop.f32.mrb[0].mxu0
      %v8221 = vadd.f32 %v8045, %v8220
      %v8222 = vpop.f32.mrb[0].mxu0
      %v8223 = vpop.f32.mrb[0].mxu0
      %v8224 = vadd.f32 %v8048, %v8223
      %v8225 = vpop.f32.mrb[0].mxu0
      %8226 = vdwg.mxu0
      %v8227 = vld [vmem:[#allocation3 + $0x10] sm:$0xff]
      %v8228 = vld [vmem:[#allocation3 + $0x18] sm:$0xff]
      %v8229 = vld [vmem:[#allocation3 + $0x20] sm:$0xff]
      %v8230 = vld [vmem:[#allocation3 + $0x28] sm:$0xff]
      %v8231 = vld [vmem:[#allocation3 + $0x30] sm:$0xff]
      %v8232 = vld [vmem:[#allocation3 + $0x38] sm:$0xff]
      %v8233 = vld [vmem:[#allocation3 + $0x40] sm:$0xff]
      %v8234 = vld [vmem:[#allocation3 + $0x48] sm:$0xff]
      %v8235 = vld [vmem:[#allocation3 + $0x50] sm:$0xff]
      %v8236 = vld [vmem:[#allocation3 + $0x58] sm:$0xff]
      %v8237 = vld [vmem:[#allocation3 + $0x60] sm:$0xff]
      %v8238 = vld [vmem:[#allocation3 + $0x68] sm:$0xff]
      %v8239 = vld [vmem:[#allocation3 + $0x70] sm:$0xff]
      %v8240 = vld [vmem:[#allocation3 + $0x78] sm:$0xff]
      %v8241 = vld [vmem:[#allocation3 + $0x80] sm:$0xff]
      %v8242 = vld [vmem:[#allocation3 + $0x88] sm:$0xff]
      %s8243 = scalar_lea.vmem %s14, 24
      %v8244 = vld [vmem:[%s8243] sm:$0xf]
      %v8245 = vld [vmem:[%s8243 + $0x4] sm:$0xf]
      %v8246 = vld [vmem:[%s8243 + $0x8] sm:$0xf]
      %v8250 = vunpack.c.l.b16 %v8244
      %v8251 = vunpack.c.l.b16 %v8245
      %v8252 = vunpack.c.l.b16 %v8246
      %v8253 = vpack.c.b16 %v8251, %v8250
      %v8254 = vpack.c.b16 %v8252, %v8252
      %v8257 = vsel %vm7227, %v8227, 0
      %v8260 = vsel %vm7227, %v8228, 0
      %v8263 = vsel %vm7227, %v8229, 0
      %v8266 = vsel %vm7227, %v8230, 0
      %v8269 = vsel %vm7227, %v8231, 0
      %v8272 = vsel %vm7227, %v8232, 0
      %v8275 = vsel %vm7227, %v8233, 0
      %v8278 = vsel %vm7227, %v8234, 0
      %v8281 = vsel %vm7227, %v8235, 0
      %v8284 = vsel %vm7227, %v8236, 0
      %v8287 = vsel %vm7227, %v8237, 0
      %v8290 = vsel %vm7227, %v8238, 0
      %v8293 = vsel %vm7227, %v8239, 0
      %v8296 = vsel %vm7227, %v8240, 0
      %v8299 = vsel %vm7227, %v8241, 0
      %v8302 = vsel %vm7227, %v8242, 0
      %v8305 = vsel %vm1295, %v8254, 0
      %8307 = vmatprep.subr.bf16.mxu0 0
      %8308 = vmatpush1.bf16.msra.mxu0 %v8253
      %8309 = vmatprep.subr.bf16.mxu0 0
      %8310 = vmatpush1.bf16.msra.mxu0 %v8305
      %8311 = vmatprep.subr.bf16.mxu0 0
      %8312 = vmatpush1.bf16.msra.mxu0 0
      %8313 = vmatprep.subr.bf16.mxu0 0
      %8314 = vmatpush1.bf16.msra.mxu0 0
      %8315 = vmatprep.subr.bf16.mxu0 0
      %8316 = vmatpush1.bf16.msra.mxu0 0
      %8317 = vmatprep.subr.bf16.mxu0 0
      %8318 = vmatpush1.bf16.msra.mxu0 0
      %8319 = vmatprep.subr.bf16.mxu0 0
      %8320 = vmatpush1.bf16.msra.mxu0 0
      %8321 = vmatprep.subr.bf16.mxu0 0
      %8322 = vmatpush1.bf16.msra.mxu0 0
      %8323 = vmatprep.subr.bf16.mxu0 0
      %8324 = vmatpush1.bf16.msra.mxu0 0
      %8325 = vmatprep.subr.bf16.mxu0 0
      %8326 = vmatpush1.bf16.msra.mxu0 0
      %8327 = vmatprep.subr.bf16.mxu0 0
      %8328 = vmatpush1.bf16.msra.mxu0 0
      %8329 = vmatprep.subr.bf16.mxu0 0
      %8330 = vmatpush1.bf16.msra.mxu0 0
      %8331 = vmatprep.subr.bf16.mxu0 0
      %8332 = vmatpush1.bf16.msra.mxu0 0
      %8333 = vmatprep.subr.bf16.mxu0 0
      %8334 = vmatpush1.bf16.msra.mxu0 0
      %8335 = vmatprep.subr.bf16.mxu0 0
      %8336 = vmatpush1.bf16.msra.mxu0 0
      %8337 = vmatprep.subr.bf16.mxu0 0
      %8338 = vmatpush1.bf16.msra.mxu0 0
      %8339 = vmatprep.mubr.bf16.mxu0 0
      %8340 = vmatmul.mubr.bf16.gmra.mrb[0].mxu0 %v8257
      %v8341 = vpop.f32.mrb[0].mxu0
      %v8342 = vadd.f32 0.0, %v8341
      %v8343 = vpop.f32.mrb[0].mxu0
      %v8344 = vpop.f32.mrb[0].mxu0
      %v8345 = vadd.f32 0.0, %v8344
      %v8346 = vpop.f32.mrb[0].mxu0
      %8347 = vmatprep.mubr.bf16.mxu0 0
      %8348 = vmatmul.mubr.bf16.gmra.mrb[0].mxu0 %v8260
      %v8349 = vpop.f32.mrb[0].mxu0
      %v8350 = vadd.f32 0.0, %v8349
      %v8351 = vpop.f32.mrb[0].mxu0
      %v8352 = vpop.f32.mrb[0].mxu0
      %v8353 = vadd.f32 0.0, %v8352
      %v8354 = vpop.f32.mrb[0].mxu0
      %8355 = vmatprep.mubr.bf16.mxu0 0
      %8356 = vmatmul.mubr.bf16.gmra.mrb[0].mxu0 %v8263
      %v8357 = vpop.f32.mrb[0].mxu0
      %v8358 = vadd.f32 0.0, %v8357
      %v8359 = vpop.f32.mrb[0].mxu0
      %v8360 = vpop.f32.mrb[0].mxu0
      %v8361 = vadd.f32 0.0, %v8360
      %v8362 = vpop.f32.mrb[0].mxu0
      %8363 = vmatprep.mubr.bf16.mxu0 0
      %8364 = vmatmul.mubr.bf16.gmra.mrb[0].mxu0 %v8266
      %v8365 = vpop.f32.mrb[0].mxu0
      %v8366 = vadd.f32 0.0, %v8365
      %v8367 = vpop.f32.mrb[0].mxu0
      %v8368 = vpop.f32.mrb[0].mxu0
      %v8369 = vadd.f32 0.0, %v8368
      %v8370 = vpop.f32.mrb[0].mxu0
      %8371 = vmatprep.mubr.bf16.mxu0 0
      %8372 = vmatmul.mubr.bf16.gmra.mrb[0].mxu0 %v8269
      %v8373 = vpop.f32.mrb[0].mxu0
      %v8374 = vadd.f32 0.0, %v8373
      %v8375 = vpop.f32.mrb[0].mxu0
      %v8376 = vpop.f32.mrb[0].mxu0
      %v8377 = vadd.f32 0.0, %v8376
      %v8378 = vpop.f32.mrb[0].mxu0
      %8379 = vmatprep.mubr.bf16.mxu0 0
      %8380 = vmatmul.mubr.bf16.gmra.mrb[0].mxu0 %v8272
      %v8381 = vpop.f32.mrb[0].mxu0
      %v8382 = vadd.f32 0.0, %v8381
      %v8383 = vpop.f32.mrb[0].mxu0
      %v8384 = vpop.f32.mrb[0].mxu0
      %v8385 = vadd.f32 0.0, %v8384
      %v8386 = vpop.f32.mrb[0].mxu0
      %8387 = vmatprep.mubr.bf16.mxu0 0
      %8388 = vmatmul.mubr.bf16.gmra.mrb[0].mxu0 %v8275
      %v8389 = vpop.f32.mrb[0].mxu0
      %v8390 = vadd.f32 0.0, %v8389
      %v8391 = vpop.f32.mrb[0].mxu0
      %v8392 = vpop.f32.mrb[0].mxu0
      %v8393 = vadd.f32 0.0, %v8392
      %v8394 = vpop.f32.mrb[0].mxu0
      %8395 = vmatprep.mubr.bf16.mxu0 0
      %8396 = vmatmul.mubr.bf16.gmra.mrb[0].mxu0 %v8278
      %v8397 = vpop.f32.mrb[0].mxu0
      %v8398 = vadd.f32 0.0, %v8397
      %v8399 = vpop.f32.mrb[0].mxu0
      %v8400 = vpop.f32.mrb[0].mxu0
      %v8401 = vadd.f32 0.0, %v8400
      %v8402 = vpop.f32.mrb[0].mxu0
      %8403 = vmatprep.mubr.bf16.mxu0 0
      %8404 = vmatmul.mubr.bf16.gmra.mrb[0].mxu0 %v8281
      %v8405 = vpop.f32.mrb[0].mxu0
      %v8406 = vadd.f32 0.0, %v8405
      %v8407 = vpop.f32.mrb[0].mxu0
      %v8408 = vpop.f32.mrb[0].mxu0
      %v8409 = vadd.f32 0.0, %v8408
      %v8410 = vpop.f32.mrb[0].mxu0
      %8411 = vmatprep.mubr.bf16.mxu0 0
      %8412 = vmatmul.mubr.bf16.gmra.mrb[0].mxu0 %v8284
      %v8413 = vpop.f32.mrb[0].mxu0
      %v8414 = vadd.f32 0.0, %v8413
      %v8415 = vpop.f32.mrb[0].mxu0
      %v8416 = vpop.f32.mrb[0].mxu0
      %v8417 = vadd.f32 0.0, %v8416
      %v8418 = vpop.f32.mrb[0].mxu0
      %8419 = vmatprep.mubr.bf16.mxu0 0
      %8420 = vmatmul.mubr.bf16.gmra.mrb[0].mxu0 %v8287
      %v8421 = vpop.f32.mrb[0].mxu0
      %v8422 = vadd.f32 0.0, %v8421
      %v8423 = vpop.f32.mrb[0].mxu0
      %v8424 = vpop.f32.mrb[0].mxu0
      %v8425 = vadd.f32 0.0, %v8424
      %v8426 = vpop.f32.mrb[0].mxu0
      %8427 = vmatprep.mubr.bf16.mxu0 0
      %8428 = vmatmul.mubr.bf16.gmra.mrb[0].mxu0 %v8290
      %v8429 = vpop.f32.mrb[0].mxu0
      %v8430 = vadd.f32 0.0, %v8429
      %v8431 = vpop.f32.mrb[0].mxu0
      %v8432 = vpop.f32.mrb[0].mxu0
      %v8433 = vadd.f32 0.0, %v8432
      %v8434 = vpop.f32.mrb[0].mxu0
      %8435 = vmatprep.mubr.bf16.mxu0 0
      %8436 = vmatmul.mubr.bf16.gmra.mrb[0].mxu0 %v8293
      %v8437 = vpop.f32.mrb[0].mxu0
      %v8438 = vadd.f32 0.0, %v8437
      %v8439 = vpop.f32.mrb[0].mxu0
      %v8440 = vpop.f32.mrb[0].mxu0
      %v8441 = vadd.f32 0.0, %v8440
      %v8442 = vpop.f32.mrb[0].mxu0
      %8443 = vmatprep.mubr.bf16.mxu0 0
      %8444 = vmatmul.mubr.bf16.gmra.mrb[0].mxu0 %v8296
      %v8445 = vpop.f32.mrb[0].mxu0
      %v8446 = vadd.f32 0.0, %v8445
      %v8447 = vpop.f32.mrb[0].mxu0
      %v8448 = vpop.f32.mrb[0].mxu0
      %v8449 = vadd.f32 0.0, %v8448
      %v8450 = vpop.f32.mrb[0].mxu0
      %8451 = vmatprep.mubr.bf16.mxu0 0
      %8452 = vmatmul.mubr.bf16.gmra.mrb[0].mxu0 %v8299
      %v8453 = vpop.f32.mrb[0].mxu0
      %v8454 = vadd.f32 0.0, %v8453
      %v8455 = vpop.f32.mrb[0].mxu0
      %v8456 = vpop.f32.mrb[0].mxu0
      %v8457 = vadd.f32 0.0, %v8456
      %v8458 = vpop.f32.mrb[0].mxu0
      %8459 = vmatprep.mubr.bf16.mxu0 0
      %8460 = vmatmul.mubr.bf16.gmra.mrb[0].mxu0 %v8302
      %v8461 = vpop.f32.mrb[0].mxu0
      %v8462 = vadd.f32 0.0, %v8461
      %v8463 = vpop.f32.mrb[0].mxu0
      %v8464 = vpop.f32.mrb[0].mxu0
      %v8465 = vadd.f32 0.0, %v8464
      %v8466 = vpop.f32.mrb[0].mxu0
      %8467 = vdwg.mxu0
      %v8468 = vadd.f32 %v8101, %v8342
      %v8469 = vadd.f32 %v8104, %v8345
      %v8470 = vadd.f32 %v8109, %v8350
      %v8471 = vadd.f32 %v8112, %v8353
      %v8472 = vadd.f32 %v8117, %v8358
      %v8473 = vadd.f32 %v8120, %v8361
      %v8474 = vadd.f32 %v8125, %v8366
      %v8475 = vadd.f32 %v8128, %v8369
      %v8476 = vadd.f32 %v8133, %v8374
      %v8477 = vadd.f32 %v8136, %v8377
      %v8478 = vadd.f32 %v8141, %v8382
      %v8479 = vadd.f32 %v8144, %v8385
      %v8480 = vadd.f32 %v8149, %v8390
      %v8481 = vadd.f32 %v8152, %v8393
      %v8482 = vadd.f32 %v8157, %v8398
      %v8483 = vadd.f32 %v8160, %v8401
      %v8484 = vadd.f32 %v8165, %v8406
      %v8485 = vadd.f32 %v8168, %v8409
      %v8486 = vadd.f32 %v8173, %v8414
      %v8487 = vadd.f32 %v8176, %v8417
      %v8488 = vadd.f32 %v8181, %v8422
      %v8489 = vadd.f32 %v8184, %v8425
      %v8490 = vadd.f32 %v8189, %v8430
      %v8491 = vadd.f32 %v8192, %v8433
      %v8492 = vadd.f32 %v8197, %v8438
      %v8493 = vadd.f32 %v8200, %v8441
      %v8494 = vadd.f32 %v8205, %v8446
      %v8495 = vadd.f32 %v8208, %v8449
      %v8496 = vadd.f32 %v8213, %v8454
      %v8497 = vadd.f32 %v8216, %v8457
      %v8498 = vadd.f32 %v8221, %v8462
      %v8499 = vadd.f32 %v8224, %v8465
      %v8501 = vlaneseq
      %v8502 = vshrl.u32 %v8501, 7
      %v8503 = vsub.s32 0, %v8502
      %v8504 = vrot.slane %v7226, %v8503
      %v8506 = vadd.f32 %v8468, %v8504
      %v8507 = vadd.f32 %v8469, %v8504
      %v8508 = vadd.f32 %v8470, %v8504
      %v8509 = vadd.f32 %v8471, %v8504
      %v8510 = vadd.f32 %v8472, %v8504
      %v8511 = vadd.f32 %v8473, %v8504
      %v8512 = vadd.f32 %v8474, %v8504
      %v8513 = vadd.f32 %v8475, %v8504
      %v8514 = vadd.f32 %v8476, %v8504
      %v8515 = vadd.f32 %v8477, %v8504
      %v8516 = vadd.f32 %v8478, %v8504
      %v8517 = vadd.f32 %v8479, %v8504
      %v8518 = vadd.f32 %v8480, %v8504
      %v8519 = vadd.f32 %v8481, %v8504
      %v8520 = vadd.f32 %v8482, %v8504
      %v8521 = vadd.f32 %v8483, %v8504
      %v8522 = vadd.f32 %v8484, %v8504
      %v8523 = vadd.f32 %v8485, %v8504
      %v8524 = vadd.f32 %v8486, %v8504
      %v8525 = vadd.f32 %v8487, %v8504
      %v8526 = vadd.f32 %v8488, %v8504
      %v8527 = vadd.f32 %v8489, %v8504
      %v8528 = vadd.f32 %v8490, %v8504
      %v8529 = vadd.f32 %v8491, %v8504
      %v8530 = vadd.f32 %v8492, %v8504
      %v8531 = vadd.f32 %v8493, %v8504
      %v8532 = vadd.f32 %v8494, %v8504
      %v8533 = vadd.f32 %v8495, %v8504
      %v8534 = vadd.f32 %v8496, %v8504
      %v8535 = vadd.f32 %v8497, %v8504
      %v8536 = vadd.f32 %v8498, %v8504
      %v8537 = vadd.f32 %v8499, %v8504
      %v8538 = vadd.f32 %v8506, %v992
      %v8539 = vadd.f32 %v8507, %v995
      %v8540 = vadd.f32 %v8508, %v1000
      %v8541 = vadd.f32 %v8509, %v1003
      %v8542 = vadd.f32 %v8510, %v1008
      %v8543 = vadd.f32 %v8511, %v1011
      %v8544 = vadd.f32 %v8512, %v1016
      %v8545 = vadd.f32 %v8513, %v1019
      %v8546 = vadd.f32 %v8514, %v1024
      %v8547 = vadd.f32 %v8515, %v1027
      %v8548 = vadd.f32 %v8516, %v1032
      %v8549 = vadd.f32 %v8517, %v1035
      %v8550 = vadd.f32 %v8518, %v1040
      %v8551 = vadd.f32 %v8519, %v1043
      %v8552 = vadd.f32 %v8520, %v1048
      %v8553 = vadd.f32 %v8521, %v1051
      %v8554 = vadd.f32 %v8522, %v1056
      %v8555 = vadd.f32 %v8523, %v1059
      %v8556 = vadd.f32 %v8524, %v1064
      %v8557 = vadd.f32 %v8525, %v1067
      %v8558 = vadd.f32 %v8526, %v1072
      %v8559 = vadd.f32 %v8527, %v1075
      %v8560 = vadd.f32 %v8528, %v1080
      %v8561 = vadd.f32 %v8529, %v1083
      %v8562 = vadd.f32 %v8530, %v1088
      %v8563 = vadd.f32 %v8531, %v1091
      %v8564 = vadd.f32 %v8532, %v1096
      %v8565 = vadd.f32 %v8533, %v1099
      %v8566 = vadd.f32 %v8534, %v1104
      %v8567 = vadd.f32 %v8535, %v1107
      %v8568 = vadd.f32 %v8536, %v1112
      %v8569 = vadd.f32 %v8537, %v1115
      %8570 = vst.msk [vmem:[%s589] sm:$0xff] %vm4878, %v8538
      %8571 = vst.msk [vmem:[%s589 + $0x8] sm:$0xff] %vm4878, %v8539
      %8572 = vst.msk [vmem:[%s589 + $0x10] sm:$0xff] %vm4878, %v8540
      %8573 = vst.msk [vmem:[%s589 + $0x18] sm:$0xff] %vm4878, %v8541
      %8574 = vst.msk [vmem:[%s589 + $0x20] sm:$0xff] %vm4878, %v8542
      %8575 = vst.msk [vmem:[%s589 + $0x28] sm:$0xff] %vm4878, %v8543
      %8576 = vst.msk [vmem:[%s589 + $0x30] sm:$0xff] %vm4878, %v8544
      %8577 = vst.msk [vmem:[%s589 + $0x38] sm:$0xff] %vm4878, %v8545
      %8578 = vst.msk [vmem:[%s589 + $0x40] sm:$0xff] %vm4878, %v8546
      %8579 = vst.msk [vmem:[%s589 + $0x48] sm:$0xff] %vm4878, %v8547
      %8580 = vst.msk [vmem:[%s589 + $0x50] sm:$0xff] %vm4878, %v8548
      %8581 = vst.msk [vmem:[%s589 + $0x58] sm:$0xff] %vm4878, %v8549
      %8582 = vst.msk [vmem:[%s589 + $0x60] sm:$0xff] %vm4878, %v8550
      %8583 = vst.msk [vmem:[%s589 + $0x68] sm:$0xff] %vm4878, %v8551
      %8584 = vst.msk [vmem:[%s589 + $0x70] sm:$0xff] %vm4878, %v8552
      %8585 = vst.msk [vmem:[%s589 + $0x78] sm:$0xff] %vm4878, %v8553
      %8586 = vst.msk [vmem:[%s589 + $0x80] sm:$0xff] %vm4878, %v8554
      %8587 = vst.msk [vmem:[%s589 + $0x88] sm:$0xff] %vm4878, %v8555
      %8588 = vst.msk [vmem:[%s589 + $0x90] sm:$0xff] %vm4878, %v8556
      %8589 = vst.msk [vmem:[%s589 + $0x98] sm:$0xff] %vm4878, %v8557
      %8590 = vst.msk [vmem:[%s589 + $0xa0] sm:$0xff] %vm4878, %v8558
      %8591 = vst.msk [vmem:[%s589 + $0xa8] sm:$0xff] %vm4878, %v8559
      %8592 = vst.msk [vmem:[%s589 + $0xb0] sm:$0xff] %vm4878, %v8560
      %8593 = vst.msk [vmem:[%s589 + $0xb8] sm:$0xff] %vm4878, %v8561
      %8594 = vst.msk [vmem:[%s589 + $0xc0] sm:$0xff] %vm4878, %v8562
      %8595 = vst.msk [vmem:[%s589 + $0xc8] sm:$0xff] %vm4878, %v8563
      %8596 = vst.msk [vmem:[%s589 + $0xd0] sm:$0xff] %vm4878, %v8564
      %8597 = vst.msk [vmem:[%s589 + $0xd8] sm:$0xff] %vm4878, %v8565
      %8598 = vst.msk [vmem:[%s589 + $0xe0] sm:$0xff] %vm4878, %v8566
      %8599 = vst.msk [vmem:[%s589 + $0xe8] sm:$0xff] %vm4878, %v8567
      %8600 = vst.msk [vmem:[%s589 + $0xf0] sm:$0xff] %vm4878, %v8568
      %8601 = vst.msk [vmem:[%s589 + $0xf8] sm:$0xff] %vm4878, %v8569
      %p8602 = scmp.lt.s32.totalorder %s29, 1
      %s8603 = scalar_select %p8602, %s29, 1
      %s8604 = smul.addr %s8603, 32
      %s8605 = smul.addr %s8604, 8
      %s8606 = scalar_lea.vmem %s18, %s8605
      // Predicated region
      $region93: #{_lambda_.1} parent=91 // pred_check
        %p8607 = pneg %p435
      $region94: #{_lambda_.1} parent=91 // pred_check_branch
        %8609 = sbr.rel (%p8607) target = $region96
      $region95: #{_lambda_.1} parent=91 // pred_region
        _
      $region96: #{_lambda_.1} parent=91 // pred_fallthru
        _
    $region92: #{_lambda_.1} parent=5 // pred_fallthru
      _
    %p8610 = scmp.le.s32.totalorder 2, %s24
    // Predicated region
    $region97: #{_lambda_.1} parent=5 // pred_check
      %p8611 = pneg %p8610
    $region98: #{_lambda_.1} parent=5 // pred_check_branch
      %8613 = sbr.rel (%p8611) target = $region100
    $region99: #{_lambda_.1} parent=5 // pred_region
      %s8614 = ssub.s32 %s24, 2
      // Predicated region
      $region101: #{_lambda_.1} parent=99 // pred_check
        %p8615 = pneg %p441
      $region102: #{_lambda_.1} parent=99 // pred_check_branch
        %8617 = sbr.rel (%p8615) target = $region104
      $region103: #{_lambda_.1} parent=99 // pred_region
        %p8618 = scmp.lt.s32.totalorder %s30, 1
        %s8619 = scalar_select %p8618, %s30, 1
        %s8620 = smul.addr %s8619, 32
        %s8621 = smul.addr %s8620, 8
        %s8622 = scalar_lea.vmem %s18, %s8621
      $region104: #{_lambda_.1} parent=99 // pred_fallthru
        _
    $region100: #{_lambda_.1} parent=5 // pred_fallthru
      _
  $region6: #{_lambda_.1} parent=0 // loop_footer
    %s28 = sadd.s32 1, %s24
  $region7: #{_lambda_.1} parent=0 // loop_footer_branch
    %23 = sbr.rel target = $region3
  $region8: #{_lambda_.1} parent=0 // loop_exit
    _

</llo_original>
